<compile_context>
chip_gen: v7x
topology: tpu7x:2x2x1
jax: 0.10.0
libtpu: 0.0.40
codegen_flags: <defaults>
</compile_context>

<pallas_src>
import functools
from typing import NamedTuple

import jax
import jax.numpy as jnp
import numpy as np
from jax.experimental import pallas as pl
from jax.experimental.pallas import tpu as pltpu

H = 256          # embedding dim == LSTM hidden dim
IMG_DIM = 1000   # bottleneck input dim
C1 = 512         # classifier hidden 1
C2 = 1024        # classifier hidden 2
FUSE_MAX_V = 4096  # bf16 wc3 <= 8 MiB -> keep resident, single fused kernel


class DecoderPlan(NamedTuple):
    num_vocab: int
    v_pad: int
    tile_v: int      # 0 => fused single-kernel path


def _round_up(x, m):
    return (x + m - 1) // m * m


def build_plan(num_vocab: int) -> DecoderPlan:
    """Static (per-vocab / per-chip) tiling decisions, made once."""
    if num_vocab <= FUSE_MAX_V:
        return DecoderPlan(num_vocab, _round_up(num_vocab, 128), 0)
    kind = ""
    try:
        kind = jax.devices()[0].device_kind.lower()
    except Exception:
        pass
    # v6e: 4096-wide wc3 tiles (8 MiB, 16 MiB double-buffered) amortize the
    # ~0.35us per-grid-step overhead and fit its 32 MiB scoped VMEM.
    # v5e (16 MiB scoped default) and v7x (needs >=2 parallel tiles to use
    # both TensorCores) stay at 2048.
    max_tile = 4096 if "v6" in kind else 2048
    return DecoderPlan(num_vocab, _round_up(num_vocab, max_tile), max_tile)


def prepare_params(params, plan: DecoderPlan):
    """One-time prep: bf16-cast matmul weights, fold LSTM biases, pad wc3.

    Doing this here (not per forward call) removes the redundant f32-read /
    bf16-write / pad HBM traffic that previously ~tripled the bandwidth cost
    of the vocab projection."""
    bf = lambda w: w.astype(jnp.bfloat16)
    pad = plan.v_pad - plan.num_vocab
    wc3 = bf(params['wc3'])
    bc3 = params['bc3']
    if pad:
        wc3 = jnp.pad(wc3, ((0, 0), (0, pad)))   # zero-fill keeps pad logits 0
        bc3 = jnp.pad(bc3, ((0, 0), (0, pad)))
    return {
        'emb': params['emb'],                     # f32; gathered rows cast later
        'wb1': bf(params['wb1']), 'bb1': params['bb1'],
        'wb2': bf(params['wb2']), 'bb2': params['bb2'],
        'wih': bf(params['wih']), 'whh': bf(params['whh']),
        'blstm': params['bih'] + params['bhh'],   # combined LSTM bias (1, 4H) f32
        'wc1': bf(params['wc1']), 'bc1': params['bc1'],
        'wc2': bf(params['wc2']), 'bc2': params['bc2'],
        'wc3': wc3, 'bc3': bc3,
    }


# ----------------------------------------------------------------------------
# Kernels
# ----------------------------------------------------------------------------
def _decoder_front(x_ref, img_ref,
                   wb1_ref, bb1_ref, wb2_ref, bb2_ref,
                   wih_ref, whh_ref, blstm_ref,
                   wc1_ref, bc1_ref, wc2_ref, bc2_ref):
    """Bottleneck + LSTM recurrence + classifier front.

    Returns the (B*T, C2) bf16 feature in BATCH-major row order (b*T + t)."""
    TB = x_ref.shape[0]
    B = img_ref.shape[0]
    T = TB // B

    # ---- bottleneck: Linear(1000,512)+ReLU -> Linear(512,256)+ReLU ----
    z = jnp.dot(img_ref[...], wb1_ref[...],
                preferred_element_type=jnp.float32) + bb1_ref[...]
    z = jnp.maximum(z, 0.0).astype(jnp.bfloat16)
    h0 = jnp.dot(z, wb2_ref[...],
                 preferred_element_type=jnp.float32) + bb2_ref[...]
    h0 = jnp.maximum(h0, 0.0)                      # (B, H) f32; h0 == c0

    # ---- input projection for ALL timesteps, combined bias folded once ----
    xg = jnp.dot(x_ref[...], wih_ref[...],
                 preferred_element_type=jnp.float32) + blstm_ref[...]

    # ---- LSTM over time (PyTorch gate order: i, f, g, o) ----
    # h/c and every h_t are register-carried (no scratch, no partial stores).
    # Static unroll: LLO overlaps step t's EUP sigmoid/tanh with step t+1 MXU.
    h = h0
    c = h0
    hs = []
    for t in range(T):
        gates = xg[t * B:(t + 1) * B, :] + jnp.dot(
            h.astype(jnp.bfloat16), whh_ref[...],
            preferred_element_type=jnp.float32)    # (B, 4H) f32
        i_g = jax.nn.sigmoid(gates[:, 0 * H:1 * H])
        f_g = jax.nn.sigmoid(gates[:, 1 * H:2 * H])
        g_g = jnp.tanh(gates[:, 2 * H:3 * H])
        o_g = jax.nn.sigmoid(gates[:, 3 * H:4 * H])
        c = f_g * c + i_g * g_g
        h = o_g * jnp.tanh(c)
        hs.append(h)

    # ---- reorder hidden states to batch-major (row b*T + t), in registers ----
    hid = jnp.concatenate(
        [hs[t][b:b + 1, :] for b in range(B) for t in range(T)], axis=0
    ).astype(jnp.bfloat16)                         # (B*T, H)

    # ---- classifier front, batched over M = B*T rows ----
    z1 = jnp.dot(hid, wc1_ref[...],
                 preferred_element_type=jnp.float32) + bc1_ref[...]
    z1 = jnp.maximum(z1, 0.0).astype(jnp.bfloat16)
    z2 = jnp.dot(z1, wc2_ref[...],
                 preferred_element_type=jnp.float32) + bc2_ref[...]
    return z2.astype(jnp.bfloat16)                 # (B*T, C2) batch-major


def fused_decoder_kernel(x_ref, img_ref,
                         wb1_ref, bb1_ref, wb2_ref, bb2_ref,
                         wih_ref, whh_ref, blstm_ref,
                         wc1_ref, bc1_ref, wc2_ref, bc2_ref,
                         wc3_ref, bc3_ref, out_ref):
    """Whole forward in one kernel (small vocab: wc3 resident in VMEM)."""
    feat = _decoder_front(x_ref, img_ref, wb1_ref, bb1_ref, wb2_ref, bb2_ref,
                          wih_ref, whh_ref, blstm_ref,
                          wc1_ref, bc1_ref, wc2_ref, bc2_ref)
    out_ref[...] = (jnp.dot(feat, wc3_ref[...],
                            preferred_element_type=jnp.float32)
                    + bc3_ref[...])                # (B*T, Vpad) f32, lane-dense


def recurrence_kernel(x_ref, img_ref,
                      wb1_ref, bb1_ref, wb2_ref, bb2_ref,
                      wih_ref, whh_ref, blstm_ref,
                      wc1_ref, bc1_ref, wc2_ref, bc2_ref,
                      feat_ref):
    """Kernel A of the tiled path: emit the bf16 batch-major feature."""
    feat_ref[...] = _decoder_front(
        x_ref, img_ref, wb1_ref, bb1_ref, wb2_ref, bb2_ref,
        wih_ref, whh_ref, blstm_ref, wc1_ref, bc1_ref, wc2_ref, bc2_ref)


def vocab_proj_kernel(feat_ref, wc3_ref, bc3_ref, out_ref):
    """Kernel B of the tiled path: Linear(1024, V) tiled over vocab."""
    out_ref[...] = (jnp.dot(feat_ref[...], wc3_ref[...],
                            preferred_element_type=jnp.float32)
                    + bc3_ref[...])


# ----------------------------------------------------------------------------
# Parameter init (raw f32, PyTorch-style) and forward wrapper
# ----------------------------------------------------------------------------
def init_params(key, num_vocab):
    ks = jax.random.split(key, 10)

    def lin(k, fan_in, fan_out):
        bound = 1.0 / np.sqrt(fan_in)
        kw, kb = jax.random.split(k)
        w = jax.random.uniform(kw, (fan_in, fan_out), jnp.float32, -bound, bound)
        b = jax.random.uniform(kb, (1, fan_out), jnp.float32, -bound, bound)
        return w, b

    p = {}
    emb = 0.02 * jax.random.normal(ks[0], (num_vocab, H), jnp.float32)
    p['emb'] = emb.at[0].set(0.0)                  # padding_idx=0 -> zero row
    p['wb1'], p['bb1'] = lin(ks[1], IMG_DIM, C1)
    p['wb2'], p['bb2'] = lin(ks[2], C1, H)
    # LSTM weights stored transposed as (in_dim, 4H) so the kernel does x @ W.
    bound = 1.0 / np.sqrt(H)
    p['wih'] = jax.random.uniform(ks[3], (H, 4 * H), jnp.float32, -bound, bound)
    p['bih'] = jax.random.uniform(ks[4], (1, 4 * H), jnp.float32, -bound, bound)
    p['whh'] = jax.random.uniform(ks[5], (H, 4 * H), jnp.float32, -bound, bound)
    p['bhh'] = jax.random.uniform(ks[6], (1, 4 * H), jnp.float32, -bound, bound)
    p['wc1'], p['bc1'] = lin(ks[7], H, C1)
    p['wc2'], p['bc2'] = lin(ks[8], C1, C2)
    p['wc3'], p['bc3'] = lin(ks[9], C2, num_vocab)
    return p


@functools.partial(jax.jit, static_argnums=(3,))
def rnn_decoder_forward(tokens, img_embeded, prep, plan: DecoderPlan):
    B, T = tokens.shape
    M = B * T
    V, v_pad = plan.num_vocab, plan.v_pad

    # Embedding gather directly into time-major (T*B, H), row order t*B + b.
    x_tm = jnp.take(prep['emb'], tokens.T.reshape(-1),
                    axis=0).astype(jnp.bfloat16)
    img = img_embeded.astype(jnp.bfloat16)

    front_args = (x_tm, img,
                  prep['wb1'], prep['bb1'], prep['wb2'], prep['bb2'],
                  prep['wih'], prep['whh'], prep['blstm'],
                  prep['wc1'], prep['bc1'], prep['wc2'], prep['bc2'])
    vmem = pl.BlockSpec(memory_space=pltpu.MemorySpace.VMEM)

    if plan.tile_v == 0:
        # ---- fused path: one kernel, no feat round trip, no transposes ----
        logits = pl.pallas_call(
            fused_decoder_kernel,
            out_shape=jax.ShapeDtypeStruct((M, v_pad), jnp.float32),
            in_specs=[vmem] * (len(front_args) + 2),
            out_specs=vmem,
        )(*front_args, prep['wc3'], prep['bc3'])
    else:
        # ---- tiled path: recurrence kernel + vocab-tiled projection ----
        feat = pl.pallas_call(
            recurrence_kernel,
            out_shape=jax.ShapeDtypeStruct((M, C2), jnp.bfloat16),
            in_specs=[vmem] * len(front_args),
            out_specs=vmem,
        )(*front_args)

        tile_v = plan.tile_v
        vmem_limit = None
        if tile_v > 2048:  # v6e-sized tiles: raise the scoped VMEM limit
            vmem_limit = (2 * tile_v * C2 * 2        # wc3 double-buffered (bf16)
                          + 2 * M * tile_v * 4       # out tile double-buffered
                          + M * C2 * 2               # resident feat
                          + 2 * tile_v * 4           # bc3
                          + (4 << 20))               # headroom
        logits = pl.pallas_call(
            vocab_proj_kernel,
            out_shape=jax.ShapeDtypeStruct((M, v_pad), jnp.float32),
            grid=(v_pad // tile_v,),
            in_specs=[pl.BlockSpec((M, C2), lambda j: (0, 0)),       # resident
                      pl.BlockSpec((C2, tile_v), lambda j: (0, j)),  # wc3 tile
                      pl.BlockSpec((1, tile_v), lambda j: (0, j))],  # bc3 tile
            out_specs=pl.BlockSpec((M, tile_v), lambda j: (0, j)),
            compiler_params=pltpu.CompilerParams(
                dimension_semantics=("parallel",),   # shards across TCs on v7x
                vmem_limit_bytes=vmem_limit),
        )(feat, prep['wc3'], prep['bc3'])

    out = logits if v_pad == V else logits[:, :V]
    return out.reshape(B, T, V)                      # batch-major -> free reshape


# ----------------------------------------------------------------------------
# Pure-JAX f32 reference of the PyTorch forward (prediction=False)
# ----------------------------------------------------------------------------
def ref_forward(tokens, img, p):
    x = p['emb'][tokens]                             # (B, T, H)
    z = jnp.maximum(img @ p['wb1'] + p['bb1'], 0.0)
    h = jnp.maximum(z @ p['wb2'] + p['bb2'], 0.0)
    c = h
    outs = []
    for t in range(x.shape[1]):
        g = x[:, t, :] @ p['wih'] + p['bih'] + h @ p['whh'] + p['bhh']
        i_g = jax.nn.sigmoid(g[:, :H])
        f_g = jax.nn.sigmoid(g[:, H:2 * H])
        g_g = jnp.tanh(g[:, 2 * H:3 * H])
        o_g = jax.nn.sigmoid(g[:, 3 * H:])
        c = f_g * c + i_g * g_g
        h = o_g * jnp.tanh(c)
        outs.append(h)
    hid = jnp.stack(outs, axis=1)                    # (B, T, H)
    z = jnp.maximum(hid @ p['wc1'] + p['bc1'], 0.0)
    z = z @ p['wc2'] + p['bc2']
    return z @ p['wc3'] + p['bc3']


if __name__ == "__main__":
    NUM_VOCAB = 512
    B, T = 2, 8

    key = jax.random.PRNGKey(0)
    kp, kt, ki = jax.random.split(key, 3)
    params = init_params(kp, NUM_VOCAB)
    tokens = jax.random.randint(kt, (B, T), 0, NUM_VOCAB, dtype=jnp.int32)
    img_embeded = jax.random.normal(ki, (B, IMG_DIM), jnp.float32)

    ref = np.asarray(ref_forward(tokens, img_embeded, params))

    # Fused single-kernel path (what a small vocab actually uses).
    plan = build_plan(NUM_VOCAB)
    prep = prepare_params(params, plan)
    out = jax.block_until_ready(
        rnn_decoder_forward(tokens, img_embeded, prep, plan))
    assert out.shape == (B, T, NUM_VOCAB), out.shape
    if not np.allclose(np.asarray(out), ref, rtol=2e-2, atol=2e-2):
        raise AssertionError("fused-path output mismatch vs pure-JAX reference")

    # Tiled path, exercised with an artificially small vocab tile so both
    # code paths are compiled and validated at small shapes.
    plan_tiled = DecoderPlan(num_vocab=NUM_VOCAB, v_pad=NUM_VOCAB, tile_v=256)
    prep_tiled = prepare_params(params, plan_tiled)
    out_tiled = jax.block_until_ready(
        rnn_decoder_forward(tokens, img_embeded, prep_tiled, plan_tiled))
    assert out_tiled.shape == (B, T, NUM_VOCAB), out_tiled.shape
    if not np.allclose(np.asarray(out_tiled), ref, rtol=2e-2, atol=2e-2):
        raise AssertionError("tiled-path output mismatch vs pure-JAX reference")

    print("KERNEL_OK")
</pallas_src>

<mosaic_0001>
module attributes {stable_mosaic.version = 11 : i64} {
  func.func @fused_decoder_kernel(%arg0: memref<16x256xbf16, #tpu.memory_space<vmem>>, %arg1: memref<2x1000xbf16, #tpu.memory_space<vmem>>, %arg2: memref<1000x512xbf16, #tpu.memory_space<vmem>>, %arg3: memref<1x512xf32, #tpu.memory_space<vmem>>, %arg4: memref<512x256xbf16, #tpu.memory_space<vmem>>, %arg5: memref<1x256xf32, #tpu.memory_space<vmem>>, %arg6: memref<256x1024xbf16, #tpu.memory_space<vmem>>, %arg7: memref<256x1024xbf16, #tpu.memory_space<vmem>>, %arg8: memref<1x1024xf32, #tpu.memory_space<vmem>>, %arg9: memref<256x512xbf16, #tpu.memory_space<vmem>>, %arg10: memref<1x512xf32, #tpu.memory_space<vmem>>, %arg11: memref<512x1024xbf16, #tpu.memory_space<vmem>>, %arg12: memref<1x1024xf32, #tpu.memory_space<vmem>>, %arg13: memref<1024x512xbf16, #tpu.memory_space<vmem>>, %arg14: memref<1x512xf32, #tpu.memory_space<vmem>>, %arg15: memref<16x512xf32, #tpu.memory_space<vmem>>) attributes {dimension_semantics = [], scalar_prefetch = 0 : i64, scratch_operands = 0 : i64, tpu.core_type = #tpu.core_type<tc>} {
    %c0 = arith.constant 0 : index
    %c0_0 = arith.constant 0 : index
    %0 = vector.load %arg1[%c0, %c0_0] : memref<2x1000xbf16, #tpu.memory_space<vmem>>, vector<2x1000xbf16>
    %c0_1 = arith.constant 0 : index
    %c0_2 = arith.constant 0 : index
    %1 = vector.load %arg2[%c0_1, %c0_2] : memref<1000x512xbf16, #tpu.memory_space<vmem>>, vector<1000x512xbf16>
    %cst = arith.constant dense<0.000000e+00> : vector<2x512xf32>
    %2 = tpu.matmul %0, %1, %cst {dimension_numbers = #tpu.dot_dimension_numbers<[1], [0], [0], [1], [0, 0, 1, 1], [], []>} : vector<2x1000xbf16>, vector<1000x512xbf16>, vector<2x512xf32> -> vector<2x512xf32>
    %c0_3 = arith.constant 0 : index
    %c0_4 = arith.constant 0 : index
    %3 = vector.load %arg3[%c0_3, %c0_4] : memref<1x512xf32, #tpu.memory_space<vmem>>, vector<1x512xf32>
    %4 = vector.broadcast %3 : vector<1x512xf32> to vector<2x512xf32>
    %5 = arith.addf %2, %4 : vector<2x512xf32>
    %cst_5 = arith.constant 0.000000e+00 : f32
    %6 = vector.broadcast %cst_5 : f32 to vector<2x512xf32>
    %7 = arith.maximumf %5, %6 : vector<2x512xf32>
    %8 = arith.truncf %7 : vector<2x512xf32> to vector<2x512xbf16>
    %c0_6 = arith.constant 0 : index
    %c0_7 = arith.constant 0 : index
    %9 = vector.load %arg4[%c0_6, %c0_7] : memref<512x256xbf16, #tpu.memory_space<vmem>>, vector<512x256xbf16>
    %cst_8 = arith.constant dense<0.000000e+00> : vector<2x256xf32>
    %10 = tpu.matmul %8, %9, %cst_8 {dimension_numbers = #tpu.dot_dimension_numbers<[1], [0], [0], [1], [0, 0, 1, 1], [], []>} : vector<2x512xbf16>, vector<512x256xbf16>, vector<2x256xf32> -> vector<2x256xf32>
    %c0_9 = arith.constant 0 : index
    %c0_10 = arith.constant 0 : index
    %11 = vector.load %arg5[%c0_9, %c0_10] : memref<1x256xf32, #tpu.memory_space<vmem>>, vector<1x256xf32>
    %12 = vector.broadcast %11 : vector<1x256xf32> to vector<2x256xf32>
    %13 = arith.addf %10, %12 : vector<2x256xf32>
    %cst_11 = arith.constant 0.000000e+00 : f32
    %14 = vector.broadcast %cst_11 : f32 to vector<2x256xf32>
    %15 = arith.maximumf %13, %14 : vector<2x256xf32>
    %c0_12 = arith.constant 0 : index
    %c0_13 = arith.constant 0 : index
    %16 = vector.load %arg0[%c0_12, %c0_13] : memref<16x256xbf16, #tpu.memory_space<vmem>>, vector<16x256xbf16>
    %c0_14 = arith.constant 0 : index
    %c0_15 = arith.constant 0 : index
    %17 = vector.load %arg6[%c0_14, %c0_15] : memref<256x1024xbf16, #tpu.memory_space<vmem>>, vector<256x1024xbf16>
    %cst_16 = arith.constant dense<0.000000e+00> : vector<16x1024xf32>
    %18 = tpu.matmul %16, %17, %cst_16 {dimension_numbers = #tpu.dot_dimension_numbers<[1], [0], [0], [1], [0, 0, 1, 1], [], []>} : vector<16x256xbf16>, vector<256x1024xbf16>, vector<16x1024xf32> -> vector<16x1024xf32>
    %c0_17 = arith.constant 0 : index
    %c0_18 = arith.constant 0 : index
    %19 = vector.load %arg8[%c0_17, %c0_18] : memref<1x1024xf32, #tpu.memory_space<vmem>>, vector<1x1024xf32>
    %20 = vector.broadcast %19 : vector<1x1024xf32> to vector<16x1024xf32>
    %21 = arith.addf %18, %20 : vector<16x1024xf32>
    %22 = vector.extract_strided_slice %21 {offsets = [0, 0], sizes = [2, 1024], strides = [1, 1]} : vector<16x1024xf32> to vector<2x1024xf32>
    %23 = arith.truncf %15 : vector<2x256xf32> to vector<2x256xbf16>
    %c0_19 = arith.constant 0 : index
    %c0_20 = arith.constant 0 : index
    %24 = vector.load %arg7[%c0_19, %c0_20] : memref<256x1024xbf16, #tpu.memory_space<vmem>>, vector<256x1024xbf16>
    %cst_21 = arith.constant dense<0.000000e+00> : vector<2x1024xf32>
    %25 = tpu.matmul %23, %24, %cst_21 {dimension_numbers = #tpu.dot_dimension_numbers<[1], [0], [0], [1], [0, 0, 1, 1], [], []>} : vector<2x256xbf16>, vector<256x1024xbf16>, vector<2x1024xf32> -> vector<2x1024xf32>
    %26 = arith.addf %22, %25 : vector<2x1024xf32>
    %27 = vector.extract_strided_slice %26 {offsets = [0, 0], sizes = [2, 256], strides = [1, 1]} : vector<2x1024xf32> to vector<2x256xf32>
    %28 = arith.negf %27 : vector<2x256xf32>
    %29 = math.exp %28 : vector<2x256xf32>
    %cst_22 = arith.constant 1.000000e+00 : f32
    %30 = vector.broadcast %cst_22 : f32 to vector<2x256xf32>
    %31 = arith.addf %30, %29 : vector<2x256xf32>
    %32 = arith.divf %30, %31 : vector<2x256xf32>
    %33 = vector.extract_strided_slice %26 {offsets = [0, 256], sizes = [2, 256], strides = [1, 1]} : vector<2x1024xf32> to vector<2x256xf32>
    %34 = arith.negf %33 : vector<2x256xf32>
    %35 = math.exp %34 : vector<2x256xf32>
    %cst_23 = arith.constant 1.000000e+00 : f32
    %36 = vector.broadcast %cst_23 : f32 to vector<2x256xf32>
    %37 = arith.addf %36, %35 : vector<2x256xf32>
    %38 = arith.divf %36, %37 : vector<2x256xf32>
    %39 = vector.extract_strided_slice %26 {offsets = [0, 512], sizes = [2, 256], strides = [1, 1]} : vector<2x1024xf32> to vector<2x256xf32>
    %40 = math.tanh %39 : vector<2x256xf32>
    %41 = vector.extract_strided_slice %26 {offsets = [0, 768], sizes = [2, 256], strides = [1, 1]} : vector<2x1024xf32> to vector<2x256xf32>
    %42 = arith.negf %41 : vector<2x256xf32>
    %43 = math.exp %42 : vector<2x256xf32>
    %cst_24 = arith.constant 1.000000e+00 : f32
    %44 = vector.broadcast %cst_24 : f32 to vector<2x256xf32>
    %45 = arith.addf %44, %43 : vector<2x256xf32>
    %46 = arith.divf %44, %45 : vector<2x256xf32>
    %47 = arith.mulf %38, %15 : vector<2x256xf32>
    %48 = arith.mulf %32, %40 : vector<2x256xf32>
    %49 = arith.addf %47, %48 : vector<2x256xf32>
    %50 = math.tanh %49 : vector<2x256xf32>
    %51 = arith.mulf %46, %50 : vector<2x256xf32>
    %52 = vector.extract_strided_slice %21 {offsets = [2, 0], sizes = [2, 1024], strides = [1, 1]} : vector<16x1024xf32> to vector<2x1024xf32>
    %53 = arith.truncf %51 : vector<2x256xf32> to vector<2x256xbf16>
    %c0_25 = arith.constant 0 : index
    %c0_26 = arith.constant 0 : index
    %54 = vector.load %arg7[%c0_25, %c0_26] : memref<256x1024xbf16, #tpu.memory_space<vmem>>, vector<256x1024xbf16>
    %cst_27 = arith.constant dense<0.000000e+00> : vector<2x1024xf32>
    %55 = tpu.matmul %53, %54, %cst_27 {dimension_numbers = #tpu.dot_dimension_numbers<[1], [0], [0], [1], [0, 0, 1, 1], [], []>} : vector<2x256xbf16>, vector<256x1024xbf16>, vector<2x1024xf32> -> vector<2x1024xf32>
    %56 = arith.addf %52, %55 : vector<2x1024xf32>
    %57 = vector.extract_strided_slice %56 {offsets = [0, 0], sizes = [2, 256], strides = [1, 1]} : vector<2x1024xf32> to vector<2x256xf32>
    %58 = arith.negf %57 : vector<2x256xf32>
    %59 = math.exp %58 : vector<2x256xf32>
    %cst_28 = arith.constant 1.000000e+00 : f32
    %60 = vector.broadcast %cst_28 : f32 to vector<2x256xf32>
    %61 = arith.addf %60, %59 : vector<2x256xf32>
    %62 = arith.divf %60, %61 : vector<2x256xf32>
    %63 = vector.extract_strided_slice %56 {offsets = [0, 256], sizes = [2, 256], strides = [1, 1]} : vector<2x1024xf32> to vector<2x256xf32>
    %64 = arith.negf %63 : vector<2x256xf32>
    %65 = math.exp %64 : vector<2x256xf32>
    %cst_29 = arith.constant 1.000000e+00 : f32
    %66 = vector.broadcast %cst_29 : f32 to vector<2x256xf32>
    %67 = arith.addf %66, %65 : vector<2x256xf32>
    %68 = arith.divf %66, %67 : vector<2x256xf32>
    %69 = vector.extract_strided_slice %56 {offsets = [0, 512], sizes = [2, 256], strides = [1, 1]} : vector<2x1024xf32> to vector<2x256xf32>
    %70 = math.tanh %69 : vector<2x256xf32>
    %71 = vector.extract_strided_slice %56 {offsets = [0, 768], sizes = [2, 256], strides = [1, 1]} : vector<2x1024xf32> to vector<2x256xf32>
    %72 = arith.negf %71 : vector<2x256xf32>
    %73 = math.exp %72 : vector<2x256xf32>
    %cst_30 = arith.constant 1.000000e+00 : f32
    %74 = vector.broadcast %cst_30 : f32 to vector<2x256xf32>
    %75 = arith.addf %74, %73 : vector<2x256xf32>
    %76 = arith.divf %74, %75 : vector<2x256xf32>
    %77 = arith.mulf %68, %49 : vector<2x256xf32>
    %78 = arith.mulf %62, %70 : vector<2x256xf32>
    %79 = arith.addf %77, %78 : vector<2x256xf32>
    %80 = math.tanh %79 : vector<2x256xf32>
    %81 = arith.mulf %76, %80 : vector<2x256xf32>
    %82 = vector.extract_strided_slice %21 {offsets = [4, 0], sizes = [2, 1024], strides = [1, 1]} : vector<16x1024xf32> to vector<2x1024xf32>
    %83 = arith.truncf %81 : vector<2x256xf32> to vector<2x256xbf16>
    %c0_31 = arith.constant 0 : index
    %c0_32 = arith.constant 0 : index
    %84 = vector.load %arg7[%c0_31, %c0_32] : memref<256x1024xbf16, #tpu.memory_space<vmem>>, vector<256x1024xbf16>
    %cst_33 = arith.constant dense<0.000000e+00> : vector<2x1024xf32>
    %85 = tpu.matmul %83, %84, %cst_33 {dimension_numbers = #tpu.dot_dimension_numbers<[1], [0], [0], [1], [0, 0, 1, 1], [], []>} : vector<2x256xbf16>, vector<256x1024xbf16>, vector<2x1024xf32> -> vector<2x1024xf32>
    %86 = arith.addf %82, %85 : vector<2x1024xf32>
    %87 = vector.extract_strided_slice %86 {offsets = [0, 0], sizes = [2, 256], strides = [1, 1]} : vector<2x1024xf32> to vector<2x256xf32>
    %88 = arith.negf %87 : vector<2x256xf32>
    %89 = math.exp %88 : vector<2x256xf32>
    %cst_34 = arith.constant 1.000000e+00 : f32
    %90 = vector.broadcast %cst_34 : f32 to vector<2x256xf32>
    %91 = arith.addf %90, %89 : vector<2x256xf32>
    %92 = arith.divf %90, %91 : vector<2x256xf32>
    %93 = vector.extract_strided_slice %86 {offsets = [0, 256], sizes = [2, 256], strides = [1, 1]} : vector<2x1024xf32> to vector<2x256xf32>
    %94 = arith.negf %93 : vector<2x256xf32>
    %95 = math.exp %94 : vector<2x256xf32>
    %cst_35 = arith.constant 1.000000e+00 : f32
    %96 = vector.broadcast %cst_35 : f32 to vector<2x256xf32>
    %97 = arith.addf %96, %95 : vector<2x256xf32>
    %98 = arith.divf %96, %97 : vector<2x256xf32>
    %99 = vector.extract_strided_slice %86 {offsets = [0, 512], sizes = [2, 256], strides = [1, 1]} : vector<2x1024xf32> to vector<2x256xf32>
    %100 = math.tanh %99 : vector<2x256xf32>
    %101 = vector.extract_strided_slice %86 {offsets = [0, 768], sizes = [2, 256], strides = [1, 1]} : vector<2x1024xf32> to vector<2x256xf32>
    %102 = arith.negf %101 : vector<2x256xf32>
    %103 = math.exp %102 : vector<2x256xf32>
    %cst_36 = arith.constant 1.000000e+00 : f32
    %104 = vector.broadcast %cst_36 : f32 to vector<2x256xf32>
    %105 = arith.addf %104, %103 : vector<2x256xf32>
    %106 = arith.divf %104, %105 : vector<2x256xf32>
    %107 = arith.mulf %98, %79 : vector<2x256xf32>
    %108 = arith.mulf %92, %100 : vector<2x256xf32>
    %109 = arith.addf %107, %108 : vector<2x256xf32>
    %110 = math.tanh %109 : vector<2x256xf32>
    %111 = arith.mulf %106, %110 : vector<2x256xf32>
    %112 = vector.extract_strided_slice %21 {offsets = [6, 0], sizes = [2, 1024], strides = [1, 1]} : vector<16x1024xf32> to vector<2x1024xf32>
    %113 = arith.truncf %111 : vector<2x256xf32> to vector<2x256xbf16>
    %c0_37 = arith.constant 0 : index
    %c0_38 = arith.constant 0 : index
    %114 = vector.load %arg7[%c0_37, %c0_38] : memref<256x1024xbf16, #tpu.memory_space<vmem>>, vector<256x1024xbf16>
    %cst_39 = arith.constant dense<0.000000e+00> : vector<2x1024xf32>
    %115 = tpu.matmul %113, %114, %cst_39 {dimension_numbers = #tpu.dot_dimension_numbers<[1], [0], [0], [1], [0, 0, 1, 1], [], []>} : vector<2x256xbf16>, vector<256x1024xbf16>, vector<2x1024xf32> -> vector<2x1024xf32>
    %116 = arith.addf %112, %115 : vector<2x1024xf32>
    %117 = vector.extract_strided_slice %116 {offsets = [0, 0], sizes = [2, 256], strides = [1, 1]} : vector<2x1024xf32> to vector<2x256xf32>
    %118 = arith.negf %117 : vector<2x256xf32>
    %119 = math.exp %118 : vector<2x256xf32>
    %cst_40 = arith.constant 1.000000e+00 : f32
    %120 = vector.broadcast %cst_40 : f32 to vector<2x256xf32>
    %121 = arith.addf %120, %119 : vector<2x256xf32>
    %122 = arith.divf %120, %121 : vector<2x256xf32>
    %123 = vector.extract_strided_slice %116 {offsets = [0, 256], sizes = [2, 256], strides = [1, 1]} : vector<2x1024xf32> to vector<2x256xf32>
    %124 = arith.negf %123 : vector<2x256xf32>
    %125 = math.exp %124 : vector<2x256xf32>
    %cst_41 = arith.constant 1.000000e+00 : f32
    %126 = vector.broadcast %cst_41 : f32 to vector<2x256xf32>
    %127 = arith.addf %126, %125 : vector<2x256xf32>
    %128 = arith.divf %126, %127 : vector<2x256xf32>
    %129 = vector.extract_strided_slice %116 {offsets = [0, 512], sizes = [2, 256], strides = [1, 1]} : vector<2x1024xf32> to vector<2x256xf32>
    %130 = math.tanh %129 : vector<2x256xf32>
    %131 = vector.extract_strided_slice %116 {offsets = [0, 768], sizes = [2, 256], strides = [1, 1]} : vector<2x1024xf32> to vector<2x256xf32>
    %132 = arith.negf %131 : vector<2x256xf32>
    %133 = math.exp %132 : vector<2x256xf32>
    %cst_42 = arith.constant 1.000000e+00 : f32
    %134 = vector.broadcast %cst_42 : f32 to vector<2x256xf32>
    %135 = arith.addf %134, %133 : vector<2x256xf32>
    %136 = arith.divf %134, %135 : vector<2x256xf32>
    %137 = arith.mulf %128, %109 : vector<2x256xf32>
    %138 = arith.mulf %122, %130 : vector<2x256xf32>
    %139 = arith.addf %137, %138 : vector<2x256xf32>
    %140 = math.tanh %139 : vector<2x256xf32>
    %141 = arith.mulf %136, %140 : vector<2x256xf32>
    %142 = vector.extract_strided_slice %21 {offsets = [8, 0], sizes = [2, 1024], strides = [1, 1]} : vector<16x1024xf32> to vector<2x1024xf32>
    %143 = arith.truncf %141 : vector<2x256xf32> to vector<2x256xbf16>
    %c0_43 = arith.constant 0 : index
    %c0_44 = arith.constant 0 : index
    %144 = vector.load %arg7[%c0_43, %c0_44] : memref<256x1024xbf16, #tpu.memory_space<vmem>>, vector<256x1024xbf16>
    %cst_45 = arith.constant dense<0.000000e+00> : vector<2x1024xf32>
    %145 = tpu.matmul %143, %144, %cst_45 {dimension_numbers = #tpu.dot_dimension_numbers<[1], [0], [0], [1], [0, 0, 1, 1], [], []>} : vector<2x256xbf16>, vector<256x1024xbf16>, vector<2x1024xf32> -> vector<2x1024xf32>
    %146 = arith.addf %142, %145 : vector<2x1024xf32>
    %147 = vector.extract_strided_slice %146 {offsets = [0, 0], sizes = [2, 256], strides = [1, 1]} : vector<2x1024xf32> to vector<2x256xf32>
    %148 = arith.negf %147 : vector<2x256xf32>
    %149 = math.exp %148 : vector<2x256xf32>
    %cst_46 = arith.constant 1.000000e+00 : f32
    %150 = vector.broadcast %cst_46 : f32 to vector<2x256xf32>
    %151 = arith.addf %150, %149 : vector<2x256xf32>
    %152 = arith.divf %150, %151 : vector<2x256xf32>
    %153 = vector.extract_strided_slice %146 {offsets = [0, 256], sizes = [2, 256], strides = [1, 1]} : vector<2x1024xf32> to vector<2x256xf32>
    %154 = arith.negf %153 : vector<2x256xf32>
    %155 = math.exp %154 : vector<2x256xf32>
    %cst_47 = arith.constant 1.000000e+00 : f32
    %156 = vector.broadcast %cst_47 : f32 to vector<2x256xf32>
    %157 = arith.addf %156, %155 : vector<2x256xf32>
    %158 = arith.divf %156, %157 : vector<2x256xf32>
    %159 = vector.extract_strided_slice %146 {offsets = [0, 512], sizes = [2, 256], strides = [1, 1]} : vector<2x1024xf32> to vector<2x256xf32>
    %160 = math.tanh %159 : vector<2x256xf32>
    %161 = vector.extract_strided_slice %146 {offsets = [0, 768], sizes = [2, 256], strides = [1, 1]} : vector<2x1024xf32> to vector<2x256xf32>
    %162 = arith.negf %161 : vector<2x256xf32>
    %163 = math.exp %162 : vector<2x256xf32>
    %cst_48 = arith.constant 1.000000e+00 : f32
    %164 = vector.broadcast %cst_48 : f32 to vector<2x256xf32>
    %165 = arith.addf %164, %163 : vector<2x256xf32>
    %166 = arith.divf %164, %165 : vector<2x256xf32>
    %167 = arith.mulf %158, %139 : vector<2x256xf32>
    %168 = arith.mulf %152, %160 : vector<2x256xf32>
    %169 = arith.addf %167, %168 : vector<2x256xf32>
    %170 = math.tanh %169 : vector<2x256xf32>
    %171 = arith.mulf %166, %170 : vector<2x256xf32>
    %172 = vector.extract_strided_slice %21 {offsets = [10, 0], sizes = [2, 1024], strides = [1, 1]} : vector<16x1024xf32> to vector<2x1024xf32>
    %173 = arith.truncf %171 : vector<2x256xf32> to vector<2x256xbf16>
    %c0_49 = arith.constant 0 : index
    %c0_50 = arith.constant 0 : index
    %174 = vector.load %arg7[%c0_49, %c0_50] : memref<256x1024xbf16, #tpu.memory_space<vmem>>, vector<256x1024xbf16>
    %cst_51 = arith.constant dense<0.000000e+00> : vector<2x1024xf32>
    %175 = tpu.matmul %173, %174, %cst_51 {dimension_numbers = #tpu.dot_dimension_numbers<[1], [0], [0], [1], [0, 0, 1, 1], [], []>} : vector<2x256xbf16>, vector<256x1024xbf16>, vector<2x1024xf32> -> vector<2x1024xf32>
    %176 = arith.addf %172, %175 : vector<2x1024xf32>
    %177 = vector.extract_strided_slice %176 {offsets = [0, 0], sizes = [2, 256], strides = [1, 1]} : vector<2x1024xf32> to vector<2x256xf32>
    %178 = arith.negf %177 : vector<2x256xf32>
    %179 = math.exp %178 : vector<2x256xf32>
    %cst_52 = arith.constant 1.000000e+00 : f32
    %180 = vector.broadcast %cst_52 : f32 to vector<2x256xf32>
    %181 = arith.addf %180, %179 : vector<2x256xf32>
    %182 = arith.divf %180, %181 : vector<2x256xf32>
    %183 = vector.extract_strided_slice %176 {offsets = [0, 256], sizes = [2, 256], strides = [1, 1]} : vector<2x1024xf32> to vector<2x256xf32>
    %184 = arith.negf %183 : vector<2x256xf32>
    %185 = math.exp %184 : vector<2x256xf32>
    %cst_53 = arith.constant 1.000000e+00 : f32
    %186 = vector.broadcast %cst_53 : f32 to vector<2x256xf32>
    %187 = arith.addf %186, %185 : vector<2x256xf32>
    %188 = arith.divf %186, %187 : vector<2x256xf32>
    %189 = vector.extract_strided_slice %176 {offsets = [0, 512], sizes = [2, 256], strides = [1, 1]} : vector<2x1024xf32> to vector<2x256xf32>
    %190 = math.tanh %189 : vector<2x256xf32>
    %191 = vector.extract_strided_slice %176 {offsets = [0, 768], sizes = [2, 256], strides = [1, 1]} : vector<2x1024xf32> to vector<2x256xf32>
    %192 = arith.negf %191 : vector<2x256xf32>
    %193 = math.exp %192 : vector<2x256xf32>
    %cst_54 = arith.constant 1.000000e+00 : f32
    %194 = vector.broadcast %cst_54 : f32 to vector<2x256xf32>
    %195 = arith.addf %194, %193 : vector<2x256xf32>
    %196 = arith.divf %194, %195 : vector<2x256xf32>
    %197 = arith.mulf %188, %169 : vector<2x256xf32>
    %198 = arith.mulf %182, %190 : vector<2x256xf32>
    %199 = arith.addf %197, %198 : vector<2x256xf32>
    %200 = math.tanh %199 : vector<2x256xf32>
    %201 = arith.mulf %196, %200 : vector<2x256xf32>
    %202 = vector.extract_strided_slice %21 {offsets = [12, 0], sizes = [2, 1024], strides = [1, 1]} : vector<16x1024xf32> to vector<2x1024xf32>
    %203 = arith.truncf %201 : vector<2x256xf32> to vector<2x256xbf16>
    %c0_55 = arith.constant 0 : index
    %c0_56 = arith.constant 0 : index
    %204 = vector.load %arg7[%c0_55, %c0_56] : memref<256x1024xbf16, #tpu.memory_space<vmem>>, vector<256x1024xbf16>
    %cst_57 = arith.constant dense<0.000000e+00> : vector<2x1024xf32>
    %205 = tpu.matmul %203, %204, %cst_57 {dimension_numbers = #tpu.dot_dimension_numbers<[1], [0], [0], [1], [0, 0, 1, 1], [], []>} : vector<2x256xbf16>, vector<256x1024xbf16>, vector<2x1024xf32> -> vector<2x1024xf32>
    %206 = arith.addf %202, %205 : vector<2x1024xf32>
    %207 = vector.extract_strided_slice %206 {offsets = [0, 0], sizes = [2, 256], strides = [1, 1]} : vector<2x1024xf32> to vector<2x256xf32>
    %208 = arith.negf %207 : vector<2x256xf32>
    %209 = math.exp %208 : vector<2x256xf32>
    %cst_58 = arith.constant 1.000000e+00 : f32
    %210 = vector.broadcast %cst_58 : f32 to vector<2x256xf32>
    %211 = arith.addf %210, %209 : vector<2x256xf32>
    %212 = arith.divf %210, %211 : vector<2x256xf32>
    %213 = vector.extract_strided_slice %206 {offsets = [0, 256], sizes = [2, 256], strides = [1, 1]} : vector<2x1024xf32> to vector<2x256xf32>
    %214 = arith.negf %213 : vector<2x256xf32>
    %215 = math.exp %214 : vector<2x256xf32>
    %cst_59 = arith.constant 1.000000e+00 : f32
    %216 = vector.broadcast %cst_59 : f32 to vector<2x256xf32>
    %217 = arith.addf %216, %215 : vector<2x256xf32>
    %218 = arith.divf %216, %217 : vector<2x256xf32>
    %219 = vector.extract_strided_slice %206 {offsets = [0, 512], sizes = [2, 256], strides = [1, 1]} : vector<2x1024xf32> to vector<2x256xf32>
    %220 = math.tanh %219 : vector<2x256xf32>
    %221 = vector.extract_strided_slice %206 {offsets = [0, 768], sizes = [2, 256], strides = [1, 1]} : vector<2x1024xf32> to vector<2x256xf32>
    %222 = arith.negf %221 : vector<2x256xf32>
    %223 = math.exp %222 : vector<2x256xf32>
    %cst_60 = arith.constant 1.000000e+00 : f32
    %224 = vector.broadcast %cst_60 : f32 to vector<2x256xf32>
    %225 = arith.addf %224, %223 : vector<2x256xf32>
    %226 = arith.divf %224, %225 : vector<2x256xf32>
    %227 = arith.mulf %218, %199 : vector<2x256xf32>
    %228 = arith.mulf %212, %220 : vector<2x256xf32>
    %229 = arith.addf %227, %228 : vector<2x256xf32>
    %230 = math.tanh %229 : vector<2x256xf32>
    %231 = arith.mulf %226, %230 : vector<2x256xf32>
    %232 = vector.extract_strided_slice %21 {offsets = [14, 0], sizes = [2, 1024], strides = [1, 1]} : vector<16x1024xf32> to vector<2x1024xf32>
    %233 = arith.truncf %231 : vector<2x256xf32> to vector<2x256xbf16>
    %c0_61 = arith.constant 0 : index
    %c0_62 = arith.constant 0 : index
    %234 = vector.load %arg7[%c0_61, %c0_62] : memref<256x1024xbf16, #tpu.memory_space<vmem>>, vector<256x1024xbf16>
    %cst_63 = arith.constant dense<0.000000e+00> : vector<2x1024xf32>
    %235 = tpu.matmul %233, %234, %cst_63 {dimension_numbers = #tpu.dot_dimension_numbers<[1], [0], [0], [1], [0, 0, 1, 1], [], []>} : vector<2x256xbf16>, vector<256x1024xbf16>, vector<2x1024xf32> -> vector<2x1024xf32>
    %236 = arith.addf %232, %235 : vector<2x1024xf32>
    %237 = vector.extract_strided_slice %236 {offsets = [0, 0], sizes = [2, 256], strides = [1, 1]} : vector<2x1024xf32> to vector<2x256xf32>
    %238 = arith.negf %237 : vector<2x256xf32>
    %239 = math.exp %238 : vector<2x256xf32>
    %cst_64 = arith.constant 1.000000e+00 : f32
    %240 = vector.broadcast %cst_64 : f32 to vector<2x256xf32>
    %241 = arith.addf %240, %239 : vector<2x256xf32>
    %242 = arith.divf %240, %241 : vector<2x256xf32>
    %243 = vector.extract_strided_slice %236 {offsets = [0, 256], sizes = [2, 256], strides = [1, 1]} : vector<2x1024xf32> to vector<2x256xf32>
    %244 = arith.negf %243 : vector<2x256xf32>
    %245 = math.exp %244 : vector<2x256xf32>
    %cst_65 = arith.constant 1.000000e+00 : f32
    %246 = vector.broadcast %cst_65 : f32 to vector<2x256xf32>
    %247 = arith.addf %246, %245 : vector<2x256xf32>
    %248 = arith.divf %246, %247 : vector<2x256xf32>
    %249 = vector.extract_strided_slice %236 {offsets = [0, 512], sizes = [2, 256], strides = [1, 1]} : vector<2x1024xf32> to vector<2x256xf32>
    %250 = math.tanh %249 : vector<2x256xf32>
    %251 = vector.extract_strided_slice %236 {offsets = [0, 768], sizes = [2, 256], strides = [1, 1]} : vector<2x1024xf32> to vector<2x256xf32>
    %252 = arith.negf %251 : vector<2x256xf32>
    %253 = math.exp %252 : vector<2x256xf32>
    %cst_66 = arith.constant 1.000000e+00 : f32
    %254 = vector.broadcast %cst_66 : f32 to vector<2x256xf32>
    %255 = arith.addf %254, %253 : vector<2x256xf32>
    %256 = arith.divf %254, %255 : vector<2x256xf32>
    %257 = arith.mulf %248, %229 : vector<2x256xf32>
    %258 = arith.mulf %242, %250 : vector<2x256xf32>
    %259 = arith.addf %257, %258 : vector<2x256xf32>
    %260 = math.tanh %259 : vector<2x256xf32>
    %261 = arith.mulf %256, %260 : vector<2x256xf32>
    %262 = vector.extract_strided_slice %51 {offsets = [0, 0], sizes = [1, 256], strides = [1, 1]} : vector<2x256xf32> to vector<1x256xf32>
    %263 = vector.extract_strided_slice %81 {offsets = [0, 0], sizes = [1, 256], strides = [1, 1]} : vector<2x256xf32> to vector<1x256xf32>
    %264 = vector.extract_strided_slice %111 {offsets = [0, 0], sizes = [1, 256], strides = [1, 1]} : vector<2x256xf32> to vector<1x256xf32>
    %265 = vector.extract_strided_slice %141 {offsets = [0, 0], sizes = [1, 256], strides = [1, 1]} : vector<2x256xf32> to vector<1x256xf32>
    %266 = vector.extract_strided_slice %171 {offsets = [0, 0], sizes = [1, 256], strides = [1, 1]} : vector<2x256xf32> to vector<1x256xf32>
    %267 = vector.extract_strided_slice %201 {offsets = [0, 0], sizes = [1, 256], strides = [1, 1]} : vector<2x256xf32> to vector<1x256xf32>
    %268 = vector.extract_strided_slice %231 {offsets = [0, 0], sizes = [1, 256], strides = [1, 1]} : vector<2x256xf32> to vector<1x256xf32>
    %269 = vector.extract_strided_slice %261 {offsets = [0, 0], sizes = [1, 256], strides = [1, 1]} : vector<2x256xf32> to vector<1x256xf32>
    %270 = vector.extract_strided_slice %51 {offsets = [1, 0], sizes = [1, 256], strides = [1, 1]} : vector<2x256xf32> to vector<1x256xf32>
    %271 = vector.extract_strided_slice %81 {offsets = [1, 0], sizes = [1, 256], strides = [1, 1]} : vector<2x256xf32> to vector<1x256xf32>
    %272 = vector.extract_strided_slice %111 {offsets = [1, 0], sizes = [1, 256], strides = [1, 1]} : vector<2x256xf32> to vector<1x256xf32>
    %273 = vector.extract_strided_slice %141 {offsets = [1, 0], sizes = [1, 256], strides = [1, 1]} : vector<2x256xf32> to vector<1x256xf32>
    %274 = vector.extract_strided_slice %171 {offsets = [1, 0], sizes = [1, 256], strides = [1, 1]} : vector<2x256xf32> to vector<1x256xf32>
    %275 = vector.extract_strided_slice %201 {offsets = [1, 0], sizes = [1, 256], strides = [1, 1]} : vector<2x256xf32> to vector<1x256xf32>
    %276 = vector.extract_strided_slice %231 {offsets = [1, 0], sizes = [1, 256], strides = [1, 1]} : vector<2x256xf32> to vector<1x256xf32>
    %277 = vector.extract_strided_slice %261 {offsets = [1, 0], sizes = [1, 256], strides = [1, 1]} : vector<2x256xf32> to vector<1x256xf32>
    %278 = tpu.concatenate %262, %263, %264, %265, %266, %267, %268, %269, %270, %271, %272, %273, %274, %275, %276, %277 in 0 : vector<1x256xf32>, vector<1x256xf32>, vector<1x256xf32>, vector<1x256xf32>, vector<1x256xf32>, vector<1x256xf32>, vector<1x256xf32>, vector<1x256xf32>, vector<1x256xf32>, vector<1x256xf32>, vector<1x256xf32>, vector<1x256xf32>, vector<1x256xf32>, vector<1x256xf32>, vector<1x256xf32>, vector<1x256xf32> -> vector<16x256xf32>
    %279 = arith.truncf %278 : vector<16x256xf32> to vector<16x256xbf16>
    %c0_67 = arith.constant 0 : index
    %c0_68 = arith.constant 0 : index
    %280 = vector.load %arg9[%c0_67, %c0_68] : memref<256x512xbf16, #tpu.memory_space<vmem>>, vector<256x512xbf16>
    %cst_69 = arith.constant dense<0.000000e+00> : vector<16x512xf32>
    %281 = tpu.matmul %279, %280, %cst_69 {dimension_numbers = #tpu.dot_dimension_numbers<[1], [0], [0], [1], [0, 0, 1, 1], [], []>} : vector<16x256xbf16>, vector<256x512xbf16>, vector<16x512xf32> -> vector<16x512xf32>
    %c0_70 = arith.constant 0 : index
    %c0_71 = arith.constant 0 : index
    %282 = vector.load %arg10[%c0_70, %c0_71] : memref<1x512xf32, #tpu.memory_space<vmem>>, vector<1x512xf32>
    %283 = vector.broadcast %282 : vector<1x512xf32> to vector<16x512xf32>
    %284 = arith.addf %281, %283 : vector<16x512xf32>
    %cst_72 = arith.constant 0.000000e+00 : f32
    %285 = vector.broadcast %cst_72 : f32 to vector<16x512xf32>
    %286 = arith.maximumf %284, %285 : vector<16x512xf32>
    %287 = arith.truncf %286 : vector<16x512xf32> to vector<16x512xbf16>
    %c0_73 = arith.constant 0 : index
    %c0_74 = arith.constant 0 : index
    %288 = vector.load %arg11[%c0_73, %c0_74] : memref<512x1024xbf16, #tpu.memory_space<vmem>>, vector<512x1024xbf16>
    %cst_75 = arith.constant dense<0.000000e+00> : vector<16x1024xf32>
    %289 = tpu.matmul %287, %288, %cst_75 {dimension_numbers = #tpu.dot_dimension_numbers<[1], [0], [0], [1], [0, 0, 1, 1], [], []>} : vector<16x512xbf16>, vector<512x1024xbf16>, vector<16x1024xf32> -> vector<16x1024xf32>
    %c0_76 = arith.constant 0 : index
    %c0_77 = arith.constant 0 : index
    %290 = vector.load %arg12[%c0_76, %c0_77] : memref<1x1024xf32, #tpu.memory_space<vmem>>, vector<1x1024xf32>
    %291 = vector.broadcast %290 : vector<1x1024xf32> to vector<16x1024xf32>
    %292 = arith.addf %289, %291 : vector<16x1024xf32>
    %293 = arith.truncf %292 : vector<16x1024xf32> to vector<16x1024xbf16>
    %c0_78 = arith.constant 0 : index
    %c0_79 = arith.constant 0 : index
    %294 = vector.load %arg13[%c0_78, %c0_79] : memref<1024x512xbf16, #tpu.memory_space<vmem>>, vector<1024x512xbf16>
    %cst_80 = arith.constant dense<0.000000e+00> : vector<16x512xf32>
    %295 = tpu.matmul %293, %294, %cst_80 {dimension_numbers = #tpu.dot_dimension_numbers<[1], [0], [0], [1], [0, 0, 1, 1], [], []>} : vector<16x1024xbf16>, vector<1024x512xbf16>, vector<16x512xf32> -> vector<16x512xf32>
    %c0_81 = arith.constant 0 : index
    %c0_82 = arith.constant 0 : index
    %296 = vector.load %arg14[%c0_81, %c0_82] : memref<1x512xf32, #tpu.memory_space<vmem>>, vector<1x512xf32>
    %297 = vector.broadcast %296 : vector<1x512xf32> to vector<16x512xf32>
    %298 = arith.addf %295, %297 : vector<16x512xf32>
    %c0_83 = arith.constant 0 : index
    %c0_84 = arith.constant 0 : index
    %299 = vector.load %arg15[%c0_83, %c0_84] : memref<16x512xf32, #tpu.memory_space<vmem>>, vector<16x512xf32>
    tpu.vector_store %arg15[%c0_83, %c0_84], %298 {strides = array<i32>} : memref<16x512xf32, #tpu.memory_space<vmem>>, vector<16x512xf32>,
    return
  }
}

</mosaic_0001>

<llo_original>
// kernel: rnn_decoder_forward.1
$region0: #{rnn_decoder_forward.1}
  #allocation0 [shape = 'u32[]', space=smem, size = 0x4, offset = 0x4, fixed_abs, tag = 'smem constant byte address 0x4 - core index']
  #allocation1 [shape = 'u32[144,128]{1,0:T(1,128)}', space=vmem, size = 0x12000, scoped, tag = 'internal scratch']
  %s0 = inlined_call_operand.vmem [shape: bf16[16,256], index: 0, kind: input, shape index: {}]
  %s1 = inlined_call_operand.vmem [shape: bf16[2,1000], index: 1, kind: input, shape index: {}]
  %s2 = inlined_call_operand.hbm [shape: bf16[1000,512], index: 2, kind: input, shape index: {}]
  %s3 = inlined_call_operand.vmem [shape: f32[1,512], index: 3, kind: input, shape index: {}]
  %s4 = inlined_call_operand.hbm [shape: bf16[512,256], index: 4, kind: input, shape index: {}]
  %s5 = inlined_call_operand.vmem [shape: f32[1,256], index: 5, kind: input, shape index: {}]
  %s6 = inlined_call_operand.hbm [shape: bf16[256,1024], index: 6, kind: input, shape index: {}]
  %s7 = inlined_call_operand.hbm [shape: bf16[256,1024], index: 7, kind: input, shape index: {}]
  %s8 = inlined_call_operand.vmem [shape: f32[1,1024], index: 8, kind: input, shape index: {}]
  %s9 = inlined_call_operand.hbm [shape: bf16[256,512], index: 9, kind: input, shape index: {}]
  %s10 = inlined_call_operand.vmem [shape: f32[1,512], index: 10, kind: input, shape index: {}]
  %s11 = inlined_call_operand.hbm [shape: bf16[512,1024], index: 11, kind: input, shape index: {}]
  %s12 = inlined_call_operand.vmem [shape: f32[1,1024], index: 12, kind: input, shape index: {}]
  %s13 = inlined_call_operand.hbm [shape: bf16[1024,512], index: 13, kind: input, shape index: {}]
  %s14 = inlined_call_operand.vmem [shape: f32[1,512], index: 14, kind: input, shape index: {}]
  %s15 = inlined_call_operand.hbm [shape: f32[16,512], index: 15, kind: output, shape index: {}]
  %s16 = sld [smem:[#allocation0]]
  $region98: #{rnn_decoder_forward.1} parent=0
    _
  %s18 = ssub.s32 1, %s16
  %s19 = scalar_select 0, %s18, %s16
  $region1: #{rnn_decoder_forward.1} parent=0
    #allocation2 [shape = 'u8[1024000]{0}', space=vmem, size = 0xfa000, scoped, tag = 'input window, operand 2, single buffered']
    #allocation3 [shape = 's32[1]{0}', space=sflag, size = 0x4, scoped, tag = 'scoped memory for rnn_decoder_forward.1']
    #allocation4 [shape = 's32[1]{0}', space=sflag, size = 0x4, scoped, tag = 'scoped memory for rnn_decoder_forward.1']
    #allocation5 [shape = 'u8[262144]{0}', space=vmem, size = 0x40000, scoped, tag = 'input window, operand 4, single buffered']
    #allocation6 [shape = 's32[1]{0}', space=sflag, size = 0x4, scoped, tag = 'scoped memory for rnn_decoder_forward.1']
    #allocation7 [shape = 'u8[524288]{0}', space=vmem, size = 0x80000, scoped, tag = 'input window, operand 6, single buffered']
    #allocation8 [shape = 'u8[524288]{0}', space=vmem, size = 0x80000, scoped, tag = 'input window, operand 7, single buffered']
    #allocation9 [shape = 's32[1]{0}', space=sflag, size = 0x4, scoped, tag = 'scoped memory for rnn_decoder_forward.1']
    #allocation10 [shape = 'u8[262144]{0}', space=vmem, size = 0x40000, scoped, tag = 'input window, operand 9, single buffered']
    #allocation11 [shape = 'u8[1048576]{0}', space=vmem, size = 0x100000, scoped, tag = 'input window, operand 11, single buffered']
    #allocation12 [shape = 's32[1]{0}', space=sflag, size = 0x4, scoped, tag = 'scoped memory for rnn_decoder_forward.1']
    #allocation13 [shape = 'u8[1048576]{0}', space=vmem, size = 0x100000, scoped, tag = 'input window, operand 13, single buffered']
    #allocation14 [shape = 'u8[32768]{0}', space=vmem, size = 0x8000, scoped, tag = 'output window, operand 0, single buffered']
    %20 = vsyncpa [#allocation3], 0
    %21 = vsyncpa [#allocation6], 0
    %22 = vsyncpa [#allocation9], 0
    %23 = vsyncpa [#allocation12], 0
    %24 = vsyncpa [#allocation4], 0
    // Predicated region
    $region2: #{rnn_decoder_forward.1} parent=1 // pred_check
      _
    $region3: #{rnn_decoder_forward.1} parent=1 // pred_check_branch
      %26 = sbr.rel (0) target = $region5
    $region4: #{rnn_decoder_forward.1} parent=1 // pred_region
      _
    $region5: #{rnn_decoder_forward.1} parent=1 // pred_fallthru
      _
    // Predicated region
    $region6: #{rnn_decoder_forward.1} parent=1 // pred_check
      _
    $region7: #{rnn_decoder_forward.1} parent=1 // pred_check_branch
      %28 = sbr.rel (0) target = $region9
    $region8: #{rnn_decoder_forward.1} parent=1 // pred_region
      _
    $region9: #{rnn_decoder_forward.1} parent=1 // pred_fallthru
      _
    // Predicated region
    $region10: #{rnn_decoder_forward.1} parent=1 // pred_check
      _
    $region11: #{rnn_decoder_forward.1} parent=1 // pred_check_branch
      %30 = sbr.rel (0) target = $region13
    $region12: #{rnn_decoder_forward.1} parent=1 // pred_region
      %s32 = ssub.s32 32000, 32000
      %33 = vsyncadd [#allocation3], %s32
      %s34 = sshll.u32 [#allocation2], 4
      %s35 = int_to_ptr.vmem [resolvable:$true] %s34
      %40 = dma.hbm_to_vmem [thread:$0]  %s2, 32000, %s35, [#allocation3], 256, 256, 16
    $region13: #{rnn_decoder_forward.1} parent=1 // pred_fallthru
      _
    // Predicated region
    $region14: #{rnn_decoder_forward.1} parent=1 // pred_check
      _
    $region15: #{rnn_decoder_forward.1} parent=1 // pred_check_branch
      %42 = sbr.rel (0) target = $region17
    $region16: #{rnn_decoder_forward.1} parent=1 // pred_region
      _
    $region17: #{rnn_decoder_forward.1} parent=1 // pred_fallthru
      _
    // Predicated region
    $region18: #{rnn_decoder_forward.1} parent=1 // pred_check
      _
    $region19: #{rnn_decoder_forward.1} parent=1 // pred_check_branch
      %44 = sbr.rel (0) target = $region21
    $region20: #{rnn_decoder_forward.1} parent=1 // pred_region
      %s46 = ssub.s32 8192, 8192
      %47 = vsyncadd [#allocation6], %s46
      %s48 = sshll.u32 [#allocation5], 4
      %s49 = int_to_ptr.vmem [resolvable:$true] %s48
      %54 = dma.hbm_to_vmem [thread:$0]  %s4, 8192, %s49, [#allocation6], 128, 128, 8
    $region21: #{rnn_decoder_forward.1} parent=1 // pred_fallthru
      _
    // Predicated region
    $region22: #{rnn_decoder_forward.1} parent=1 // pred_check
      _
    $region23: #{rnn_decoder_forward.1} parent=1 // pred_check_branch
      %56 = sbr.rel (0) target = $region25
    $region24: #{rnn_decoder_forward.1} parent=1 // pred_region
      _
    $region25: #{rnn_decoder_forward.1} parent=1 // pred_fallthru
      _
    // Predicated region
    $region26: #{rnn_decoder_forward.1} parent=1 // pred_check
      _
    $region27: #{rnn_decoder_forward.1} parent=1 // pred_check_branch
      %58 = sbr.rel (0) target = $region29
    $region28: #{rnn_decoder_forward.1} parent=1 // pred_region
      %s60 = ssub.s32 16384, 16384
      %61 = vsyncadd [#allocation6], %s60
      %s62 = sshll.u32 [#allocation7], 4
      %s63 = int_to_ptr.vmem [resolvable:$true] %s62
      %68 = dma.hbm_to_vmem [thread:$0]  %s6, 16384, %s63, [#allocation6], 512, 512, 32
    $region29: #{rnn_decoder_forward.1} parent=1 // pred_fallthru
      _
    // Predicated region
    $region30: #{rnn_decoder_forward.1} parent=1 // pred_check
      _
    $region31: #{rnn_decoder_forward.1} parent=1 // pred_check_branch
      %70 = sbr.rel (0) target = $region33
    $region32: #{rnn_decoder_forward.1} parent=1 // pred_region
      %s72 = ssub.s32 16384, 16384
      %73 = vsyncadd [#allocation9], %s72
      %s74 = sshll.u32 [#allocation8], 4
      %s75 = int_to_ptr.vmem [resolvable:$true] %s74
      %80 = dma.hbm_to_vmem [thread:$0]  %s7, 16384, %s75, [#allocation9], 512, 512, 32
    $region33: #{rnn_decoder_forward.1} parent=1 // pred_fallthru
      _
    // Predicated region
    $region34: #{rnn_decoder_forward.1} parent=1 // pred_check
      _
    $region35: #{rnn_decoder_forward.1} parent=1 // pred_check_branch
      %82 = sbr.rel (0) target = $region37
    $region36: #{rnn_decoder_forward.1} parent=1 // pred_region
      _
    $region37: #{rnn_decoder_forward.1} parent=1 // pred_fallthru
      _
    // Predicated region
    $region38: #{rnn_decoder_forward.1} parent=1 // pred_check
      _
    $region39: #{rnn_decoder_forward.1} parent=1 // pred_check_branch
      %84 = sbr.rel (0) target = $region41
    $region40: #{rnn_decoder_forward.1} parent=1 // pred_region
      %s86 = ssub.s32 8192, 8192
      %87 = vsyncadd [#allocation9], %s86
      %s88 = sshll.u32 [#allocation10], 4
      %s89 = int_to_ptr.vmem [resolvable:$true] %s88
      %94 = dma.hbm_to_vmem [thread:$0]  %s9, 8192, %s89, [#allocation9], 256, 256, 16
    $region41: #{rnn_decoder_forward.1} parent=1 // pred_fallthru
      _
    // Predicated region
    $region42: #{rnn_decoder_forward.1} parent=1 // pred_check
      _
    $region43: #{rnn_decoder_forward.1} parent=1 // pred_check_branch
      %96 = sbr.rel (0) target = $region45
    $region44: #{rnn_decoder_forward.1} parent=1 // pred_region
      _
    $region45: #{rnn_decoder_forward.1} parent=1 // pred_fallthru
      _
    // Predicated region
    $region46: #{rnn_decoder_forward.1} parent=1 // pred_check
      _
    $region47: #{rnn_decoder_forward.1} parent=1 // pred_check_branch
      %98 = sbr.rel (0) target = $region49
    $region48: #{rnn_decoder_forward.1} parent=1 // pred_region
      %s100 = ssub.s32 32768, 32768
      %101 = vsyncadd [#allocation12], %s100
      %s102 = sshll.u32 [#allocation11], 4
      %s103 = int_to_ptr.vmem [resolvable:$true] %s102
      %108 = dma.hbm_to_vmem [thread:$0]  %s11, 32768, %s103, [#allocation12], 512, 512, 32
    $region49: #{rnn_decoder_forward.1} parent=1 // pred_fallthru
      _
    // Predicated region
    $region50: #{rnn_decoder_forward.1} parent=1 // pred_check
      _
    $region51: #{rnn_decoder_forward.1} parent=1 // pred_check_branch
      %110 = sbr.rel (0) target = $region53
    $region52: #{rnn_decoder_forward.1} parent=1 // pred_region
      _
    $region53: #{rnn_decoder_forward.1} parent=1 // pred_fallthru
      _
    // Predicated region
    $region54: #{rnn_decoder_forward.1} parent=1 // pred_check
      _
    $region55: #{rnn_decoder_forward.1} parent=1 // pred_check_branch
      %112 = sbr.rel (0) target = $region57
    $region56: #{rnn_decoder_forward.1} parent=1 // pred_region
      %s114 = ssub.s32 32768, 32768
      %115 = vsyncadd [#allocation12], %s114
      %s116 = sshll.u32 [#allocation13], 4
      %s117 = int_to_ptr.vmem [resolvable:$true] %s116
      %122 = dma.hbm_to_vmem [thread:$0]  %s13, 32768, %s117, [#allocation12], 256, 256, 16
    $region57: #{rnn_decoder_forward.1} parent=1 // pred_fallthru
      _
    // Predicated region
    $region58: #{rnn_decoder_forward.1} parent=1 // pred_check
      _
    $region59: #{rnn_decoder_forward.1} parent=1 // pred_check_branch
      %124 = sbr.rel (0) target = $region61
    $region60: #{rnn_decoder_forward.1} parent=1 // pred_region
      _
    $region61: #{rnn_decoder_forward.1} parent=1 // pred_fallthru
      _
    // Predicated region
    $region62: #{rnn_decoder_forward.1} parent=1 // pred_check
      _
    $region63: #{rnn_decoder_forward.1} parent=1 // pred_check_branch
      %126 = sbr.rel (0) target = $region65
    $region64: #{rnn_decoder_forward.1} parent=1 // pred_region
      %127 = dma.done [#allocation3], 32000
    $region65: #{rnn_decoder_forward.1} parent=1 // pred_fallthru
      _
    // Predicated region
    $region66: #{rnn_decoder_forward.1} parent=1 // pred_check
      _
    $region67: #{rnn_decoder_forward.1} parent=1 // pred_check_branch
      %129 = sbr.rel (0) target = $region69
    $region68: #{rnn_decoder_forward.1} parent=1 // pred_region
      %130 = dma.done [#allocation6], 8192
    $region69: #{rnn_decoder_forward.1} parent=1 // pred_fallthru
      _
    // Predicated region
    $region70: #{rnn_decoder_forward.1} parent=1 // pred_check
      _
    $region71: #{rnn_decoder_forward.1} parent=1 // pred_check_branch
      %132 = sbr.rel (0) target = $region73
    $region72: #{rnn_decoder_forward.1} parent=1 // pred_region
      %133 = dma.done [#allocation6], 16384
    $region73: #{rnn_decoder_forward.1} parent=1 // pred_fallthru
      _
    // Predicated region
    $region74: #{rnn_decoder_forward.1} parent=1 // pred_check
      _
    $region75: #{rnn_decoder_forward.1} parent=1 // pred_check_branch
      %135 = sbr.rel (0) target = $region77
    $region76: #{rnn_decoder_forward.1} parent=1 // pred_region
      %136 = dma.done [#allocation9], 16384
    $region77: #{rnn_decoder_forward.1} parent=1 // pred_fallthru
      _
    // Predicated region
    $region78: #{rnn_decoder_forward.1} parent=1 // pred_check
      _
    $region79: #{rnn_decoder_forward.1} parent=1 // pred_check_branch
      %138 = sbr.rel (0) target = $region81
    $region80: #{rnn_decoder_forward.1} parent=1 // pred_region
      %139 = dma.done [#allocation9], 8192
    $region81: #{rnn_decoder_forward.1} parent=1 // pred_fallthru
      _
    // Predicated region
    $region82: #{rnn_decoder_forward.1} parent=1 // pred_check
      _
    $region83: #{rnn_decoder_forward.1} parent=1 // pred_check_branch
      %141 = sbr.rel (0) target = $region85
    $region84: #{rnn_decoder_forward.1} parent=1 // pred_region
      %142 = dma.done [#allocation12], 32768
    $region85: #{rnn_decoder_forward.1} parent=1 // pred_fallthru
      _
    // Predicated region
    $region86: #{rnn_decoder_forward.1} parent=1 // pred_check
      _
    $region87: #{rnn_decoder_forward.1} parent=1 // pred_check_branch
      %144 = sbr.rel (0) target = $region89
    $region88: #{rnn_decoder_forward.1} parent=1 // pred_region
      %145 = dma.done [#allocation12], 32768
    $region89: #{rnn_decoder_forward.1} parent=1 // pred_fallthru
      _
    %v147 = vld [vmem:[%s1] sm:$0xff]
    %v148 = vld [vmem:[#allocation2] sm:$0xff]
    %v149 = vld [vmem:[#allocation2 + $0x8] sm:$0xff]
    %v150 = vld [vmem:[#allocation2 + $0x10] sm:$0xff]
    %v151 = vld [vmem:[#allocation2 + $0x18] sm:$0xff]
    %v152 = vld [vmem:[#allocation2 + $0x20] sm:$0xff]
    %v153 = vld [vmem:[#allocation2 + $0x28] sm:$0xff]
    %v154 = vld [vmem:[#allocation2 + $0x30] sm:$0xff]
    %v155 = vld [vmem:[#allocation2 + $0x38] sm:$0xff]
    %v156 = vld [vmem:[#allocation2 + $0x40] sm:$0xff]
    %v157 = vld [vmem:[#allocation2 + $0x48] sm:$0xff]
    %v158 = vld [vmem:[#allocation2 + $0x50] sm:$0xff]
    %v159 = vld [vmem:[#allocation2 + $0x58] sm:$0xff]
    %v160 = vld [vmem:[#allocation2 + $0x60] sm:$0xff]
    %v161 = vld [vmem:[#allocation2 + $0x68] sm:$0xff]
    %v162 = vld [vmem:[#allocation2 + $0x70] sm:$0xff]
    %v163 = vld [vmem:[#allocation2 + $0x78] sm:$0xff]
    %v164 = vld [vmem:[#allocation2 + $0x80] sm:$0xff]
    %v165 = vld [vmem:[#allocation2 + $0x88] sm:$0xff]
    %v166 = vld [vmem:[#allocation2 + $0x90] sm:$0xff]
    %v167 = vld [vmem:[#allocation2 + $0x98] sm:$0xff]
    %v168 = vld [vmem:[#allocation2 + $0xa0] sm:$0xff]
    %v169 = vld [vmem:[#allocation2 + $0xa8] sm:$0xff]
    %v170 = vld [vmem:[#allocation2 + $0xb0] sm:$0xff]
    %v171 = vld [vmem:[#allocation2 + $0xb8] sm:$0xff]
    %v172 = vld [vmem:[#allocation2 + $0xc0] sm:$0xff]
    %v173 = vld [vmem:[#allocation2 + $0xc8] sm:$0xff]
    %v174 = vld [vmem:[#allocation2 + $0xd0] sm:$0xff]
    %v175 = vld [vmem:[#allocation2 + $0xd8] sm:$0xff]
    %v176 = vld [vmem:[#allocation2 + $0xe0] sm:$0xff]
    %v177 = vld [vmem:[#allocation2 + $0xe8] sm:$0xff]
    %v178 = vld [vmem:[#allocation2 + $0xf0] sm:$0xff]
    %v179 = vld [vmem:[#allocation2 + $0xf8] sm:$0xff]
    %v180 = vld [vmem:[#allocation2 + $0x100] sm:$0xff]
    %v181 = vld [vmem:[#allocation2 + $0x108] sm:$0xff]
    %v182 = vld [vmem:[#allocation2 + $0x110] sm:$0xff]
    %v183 = vld [vmem:[#allocation2 + $0x118] sm:$0xff]
    %v184 = vld [vmem:[#allocation2 + $0x120] sm:$0xff]
    %v185 = vld [vmem:[#allocation2 + $0x128] sm:$0xff]
    %v186 = vld [vmem:[#allocation2 + $0x130] sm:$0xff]
    %v187 = vld [vmem:[#allocation2 + $0x138] sm:$0xff]
    %v188 = vld [vmem:[#allocation2 + $0x140] sm:$0xff]
    %v189 = vld [vmem:[#allocation2 + $0x148] sm:$0xff]
    %v190 = vld [vmem:[#allocation2 + $0x150] sm:$0xff]
    %v191 = vld [vmem:[#allocation2 + $0x158] sm:$0xff]
    %v192 = vld [vmem:[#allocation2 + $0x160] sm:$0xff]
    %v193 = vld [vmem:[#allocation2 + $0x168] sm:$0xff]
    %v194 = vld [vmem:[#allocation2 + $0x170] sm:$0xff]
    %v195 = vld [vmem:[#allocation2 + $0x178] sm:$0xff]
    %v196 = vld [vmem:[#allocation2 + $0x180] sm:$0xff]
    %v197 = vld [vmem:[#allocation2 + $0x188] sm:$0xff]
    %v198 = vld [vmem:[#allocation2 + $0x190] sm:$0xff]
    %v199 = vld [vmem:[#allocation2 + $0x198] sm:$0xff]
    %v200 = vld [vmem:[#allocation2 + $0x1a0] sm:$0xff]
    %v201 = vld [vmem:[#allocation2 + $0x1a8] sm:$0xff]
    %v202 = vld [vmem:[#allocation2 + $0x1b0] sm:$0xff]
    %v203 = vld [vmem:[#allocation2 + $0x1b8] sm:$0xff]
    %v204 = vld [vmem:[#allocation2 + $0x1c0] sm:$0xff]
    %v205 = vld [vmem:[#allocation2 + $0x1c8] sm:$0xff]
    %v206 = vld [vmem:[#allocation2 + $0x1d0] sm:$0xff]
    %v207 = vld [vmem:[#allocation2 + $0x1d8] sm:$0xff]
    %v208 = vld [vmem:[#allocation2 + $0x1e0] sm:$0xff]
    %v209 = vld [vmem:[#allocation2 + $0x1e8] sm:$0xff]
    %v210 = vld [vmem:[#allocation2 + $0x1f0] sm:$0xff]
    %v211 = vld [vmem:[#allocation2 + $0x1f8] sm:$0xff]
    %v212 = vld [vmem:[#allocation2 + $0x200] sm:$0xff]
    %v213 = vld [vmem:[#allocation2 + $0x208] sm:$0xff]
    %v214 = vld [vmem:[#allocation2 + $0x210] sm:$0xff]
    %v215 = vld [vmem:[#allocation2 + $0x218] sm:$0xff]
    %v216 = vld [vmem:[#allocation2 + $0x220] sm:$0xff]
    %v217 = vld [vmem:[#allocation2 + $0x228] sm:$0xff]
    %v218 = vld [vmem:[#allocation2 + $0x230] sm:$0xff]
    %v219 = vld [vmem:[#allocation2 + $0x238] sm:$0xff]
    %v220 = vld [vmem:[#allocation2 + $0x240] sm:$0xff]
    %v221 = vld [vmem:[#allocation2 + $0x248] sm:$0xff]
    %v222 = vld [vmem:[#allocation2 + $0x250] sm:$0xff]
    %v223 = vld [vmem:[#allocation2 + $0x258] sm:$0xff]
    %v224 = vld [vmem:[#allocation2 + $0x260] sm:$0xff]
    %v225 = vld [vmem:[#allocation2 + $0x268] sm:$0xff]
    %v226 = vld [vmem:[#allocation2 + $0x270] sm:$0xff]
    %v227 = vld [vmem:[#allocation2 + $0x278] sm:$0xff]
    %v228 = vld [vmem:[#allocation2 + $0x280] sm:$0xff]
    %v229 = vld [vmem:[#allocation2 + $0x288] sm:$0xff]
    %v230 = vld [vmem:[#allocation2 + $0x290] sm:$0xff]
    %v231 = vld [vmem:[#allocation2 + $0x298] sm:$0xff]
    %v232 = vld [vmem:[#allocation2 + $0x2a0] sm:$0xff]
    %v233 = vld [vmem:[#allocation2 + $0x2a8] sm:$0xff]
    %v234 = vld [vmem:[#allocation2 + $0x2b0] sm:$0xff]
    %v235 = vld [vmem:[#allocation2 + $0x2b8] sm:$0xff]
    %v236 = vld [vmem:[#allocation2 + $0x2c0] sm:$0xff]
    %v237 = vld [vmem:[#allocation2 + $0x2c8] sm:$0xff]
    %v238 = vld [vmem:[#allocation2 + $0x2d0] sm:$0xff]
    %v239 = vld [vmem:[#allocation2 + $0x2d8] sm:$0xff]
    %v240 = vld [vmem:[#allocation2 + $0x2e0] sm:$0xff]
    %v241 = vld [vmem:[#allocation2 + $0x2e8] sm:$0xff]
    %v242 = vld [vmem:[#allocation2 + $0x2f0] sm:$0xff]
    %v243 = vld [vmem:[#allocation2 + $0x2f8] sm:$0xff]
    %v244 = vld [vmem:[#allocation2 + $0x300] sm:$0xff]
    %v245 = vld [vmem:[#allocation2 + $0x308] sm:$0xff]
    %v246 = vld [vmem:[#allocation2 + $0x310] sm:$0xff]
    %v247 = vld [vmem:[#allocation2 + $0x318] sm:$0xff]
    %v248 = vld [vmem:[#allocation2 + $0x320] sm:$0xff]
    %v249 = vld [vmem:[#allocation2 + $0x328] sm:$0xff]
    %v250 = vld [vmem:[#allocation2 + $0x330] sm:$0xff]
    %v251 = vld [vmem:[#allocation2 + $0x338] sm:$0xff]
    %v252 = vld [vmem:[#allocation2 + $0x340] sm:$0xff]
    %v253 = vld [vmem:[#allocation2 + $0x348] sm:$0xff]
    %v254 = vld [vmem:[#allocation2 + $0x350] sm:$0xff]
    %v255 = vld [vmem:[#allocation2 + $0x358] sm:$0xff]
    %v256 = vld [vmem:[#allocation2 + $0x360] sm:$0xff]
    %v257 = vld [vmem:[#allocation2 + $0x368] sm:$0xff]
    %v258 = vld [vmem:[#allocation2 + $0x370] sm:$0xff]
    %v259 = vld [vmem:[#allocation2 + $0x378] sm:$0xff]
    %v260 = vld [vmem:[#allocation2 + $0x380] sm:$0xff]
    %v261 = vld [vmem:[#allocation2 + $0x388] sm:$0xff]
    %v262 = vld [vmem:[#allocation2 + $0x390] sm:$0xff]
    %v263 = vld [vmem:[#allocation2 + $0x398] sm:$0xff]
    %v264 = vld [vmem:[#allocation2 + $0x3a0] sm:$0xff]
    %v265 = vld [vmem:[#allocation2 + $0x3a8] sm:$0xff]
    %v266 = vld [vmem:[#allocation2 + $0x3b0] sm:$0xff]
    %v267 = vld [vmem:[#allocation2 + $0x3b8] sm:$0xff]
    %v268 = vld [vmem:[#allocation2 + $0x3c0] sm:$0xff]
    %v269 = vld [vmem:[#allocation2 + $0x3c8] sm:$0xff]
    %v270 = vld [vmem:[#allocation2 + $0x3d0] sm:$0xff]
    %v271 = vld [vmem:[#allocation2 + $0x3d8] sm:$0xff]
    %v272 = vld [vmem:[#allocation2 + $0x3e0] sm:$0xff]
    %v273 = vld [vmem:[#allocation2 + $0x3e8] sm:$0xff]
    %v274 = vld [vmem:[#allocation2 + $0x3f0] sm:$0xff]
    %v275 = vld [vmem:[#allocation2 + $0x3f8] sm:$0xff]
    %v276 = vld [vmem:[#allocation2 + $0x400] sm:$0xff]
    %v277 = vld [vmem:[#allocation2 + $0x408] sm:$0xff]
    %v278 = vld [vmem:[#allocation2 + $0x410] sm:$0xff]
    %v279 = vld [vmem:[#allocation2 + $0x418] sm:$0xff]
    %v280 = vld [vmem:[#allocation2 + $0x420] sm:$0xff]
    %v281 = vld [vmem:[#allocation2 + $0x428] sm:$0xff]
    %v282 = vld [vmem:[#allocation2 + $0x430] sm:$0xff]
    %v283 = vld [vmem:[#allocation2 + $0x438] sm:$0xff]
    %v284 = vld [vmem:[#allocation2 + $0x440] sm:$0xff]
    %v285 = vld [vmem:[#allocation2 + $0x448] sm:$0xff]
    %v286 = vld [vmem:[#allocation2 + $0x450] sm:$0xff]
    %v287 = vld [vmem:[#allocation2 + $0x458] sm:$0xff]
    %v288 = vld [vmem:[#allocation2 + $0x460] sm:$0xff]
    %v289 = vld [vmem:[#allocation2 + $0x468] sm:$0xff]
    %v290 = vld [vmem:[#allocation2 + $0x470] sm:$0xff]
    %v291 = vld [vmem:[#allocation2 + $0x478] sm:$0xff]
    %v292 = vld [vmem:[#allocation2 + $0x480] sm:$0xff]
    %v293 = vld [vmem:[#allocation2 + $0x488] sm:$0xff]
    %v294 = vld [vmem:[#allocation2 + $0x490] sm:$0xff]
    %v295 = vld [vmem:[#allocation2 + $0x498] sm:$0xff]
    %v296 = vld [vmem:[#allocation2 + $0x4a0] sm:$0xff]
    %v297 = vld [vmem:[#allocation2 + $0x4a8] sm:$0xff]
    %v298 = vld [vmem:[#allocation2 + $0x4b0] sm:$0xff]
    %v299 = vld [vmem:[#allocation2 + $0x4b8] sm:$0xff]
    %v300 = vld [vmem:[#allocation2 + $0x4c0] sm:$0xff]
    %v301 = vld [vmem:[#allocation2 + $0x4c8] sm:$0xff]
    %v302 = vld [vmem:[#allocation2 + $0x4d0] sm:$0xff]
    %v303 = vld [vmem:[#allocation2 + $0x4d8] sm:$0xff]
    %v304 = vld [vmem:[#allocation2 + $0x4e0] sm:$0xff]
    %v305 = vld [vmem:[#allocation2 + $0x4e8] sm:$0xff]
    %v306 = vld [vmem:[#allocation2 + $0x4f0] sm:$0xff]
    %v307 = vld [vmem:[#allocation2 + $0x4f8] sm:$0xff]
    %v308 = vld [vmem:[#allocation2 + $0x500] sm:$0xff]
    %v309 = vld [vmem:[#allocation2 + $0x508] sm:$0xff]
    %v310 = vld [vmem:[#allocation2 + $0x510] sm:$0xff]
    %v311 = vld [vmem:[#allocation2 + $0x518] sm:$0xff]
    %v312 = vld [vmem:[#allocation2 + $0x520] sm:$0xff]
    %v313 = vld [vmem:[#allocation2 + $0x528] sm:$0xff]
    %v314 = vld [vmem:[#allocation2 + $0x530] sm:$0xff]
    %v315 = vld [vmem:[#allocation2 + $0x538] sm:$0xff]
    %v316 = vld [vmem:[#allocation2 + $0x540] sm:$0xff]
    %v317 = vld [vmem:[#allocation2 + $0x548] sm:$0xff]
    %v318 = vld [vmem:[#allocation2 + $0x550] sm:$0xff]
    %v319 = vld [vmem:[#allocation2 + $0x558] sm:$0xff]
    %v320 = vld [vmem:[#allocation2 + $0x560] sm:$0xff]
    %v321 = vld [vmem:[#allocation2 + $0x568] sm:$0xff]
    %v322 = vld [vmem:[#allocation2 + $0x570] sm:$0xff]
    %v323 = vld [vmem:[#allocation2 + $0x578] sm:$0xff]
    %v324 = vld [vmem:[#allocation2 + $0x580] sm:$0xff]
    %v325 = vld [vmem:[#allocation2 + $0x588] sm:$0xff]
    %v326 = vld [vmem:[#allocation2 + $0x590] sm:$0xff]
    %v327 = vld [vmem:[#allocation2 + $0x598] sm:$0xff]
    %v328 = vld [vmem:[#allocation2 + $0x5a0] sm:$0xff]
    %v329 = vld [vmem:[#allocation2 + $0x5a8] sm:$0xff]
    %v330 = vld [vmem:[#allocation2 + $0x5b0] sm:$0xff]
    %v331 = vld [vmem:[#allocation2 + $0x5b8] sm:$0xff]
    %v332 = vld [vmem:[#allocation2 + $0x5c0] sm:$0xff]
    %v333 = vld [vmem:[#allocation2 + $0x5c8] sm:$0xff]
    %v334 = vld [vmem:[#allocation2 + $0x5d0] sm:$0xff]
    %v335 = vld [vmem:[#allocation2 + $0x5d8] sm:$0xff]
    %v336 = vld [vmem:[#allocation2 + $0x5e0] sm:$0xff]
    %v337 = vld [vmem:[#allocation2 + $0x5e8] sm:$0xff]
    %v338 = vld [vmem:[#allocation2 + $0x5f0] sm:$0xff]
    %v339 = vld [vmem:[#allocation2 + $0x5f8] sm:$0xff]
    %v340 = vld [vmem:[#allocation2 + $0x600] sm:$0xff]
    %v341 = vld [vmem:[#allocation2 + $0x608] sm:$0xff]
    %v342 = vld [vmem:[#allocation2 + $0x610] sm:$0xff]
    %v343 = vld [vmem:[#allocation2 + $0x618] sm:$0xff]
    %v344 = vld [vmem:[#allocation2 + $0x620] sm:$0xff]
    %v345 = vld [vmem:[#allocation2 + $0x628] sm:$0xff]
    %v346 = vld [vmem:[#allocation2 + $0x630] sm:$0xff]
    %v347 = vld [vmem:[#allocation2 + $0x638] sm:$0xff]
    %v348 = vld [vmem:[#allocation2 + $0x640] sm:$0xff]
    %v349 = vld [vmem:[#allocation2 + $0x648] sm:$0xff]
    %v350 = vld [vmem:[#allocation2 + $0x650] sm:$0xff]
    %v351 = vld [vmem:[#allocation2 + $0x658] sm:$0xff]
    %v352 = vld [vmem:[#allocation2 + $0x660] sm:$0xff]
    %v353 = vld [vmem:[#allocation2 + $0x668] sm:$0xff]
    %v354 = vld [vmem:[#allocation2 + $0x670] sm:$0xff]
    %v355 = vld [vmem:[#allocation2 + $0x678] sm:$0xff]
    %v356 = vld [vmem:[#allocation2 + $0x680] sm:$0xff]
    %v357 = vld [vmem:[#allocation2 + $0x688] sm:$0xff]
    %v358 = vld [vmem:[#allocation2 + $0x690] sm:$0xff]
    %v359 = vld [vmem:[#allocation2 + $0x698] sm:$0xff]
    %v360 = vld [vmem:[#allocation2 + $0x6a0] sm:$0xff]
    %v361 = vld [vmem:[#allocation2 + $0x6a8] sm:$0xff]
    %v362 = vld [vmem:[#allocation2 + $0x6b0] sm:$0xff]
    %v363 = vld [vmem:[#allocation2 + $0x6b8] sm:$0xff]
    %v364 = vld [vmem:[#allocation2 + $0x6c0] sm:$0xff]
    %v365 = vld [vmem:[#allocation2 + $0x6c8] sm:$0xff]
    %v366 = vld [vmem:[#allocation2 + $0x6d0] sm:$0xff]
    %v367 = vld [vmem:[#allocation2 + $0x6d8] sm:$0xff]
    %v368 = vld [vmem:[#allocation2 + $0x6e0] sm:$0xff]
    %v369 = vld [vmem:[#allocation2 + $0x6e8] sm:$0xff]
    %v370 = vld [vmem:[#allocation2 + $0x6f0] sm:$0xff]
    %v371 = vld [vmem:[#allocation2 + $0x6f8] sm:$0xff]
    %v372 = vld [vmem:[#allocation2 + $0x700] sm:$0xff]
    %v373 = vld [vmem:[#allocation2 + $0x708] sm:$0xff]
    %v374 = vld [vmem:[#allocation2 + $0x710] sm:$0xff]
    %v375 = vld [vmem:[#allocation2 + $0x718] sm:$0xff]
    %v376 = vld [vmem:[#allocation2 + $0x720] sm:$0xff]
    %v377 = vld [vmem:[#allocation2 + $0x728] sm:$0xff]
    %v378 = vld [vmem:[#allocation2 + $0x730] sm:$0xff]
    %v379 = vld [vmem:[#allocation2 + $0x738] sm:$0xff]
    %v380 = vld [vmem:[#allocation2 + $0x740] sm:$0xff]
    %v381 = vld [vmem:[#allocation2 + $0x748] sm:$0xff]
    %v382 = vld [vmem:[#allocation2 + $0x750] sm:$0xff]
    %v383 = vld [vmem:[#allocation2 + $0x758] sm:$0xff]
    %v384 = vld [vmem:[#allocation2 + $0x760] sm:$0xff]
    %v385 = vld [vmem:[#allocation2 + $0x768] sm:$0xff]
    %v386 = vld [vmem:[#allocation2 + $0x770] sm:$0xff]
    %v387 = vld [vmem:[#allocation2 + $0x778] sm:$0xff]
    %v388 = vld [vmem:[#allocation2 + $0x780] sm:$0xff]
    %v389 = vld [vmem:[#allocation2 + $0x788] sm:$0xff]
    %v390 = vld [vmem:[#allocation2 + $0x790] sm:$0xff]
    %v391 = vld [vmem:[#allocation2 + $0x798] sm:$0xff]
    %v392 = vld [vmem:[#allocation2 + $0x7a0] sm:$0xff]
    %v393 = vld [vmem:[#allocation2 + $0x7a8] sm:$0xff]
    %v394 = vld [vmem:[#allocation2 + $0x7b0] sm:$0xff]
    %v395 = vld [vmem:[#allocation2 + $0x7b8] sm:$0xff]
    %v396 = vld [vmem:[#allocation2 + $0x7c0] sm:$0xff]
    %v397 = vld [vmem:[#allocation2 + $0x7c8] sm:$0xff]
    %v398 = vld [vmem:[%s3] sm:$0xf]
    %v400 = vlaneseq
    %v401 = vshrl.u32 %v400, 7
    %v402 = vsub.s32 0, %v401
    %v403 = vrot.slane %v398, %v402
    %v404 = vlaneseq
    %v405 = vshrl.u32 %v404, 7
    %v406 = vsub.s32 1, %v405
    %v407 = vrot.slane %v398, %v406
    %v408 = vlaneseq
    %v409 = vshrl.u32 %v408, 7
    %v410 = vsub.s32 2, %v409
    %v411 = vrot.slane %v398, %v410
    %v412 = vlaneseq
    %v413 = vshrl.u32 %v412, 7
    %v414 = vsub.s32 3, %v413
    %v415 = vrot.slane %v398, %v414
    %v421 = vcombine.high %v147, %v147
    %v423 = vunpack.c.l.s4 1966171168
    %v424 = vunpack.c.0.s8 %v423
    %v425 = vlaneseq
    %v426 = vshrl.u32 %v425, 7
    %v427 = vsub.s32 %v424, %v426
    %v428 = vrot.slane %v147, %v427
    %v430 = vunpack.c.l.s4 1966171168
    %v431 = vunpack.c.0.s8 %v430
    %v432 = vlaneseq
    %v433 = vshrl.u32 %v432, 7
    %v434 = vsub.s32 %v431, %v433
    %v435 = vrot.slane %v421, %v434
    %v436 = vcombine.high %v428, %v428
    %v437 = vcombine.high %v435, %v435
    %v439 = vunpack.c.l.s4 1966171168
    %v440 = vunpack.c.0.s8 %v439
    %v441 = vlaneseq
    %v442 = vshrl.u32 %v441, 7
    %v443 = vsub.s32 %v440, %v442
    %v444 = vrot.slane %v428, %v443
    %v446 = vunpack.c.l.s4 1966171168
    %v447 = vunpack.c.0.s8 %v446
    %v448 = vlaneseq
    %v449 = vshrl.u32 %v448, 7
    %v450 = vsub.s32 %v447, %v449
    %v451 = vrot.slane %v435, %v450
    %v453 = vunpack.c.l.s4 1966171168
    %v454 = vunpack.c.0.s8 %v453
    %v455 = vlaneseq
    %v456 = vshrl.u32 %v455, 7
    %v457 = vsub.s32 %v454, %v456
    %v458 = vrot.slane %v436, %v457
    %v460 = vunpack.c.l.s4 1966171168
    %v461 = vunpack.c.0.s8 %v460
    %v462 = vlaneseq
    %v463 = vshrl.u32 %v462, 7
    %v464 = vsub.s32 %v461, %v463
    %v465 = vrot.slane %v437, %v464
    %v466 = vcombine.high %v444, %v444
    %v467 = vcombine.high %v451, %v451
    %v468 = vcombine.high %v458, %v458
    %v469 = vcombine.high %v465, %v465
    %v727 = vunpack.c.l.b16 %v148
    %v728 = vunpack.c.h.b16 %v148
    %v729 = vunpack.c.l.b16 %v149
    %v730 = vunpack.c.h.b16 %v149
    %v731 = vunpack.c.l.b16 %v150
    %v732 = vunpack.c.h.b16 %v150
    %v733 = vunpack.c.l.b16 %v151
    %v734 = vunpack.c.h.b16 %v151
    %v735 = vunpack.c.l.b16 %v152
    %v736 = vunpack.c.h.b16 %v152
    %v737 = vunpack.c.l.b16 %v153
    %v738 = vunpack.c.h.b16 %v153
    %v739 = vunpack.c.l.b16 %v154
    %v740 = vunpack.c.h.b16 %v154
    %v741 = vunpack.c.l.b16 %v155
    %v742 = vunpack.c.h.b16 %v155
    %v743 = vunpack.c.l.b16 %v156
    %v744 = vunpack.c.h.b16 %v156
    %v745 = vunpack.c.l.b16 %v157
    %v746 = vunpack.c.h.b16 %v157
    %v747 = vunpack.c.l.b16 %v158
    %v748 = vunpack.c.h.b16 %v158
    %v749 = vunpack.c.l.b16 %v159
    %v750 = vunpack.c.h.b16 %v159
    %v751 = vunpack.c.l.b16 %v160
    %v752 = vunpack.c.h.b16 %v160
    %v753 = vunpack.c.l.b16 %v161
    %v754 = vunpack.c.h.b16 %v161
    %v755 = vunpack.c.l.b16 %v162
    %v756 = vunpack.c.h.b16 %v162
    %v757 = vunpack.c.l.b16 %v163
    %v758 = vunpack.c.h.b16 %v163
    %v759 = vunpack.c.l.b16 %v164
    %v760 = vunpack.c.h.b16 %v164
    %v761 = vunpack.c.l.b16 %v165
    %v762 = vunpack.c.h.b16 %v165
    %v763 = vunpack.c.l.b16 %v166
    %v764 = vunpack.c.h.b16 %v166
    %v765 = vunpack.c.l.b16 %v167
    %v766 = vunpack.c.h.b16 %v167
    %v767 = vunpack.c.l.b16 %v168
    %v768 = vunpack.c.h.b16 %v168
    %v769 = vunpack.c.l.b16 %v169
    %v770 = vunpack.c.h.b16 %v169
    %v771 = vunpack.c.l.b16 %v170
    %v772 = vunpack.c.h.b16 %v170
    %v773 = vunpack.c.l.b16 %v171
    %v774 = vunpack.c.h.b16 %v171
    %v775 = vunpack.c.l.b16 %v172
    %v776 = vunpack.c.h.b16 %v172
    %v777 = vunpack.c.l.b16 %v173
    %v778 = vunpack.c.h.b16 %v173
    %v779 = vunpack.c.l.b16 %v174
    %v780 = vunpack.c.h.b16 %v174
    %v781 = vunpack.c.l.b16 %v175
    %v782 = vunpack.c.h.b16 %v175
    %v783 = vunpack.c.l.b16 %v176
    %v784 = vunpack.c.h.b16 %v176
    %v785 = vunpack.c.l.b16 %v177
    %v786 = vunpack.c.h.b16 %v177
    %v787 = vunpack.c.l.b16 %v178
    %v788 = vunpack.c.h.b16 %v178
    %v789 = vunpack.c.l.b16 %v179
    %v790 = vunpack.c.h.b16 %v179
    %v791 = vunpack.c.l.b16 %v180
    %v792 = vunpack.c.h.b16 %v180
    %v793 = vunpack.c.l.b16 %v181
    %v794 = vunpack.c.h.b16 %v181
    %v795 = vunpack.c.l.b16 %v182
    %v796 = vunpack.c.h.b16 %v182
    %v797 = vunpack.c.l.b16 %v183
    %v798 = vunpack.c.h.b16 %v183
    %v799 = vunpack.c.l.b16 %v184
    %v800 = vunpack.c.h.b16 %v184
    %v801 = vunpack.c.l.b16 %v185
    %v802 = vunpack.c.h.b16 %v185
    %v803 = vunpack.c.l.b16 %v186
    %v804 = vunpack.c.h.b16 %v186
    %v805 = vunpack.c.l.b16 %v187
    %v806 = vunpack.c.h.b16 %v187
    %v807 = vunpack.c.l.b16 %v188
    %v808 = vunpack.c.h.b16 %v188
    %v809 = vunpack.c.l.b16 %v189
    %v810 = vunpack.c.h.b16 %v189
    %v811 = vunpack.c.l.b16 %v190
    %v812 = vunpack.c.h.b16 %v190
    %v813 = vunpack.c.l.b16 %v191
    %v814 = vunpack.c.h.b16 %v191
    %v815 = vunpack.c.l.b16 %v192
    %v816 = vunpack.c.h.b16 %v192
    %v817 = vunpack.c.l.b16 %v193
    %v818 = vunpack.c.h.b16 %v193
    %v819 = vunpack.c.l.b16 %v194
    %v820 = vunpack.c.h.b16 %v194
    %v821 = vunpack.c.l.b16 %v195
    %v822 = vunpack.c.h.b16 %v195
    %v823 = vunpack.c.l.b16 %v196
    %v824 = vunpack.c.h.b16 %v196
    %v825 = vunpack.c.l.b16 %v197
    %v826 = vunpack.c.h.b16 %v197
    %v827 = vunpack.c.l.b16 %v198
    %v828 = vunpack.c.h.b16 %v198
    %v829 = vunpack.c.l.b16 %v199
    %v830 = vunpack.c.h.b16 %v199
    %v831 = vunpack.c.l.b16 %v200
    %v832 = vunpack.c.h.b16 %v200
    %v833 = vunpack.c.l.b16 %v201
    %v834 = vunpack.c.h.b16 %v201
    %v835 = vunpack.c.l.b16 %v202
    %v836 = vunpack.c.h.b16 %v202
    %v837 = vunpack.c.l.b16 %v203
    %v838 = vunpack.c.h.b16 %v203
    %v839 = vunpack.c.l.b16 %v204
    %v840 = vunpack.c.h.b16 %v204
    %v841 = vunpack.c.l.b16 %v205
    %v842 = vunpack.c.h.b16 %v205
    %v843 = vunpack.c.l.b16 %v206
    %v844 = vunpack.c.h.b16 %v206
    %v845 = vunpack.c.l.b16 %v207
    %v846 = vunpack.c.h.b16 %v207
    %v847 = vunpack.c.l.b16 %v208
    %v848 = vunpack.c.h.b16 %v208
    %v849 = vunpack.c.l.b16 %v209
    %v850 = vunpack.c.h.b16 %v209
    %v851 = vunpack.c.l.b16 %v210
    %v852 = vunpack.c.h.b16 %v210
    %v853 = vunpack.c.l.b16 %v211
    %v854 = vunpack.c.h.b16 %v211
    %v855 = vunpack.c.l.b16 %v212
    %v856 = vunpack.c.h.b16 %v212
    %v857 = vunpack.c.l.b16 %v213
    %v858 = vunpack.c.h.b16 %v213
    %v859 = vunpack.c.l.b16 %v214
    %v860 = vunpack.c.h.b16 %v214
    %v861 = vunpack.c.l.b16 %v215
    %v862 = vunpack.c.h.b16 %v215
    %v863 = vunpack.c.l.b16 %v216
    %v864 = vunpack.c.h.b16 %v216
    %v865 = vunpack.c.l.b16 %v217
    %v866 = vunpack.c.h.b16 %v217
    %v867 = vunpack.c.l.b16 %v218
    %v868 = vunpack.c.h.b16 %v218
    %v869 = vunpack.c.l.b16 %v219
    %v870 = vunpack.c.h.b16 %v219
    %v871 = vunpack.c.l.b16 %v220
    %v872 = vunpack.c.h.b16 %v220
    %v873 = vunpack.c.l.b16 %v221
    %v874 = vunpack.c.h.b16 %v221
    %v875 = vunpack.c.l.b16 %v222
    %v876 = vunpack.c.h.b16 %v222
    %v877 = vunpack.c.l.b16 %v223
    %v878 = vunpack.c.h.b16 %v223
    %v879 = vunpack.c.l.b16 %v224
    %v880 = vunpack.c.h.b16 %v224
    %v881 = vunpack.c.l.b16 %v225
    %v882 = vunpack.c.h.b16 %v225
    %v883 = vunpack.c.l.b16 %v226
    %v884 = vunpack.c.h.b16 %v226
    %v885 = vunpack.c.l.b16 %v227
    %v886 = vunpack.c.h.b16 %v227
    %v887 = vunpack.c.l.b16 %v228
    %v888 = vunpack.c.h.b16 %v228
    %v889 = vunpack.c.l.b16 %v229
    %v890 = vunpack.c.h.b16 %v229
    %v891 = vunpack.c.l.b16 %v230
    %v892 = vunpack.c.h.b16 %v230
    %v893 = vunpack.c.l.b16 %v231
    %v894 = vunpack.c.h.b16 %v231
    %v895 = vunpack.c.l.b16 %v232
    %v896 = vunpack.c.h.b16 %v232
    %v897 = vunpack.c.l.b16 %v233
    %v898 = vunpack.c.h.b16 %v233
    %v899 = vunpack.c.l.b16 %v234
    %v900 = vunpack.c.h.b16 %v234
    %v901 = vunpack.c.l.b16 %v235
    %v902 = vunpack.c.h.b16 %v235
    %v903 = vunpack.c.l.b16 %v236
    %v904 = vunpack.c.h.b16 %v236
    %v905 = vunpack.c.l.b16 %v237
    %v906 = vunpack.c.h.b16 %v237
    %v907 = vunpack.c.l.b16 %v238
    %v908 = vunpack.c.h.b16 %v238
    %v909 = vunpack.c.l.b16 %v239
    %v910 = vunpack.c.h.b16 %v239
    %v911 = vunpack.c.l.b16 %v240
    %v912 = vunpack.c.h.b16 %v240
    %v913 = vunpack.c.l.b16 %v241
    %v914 = vunpack.c.h.b16 %v241
    %v915 = vunpack.c.l.b16 %v242
    %v916 = vunpack.c.h.b16 %v242
    %v917 = vunpack.c.l.b16 %v243
    %v918 = vunpack.c.h.b16 %v243
    %v919 = vunpack.c.l.b16 %v244
    %v920 = vunpack.c.h.b16 %v244
    %v921 = vunpack.c.l.b16 %v245
    %v922 = vunpack.c.h.b16 %v245
    %v923 = vunpack.c.l.b16 %v246
    %v924 = vunpack.c.h.b16 %v246
    %v925 = vunpack.c.l.b16 %v247
    %v926 = vunpack.c.h.b16 %v247
    %v927 = vunpack.c.l.b16 %v248
    %v928 = vunpack.c.h.b16 %v248
    %v929 = vunpack.c.l.b16 %v249
    %v930 = vunpack.c.h.b16 %v249
    %v931 = vunpack.c.l.b16 %v250
    %v932 = vunpack.c.h.b16 %v250
    %v933 = vunpack.c.l.b16 %v251
    %v934 = vunpack.c.h.b16 %v251
    %v935 = vunpack.c.l.b16 %v252
    %v936 = vunpack.c.h.b16 %v252
    %v937 = vunpack.c.l.b16 %v253
    %v938 = vunpack.c.h.b16 %v253
    %v939 = vunpack.c.l.b16 %v254
    %v940 = vunpack.c.h.b16 %v254
    %v941 = vunpack.c.l.b16 %v255
    %v942 = vunpack.c.h.b16 %v255
    %v943 = vunpack.c.l.b16 %v256
    %v944 = vunpack.c.h.b16 %v256
    %v945 = vunpack.c.l.b16 %v257
    %v946 = vunpack.c.h.b16 %v257
    %v947 = vunpack.c.l.b16 %v258
    %v948 = vunpack.c.h.b16 %v258
    %v949 = vunpack.c.l.b16 %v259
    %v950 = vunpack.c.h.b16 %v259
    %v951 = vunpack.c.l.b16 %v260
    %v952 = vunpack.c.h.b16 %v260
    %v953 = vunpack.c.l.b16 %v261
    %v954 = vunpack.c.h.b16 %v261
    %v955 = vunpack.c.l.b16 %v262
    %v956 = vunpack.c.h.b16 %v262
    %v957 = vunpack.c.l.b16 %v263
    %v958 = vunpack.c.h.b16 %v263
    %v959 = vunpack.c.l.b16 %v264
    %v960 = vunpack.c.h.b16 %v264
    %v961 = vunpack.c.l.b16 %v265
    %v962 = vunpack.c.h.b16 %v265
    %v963 = vunpack.c.l.b16 %v266
    %v964 = vunpack.c.h.b16 %v266
    %v965 = vunpack.c.l.b16 %v267
    %v966 = vunpack.c.h.b16 %v267
    %v967 = vunpack.c.l.b16 %v268
    %v968 = vunpack.c.h.b16 %v268
    %v969 = vunpack.c.l.b16 %v269
    %v970 = vunpack.c.h.b16 %v269
    %v971 = vunpack.c.l.b16 %v270
    %v972 = vunpack.c.h.b16 %v270
    %v973 = vunpack.c.l.b16 %v271
    %v974 = vunpack.c.h.b16 %v271
    %v975 = vunpack.c.l.b16 %v272
    %v976 = vunpack.c.h.b16 %v272
    %v977 = vunpack.c.l.b16 %v273
    %v978 = vunpack.c.h.b16 %v273
    %v979 = vunpack.c.l.b16 %v274
    %v980 = vunpack.c.h.b16 %v274
    %v981 = vunpack.c.l.b16 %v275
    %v982 = vunpack.c.h.b16 %v275
    %v983 = vunpack.c.l.b16 %v276
    %v984 = vunpack.c.h.b16 %v276
    %v985 = vunpack.c.l.b16 %v277
    %v986 = vunpack.c.h.b16 %v277
    %v987 = vunpack.c.l.b16 %v278
    %v988 = vunpack.c.h.b16 %v278
    %v989 = vunpack.c.l.b16 %v279
    %v990 = vunpack.c.h.b16 %v279
    %v991 = vunpack.c.l.b16 %v280
    %v992 = vunpack.c.h.b16 %v280
    %v993 = vunpack.c.l.b16 %v281
    %v994 = vunpack.c.h.b16 %v281
    %v995 = vunpack.c.l.b16 %v282
    %v996 = vunpack.c.h.b16 %v282
    %v997 = vunpack.c.l.b16 %v283
    %v998 = vunpack.c.h.b16 %v283
    %v999 = vunpack.c.l.b16 %v284
    %v1000 = vunpack.c.h.b16 %v284
    %v1001 = vunpack.c.l.b16 %v285
    %v1002 = vunpack.c.h.b16 %v285
    %v1003 = vunpack.c.l.b16 %v286
    %v1004 = vunpack.c.h.b16 %v286
    %v1005 = vunpack.c.l.b16 %v287
    %v1006 = vunpack.c.h.b16 %v287
    %v1007 = vunpack.c.l.b16 %v288
    %v1008 = vunpack.c.h.b16 %v288
    %v1009 = vunpack.c.l.b16 %v289
    %v1010 = vunpack.c.h.b16 %v289
    %v1011 = vunpack.c.l.b16 %v290
    %v1012 = vunpack.c.h.b16 %v290
    %v1013 = vunpack.c.l.b16 %v291
    %v1014 = vunpack.c.h.b16 %v291
    %v1015 = vunpack.c.l.b16 %v292
    %v1016 = vunpack.c.h.b16 %v292
    %v1017 = vunpack.c.l.b16 %v293
    %v1018 = vunpack.c.h.b16 %v293
    %v1019 = vunpack.c.l.b16 %v294
    %v1020 = vunpack.c.h.b16 %v294
    %v1021 = vunpack.c.l.b16 %v295
    %v1022 = vunpack.c.h.b16 %v295
    %v1023 = vunpack.c.l.b16 %v296
    %v1024 = vunpack.c.h.b16 %v296
    %v1025 = vunpack.c.l.b16 %v297
    %v1026 = vunpack.c.h.b16 %v297
    %v1027 = vunpack.c.l.b16 %v298
    %v1028 = vunpack.c.h.b16 %v298
    %v1029 = vunpack.c.l.b16 %v299
    %v1030 = vunpack.c.h.b16 %v299
    %v1031 = vunpack.c.l.b16 %v300
    %v1032 = vunpack.c.h.b16 %v300
    %v1033 = vunpack.c.l.b16 %v301
    %v1034 = vunpack.c.h.b16 %v301
    %v1035 = vunpack.c.l.b16 %v302
    %v1036 = vunpack.c.h.b16 %v302
    %v1037 = vunpack.c.l.b16 %v303
    %v1038 = vunpack.c.h.b16 %v303
    %v1039 = vunpack.c.l.b16 %v304
    %v1040 = vunpack.c.h.b16 %v304
    %v1041 = vunpack.c.l.b16 %v305
    %v1042 = vunpack.c.h.b16 %v305
    %v1043 = vunpack.c.l.b16 %v306
    %v1044 = vunpack.c.h.b16 %v306
    %v1045 = vunpack.c.l.b16 %v307
    %v1046 = vunpack.c.h.b16 %v307
    %v1047 = vunpack.c.l.b16 %v308
    %v1048 = vunpack.c.h.b16 %v308
    %v1049 = vunpack.c.l.b16 %v309
    %v1050 = vunpack.c.h.b16 %v309
    %v1051 = vunpack.c.l.b16 %v310
    %v1052 = vunpack.c.h.b16 %v310
    %v1053 = vunpack.c.l.b16 %v311
    %v1054 = vunpack.c.h.b16 %v311
    %v1055 = vunpack.c.l.b16 %v312
    %v1056 = vunpack.c.h.b16 %v312
    %v1057 = vunpack.c.l.b16 %v313
    %v1058 = vunpack.c.h.b16 %v313
    %v1059 = vunpack.c.l.b16 %v314
    %v1060 = vunpack.c.h.b16 %v314
    %v1061 = vunpack.c.l.b16 %v315
    %v1062 = vunpack.c.h.b16 %v315
    %v1063 = vunpack.c.l.b16 %v316
    %v1064 = vunpack.c.h.b16 %v316
    %v1065 = vunpack.c.l.b16 %v317
    %v1066 = vunpack.c.h.b16 %v317
    %v1067 = vunpack.c.l.b16 %v318
    %v1068 = vunpack.c.h.b16 %v318
    %v1069 = vunpack.c.l.b16 %v319
    %v1070 = vunpack.c.h.b16 %v319
    %v1071 = vunpack.c.l.b16 %v320
    %v1072 = vunpack.c.h.b16 %v320
    %v1073 = vunpack.c.l.b16 %v321
    %v1074 = vunpack.c.h.b16 %v321
    %v1075 = vunpack.c.l.b16 %v322
    %v1076 = vunpack.c.h.b16 %v322
    %v1077 = vunpack.c.l.b16 %v323
    %v1078 = vunpack.c.h.b16 %v323
    %v1079 = vunpack.c.l.b16 %v324
    %v1080 = vunpack.c.h.b16 %v324
    %v1081 = vunpack.c.l.b16 %v325
    %v1082 = vunpack.c.h.b16 %v325
    %v1083 = vunpack.c.l.b16 %v326
    %v1084 = vunpack.c.h.b16 %v326
    %v1085 = vunpack.c.l.b16 %v327
    %v1086 = vunpack.c.h.b16 %v327
    %v1087 = vunpack.c.l.b16 %v328
    %v1088 = vunpack.c.h.b16 %v328
    %v1089 = vunpack.c.l.b16 %v329
    %v1090 = vunpack.c.h.b16 %v329
    %v1091 = vunpack.c.l.b16 %v330
    %v1092 = vunpack.c.h.b16 %v330
    %v1093 = vunpack.c.l.b16 %v331
    %v1094 = vunpack.c.h.b16 %v331
    %v1095 = vunpack.c.l.b16 %v332
    %v1096 = vunpack.c.h.b16 %v332
    %v1097 = vunpack.c.l.b16 %v333
    %v1098 = vunpack.c.h.b16 %v333
    %v1099 = vunpack.c.l.b16 %v334
    %v1100 = vunpack.c.h.b16 %v334
    %v1101 = vunpack.c.l.b16 %v335
    %v1102 = vunpack.c.h.b16 %v335
    %v1103 = vunpack.c.l.b16 %v336
    %v1104 = vunpack.c.h.b16 %v336
    %v1105 = vunpack.c.l.b16 %v337
    %v1106 = vunpack.c.h.b16 %v337
    %v1107 = vunpack.c.l.b16 %v338
    %v1108 = vunpack.c.h.b16 %v338
    %v1109 = vunpack.c.l.b16 %v339
    %v1110 = vunpack.c.h.b16 %v339
    %v1111 = vunpack.c.l.b16 %v340
    %v1112 = vunpack.c.h.b16 %v340
    %v1113 = vunpack.c.l.b16 %v341
    %v1114 = vunpack.c.h.b16 %v341
    %v1115 = vunpack.c.l.b16 %v342
    %v1116 = vunpack.c.h.b16 %v342
    %v1117 = vunpack.c.l.b16 %v343
    %v1118 = vunpack.c.h.b16 %v343
    %v1119 = vunpack.c.l.b16 %v344
    %v1120 = vunpack.c.h.b16 %v344
    %v1121 = vunpack.c.l.b16 %v345
    %v1122 = vunpack.c.h.b16 %v345
    %v1123 = vunpack.c.l.b16 %v346
    %v1124 = vunpack.c.h.b16 %v346
    %v1125 = vunpack.c.l.b16 %v347
    %v1126 = vunpack.c.h.b16 %v347
    %v1127 = vunpack.c.l.b16 %v348
    %v1128 = vunpack.c.h.b16 %v348
    %v1129 = vunpack.c.l.b16 %v349
    %v1130 = vunpack.c.h.b16 %v349
    %v1131 = vunpack.c.l.b16 %v350
    %v1132 = vunpack.c.h.b16 %v350
    %v1133 = vunpack.c.l.b16 %v351
    %v1134 = vunpack.c.h.b16 %v351
    %v1135 = vunpack.c.l.b16 %v352
    %v1136 = vunpack.c.h.b16 %v352
    %v1137 = vunpack.c.l.b16 %v353
    %v1138 = vunpack.c.h.b16 %v353
    %v1139 = vunpack.c.l.b16 %v354
    %v1140 = vunpack.c.h.b16 %v354
    %v1141 = vunpack.c.l.b16 %v355
    %v1142 = vunpack.c.h.b16 %v355
    %v1143 = vunpack.c.l.b16 %v356
    %v1144 = vunpack.c.h.b16 %v356
    %v1145 = vunpack.c.l.b16 %v357
    %v1146 = vunpack.c.h.b16 %v357
    %v1147 = vunpack.c.l.b16 %v358
    %v1148 = vunpack.c.h.b16 %v358
    %v1149 = vunpack.c.l.b16 %v359
    %v1150 = vunpack.c.h.b16 %v359
    %v1151 = vunpack.c.l.b16 %v360
    %v1152 = vunpack.c.h.b16 %v360
    %v1153 = vunpack.c.l.b16 %v361
    %v1154 = vunpack.c.h.b16 %v361
    %v1155 = vunpack.c.l.b16 %v362
    %v1156 = vunpack.c.h.b16 %v362
    %v1157 = vunpack.c.l.b16 %v363
    %v1158 = vunpack.c.h.b16 %v363
    %v1159 = vunpack.c.l.b16 %v364
    %v1160 = vunpack.c.h.b16 %v364
    %v1161 = vunpack.c.l.b16 %v365
    %v1162 = vunpack.c.h.b16 %v365
    %v1163 = vunpack.c.l.b16 %v366
    %v1164 = vunpack.c.h.b16 %v366
    %v1165 = vunpack.c.l.b16 %v367
    %v1166 = vunpack.c.h.b16 %v367
    %v1167 = vunpack.c.l.b16 %v368
    %v1168 = vunpack.c.h.b16 %v368
    %v1169 = vunpack.c.l.b16 %v369
    %v1170 = vunpack.c.h.b16 %v369
    %v1171 = vunpack.c.l.b16 %v370
    %v1172 = vunpack.c.h.b16 %v370
    %v1173 = vunpack.c.l.b16 %v371
    %v1174 = vunpack.c.h.b16 %v371
    %v1175 = vunpack.c.l.b16 %v372
    %v1176 = vunpack.c.h.b16 %v372
    %v1177 = vunpack.c.l.b16 %v373
    %v1178 = vunpack.c.h.b16 %v373
    %v1179 = vunpack.c.l.b16 %v374
    %v1180 = vunpack.c.h.b16 %v374
    %v1181 = vunpack.c.l.b16 %v375
    %v1182 = vunpack.c.h.b16 %v375
    %v1183 = vunpack.c.l.b16 %v376
    %v1184 = vunpack.c.h.b16 %v376
    %v1185 = vunpack.c.l.b16 %v377
    %v1186 = vunpack.c.h.b16 %v377
    %v1187 = vunpack.c.l.b16 %v378
    %v1188 = vunpack.c.h.b16 %v378
    %v1189 = vunpack.c.l.b16 %v379
    %v1190 = vunpack.c.h.b16 %v379
    %v1191 = vunpack.c.l.b16 %v380
    %v1192 = vunpack.c.h.b16 %v380
    %v1193 = vunpack.c.l.b16 %v381
    %v1194 = vunpack.c.h.b16 %v381
    %v1195 = vunpack.c.l.b16 %v382
    %v1196 = vunpack.c.h.b16 %v382
    %v1197 = vunpack.c.l.b16 %v383
    %v1198 = vunpack.c.h.b16 %v383
    %v1199 = vunpack.c.l.b16 %v384
    %v1200 = vunpack.c.h.b16 %v384
    %v1201 = vunpack.c.l.b16 %v385
    %v1202 = vunpack.c.h.b16 %v385
    %v1203 = vunpack.c.l.b16 %v386
    %v1204 = vunpack.c.h.b16 %v386
    %v1205 = vunpack.c.l.b16 %v387
    %v1206 = vunpack.c.h.b16 %v387
    %v1207 = vunpack.c.l.b16 %v388
    %v1208 = vunpack.c.h.b16 %v388
    %v1209 = vunpack.c.l.b16 %v389
    %v1210 = vunpack.c.h.b16 %v389
    %v1211 = vunpack.c.l.b16 %v390
    %v1212 = vunpack.c.h.b16 %v390
    %v1213 = vunpack.c.l.b16 %v391
    %v1214 = vunpack.c.h.b16 %v391
    %v1215 = vunpack.c.l.b16 %v392
    %v1216 = vunpack.c.h.b16 %v392
    %v1217 = vunpack.c.l.b16 %v393
    %v1218 = vunpack.c.h.b16 %v393
    %v1219 = vunpack.c.l.b16 %v394
    %v1220 = vunpack.c.h.b16 %v394
    %v1221 = vunpack.c.l.b16 %v395
    %v1222 = vunpack.c.h.b16 %v395
    %v1223 = vunpack.c.l.b16 %v396
    %v1224 = vunpack.c.h.b16 %v396
    %v1225 = vunpack.c.l.b16 %v397
    %v1226 = vunpack.c.h.b16 %v397
    %v1227 = vpack.c.b16 %v731, %v727
    %v1228 = vpack.c.b16 %v732, %v728
    %v1229 = vpack.c.b16 %v733, %v729
    %v1230 = vpack.c.b16 %v734, %v730
    %v1231 = vpack.c.b16 %v739, %v735
    %v1232 = vpack.c.b16 %v740, %v736
    %v1233 = vpack.c.b16 %v741, %v737
    %v1234 = vpack.c.b16 %v742, %v738
    %v1235 = vpack.c.b16 %v747, %v743
    %v1236 = vpack.c.b16 %v748, %v744
    %v1237 = vpack.c.b16 %v749, %v745
    %v1238 = vpack.c.b16 %v750, %v746
    %v1239 = vpack.c.b16 %v755, %v751
    %v1240 = vpack.c.b16 %v756, %v752
    %v1241 = vpack.c.b16 %v757, %v753
    %v1242 = vpack.c.b16 %v758, %v754
    %v1243 = vpack.c.b16 %v763, %v759
    %v1244 = vpack.c.b16 %v764, %v760
    %v1245 = vpack.c.b16 %v765, %v761
    %v1246 = vpack.c.b16 %v766, %v762
    %v1247 = vpack.c.b16 %v771, %v767
    %v1248 = vpack.c.b16 %v772, %v768
    %v1249 = vpack.c.b16 %v773, %v769
    %v1250 = vpack.c.b16 %v774, %v770
    %v1251 = vpack.c.b16 %v779, %v775
    %v1252 = vpack.c.b16 %v780, %v776
    %v1253 = vpack.c.b16 %v781, %v777
    %v1254 = vpack.c.b16 %v782, %v778
    %v1255 = vpack.c.b16 %v787, %v783
    %v1256 = vpack.c.b16 %v788, %v784
    %v1257 = vpack.c.b16 %v789, %v785
    %v1258 = vpack.c.b16 %v790, %v786
    %v1259 = vpack.c.b16 %v795, %v791
    %v1260 = vpack.c.b16 %v796, %v792
    %v1261 = vpack.c.b16 %v797, %v793
    %v1262 = vpack.c.b16 %v798, %v794
    %v1263 = vpack.c.b16 %v803, %v799
    %v1264 = vpack.c.b16 %v804, %v800
    %v1265 = vpack.c.b16 %v805, %v801
    %v1266 = vpack.c.b16 %v806, %v802
    %v1267 = vpack.c.b16 %v811, %v807
    %v1268 = vpack.c.b16 %v812, %v808
    %v1269 = vpack.c.b16 %v813, %v809
    %v1270 = vpack.c.b16 %v814, %v810
    %v1271 = vpack.c.b16 %v819, %v815
    %v1272 = vpack.c.b16 %v820, %v816
    %v1273 = vpack.c.b16 %v821, %v817
    %v1274 = vpack.c.b16 %v822, %v818
    %v1275 = vpack.c.b16 %v827, %v823
    %v1276 = vpack.c.b16 %v828, %v824
    %v1277 = vpack.c.b16 %v829, %v825
    %v1278 = vpack.c.b16 %v830, %v826
    %v1279 = vpack.c.b16 %v835, %v831
    %v1280 = vpack.c.b16 %v836, %v832
    %v1281 = vpack.c.b16 %v837, %v833
    %v1282 = vpack.c.b16 %v838, %v834
    %v1283 = vpack.c.b16 %v843, %v839
    %v1284 = vpack.c.b16 %v844, %v840
    %v1285 = vpack.c.b16 %v845, %v841
    %v1286 = vpack.c.b16 %v846, %v842
    %v1287 = vpack.c.b16 %v851, %v847
    %v1288 = vpack.c.b16 %v852, %v848
    %v1289 = vpack.c.b16 %v853, %v849
    %v1290 = vpack.c.b16 %v854, %v850
    %v1291 = vpack.c.b16 %v859, %v855
    %v1292 = vpack.c.b16 %v860, %v856
    %v1293 = vpack.c.b16 %v861, %v857
    %v1294 = vpack.c.b16 %v862, %v858
    %v1295 = vpack.c.b16 %v867, %v863
    %v1296 = vpack.c.b16 %v868, %v864
    %v1297 = vpack.c.b16 %v869, %v865
    %v1298 = vpack.c.b16 %v870, %v866
    %v1299 = vpack.c.b16 %v875, %v871
    %v1300 = vpack.c.b16 %v876, %v872
    %v1301 = vpack.c.b16 %v877, %v873
    %v1302 = vpack.c.b16 %v878, %v874
    %v1303 = vpack.c.b16 %v883, %v879
    %v1304 = vpack.c.b16 %v884, %v880
    %v1305 = vpack.c.b16 %v885, %v881
    %v1306 = vpack.c.b16 %v886, %v882
    %v1307 = vpack.c.b16 %v891, %v887
    %v1308 = vpack.c.b16 %v892, %v888
    %v1309 = vpack.c.b16 %v893, %v889
    %v1310 = vpack.c.b16 %v894, %v890
    %v1311 = vpack.c.b16 %v899, %v895
    %v1312 = vpack.c.b16 %v900, %v896
    %v1313 = vpack.c.b16 %v901, %v897
    %v1314 = vpack.c.b16 %v902, %v898
    %v1315 = vpack.c.b16 %v907, %v903
    %v1316 = vpack.c.b16 %v908, %v904
    %v1317 = vpack.c.b16 %v909, %v905
    %v1318 = vpack.c.b16 %v910, %v906
    %v1319 = vpack.c.b16 %v915, %v911
    %v1320 = vpack.c.b16 %v916, %v912
    %v1321 = vpack.c.b16 %v917, %v913
    %v1322 = vpack.c.b16 %v918, %v914
    %v1323 = vpack.c.b16 %v923, %v919
    %v1324 = vpack.c.b16 %v924, %v920
    %v1325 = vpack.c.b16 %v925, %v921
    %v1326 = vpack.c.b16 %v926, %v922
    %v1327 = vpack.c.b16 %v931, %v927
    %v1328 = vpack.c.b16 %v932, %v928
    %v1329 = vpack.c.b16 %v933, %v929
    %v1330 = vpack.c.b16 %v934, %v930
    %v1331 = vpack.c.b16 %v939, %v935
    %v1332 = vpack.c.b16 %v940, %v936
    %v1333 = vpack.c.b16 %v941, %v937
    %v1334 = vpack.c.b16 %v942, %v938
    %v1335 = vpack.c.b16 %v947, %v943
    %v1336 = vpack.c.b16 %v948, %v944
    %v1337 = vpack.c.b16 %v949, %v945
    %v1338 = vpack.c.b16 %v950, %v946
    %v1339 = vpack.c.b16 %v955, %v951
    %v1340 = vpack.c.b16 %v956, %v952
    %v1341 = vpack.c.b16 %v957, %v953
    %v1342 = vpack.c.b16 %v958, %v954
    %v1343 = vpack.c.b16 %v963, %v959
    %v1344 = vpack.c.b16 %v964, %v960
    %v1345 = vpack.c.b16 %v965, %v961
    %v1346 = vpack.c.b16 %v966, %v962
    %v1347 = vpack.c.b16 %v971, %v967
    %v1348 = vpack.c.b16 %v972, %v968
    %v1349 = vpack.c.b16 %v973, %v969
    %v1350 = vpack.c.b16 %v974, %v970
    %v1351 = vpack.c.b16 %v979, %v975
    %v1352 = vpack.c.b16 %v980, %v976
    %v1353 = vpack.c.b16 %v981, %v977
    %v1354 = vpack.c.b16 %v982, %v978
    %v1355 = vpack.c.b16 %v987, %v983
    %v1356 = vpack.c.b16 %v988, %v984
    %v1357 = vpack.c.b16 %v989, %v985
    %v1358 = vpack.c.b16 %v990, %v986
    %v1359 = vpack.c.b16 %v995, %v991
    %v1360 = vpack.c.b16 %v996, %v992
    %v1361 = vpack.c.b16 %v997, %v993
    %v1362 = vpack.c.b16 %v998, %v994
    %v1363 = vpack.c.b16 %v1003, %v999
    %v1364 = vpack.c.b16 %v1004, %v1000
    %v1365 = vpack.c.b16 %v1005, %v1001
    %v1366 = vpack.c.b16 %v1006, %v1002
    %v1367 = vpack.c.b16 %v1011, %v1007
    %v1368 = vpack.c.b16 %v1012, %v1008
    %v1369 = vpack.c.b16 %v1013, %v1009
    %v1370 = vpack.c.b16 %v1014, %v1010
    %v1371 = vpack.c.b16 %v1019, %v1015
    %v1372 = vpack.c.b16 %v1020, %v1016
    %v1373 = vpack.c.b16 %v1021, %v1017
    %v1374 = vpack.c.b16 %v1022, %v1018
    %v1375 = vpack.c.b16 %v1027, %v1023
    %v1376 = vpack.c.b16 %v1028, %v1024
    %v1377 = vpack.c.b16 %v1029, %v1025
    %v1378 = vpack.c.b16 %v1030, %v1026
    %v1379 = vpack.c.b16 %v1035, %v1031
    %v1380 = vpack.c.b16 %v1036, %v1032
    %v1381 = vpack.c.b16 %v1037, %v1033
    %v1382 = vpack.c.b16 %v1038, %v1034
    %v1383 = vpack.c.b16 %v1043, %v1039
    %v1384 = vpack.c.b16 %v1044, %v1040
    %v1385 = vpack.c.b16 %v1045, %v1041
    %v1386 = vpack.c.b16 %v1046, %v1042
    %v1387 = vpack.c.b16 %v1051, %v1047
    %v1388 = vpack.c.b16 %v1052, %v1048
    %v1389 = vpack.c.b16 %v1053, %v1049
    %v1390 = vpack.c.b16 %v1054, %v1050
    %v1391 = vpack.c.b16 %v1059, %v1055
    %v1392 = vpack.c.b16 %v1060, %v1056
    %v1393 = vpack.c.b16 %v1061, %v1057
    %v1394 = vpack.c.b16 %v1062, %v1058
    %v1395 = vpack.c.b16 %v1067, %v1063
    %v1396 = vpack.c.b16 %v1068, %v1064
    %v1397 = vpack.c.b16 %v1069, %v1065
    %v1398 = vpack.c.b16 %v1070, %v1066
    %v1399 = vpack.c.b16 %v1075, %v1071
    %v1400 = vpack.c.b16 %v1076, %v1072
    %v1401 = vpack.c.b16 %v1077, %v1073
    %v1402 = vpack.c.b16 %v1078, %v1074
    %v1403 = vpack.c.b16 %v1083, %v1079
    %v1404 = vpack.c.b16 %v1084, %v1080
    %v1405 = vpack.c.b16 %v1085, %v1081
    %v1406 = vpack.c.b16 %v1086, %v1082
    %v1407 = vpack.c.b16 %v1091, %v1087
    %v1408 = vpack.c.b16 %v1092, %v1088
    %v1409 = vpack.c.b16 %v1093, %v1089
    %v1410 = vpack.c.b16 %v1094, %v1090
    %v1411 = vpack.c.b16 %v1099, %v1095
    %v1412 = vpack.c.b16 %v1100, %v1096
    %v1413 = vpack.c.b16 %v1101, %v1097
    %v1414 = vpack.c.b16 %v1102, %v1098
    %v1415 = vpack.c.b16 %v1107, %v1103
    %v1416 = vpack.c.b16 %v1108, %v1104
    %v1417 = vpack.c.b16 %v1109, %v1105
    %v1418 = vpack.c.b16 %v1110, %v1106
    %v1419 = vpack.c.b16 %v1115, %v1111
    %v1420 = vpack.c.b16 %v1116, %v1112
    %v1421 = vpack.c.b16 %v1117, %v1113
    %v1422 = vpack.c.b16 %v1118, %v1114
    %v1423 = vpack.c.b16 %v1123, %v1119
    %v1424 = vpack.c.b16 %v1124, %v1120
    %v1425 = vpack.c.b16 %v1125, %v1121
    %v1426 = vpack.c.b16 %v1126, %v1122
    %v1427 = vpack.c.b16 %v1131, %v1127
    %v1428 = vpack.c.b16 %v1132, %v1128
    %v1429 = vpack.c.b16 %v1133, %v1129
    %v1430 = vpack.c.b16 %v1134, %v1130
    %v1431 = vpack.c.b16 %v1139, %v1135
    %v1432 = vpack.c.b16 %v1140, %v1136
    %v1433 = vpack.c.b16 %v1141, %v1137
    %v1434 = vpack.c.b16 %v1142, %v1138
    %v1435 = vpack.c.b16 %v1147, %v1143
    %v1436 = vpack.c.b16 %v1148, %v1144
    %v1437 = vpack.c.b16 %v1149, %v1145
    %v1438 = vpack.c.b16 %v1150, %v1146
    %v1439 = vpack.c.b16 %v1155, %v1151
    %v1440 = vpack.c.b16 %v1156, %v1152
    %v1441 = vpack.c.b16 %v1157, %v1153
    %v1442 = vpack.c.b16 %v1158, %v1154
    %v1443 = vpack.c.b16 %v1163, %v1159
    %v1444 = vpack.c.b16 %v1164, %v1160
    %v1445 = vpack.c.b16 %v1165, %v1161
    %v1446 = vpack.c.b16 %v1166, %v1162
    %v1447 = vpack.c.b16 %v1171, %v1167
    %v1448 = vpack.c.b16 %v1172, %v1168
    %v1449 = vpack.c.b16 %v1173, %v1169
    %v1450 = vpack.c.b16 %v1174, %v1170
    %v1451 = vpack.c.b16 %v1179, %v1175
    %v1452 = vpack.c.b16 %v1180, %v1176
    %v1453 = vpack.c.b16 %v1181, %v1177
    %v1454 = vpack.c.b16 %v1182, %v1178
    %v1455 = vpack.c.b16 %v1187, %v1183
    %v1456 = vpack.c.b16 %v1188, %v1184
    %v1457 = vpack.c.b16 %v1189, %v1185
    %v1458 = vpack.c.b16 %v1190, %v1186
    %v1459 = vpack.c.b16 %v1195, %v1191
    %v1460 = vpack.c.b16 %v1196, %v1192
    %v1461 = vpack.c.b16 %v1197, %v1193
    %v1462 = vpack.c.b16 %v1198, %v1194
    %v1463 = vpack.c.b16 %v1203, %v1199
    %v1464 = vpack.c.b16 %v1204, %v1200
    %v1465 = vpack.c.b16 %v1205, %v1201
    %v1466 = vpack.c.b16 %v1206, %v1202
    %v1467 = vpack.c.b16 %v1211, %v1207
    %v1468 = vpack.c.b16 %v1212, %v1208
    %v1469 = vpack.c.b16 %v1213, %v1209
    %v1470 = vpack.c.b16 %v1214, %v1210
    %v1471 = vpack.c.b16 %v1219, %v1215
    %v1472 = vpack.c.b16 %v1220, %v1216
    %v1473 = vpack.c.b16 %v1221, %v1217
    %v1474 = vpack.c.b16 %v1222, %v1218
    %v1475 = vpack.c.b16 %v1223, %v1223
    %v1476 = vpack.c.b16 %v1224, %v1224
    %v1477 = vpack.c.b16 %v1225, %v1225
    %v1478 = vpack.c.b16 %v1226, %v1226
    %vm1727 = vcmask 850944
    %v1729 = vsel %vm1727, %v469, 0
    %vm1731 = vcmask 1043456
    %v1733 = vsel %vm1731, %v1475, 0
    %v1736 = vsel %vm1731, %v1476, 0
    %v1739 = vsel %vm1731, %v1477, 0
    %v1742 = vsel %vm1731, %v1478, 0
    %1744 = vmatprep.subr.bf16.mxu0 %v1228
    %1745 = vmatpush1.bf16.msra.mxu0 %v1227
    %1746 = vmatprep.subr.bf16.mxu0 %v1232
    %1747 = vmatpush1.bf16.msra.mxu0 %v1231
    %1748 = vmatprep.subr.bf16.mxu0 %v1236
    %1749 = vmatpush1.bf16.msra.mxu0 %v1235
    %1750 = vmatprep.subr.bf16.mxu0 %v1240
    %1751 = vmatpush1.bf16.msra.mxu0 %v1239
    %1752 = vmatprep.subr.bf16.mxu0 %v1244
    %1753 = vmatpush1.bf16.msra.mxu0 %v1243
    %1754 = vmatprep.subr.bf16.mxu0 %v1248
    %1755 = vmatpush1.bf16.msra.mxu0 %v1247
    %1756 = vmatprep.subr.bf16.mxu0 %v1252
    %1757 = vmatpush1.bf16.msra.mxu0 %v1251
    %1758 = vmatprep.subr.bf16.mxu0 %v1256
    %1759 = vmatpush1.bf16.msra.mxu0 %v1255
    %1760 = vmatprep.subr.bf16.mxu0 %v1260
    %1761 = vmatpush1.bf16.msra.mxu0 %v1259
    %1762 = vmatprep.subr.bf16.mxu0 %v1264
    %1763 = vmatpush1.bf16.msra.mxu0 %v1263
    %1764 = vmatprep.subr.bf16.mxu0 %v1268
    %1765 = vmatpush1.bf16.msra.mxu0 %v1267
    %1766 = vmatprep.subr.bf16.mxu0 %v1272
    %1767 = vmatpush1.bf16.msra.mxu0 %v1271
    %1768 = vmatprep.subr.bf16.mxu0 %v1276
    %1769 = vmatpush1.bf16.msra.mxu0 %v1275
    %1770 = vmatprep.subr.bf16.mxu0 %v1280
    %1771 = vmatpush1.bf16.msra.mxu0 %v1279
    %1772 = vmatprep.subr.bf16.mxu0 %v1284
    %1773 = vmatpush1.bf16.msra.mxu0 %v1283
    %1774 = vmatprep.subr.bf16.mxu0 %v1288
    %1775 = vmatpush1.bf16.msra.mxu0 %v1287
    %1776 = vmatprep.mubr.bf16.mxu0 %v458
    %1777 = vmatmul.mubr.bf16.gmra.mrb[0].mxu0 %v444
    %v1778 = vpop.f32.mrb[0].mxu0
    %v1779 = vadd.f32 %v403, %v1778
    %v1780 = vpop.f32.mrb[0].mxu0
    %v1781 = vadd.f32 %v407, %v1780
    %v1782 = vpop.f32.mrb[0].mxu0
    %v1783 = vpop.f32.mrb[0].mxu0
    %1784 = vdwg.mxu0
    %1785 = vmatprep.subr.bf16.mxu0 %v1292
    %1786 = vmatpush1.bf16.msra.mxu0 %v1291
    %1787 = vmatprep.subr.bf16.mxu0 %v1296
    %1788 = vmatpush1.bf16.msra.mxu0 %v1295
    %1789 = vmatprep.subr.bf16.mxu0 %v1300
    %1790 = vmatpush1.bf16.msra.mxu0 %v1299
    %1791 = vmatprep.subr.bf16.mxu0 %v1304
    %1792 = vmatpush1.bf16.msra.mxu0 %v1303
    %1793 = vmatprep.subr.bf16.mxu0 %v1308
    %1794 = vmatpush1.bf16.msra.mxu0 %v1307
    %1795 = vmatprep.subr.bf16.mxu0 %v1312
    %1796 = vmatpush1.bf16.msra.mxu0 %v1311
    %1797 = vmatprep.subr.bf16.mxu0 %v1316
    %1798 = vmatpush1.bf16.msra.mxu0 %v1315
    %1799 = vmatprep.subr.bf16.mxu0 %v1320
    %1800 = vmatpush1.bf16.msra.mxu0 %v1319
    %1801 = vmatprep.subr.bf16.mxu0 %v1324
    %1802 = vmatpush1.bf16.msra.mxu0 %v1323
    %1803 = vmatprep.subr.bf16.mxu0 %v1328
    %1804 = vmatpush1.bf16.msra.mxu0 %v1327
    %1805 = vmatprep.subr.bf16.mxu0 %v1332
    %1806 = vmatpush1.bf16.msra.mxu0 %v1331
    %1807 = vmatprep.subr.bf16.mxu0 %v1336
    %1808 = vmatpush1.bf16.msra.mxu0 %v1335
    %1809 = vmatprep.subr.bf16.mxu0 %v1340
    %1810 = vmatpush1.bf16.msra.mxu0 %v1339
    %1811 = vmatprep.subr.bf16.mxu0 %v1344
    %1812 = vmatpush1.bf16.msra.mxu0 %v1343
    %1813 = vmatprep.subr.bf16.mxu0 %v1348
    %1814 = vmatpush1.bf16.msra.mxu0 %v1347
    %1815 = vmatprep.subr.bf16.mxu0 %v1352
    %1816 = vmatpush1.bf16.msra.mxu0 %v1351
    %1817 = vmatprep.mubr.bf16.mxu0 %v468
    %1818 = vmatmul.mubr.bf16.gmra.mrb[0].mxu0 %v466
    %v1819 = vpop.f32.mrb[0].mxu0
    %v1820 = vadd.f32 %v1779, %v1819
    %v1821 = vpop.f32.mrb[0].mxu0
    %v1822 = vadd.f32 %v1781, %v1821
    %v1823 = vpop.f32.mrb[0].mxu0
    %v1824 = vpop.f32.mrb[0].mxu0
    %1825 = vdwg.mxu0
    %1826 = vmatprep.subr.bf16.mxu0 %v1356
    %1827 = vmatpush1.bf16.msra.mxu0 %v1355
    %1828 = vmatprep.subr.bf16.mxu0 %v1360
    %1829 = vmatpush1.bf16.msra.mxu0 %v1359
    %1830 = vmatprep.subr.bf16.mxu0 %v1364
    %1831 = vmatpush1.bf16.msra.mxu0 %v1363
    %1832 = vmatprep.subr.bf16.mxu0 %v1368
    %1833 = vmatpush1.bf16.msra.mxu0 %v1367
    %1834 = vmatprep.subr.bf16.mxu0 %v1372
    %1835 = vmatpush1.bf16.msra.mxu0 %v1371
    %1836 = vmatprep.subr.bf16.mxu0 %v1376
    %1837 = vmatpush1.bf16.msra.mxu0 %v1375
    %1838 = vmatprep.subr.bf16.mxu0 %v1380
    %1839 = vmatpush1.bf16.msra.mxu0 %v1379
    %1840 = vmatprep.subr.bf16.mxu0 %v1384
    %1841 = vmatpush1.bf16.msra.mxu0 %v1383
    %1842 = vmatprep.subr.bf16.mxu0 %v1388
    %1843 = vmatpush1.bf16.msra.mxu0 %v1387
    %1844 = vmatprep.subr.bf16.mxu0 %v1392
    %1845 = vmatpush1.bf16.msra.mxu0 %v1391
    %1846 = vmatprep.subr.bf16.mxu0 %v1396
    %1847 = vmatpush1.bf16.msra.mxu0 %v1395
    %1848 = vmatprep.subr.bf16.mxu0 %v1400
    %1849 = vmatpush1.bf16.msra.mxu0 %v1399
    %1850 = vmatprep.subr.bf16.mxu0 %v1404
    %1851 = vmatpush1.bf16.msra.mxu0 %v1403
    %1852 = vmatprep.subr.bf16.mxu0 %v1408
    %1853 = vmatpush1.bf16.msra.mxu0 %v1407
    %1854 = vmatprep.subr.bf16.mxu0 %v1412
    %1855 = vmatpush1.bf16.msra.mxu0 %v1411
    %1856 = vmatprep.subr.bf16.mxu0 %v1416
    %1857 = vmatpush1.bf16.msra.mxu0 %v1415
    %1858 = vmatprep.mubr.bf16.mxu0 %v465
    %1859 = vmatmul.mubr.bf16.gmra.mrb[0].mxu0 %v451
    %v1860 = vpop.f32.mrb[0].mxu0
    %v1861 = vadd.f32 %v1820, %v1860
    %v1862 = vpop.f32.mrb[0].mxu0
    %v1863 = vadd.f32 %v1822, %v1862
    %v1864 = vpop.f32.mrb[0].mxu0
    %v1865 = vpop.f32.mrb[0].mxu0
    %1866 = vdwg.mxu0
    %1867 = vmatprep.subr.bf16.mxu0 %v1420
    %1868 = vmatpush1.bf16.msra.mxu0 %v1419
    %1869 = vmatprep.subr.bf16.mxu0 %v1424
    %1870 = vmatpush1.bf16.msra.mxu0 %v1423
    %1871 = vmatprep.subr.bf16.mxu0 %v1428
    %1872 = vmatpush1.bf16.msra.mxu0 %v1427
    %1873 = vmatprep.subr.bf16.mxu0 %v1432
    %1874 = vmatpush1.bf16.msra.mxu0 %v1431
    %1875 = vmatprep.subr.bf16.mxu0 %v1436
    %1876 = vmatpush1.bf16.msra.mxu0 %v1435
    %1877 = vmatprep.subr.bf16.mxu0 %v1440
    %1878 = vmatpush1.bf16.msra.mxu0 %v1439
    %1879 = vmatprep.subr.bf16.mxu0 %v1444
    %1880 = vmatpush1.bf16.msra.mxu0 %v1443
    %1881 = vmatprep.subr.bf16.mxu0 %v1448
    %1882 = vmatpush1.bf16.msra.mxu0 %v1447
    %1883 = vmatprep.subr.bf16.mxu0 %v1452
    %1884 = vmatpush1.bf16.msra.mxu0 %v1451
    %1885 = vmatprep.subr.bf16.mxu0 %v1456
    %1886 = vmatpush1.bf16.msra.mxu0 %v1455
    %1887 = vmatprep.subr.bf16.mxu0 %v1460
    %1888 = vmatpush1.bf16.msra.mxu0 %v1459
    %1889 = vmatprep.subr.bf16.mxu0 %v1464
    %1890 = vmatpush1.bf16.msra.mxu0 %v1463
    %1891 = vmatprep.subr.bf16.mxu0 %v1468
    %1892 = vmatpush1.bf16.msra.mxu0 %v1467
    %1893 = vmatprep.subr.bf16.mxu0 %v1472
    %1894 = vmatpush1.bf16.msra.mxu0 %v1471
    %1895 = vmatprep.subr.bf16.mxu0 %v1736
    %1896 = vmatpush1.bf16.msra.mxu0 %v1733
    %1897 = vmatprep.subr.bf16.mxu0 0
    %1898 = vmatpush1.bf16.msra.mxu0 0
    %1899 = vmatprep.mubr.bf16.mxu0 %v1729
    %1900 = vmatmul.mubr.bf16.gmra.mrb[0].mxu0 %v467
    %v1901 = vpop.f32.mrb[0].mxu0
    %v1902 = vadd.f32 %v1861, %v1901
    %v1903 = vpop.f32.mrb[0].mxu0
    %v1904 = vadd.f32 %v1863, %v1903
    %v1905 = vpop.f32.mrb[0].mxu0
    %v1906 = vpop.f32.mrb[0].mxu0
    %1907 = vdwg.mxu0
    %1908 = vmatprep.subr.bf16.mxu0 %v1230
    %1909 = vmatpush1.bf16.msra.mxu0 %v1229
    %1910 = vmatprep.subr.bf16.mxu0 %v1234
    %1911 = vmatpush1.bf16.msra.mxu0 %v1233
    %1912 = vmatprep.subr.bf16.mxu0 %v1238
    %1913 = vmatpush1.bf16.msra.mxu0 %v1237
    %1914 = vmatprep.subr.bf16.mxu0 %v1242
    %1915 = vmatpush1.bf16.msra.mxu0 %v1241
    %1916 = vmatprep.subr.bf16.mxu0 %v1246
    %1917 = vmatpush1.bf16.msra.mxu0 %v1245
    %1918 = vmatprep.subr.bf16.mxu0 %v1250
    %1919 = vmatpush1.bf16.msra.mxu0 %v1249
    %1920 = vmatprep.subr.bf16.mxu0 %v1254
    %1921 = vmatpush1.bf16.msra.mxu0 %v1253
    %1922 = vmatprep.subr.bf16.mxu0 %v1258
    %1923 = vmatpush1.bf16.msra.mxu0 %v1257
    %1924 = vmatprep.subr.bf16.mxu0 %v1262
    %1925 = vmatpush1.bf16.msra.mxu0 %v1261
    %1926 = vmatprep.subr.bf16.mxu0 %v1266
    %1927 = vmatpush1.bf16.msra.mxu0 %v1265
    %1928 = vmatprep.subr.bf16.mxu0 %v1270
    %1929 = vmatpush1.bf16.msra.mxu0 %v1269
    %1930 = vmatprep.subr.bf16.mxu0 %v1274
    %1931 = vmatpush1.bf16.msra.mxu0 %v1273
    %1932 = vmatprep.subr.bf16.mxu0 %v1278
    %1933 = vmatpush1.bf16.msra.mxu0 %v1277
    %1934 = vmatprep.subr.bf16.mxu0 %v1282
    %1935 = vmatpush1.bf16.msra.mxu0 %v1281
    %1936 = vmatprep.subr.bf16.mxu0 %v1286
    %1937 = vmatpush1.bf16.msra.mxu0 %v1285
    %1938 = vmatprep.subr.bf16.mxu0 %v1290
    %1939 = vmatpush1.bf16.msra.mxu0 %v1289
    %1940 = vmatprep.mubr.bf16.mxu0 %v458
    %1941 = vmatmul.mubr.bf16.gmra.mrb[0].mxu0 %v444
    %v1942 = vpop.f32.mrb[0].mxu0
    %v1943 = vadd.f32 %v411, %v1942
    %v1944 = vpop.f32.mrb[0].mxu0
    %v1945 = vadd.f32 %v415, %v1944
    %v1946 = vpop.f32.mrb[0].mxu0
    %v1947 = vpop.f32.mrb[0].mxu0
    %1948 = vdwg.mxu0
    %1949 = vmatprep.subr.bf16.mxu0 %v1294
    %1950 = vmatpush1.bf16.msra.mxu0 %v1293
    %1951 = vmatprep.subr.bf16.mxu0 %v1298
    %1952 = vmatpush1.bf16.msra.mxu0 %v1297
    %1953 = vmatprep.subr.bf16.mxu0 %v1302
    %1954 = vmatpush1.bf16.msra.mxu0 %v1301
    %1955 = vmatprep.subr.bf16.mxu0 %v1306
    %1956 = vmatpush1.bf16.msra.mxu0 %v1305
    %1957 = vmatprep.subr.bf16.mxu0 %v1310
    %1958 = vmatpush1.bf16.msra.mxu0 %v1309
    %1959 = vmatprep.subr.bf16.mxu0 %v1314
    %1960 = vmatpush1.bf16.msra.mxu0 %v1313
    %1961 = vmatprep.subr.bf16.mxu0 %v1318
    %1962 = vmatpush1.bf16.msra.mxu0 %v1317
    %1963 = vmatprep.subr.bf16.mxu0 %v1322
    %1964 = vmatpush1.bf16.msra.mxu0 %v1321
    %1965 = vmatprep.subr.bf16.mxu0 %v1326
    %1966 = vmatpush1.bf16.msra.mxu0 %v1325
    %1967 = vmatprep.subr.bf16.mxu0 %v1330
    %1968 = vmatpush1.bf16.msra.mxu0 %v1329
    %1969 = vmatprep.subr.bf16.mxu0 %v1334
    %1970 = vmatpush1.bf16.msra.mxu0 %v1333
    %1971 = vmatprep.subr.bf16.mxu0 %v1338
    %1972 = vmatpush1.bf16.msra.mxu0 %v1337
    %1973 = vmatprep.subr.bf16.mxu0 %v1342
    %1974 = vmatpush1.bf16.msra.mxu0 %v1341
    %1975 = vmatprep.subr.bf16.mxu0 %v1346
    %1976 = vmatpush1.bf16.msra.mxu0 %v1345
    %1977 = vmatprep.subr.bf16.mxu0 %v1350
    %1978 = vmatpush1.bf16.msra.mxu0 %v1349
    %1979 = vmatprep.subr.bf16.mxu0 %v1354
    %1980 = vmatpush1.bf16.msra.mxu0 %v1353
    %1981 = vmatprep.mubr.bf16.mxu0 %v468
    %1982 = vmatmul.mubr.bf16.gmra.mrb[0].mxu0 %v466
    %v1983 = vpop.f32.mrb[0].mxu0
    %v1984 = vadd.f32 %v1943, %v1983
    %v1985 = vpop.f32.mrb[0].mxu0
    %v1986 = vadd.f32 %v1945, %v1985
    %v1987 = vpop.f32.mrb[0].mxu0
    %v1988 = vpop.f32.mrb[0].mxu0
    %1989 = vdwg.mxu0
    %1990 = vmatprep.subr.bf16.mxu0 %v1358
    %1991 = vmatpush1.bf16.msra.mxu0 %v1357
    %1992 = vmatprep.subr.bf16.mxu0 %v1362
    %1993 = vmatpush1.bf16.msra.mxu0 %v1361
    %1994 = vmatprep.subr.bf16.mxu0 %v1366
    %1995 = vmatpush1.bf16.msra.mxu0 %v1365
    %1996 = vmatprep.subr.bf16.mxu0 %v1370
    %1997 = vmatpush1.bf16.msra.mxu0 %v1369
    %1998 = vmatprep.subr.bf16.mxu0 %v1374
    %1999 = vmatpush1.bf16.msra.mxu0 %v1373
    %2000 = vmatprep.subr.bf16.mxu0 %v1378
    %2001 = vmatpush1.bf16.msra.mxu0 %v1377
    %2002 = vmatprep.subr.bf16.mxu0 %v1382
    %2003 = vmatpush1.bf16.msra.mxu0 %v1381
    %2004 = vmatprep.subr.bf16.mxu0 %v1386
    %2005 = vmatpush1.bf16.msra.mxu0 %v1385
    %2006 = vmatprep.subr.bf16.mxu0 %v1390
    %2007 = vmatpush1.bf16.msra.mxu0 %v1389
    %2008 = vmatprep.subr.bf16.mxu0 %v1394
    %2009 = vmatpush1.bf16.msra.mxu0 %v1393
    %2010 = vmatprep.subr.bf16.mxu0 %v1398
    %2011 = vmatpush1.bf16.msra.mxu0 %v1397
    %2012 = vmatprep.subr.bf16.mxu0 %v1402
    %2013 = vmatpush1.bf16.msra.mxu0 %v1401
    %2014 = vmatprep.subr.bf16.mxu0 %v1406
    %2015 = vmatpush1.bf16.msra.mxu0 %v1405
    %2016 = vmatprep.subr.bf16.mxu0 %v1410
    %2017 = vmatpush1.bf16.msra.mxu0 %v1409
    %2018 = vmatprep.subr.bf16.mxu0 %v1414
    %2019 = vmatpush1.bf16.msra.mxu0 %v1413
    %2020 = vmatprep.subr.bf16.mxu0 %v1418
    %2021 = vmatpush1.bf16.msra.mxu0 %v1417
    %2022 = vmatprep.mubr.bf16.mxu0 %v465
    %2023 = vmatmul.mubr.bf16.gmra.mrb[0].mxu0 %v451
    %v2024 = vpop.f32.mrb[0].mxu0
    %v2025 = vadd.f32 %v1984, %v2024
    %v2026 = vpop.f32.mrb[0].mxu0
    %v2027 = vadd.f32 %v1986, %v2026
    %v2028 = vpop.f32.mrb[0].mxu0
    %v2029 = vpop.f32.mrb[0].mxu0
    %2030 = vdwg.mxu0
    %2031 = vmatprep.subr.bf16.mxu0 %v1422
    %2032 = vmatpush1.bf16.msra.mxu0 %v1421
    %2033 = vmatprep.subr.bf16.mxu0 %v1426
    %2034 = vmatpush1.bf16.msra.mxu0 %v1425
    %2035 = vmatprep.subr.bf16.mxu0 %v1430
    %2036 = vmatpush1.bf16.msra.mxu0 %v1429
    %2037 = vmatprep.subr.bf16.mxu0 %v1434
    %2038 = vmatpush1.bf16.msra.mxu0 %v1433
    %2039 = vmatprep.subr.bf16.mxu0 %v1438
    %2040 = vmatpush1.bf16.msra.mxu0 %v1437
    %2041 = vmatprep.subr.bf16.mxu0 %v1442
    %2042 = vmatpush1.bf16.msra.mxu0 %v1441
    %2043 = vmatprep.subr.bf16.mxu0 %v1446
    %2044 = vmatpush1.bf16.msra.mxu0 %v1445
    %2045 = vmatprep.subr.bf16.mxu0 %v1450
    %2046 = vmatpush1.bf16.msra.mxu0 %v1449
    %2047 = vmatprep.subr.bf16.mxu0 %v1454
    %2048 = vmatpush1.bf16.msra.mxu0 %v1453
    %2049 = vmatprep.subr.bf16.mxu0 %v1458
    %2050 = vmatpush1.bf16.msra.mxu0 %v1457
    %2051 = vmatprep.subr.bf16.mxu0 %v1462
    %2052 = vmatpush1.bf16.msra.mxu0 %v1461
    %2053 = vmatprep.subr.bf16.mxu0 %v1466
    %2054 = vmatpush1.bf16.msra.mxu0 %v1465
    %2055 = vmatprep.subr.bf16.mxu0 %v1470
    %2056 = vmatpush1.bf16.msra.mxu0 %v1469
    %2057 = vmatprep.subr.bf16.mxu0 %v1474
    %2058 = vmatpush1.bf16.msra.mxu0 %v1473
    %2059 = vmatprep.subr.bf16.mxu0 %v1742
    %2060 = vmatpush1.bf16.msra.mxu0 %v1739
    %2061 = vmatprep.subr.bf16.mxu0 0
    %2062 = vmatpush1.bf16.msra.mxu0 0
    %2063 = vmatprep.mubr.bf16.mxu0 %v1729
    %2064 = vmatmul.mubr.bf16.gmra.mrb[0].mxu0 %v467
    %v2065 = vpop.f32.mrb[0].mxu0
    %v2066 = vadd.f32 %v2025, %v2065
    %v2067 = vpop.f32.mrb[0].mxu0
    %v2068 = vadd.f32 %v2027, %v2067
    %v2069 = vpop.f32.mrb[0].mxu0
    %v2070 = vpop.f32.mrb[0].mxu0
    %2071 = vdwg.mxu0
    %v2072 = vmax.f32 %v1902, 0.0
    %v2073 = vmax.f32 %v1904, 0.0
    %v2074 = vmax.f32 %v2066, 0.0
    %v2075 = vmax.f32 %v2068, 0.0
    %v2076 = vpack.c.bf16 %v2072, %v2072
    %v2077 = vpack.c.bf16 %v2073, %v2073
    %v2078 = vpack.c.bf16 %v2074, %v2074
    %v2079 = vpack.c.bf16 %v2075, %v2075
    %v2080 = vld [vmem:[#allocation5] sm:$0xff]
    %v2081 = vld [vmem:[#allocation5 + $0x8] sm:$0xff]
    %v2082 = vld [vmem:[#allocation5 + $0x10] sm:$0xff]
    %v2083 = vld [vmem:[#allocation5 + $0x18] sm:$0xff]
    %v2084 = vld [vmem:[#allocation5 + $0x20] sm:$0xff]
    %v2085 = vld [vmem:[#allocation5 + $0x28] sm:$0xff]
    %v2086 = vld [vmem:[#allocation5 + $0x30] sm:$0xff]
    %v2087 = vld [vmem:[#allocation5 + $0x38] sm:$0xff]
    %v2088 = vld [vmem:[#allocation5 + $0x40] sm:$0xff]
    %v2089 = vld [vmem:[#allocation5 + $0x48] sm:$0xff]
    %v2090 = vld [vmem:[#allocation5 + $0x50] sm:$0xff]
    %v2091 = vld [vmem:[#allocation5 + $0x58] sm:$0xff]
    %v2092 = vld [vmem:[#allocation5 + $0x60] sm:$0xff]
    %v2093 = vld [vmem:[#allocation5 + $0x68] sm:$0xff]
    %v2094 = vld [vmem:[#allocation5 + $0x70] sm:$0xff]
    %v2095 = vld [vmem:[#allocation5 + $0x78] sm:$0xff]
    %v2096 = vld [vmem:[#allocation5 + $0x80] sm:$0xff]
    %v2097 = vld [vmem:[#allocation5 + $0x88] sm:$0xff]
    %v2098 = vld [vmem:[#allocation5 + $0x90] sm:$0xff]
    %v2099 = vld [vmem:[#allocation5 + $0x98] sm:$0xff]
    %v2100 = vld [vmem:[#allocation5 + $0xa0] sm:$0xff]
    %v2101 = vld [vmem:[#allocation5 + $0xa8] sm:$0xff]
    %v2102 = vld [vmem:[#allocation5 + $0xb0] sm:$0xff]
    %v2103 = vld [vmem:[#allocation5 + $0xb8] sm:$0xff]
    %v2104 = vld [vmem:[#allocation5 + $0xc0] sm:$0xff]
    %v2105 = vld [vmem:[#allocation5 + $0xc8] sm:$0xff]
    %v2106 = vld [vmem:[#allocation5 + $0xd0] sm:$0xff]
    %v2107 = vld [vmem:[#allocation5 + $0xd8] sm:$0xff]
    %v2108 = vld [vmem:[#allocation5 + $0xe0] sm:$0xff]
    %v2109 = vld [vmem:[#allocation5 + $0xe8] sm:$0xff]
    %v2110 = vld [vmem:[#allocation5 + $0xf0] sm:$0xff]
    %v2111 = vld [vmem:[#allocation5 + $0xf8] sm:$0xff]
    %v2112 = vld [vmem:[#allocation5 + $0x100] sm:$0xff]
    %v2113 = vld [vmem:[#allocation5 + $0x108] sm:$0xff]
    %v2114 = vld [vmem:[#allocation5 + $0x110] sm:$0xff]
    %v2115 = vld [vmem:[#allocation5 + $0x118] sm:$0xff]
    %v2116 = vld [vmem:[#allocation5 + $0x120] sm:$0xff]
    %v2117 = vld [vmem:[#allocation5 + $0x128] sm:$0xff]
    %v2118 = vld [vmem:[#allocation5 + $0x130] sm:$0xff]
    %v2119 = vld [vmem:[#allocation5 + $0x138] sm:$0xff]
    %v2120 = vld [vmem:[#allocation5 + $0x140] sm:$0xff]
    %v2121 = vld [vmem:[#allocation5 + $0x148] sm:$0xff]
    %v2122 = vld [vmem:[#allocation5 + $0x150] sm:$0xff]
    %v2123 = vld [vmem:[#allocation5 + $0x158] sm:$0xff]
    %v2124 = vld [vmem:[#allocation5 + $0x160] sm:$0xff]
    %v2125 = vld [vmem:[#allocation5 + $0x168] sm:$0xff]
    %v2126 = vld [vmem:[#allocation5 + $0x170] sm:$0xff]
    %v2127 = vld [vmem:[#allocation5 + $0x178] sm:$0xff]
    %v2128 = vld [vmem:[#allocation5 + $0x180] sm:$0xff]
    %v2129 = vld [vmem:[#allocation5 + $0x188] sm:$0xff]
    %v2130 = vld [vmem:[#allocation5 + $0x190] sm:$0xff]
    %v2131 = vld [vmem:[#allocation5 + $0x198] sm:$0xff]
    %v2132 = vld [vmem:[#allocation5 + $0x1a0] sm:$0xff]
    %v2133 = vld [vmem:[#allocation5 + $0x1a8] sm:$0xff]
    %v2134 = vld [vmem:[#allocation5 + $0x1b0] sm:$0xff]
    %v2135 = vld [vmem:[#allocation5 + $0x1b8] sm:$0xff]
    %v2136 = vld [vmem:[#allocation5 + $0x1c0] sm:$0xff]
    %v2137 = vld [vmem:[#allocation5 + $0x1c8] sm:$0xff]
    %v2138 = vld [vmem:[#allocation5 + $0x1d0] sm:$0xff]
    %v2139 = vld [vmem:[#allocation5 + $0x1d8] sm:$0xff]
    %v2140 = vld [vmem:[#allocation5 + $0x1e0] sm:$0xff]
    %v2141 = vld [vmem:[#allocation5 + $0x1e8] sm:$0xff]
    %v2142 = vld [vmem:[#allocation5 + $0x1f0] sm:$0xff]
    %v2143 = vld [vmem:[#allocation5 + $0x1f8] sm:$0xff]
    %v2144 = vld [vmem:[%s5] sm:$0x3]
    %v2146 = vlaneseq
    %v2147 = vshrl.u32 %v2146, 7
    %v2148 = vsub.s32 0, %v2147
    %v2149 = vrot.slane %v2144, %v2148
    %v2150 = vlaneseq
    %v2151 = vshrl.u32 %v2150, 7
    %v2152 = vsub.s32 1, %v2151
    %v2153 = vrot.slane %v2144, %v2152
    %v2220 = vunpack.c.l.b16 %v2080
    %v2221 = vunpack.c.h.b16 %v2080
    %v2222 = vunpack.c.l.b16 %v2081
    %v2223 = vunpack.c.h.b16 %v2081
    %v2224 = vunpack.c.l.b16 %v2082
    %v2225 = vunpack.c.h.b16 %v2082
    %v2226 = vunpack.c.l.b16 %v2083
    %v2227 = vunpack.c.h.b16 %v2083
    %v2228 = vunpack.c.l.b16 %v2084
    %v2229 = vunpack.c.h.b16 %v2084
    %v2230 = vunpack.c.l.b16 %v2085
    %v2231 = vunpack.c.h.b16 %v2085
    %v2232 = vunpack.c.l.b16 %v2086
    %v2233 = vunpack.c.h.b16 %v2086
    %v2234 = vunpack.c.l.b16 %v2087
    %v2235 = vunpack.c.h.b16 %v2087
    %v2236 = vunpack.c.l.b16 %v2088
    %v2237 = vunpack.c.h.b16 %v2088
    %v2238 = vunpack.c.l.b16 %v2089
    %v2239 = vunpack.c.h.b16 %v2089
    %v2240 = vunpack.c.l.b16 %v2090
    %v2241 = vunpack.c.h.b16 %v2090
    %v2242 = vunpack.c.l.b16 %v2091
    %v2243 = vunpack.c.h.b16 %v2091
    %v2244 = vunpack.c.l.b16 %v2092
    %v2245 = vunpack.c.h.b16 %v2092
    %v2246 = vunpack.c.l.b16 %v2093
    %v2247 = vunpack.c.h.b16 %v2093
    %v2248 = vunpack.c.l.b16 %v2094
    %v2249 = vunpack.c.h.b16 %v2094
    %v2250 = vunpack.c.l.b16 %v2095
    %v2251 = vunpack.c.h.b16 %v2095
    %v2252 = vunpack.c.l.b16 %v2096
    %v2253 = vunpack.c.h.b16 %v2096
    %v2254 = vunpack.c.l.b16 %v2097
    %v2255 = vunpack.c.h.b16 %v2097
    %v2256 = vunpack.c.l.b16 %v2098
    %v2257 = vunpack.c.h.b16 %v2098
    %v2258 = vunpack.c.l.b16 %v2099
    %v2259 = vunpack.c.h.b16 %v2099
    %v2260 = vunpack.c.l.b16 %v2100
    %v2261 = vunpack.c.h.b16 %v2100
    %v2262 = vunpack.c.l.b16 %v2101
    %v2263 = vunpack.c.h.b16 %v2101
    %v2264 = vunpack.c.l.b16 %v2102
    %v2265 = vunpack.c.h.b16 %v2102
    %v2266 = vunpack.c.l.b16 %v2103
    %v2267 = vunpack.c.h.b16 %v2103
    %v2268 = vunpack.c.l.b16 %v2104
    %v2269 = vunpack.c.h.b16 %v2104
    %v2270 = vunpack.c.l.b16 %v2105
    %v2271 = vunpack.c.h.b16 %v2105
    %v2272 = vunpack.c.l.b16 %v2106
    %v2273 = vunpack.c.h.b16 %v2106
    %v2274 = vunpack.c.l.b16 %v2107
    %v2275 = vunpack.c.h.b16 %v2107
    %v2276 = vunpack.c.l.b16 %v2108
    %v2277 = vunpack.c.h.b16 %v2108
    %v2278 = vunpack.c.l.b16 %v2109
    %v2279 = vunpack.c.h.b16 %v2109
    %v2280 = vunpack.c.l.b16 %v2110
    %v2281 = vunpack.c.h.b16 %v2110
    %v2282 = vunpack.c.l.b16 %v2111
    %v2283 = vunpack.c.h.b16 %v2111
    %v2284 = vunpack.c.l.b16 %v2112
    %v2285 = vunpack.c.h.b16 %v2112
    %v2286 = vunpack.c.l.b16 %v2113
    %v2287 = vunpack.c.h.b16 %v2113
    %v2288 = vunpack.c.l.b16 %v2114
    %v2289 = vunpack.c.h.b16 %v2114
    %v2290 = vunpack.c.l.b16 %v2115
    %v2291 = vunpack.c.h.b16 %v2115
    %v2292 = vunpack.c.l.b16 %v2116
    %v2293 = vunpack.c.h.b16 %v2116
    %v2294 = vunpack.c.l.b16 %v2117
    %v2295 = vunpack.c.h.b16 %v2117
    %v2296 = vunpack.c.l.b16 %v2118
    %v2297 = vunpack.c.h.b16 %v2118
    %v2298 = vunpack.c.l.b16 %v2119
    %v2299 = vunpack.c.h.b16 %v2119
    %v2300 = vunpack.c.l.b16 %v2120
    %v2301 = vunpack.c.h.b16 %v2120
    %v2302 = vunpack.c.l.b16 %v2121
    %v2303 = vunpack.c.h.b16 %v2121
    %v2304 = vunpack.c.l.b16 %v2122
    %v2305 = vunpack.c.h.b16 %v2122
    %v2306 = vunpack.c.l.b16 %v2123
    %v2307 = vunpack.c.h.b16 %v2123
    %v2308 = vunpack.c.l.b16 %v2124
    %v2309 = vunpack.c.h.b16 %v2124
    %v2310 = vunpack.c.l.b16 %v2125
    %v2311 = vunpack.c.h.b16 %v2125
    %v2312 = vunpack.c.l.b16 %v2126
    %v2313 = vunpack.c.h.b16 %v2126
    %v2314 = vunpack.c.l.b16 %v2127
    %v2315 = vunpack.c.h.b16 %v2127
    %v2316 = vunpack.c.l.b16 %v2128
    %v2317 = vunpack.c.h.b16 %v2128
    %v2318 = vunpack.c.l.b16 %v2129
    %v2319 = vunpack.c.h.b16 %v2129
    %v2320 = vunpack.c.l.b16 %v2130
    %v2321 = vunpack.c.h.b16 %v2130
    %v2322 = vunpack.c.l.b16 %v2131
    %v2323 = vunpack.c.h.b16 %v2131
    %v2324 = vunpack.c.l.b16 %v2132
    %v2325 = vunpack.c.h.b16 %v2132
    %v2326 = vunpack.c.l.b16 %v2133
    %v2327 = vunpack.c.h.b16 %v2133
    %v2328 = vunpack.c.l.b16 %v2134
    %v2329 = vunpack.c.h.b16 %v2134
    %v2330 = vunpack.c.l.b16 %v2135
    %v2331 = vunpack.c.h.b16 %v2135
    %v2332 = vunpack.c.l.b16 %v2136
    %v2333 = vunpack.c.h.b16 %v2136
    %v2334 = vunpack.c.l.b16 %v2137
    %v2335 = vunpack.c.h.b16 %v2137
    %v2336 = vunpack.c.l.b16 %v2138
    %v2337 = vunpack.c.h.b16 %v2138
    %v2338 = vunpack.c.l.b16 %v2139
    %v2339 = vunpack.c.h.b16 %v2139
    %v2340 = vunpack.c.l.b16 %v2140
    %v2341 = vunpack.c.h.b16 %v2140
    %v2342 = vunpack.c.l.b16 %v2141
    %v2343 = vunpack.c.h.b16 %v2141
    %v2344 = vunpack.c.l.b16 %v2142
    %v2345 = vunpack.c.h.b16 %v2142
    %v2346 = vunpack.c.l.b16 %v2143
    %v2347 = vunpack.c.h.b16 %v2143
    %v2348 = vpack.c.b16 %v2222, %v2220
    %v2349 = vpack.c.b16 %v2223, %v2221
    %v2350 = vpack.c.b16 %v2226, %v2224
    %v2351 = vpack.c.b16 %v2227, %v2225
    %v2352 = vpack.c.b16 %v2230, %v2228
    %v2353 = vpack.c.b16 %v2231, %v2229
    %v2354 = vpack.c.b16 %v2234, %v2232
    %v2355 = vpack.c.b16 %v2235, %v2233
    %v2356 = vpack.c.b16 %v2238, %v2236
    %v2357 = vpack.c.b16 %v2239, %v2237
    %v2358 = vpack.c.b16 %v2242, %v2240
    %v2359 = vpack.c.b16 %v2243, %v2241
    %v2360 = vpack.c.b16 %v2246, %v2244
    %v2361 = vpack.c.b16 %v2247, %v2245
    %v2362 = vpack.c.b16 %v2250, %v2248
    %v2363 = vpack.c.b16 %v2251, %v2249
    %v2364 = vpack.c.b16 %v2254, %v2252
    %v2365 = vpack.c.b16 %v2255, %v2253
    %v2366 = vpack.c.b16 %v2258, %v2256
    %v2367 = vpack.c.b16 %v2259, %v2257
    %v2368 = vpack.c.b16 %v2262, %v2260
    %v2369 = vpack.c.b16 %v2263, %v2261
    %v2370 = vpack.c.b16 %v2266, %v2264
    %v2371 = vpack.c.b16 %v2267, %v2265
    %v2372 = vpack.c.b16 %v2270, %v2268
    %v2373 = vpack.c.b16 %v2271, %v2269
    %v2374 = vpack.c.b16 %v2274, %v2272
    %v2375 = vpack.c.b16 %v2275, %v2273
    %v2376 = vpack.c.b16 %v2278, %v2276
    %v2377 = vpack.c.b16 %v2279, %v2277
    %v2378 = vpack.c.b16 %v2282, %v2280
    %v2379 = vpack.c.b16 %v2283, %v2281
    %v2380 = vpack.c.b16 %v2286, %v2284
    %v2381 = vpack.c.b16 %v2287, %v2285
    %v2382 = vpack.c.b16 %v2290, %v2288
    %v2383 = vpack.c.b16 %v2291, %v2289
    %v2384 = vpack.c.b16 %v2294, %v2292
    %v2385 = vpack.c.b16 %v2295, %v2293
    %v2386 = vpack.c.b16 %v2298, %v2296
    %v2387 = vpack.c.b16 %v2299, %v2297
    %v2388 = vpack.c.b16 %v2302, %v2300
    %v2389 = vpack.c.b16 %v2303, %v2301
    %v2390 = vpack.c.b16 %v2306, %v2304
    %v2391 = vpack.c.b16 %v2307, %v2305
    %v2392 = vpack.c.b16 %v2310, %v2308
    %v2393 = vpack.c.b16 %v2311, %v2309
    %v2394 = vpack.c.b16 %v2314, %v2312
    %v2395 = vpack.c.b16 %v2315, %v2313
    %v2396 = vpack.c.b16 %v2318, %v2316
    %v2397 = vpack.c.b16 %v2319, %v2317
    %v2398 = vpack.c.b16 %v2322, %v2320
    %v2399 = vpack.c.b16 %v2323, %v2321
    %v2400 = vpack.c.b16 %v2326, %v2324
    %v2401 = vpack.c.b16 %v2327, %v2325
    %v2402 = vpack.c.b16 %v2330, %v2328
    %v2403 = vpack.c.b16 %v2331, %v2329
    %v2404 = vpack.c.b16 %v2334, %v2332
    %v2405 = vpack.c.b16 %v2335, %v2333
    %v2406 = vpack.c.b16 %v2338, %v2336
    %v2407 = vpack.c.b16 %v2339, %v2337
    %v2408 = vpack.c.b16 %v2342, %v2340
    %v2409 = vpack.c.b16 %v2343, %v2341
    %v2410 = vpack.c.b16 %v2346, %v2344
    %v2411 = vpack.c.b16 %v2347, %v2345
    %2476 = vmatprep.subr.bf16.mxu0 %v2349
    %2477 = vmatpush1.bf16.msra.mxu0 %v2348
    %2478 = vmatprep.subr.bf16.mxu0 %v2351
    %2479 = vmatpush1.bf16.msra.mxu0 %v2350
    %2480 = vmatprep.subr.bf16.mxu0 %v2353
    %2481 = vmatpush1.bf16.msra.mxu0 %v2352
    %2482 = vmatprep.subr.bf16.mxu0 %v2355
    %2483 = vmatpush1.bf16.msra.mxu0 %v2354
    %2484 = vmatprep.subr.bf16.mxu0 %v2357
    %2485 = vmatpush1.bf16.msra.mxu0 %v2356
    %2486 = vmatprep.subr.bf16.mxu0 %v2359
    %2487 = vmatpush1.bf16.msra.mxu0 %v2358
    %2488 = vmatprep.subr.bf16.mxu0 %v2361
    %2489 = vmatpush1.bf16.msra.mxu0 %v2360
    %2490 = vmatprep.subr.bf16.mxu0 %v2363
    %2491 = vmatpush1.bf16.msra.mxu0 %v2362
    %2492 = vmatprep.subr.bf16.mxu0 %v2365
    %2493 = vmatpush1.bf16.msra.mxu0 %v2364
    %2494 = vmatprep.subr.bf16.mxu0 %v2367
    %2495 = vmatpush1.bf16.msra.mxu0 %v2366
    %2496 = vmatprep.subr.bf16.mxu0 %v2369
    %2497 = vmatpush1.bf16.msra.mxu0 %v2368
    %2498 = vmatprep.subr.bf16.mxu0 %v2371
    %2499 = vmatpush1.bf16.msra.mxu0 %v2370
    %2500 = vmatprep.subr.bf16.mxu0 %v2373
    %2501 = vmatpush1.bf16.msra.mxu0 %v2372
    %2502 = vmatprep.subr.bf16.mxu0 %v2375
    %2503 = vmatpush1.bf16.msra.mxu0 %v2374
    %2504 = vmatprep.subr.bf16.mxu0 %v2377
    %2505 = vmatpush1.bf16.msra.mxu0 %v2376
    %2506 = vmatprep.subr.bf16.mxu0 %v2379
    %2507 = vmatpush1.bf16.msra.mxu0 %v2378
    %2508 = vmatprep.mubr.bf16.mxu0 %v2077
    %2509 = vmatmul.mubr.bf16.gmra.mrb[0].mxu0 %v2076
    %v2510 = vpop.f32.mrb[0].mxu0
    %v2511 = vadd.f32 %v2149, %v2510
    %v2512 = vpop.f32.mrb[0].mxu0
    %v2513 = vadd.f32 %v2153, %v2512
    %v2514 = vpop.f32.mrb[0].mxu0
    %v2515 = vpop.f32.mrb[0].mxu0
    %2516 = vdwg.mxu0
    %2517 = vmatprep.subr.bf16.mxu0 %v2381
    %2518 = vmatpush1.bf16.msra.mxu0 %v2380
    %2519 = vmatprep.subr.bf16.mxu0 %v2383
    %2520 = vmatpush1.bf16.msra.mxu0 %v2382
    %2521 = vmatprep.subr.bf16.mxu0 %v2385
    %2522 = vmatpush1.bf16.msra.mxu0 %v2384
    %2523 = vmatprep.subr.bf16.mxu0 %v2387
    %2524 = vmatpush1.bf16.msra.mxu0 %v2386
    %2525 = vmatprep.subr.bf16.mxu0 %v2389
    %2526 = vmatpush1.bf16.msra.mxu0 %v2388
    %2527 = vmatprep.subr.bf16.mxu0 %v2391
    %2528 = vmatpush1.bf16.msra.mxu0 %v2390
    %2529 = vmatprep.subr.bf16.mxu0 %v2393
    %2530 = vmatpush1.bf16.msra.mxu0 %v2392
    %2531 = vmatprep.subr.bf16.mxu0 %v2395
    %2532 = vmatpush1.bf16.msra.mxu0 %v2394
    %2533 = vmatprep.subr.bf16.mxu0 %v2397
    %2534 = vmatpush1.bf16.msra.mxu0 %v2396
    %2535 = vmatprep.subr.bf16.mxu0 %v2399
    %2536 = vmatpush1.bf16.msra.mxu0 %v2398
    %2537 = vmatprep.subr.bf16.mxu0 %v2401
    %2538 = vmatpush1.bf16.msra.mxu0 %v2400
    %2539 = vmatprep.subr.bf16.mxu0 %v2403
    %2540 = vmatpush1.bf16.msra.mxu0 %v2402
    %2541 = vmatprep.subr.bf16.mxu0 %v2405
    %2542 = vmatpush1.bf16.msra.mxu0 %v2404
    %2543 = vmatprep.subr.bf16.mxu0 %v2407
    %2544 = vmatpush1.bf16.msra.mxu0 %v2406
    %2545 = vmatprep.subr.bf16.mxu0 %v2409
    %2546 = vmatpush1.bf16.msra.mxu0 %v2408
    %2547 = vmatprep.subr.bf16.mxu0 %v2411
    %2548 = vmatpush1.bf16.msra.mxu0 %v2410
    %2549 = vmatprep.mubr.bf16.mxu0 %v2079
    %2550 = vmatmul.mubr.bf16.gmra.mrb[0].mxu0 %v2078
    %v2551 = vpop.f32.mrb[0].mxu0
    %v2552 = vadd.f32 %v2511, %v2551
    %v2553 = vpop.f32.mrb[0].mxu0
    %v2554 = vadd.f32 %v2513, %v2553
    %v2555 = vpop.f32.mrb[0].mxu0
    %v2556 = vpop.f32.mrb[0].mxu0
    %2557 = vdwg.mxu0
    %v2558 = vmax.f32 %v2552, 0.0
    %v2559 = vmax.f32 %v2554, 0.0
    %v2560 = vld [vmem:[%s0] sm:$0xff]
    %v2561 = vld [vmem:[%s0 + $0x8] sm:$0xff]
    %v2562 = vld [vmem:[#allocation7] sm:$0xff]
    %v2563 = vld [vmem:[#allocation7 + $0x8] sm:$0xff]
    %v2564 = vld [vmem:[#allocation7 + $0x10] sm:$0xff]
    %v2565 = vld [vmem:[#allocation7 + $0x18] sm:$0xff]
    %v2566 = vld [vmem:[#allocation7 + $0x20] sm:$0xff]
    %v2567 = vld [vmem:[#allocation7 + $0x28] sm:$0xff]
    %v2568 = vld [vmem:[#allocation7 + $0x30] sm:$0xff]
    %v2569 = vld [vmem:[#allocation7 + $0x38] sm:$0xff]
    %v2570 = vld [vmem:[#allocation7 + $0x40] sm:$0xff]
    %v2571 = vld [vmem:[#allocation7 + $0x48] sm:$0xff]
    %v2572 = vld [vmem:[#allocation7 + $0x50] sm:$0xff]
    %v2573 = vld [vmem:[#allocation7 + $0x58] sm:$0xff]
    %v2574 = vld [vmem:[#allocation7 + $0x60] sm:$0xff]
    %v2575 = vld [vmem:[#allocation7 + $0x68] sm:$0xff]
    %v2576 = vld [vmem:[#allocation7 + $0x70] sm:$0xff]
    %v2577 = vld [vmem:[#allocation7 + $0x78] sm:$0xff]
    %v2578 = vld [vmem:[#allocation7 + $0x80] sm:$0xff]
    %v2579 = vld [vmem:[#allocation7 + $0x88] sm:$0xff]
    %v2580 = vld [vmem:[#allocation7 + $0x90] sm:$0xff]
    %v2581 = vld [vmem:[#allocation7 + $0x98] sm:$0xff]
    %v2582 = vld [vmem:[#allocation7 + $0xa0] sm:$0xff]
    %v2583 = vld [vmem:[#allocation7 + $0xa8] sm:$0xff]
    %v2584 = vld [vmem:[#allocation7 + $0xb0] sm:$0xff]
    %v2585 = vld [vmem:[#allocation7 + $0xb8] sm:$0xff]
    %v2586 = vld [vmem:[#allocation7 + $0xc0] sm:$0xff]
    %v2587 = vld [vmem:[#allocation7 + $0xc8] sm:$0xff]
    %v2588 = vld [vmem:[#allocation7 + $0xd0] sm:$0xff]
    %v2589 = vld [vmem:[#allocation7 + $0xd8] sm:$0xff]
    %v2590 = vld [vmem:[#allocation7 + $0xe0] sm:$0xff]
    %v2591 = vld [vmem:[#allocation7 + $0xe8] sm:$0xff]
    %v2592 = vld [vmem:[#allocation7 + $0xf0] sm:$0xff]
    %v2593 = vld [vmem:[#allocation7 + $0xf8] sm:$0xff]
    %v2594 = vld [vmem:[#allocation7 + $0x100] sm:$0xff]
    %v2595 = vld [vmem:[#allocation7 + $0x108] sm:$0xff]
    %v2596 = vld [vmem:[#allocation7 + $0x110] sm:$0xff]
    %v2597 = vld [vmem:[#allocation7 + $0x118] sm:$0xff]
    %v2598 = vld [vmem:[#allocation7 + $0x120] sm:$0xff]
    %v2599 = vld [vmem:[#allocation7 + $0x128] sm:$0xff]
    %v2600 = vld [vmem:[#allocation7 + $0x130] sm:$0xff]
    %v2601 = vld [vmem:[#allocation7 + $0x138] sm:$0xff]
    %v2602 = vld [vmem:[#allocation7 + $0x140] sm:$0xff]
    %v2603 = vld [vmem:[#allocation7 + $0x148] sm:$0xff]
    %v2604 = vld [vmem:[#allocation7 + $0x150] sm:$0xff]
    %v2605 = vld [vmem:[#allocation7 + $0x158] sm:$0xff]
    %v2606 = vld [vmem:[#allocation7 + $0x160] sm:$0xff]
    %v2607 = vld [vmem:[#allocation7 + $0x168] sm:$0xff]
    %v2608 = vld [vmem:[#allocation7 + $0x170] sm:$0xff]
    %v2609 = vld [vmem:[#allocation7 + $0x178] sm:$0xff]
    %v2610 = vld [vmem:[#allocation7 + $0x180] sm:$0xff]
    %v2611 = vld [vmem:[#allocation7 + $0x188] sm:$0xff]
    %v2612 = vld [vmem:[#allocation7 + $0x190] sm:$0xff]
    %v2613 = vld [vmem:[#allocation7 + $0x198] sm:$0xff]
    %v2614 = vld [vmem:[#allocation7 + $0x1a0] sm:$0xff]
    %v2615 = vld [vmem:[#allocation7 + $0x1a8] sm:$0xff]
    %v2616 = vld [vmem:[#allocation7 + $0x1b0] sm:$0xff]
    %v2617 = vld [vmem:[#allocation7 + $0x1b8] sm:$0xff]
    %v2618 = vld [vmem:[#allocation7 + $0x1c0] sm:$0xff]
    %v2619 = vld [vmem:[#allocation7 + $0x1c8] sm:$0xff]
    %v2620 = vld [vmem:[#allocation7 + $0x1d0] sm:$0xff]
    %v2621 = vld [vmem:[#allocation7 + $0x1d8] sm:$0xff]
    %v2622 = vld [vmem:[#allocation7 + $0x1e0] sm:$0xff]
    %v2623 = vld [vmem:[#allocation7 + $0x1e8] sm:$0xff]
    %v2624 = vld [vmem:[#allocation7 + $0x1f0] sm:$0xff]
    %v2625 = vld [vmem:[#allocation7 + $0x1f8] sm:$0xff]
    %v2626 = vld [vmem:[#allocation7 + $0x200] sm:$0xff]
    %v2627 = vld [vmem:[#allocation7 + $0x208] sm:$0xff]
    %v2628 = vld [vmem:[#allocation7 + $0x210] sm:$0xff]
    %v2629 = vld [vmem:[#allocation7 + $0x218] sm:$0xff]
    %v2630 = vld [vmem:[#allocation7 + $0x220] sm:$0xff]
    %v2631 = vld [vmem:[#allocation7 + $0x228] sm:$0xff]
    %v2632 = vld [vmem:[#allocation7 + $0x230] sm:$0xff]
    %v2633 = vld [vmem:[#allocation7 + $0x238] sm:$0xff]
    %v2634 = vld [vmem:[#allocation7 + $0x240] sm:$0xff]
    %v2635 = vld [vmem:[#allocation7 + $0x248] sm:$0xff]
    %v2636 = vld [vmem:[#allocation7 + $0x250] sm:$0xff]
    %v2637 = vld [vmem:[#allocation7 + $0x258] sm:$0xff]
    %v2638 = vld [vmem:[#allocation7 + $0x260] sm:$0xff]
    %v2639 = vld [vmem:[#allocation7 + $0x268] sm:$0xff]
    %v2640 = vld [vmem:[#allocation7 + $0x270] sm:$0xff]
    %v2641 = vld [vmem:[#allocation7 + $0x278] sm:$0xff]
    %v2642 = vld [vmem:[#allocation7 + $0x280] sm:$0xff]
    %v2643 = vld [vmem:[#allocation7 + $0x288] sm:$0xff]
    %v2644 = vld [vmem:[#allocation7 + $0x290] sm:$0xff]
    %v2645 = vld [vmem:[#allocation7 + $0x298] sm:$0xff]
    %v2646 = vld [vmem:[#allocation7 + $0x2a0] sm:$0xff]
    %v2647 = vld [vmem:[#allocation7 + $0x2a8] sm:$0xff]
    %v2648 = vld [vmem:[#allocation7 + $0x2b0] sm:$0xff]
    %v2649 = vld [vmem:[#allocation7 + $0x2b8] sm:$0xff]
    %v2650 = vld [vmem:[#allocation7 + $0x2c0] sm:$0xff]
    %v2651 = vld [vmem:[#allocation7 + $0x2c8] sm:$0xff]
    %v2652 = vld [vmem:[#allocation7 + $0x2d0] sm:$0xff]
    %v2653 = vld [vmem:[#allocation7 + $0x2d8] sm:$0xff]
    %v2654 = vld [vmem:[#allocation7 + $0x2e0] sm:$0xff]
    %v2655 = vld [vmem:[#allocation7 + $0x2e8] sm:$0xff]
    %v2656 = vld [vmem:[#allocation7 + $0x2f0] sm:$0xff]
    %v2657 = vld [vmem:[#allocation7 + $0x2f8] sm:$0xff]
    %v2658 = vld [vmem:[#allocation7 + $0x300] sm:$0xff]
    %v2659 = vld [vmem:[#allocation7 + $0x308] sm:$0xff]
    %v2660 = vld [vmem:[#allocation7 + $0x310] sm:$0xff]
    %v2661 = vld [vmem:[#allocation7 + $0x318] sm:$0xff]
    %v2662 = vld [vmem:[#allocation7 + $0x320] sm:$0xff]
    %v2663 = vld [vmem:[#allocation7 + $0x328] sm:$0xff]
    %v2664 = vld [vmem:[#allocation7 + $0x330] sm:$0xff]
    %v2665 = vld [vmem:[#allocation7 + $0x338] sm:$0xff]
    %v2666 = vld [vmem:[#allocation7 + $0x340] sm:$0xff]
    %v2667 = vld [vmem:[#allocation7 + $0x348] sm:$0xff]
    %v2668 = vld [vmem:[#allocation7 + $0x350] sm:$0xff]
    %v2669 = vld [vmem:[#allocation7 + $0x358] sm:$0xff]
    %v2670 = vld [vmem:[#allocation7 + $0x360] sm:$0xff]
    %v2671 = vld [vmem:[#allocation7 + $0x368] sm:$0xff]
    %v2672 = vld [vmem:[#allocation7 + $0x370] sm:$0xff]
    %v2673 = vld [vmem:[#allocation7 + $0x378] sm:$0xff]
    %v2674 = vld [vmem:[#allocation7 + $0x380] sm:$0xff]
    %v2675 = vld [vmem:[#allocation7 + $0x388] sm:$0xff]
    %v2676 = vld [vmem:[#allocation7 + $0x390] sm:$0xff]
    %v2677 = vld [vmem:[#allocation7 + $0x398] sm:$0xff]
    %v2678 = vld [vmem:[#allocation7 + $0x3a0] sm:$0xff]
    %v2679 = vld [vmem:[#allocation7 + $0x3a8] sm:$0xff]
    %v2680 = vld [vmem:[#allocation7 + $0x3b0] sm:$0xff]
    %v2681 = vld [vmem:[#allocation7 + $0x3b8] sm:$0xff]
    %v2682 = vld [vmem:[#allocation7 + $0x3c0] sm:$0xff]
    %v2683 = vld [vmem:[#allocation7 + $0x3c8] sm:$0xff]
    %v2684 = vld [vmem:[#allocation7 + $0x3d0] sm:$0xff]
    %v2685 = vld [vmem:[#allocation7 + $0x3d8] sm:$0xff]
    %v2686 = vld [vmem:[#allocation7 + $0x3e0] sm:$0xff]
    %v2687 = vld [vmem:[#allocation7 + $0x3e8] sm:$0xff]
    %v2688 = vld [vmem:[#allocation7 + $0x3f0] sm:$0xff]
    %v2689 = vld [vmem:[#allocation7 + $0x3f8] sm:$0xff]
    %v2690 = vld [vmem:[%s8] sm:$0xff]
    %v2692 = vlaneseq
    %v2693 = vshrl.u32 %v2692, 7
    %v2694 = vsub.s32 0, %v2693
    %v2695 = vrot.slane %v2690, %v2694
    %v2696 = vlaneseq
    %v2697 = vshrl.u32 %v2696, 7
    %v2698 = vsub.s32 1, %v2697
    %v2699 = vrot.slane %v2690, %v2698
    %v2700 = vlaneseq
    %v2701 = vshrl.u32 %v2700, 7
    %v2702 = vsub.s32 2, %v2701
    %v2703 = vrot.slane %v2690, %v2702
    %v2704 = vlaneseq
    %v2705 = vshrl.u32 %v2704, 7
    %v2706 = vsub.s32 3, %v2705
    %v2707 = vrot.slane %v2690, %v2706
    %v2708 = vlaneseq
    %v2709 = vshrl.u32 %v2708, 7
    %v2710 = vsub.s32 4, %v2709
    %v2711 = vrot.slane %v2690, %v2710
    %v2712 = vlaneseq
    %v2713 = vshrl.u32 %v2712, 7
    %v2714 = vsub.s32 5, %v2713
    %v2715 = vrot.slane %v2690, %v2714
    %v2716 = vlaneseq
    %v2717 = vshrl.u32 %v2716, 7
    %v2718 = vsub.s32 6, %v2717
    %v2719 = vrot.slane %v2690, %v2718
    %v2720 = vlaneseq
    %v2721 = vshrl.u32 %v2720, 7
    %v2722 = vsub.s32 7, %v2721
    %v2723 = vrot.slane %v2690, %v2722
    %v2734 = vunpack.c.l.b16 %v2560
    %v2735 = vunpack.c.h.b16 %v2560
    %v2736 = vunpack.c.l.b16 %v2561
    %v2737 = vunpack.c.h.b16 %v2561
    %v2738 = vpack.c.b16 %v2736, %v2734
    %v2739 = vpack.c.b16 %v2737, %v2735
    %v2870 = vunpack.c.l.b16 %v2562
    %v2871 = vunpack.c.h.b16 %v2562
    %v2872 = vunpack.c.l.b16 %v2563
    %v2873 = vunpack.c.h.b16 %v2563
    %v2874 = vunpack.c.l.b16 %v2564
    %v2875 = vunpack.c.h.b16 %v2564
    %v2876 = vunpack.c.l.b16 %v2565
    %v2877 = vunpack.c.h.b16 %v2565
    %v2878 = vunpack.c.l.b16 %v2566
    %v2879 = vunpack.c.h.b16 %v2566
    %v2880 = vunpack.c.l.b16 %v2567
    %v2881 = vunpack.c.h.b16 %v2567
    %v2882 = vunpack.c.l.b16 %v2568
    %v2883 = vunpack.c.h.b16 %v2568
    %v2884 = vunpack.c.l.b16 %v2569
    %v2885 = vunpack.c.h.b16 %v2569
    %v2886 = vunpack.c.l.b16 %v2570
    %v2887 = vunpack.c.h.b16 %v2570
    %v2888 = vunpack.c.l.b16 %v2571
    %v2889 = vunpack.c.h.b16 %v2571
    %v2890 = vunpack.c.l.b16 %v2572
    %v2891 = vunpack.c.h.b16 %v2572
    %v2892 = vunpack.c.l.b16 %v2573
    %v2893 = vunpack.c.h.b16 %v2573
    %v2894 = vunpack.c.l.b16 %v2574
    %v2895 = vunpack.c.h.b16 %v2574
    %v2896 = vunpack.c.l.b16 %v2575
    %v2897 = vunpack.c.h.b16 %v2575
    %v2898 = vunpack.c.l.b16 %v2576
    %v2899 = vunpack.c.h.b16 %v2576
    %v2900 = vunpack.c.l.b16 %v2577
    %v2901 = vunpack.c.h.b16 %v2577
    %v2902 = vunpack.c.l.b16 %v2578
    %v2903 = vunpack.c.h.b16 %v2578
    %v2904 = vunpack.c.l.b16 %v2579
    %v2905 = vunpack.c.h.b16 %v2579
    %v2906 = vunpack.c.l.b16 %v2580
    %v2907 = vunpack.c.h.b16 %v2580
    %v2908 = vunpack.c.l.b16 %v2581
    %v2909 = vunpack.c.h.b16 %v2581
    %v2910 = vunpack.c.l.b16 %v2582
    %v2911 = vunpack.c.h.b16 %v2582
    %v2912 = vunpack.c.l.b16 %v2583
    %v2913 = vunpack.c.h.b16 %v2583
    %v2914 = vunpack.c.l.b16 %v2584
    %v2915 = vunpack.c.h.b16 %v2584
    %v2916 = vunpack.c.l.b16 %v2585
    %v2917 = vunpack.c.h.b16 %v2585
    %v2918 = vunpack.c.l.b16 %v2586
    %v2919 = vunpack.c.h.b16 %v2586
    %v2920 = vunpack.c.l.b16 %v2587
    %v2921 = vunpack.c.h.b16 %v2587
    %v2922 = vunpack.c.l.b16 %v2588
    %v2923 = vunpack.c.h.b16 %v2588
    %v2924 = vunpack.c.l.b16 %v2589
    %v2925 = vunpack.c.h.b16 %v2589
    %v2926 = vunpack.c.l.b16 %v2590
    %v2927 = vunpack.c.h.b16 %v2590
    %v2928 = vunpack.c.l.b16 %v2591
    %v2929 = vunpack.c.h.b16 %v2591
    %v2930 = vunpack.c.l.b16 %v2592
    %v2931 = vunpack.c.h.b16 %v2592
    %v2932 = vunpack.c.l.b16 %v2593
    %v2933 = vunpack.c.h.b16 %v2593
    %v2934 = vunpack.c.l.b16 %v2594
    %v2935 = vunpack.c.h.b16 %v2594
    %v2936 = vunpack.c.l.b16 %v2595
    %v2937 = vunpack.c.h.b16 %v2595
    %v2938 = vunpack.c.l.b16 %v2596
    %v2939 = vunpack.c.h.b16 %v2596
    %v2940 = vunpack.c.l.b16 %v2597
    %v2941 = vunpack.c.h.b16 %v2597
    %v2942 = vunpack.c.l.b16 %v2598
    %v2943 = vunpack.c.h.b16 %v2598
    %v2944 = vunpack.c.l.b16 %v2599
    %v2945 = vunpack.c.h.b16 %v2599
    %v2946 = vunpack.c.l.b16 %v2600
    %v2947 = vunpack.c.h.b16 %v2600
    %v2948 = vunpack.c.l.b16 %v2601
    %v2949 = vunpack.c.h.b16 %v2601
    %v2950 = vunpack.c.l.b16 %v2602
    %v2951 = vunpack.c.h.b16 %v2602
    %v2952 = vunpack.c.l.b16 %v2603
    %v2953 = vunpack.c.h.b16 %v2603
    %v2954 = vunpack.c.l.b16 %v2604
    %v2955 = vunpack.c.h.b16 %v2604
    %v2956 = vunpack.c.l.b16 %v2605
    %v2957 = vunpack.c.h.b16 %v2605
    %v2958 = vunpack.c.l.b16 %v2606
    %v2959 = vunpack.c.h.b16 %v2606
    %v2960 = vunpack.c.l.b16 %v2607
    %v2961 = vunpack.c.h.b16 %v2607
    %v2962 = vunpack.c.l.b16 %v2608
    %v2963 = vunpack.c.h.b16 %v2608
    %v2964 = vunpack.c.l.b16 %v2609
    %v2965 = vunpack.c.h.b16 %v2609
    %v2966 = vunpack.c.l.b16 %v2610
    %v2967 = vunpack.c.h.b16 %v2610
    %v2968 = vunpack.c.l.b16 %v2611
    %v2969 = vunpack.c.h.b16 %v2611
    %v2970 = vunpack.c.l.b16 %v2612
    %v2971 = vunpack.c.h.b16 %v2612
    %v2972 = vunpack.c.l.b16 %v2613
    %v2973 = vunpack.c.h.b16 %v2613
    %v2974 = vunpack.c.l.b16 %v2614
    %v2975 = vunpack.c.h.b16 %v2614
    %v2976 = vunpack.c.l.b16 %v2615
    %v2977 = vunpack.c.h.b16 %v2615
    %v2978 = vunpack.c.l.b16 %v2616
    %v2979 = vunpack.c.h.b16 %v2616
    %v2980 = vunpack.c.l.b16 %v2617
    %v2981 = vunpack.c.h.b16 %v2617
    %v2982 = vunpack.c.l.b16 %v2618
    %v2983 = vunpack.c.h.b16 %v2618
    %v2984 = vunpack.c.l.b16 %v2619
    %v2985 = vunpack.c.h.b16 %v2619
    %v2986 = vunpack.c.l.b16 %v2620
    %v2987 = vunpack.c.h.b16 %v2620
    %v2988 = vunpack.c.l.b16 %v2621
    %v2989 = vunpack.c.h.b16 %v2621
    %v2990 = vunpack.c.l.b16 %v2622
    %v2991 = vunpack.c.h.b16 %v2622
    %v2992 = vunpack.c.l.b16 %v2623
    %v2993 = vunpack.c.h.b16 %v2623
    %v2994 = vunpack.c.l.b16 %v2624
    %v2995 = vunpack.c.h.b16 %v2624
    %v2996 = vunpack.c.l.b16 %v2625
    %v2997 = vunpack.c.h.b16 %v2625
    %v2998 = vunpack.c.l.b16 %v2626
    %v2999 = vunpack.c.h.b16 %v2626
    %v3000 = vunpack.c.l.b16 %v2627
    %v3001 = vunpack.c.h.b16 %v2627
    %v3002 = vunpack.c.l.b16 %v2628
    %v3003 = vunpack.c.h.b16 %v2628
    %v3004 = vunpack.c.l.b16 %v2629
    %v3005 = vunpack.c.h.b16 %v2629
    %v3006 = vunpack.c.l.b16 %v2630
    %v3007 = vunpack.c.h.b16 %v2630
    %v3008 = vunpack.c.l.b16 %v2631
    %v3009 = vunpack.c.h.b16 %v2631
    %v3010 = vunpack.c.l.b16 %v2632
    %v3011 = vunpack.c.h.b16 %v2632
    %v3012 = vunpack.c.l.b16 %v2633
    %v3013 = vunpack.c.h.b16 %v2633
    %v3014 = vunpack.c.l.b16 %v2634
    %v3015 = vunpack.c.h.b16 %v2634
    %v3016 = vunpack.c.l.b16 %v2635
    %v3017 = vunpack.c.h.b16 %v2635
    %v3018 = vunpack.c.l.b16 %v2636
    %v3019 = vunpack.c.h.b16 %v2636
    %v3020 = vunpack.c.l.b16 %v2637
    %v3021 = vunpack.c.h.b16 %v2637
    %v3022 = vunpack.c.l.b16 %v2638
    %v3023 = vunpack.c.h.b16 %v2638
    %v3024 = vunpack.c.l.b16 %v2639
    %v3025 = vunpack.c.h.b16 %v2639
    %v3026 = vunpack.c.l.b16 %v2640
    %v3027 = vunpack.c.h.b16 %v2640
    %v3028 = vunpack.c.l.b16 %v2641
    %v3029 = vunpack.c.h.b16 %v2641
    %v3030 = vunpack.c.l.b16 %v2642
    %v3031 = vunpack.c.h.b16 %v2642
    %v3032 = vunpack.c.l.b16 %v2643
    %v3033 = vunpack.c.h.b16 %v2643
    %v3034 = vunpack.c.l.b16 %v2644
    %v3035 = vunpack.c.h.b16 %v2644
    %v3036 = vunpack.c.l.b16 %v2645
    %v3037 = vunpack.c.h.b16 %v2645
    %v3038 = vunpack.c.l.b16 %v2646
    %v3039 = vunpack.c.h.b16 %v2646
    %v3040 = vunpack.c.l.b16 %v2647
    %v3041 = vunpack.c.h.b16 %v2647
    %v3042 = vunpack.c.l.b16 %v2648
    %v3043 = vunpack.c.h.b16 %v2648
    %v3044 = vunpack.c.l.b16 %v2649
    %v3045 = vunpack.c.h.b16 %v2649
    %v3046 = vunpack.c.l.b16 %v2650
    %v3047 = vunpack.c.h.b16 %v2650
    %v3048 = vunpack.c.l.b16 %v2651
    %v3049 = vunpack.c.h.b16 %v2651
    %v3050 = vunpack.c.l.b16 %v2652
    %v3051 = vunpack.c.h.b16 %v2652
    %v3052 = vunpack.c.l.b16 %v2653
    %v3053 = vunpack.c.h.b16 %v2653
    %v3054 = vunpack.c.l.b16 %v2654
    %v3055 = vunpack.c.h.b16 %v2654
    %v3056 = vunpack.c.l.b16 %v2655
    %v3057 = vunpack.c.h.b16 %v2655
    %v3058 = vunpack.c.l.b16 %v2656
    %v3059 = vunpack.c.h.b16 %v2656
    %v3060 = vunpack.c.l.b16 %v2657
    %v3061 = vunpack.c.h.b16 %v2657
    %v3062 = vunpack.c.l.b16 %v2658
    %v3063 = vunpack.c.h.b16 %v2658
    %v3064 = vunpack.c.l.b16 %v2659
    %v3065 = vunpack.c.h.b16 %v2659
    %v3066 = vunpack.c.l.b16 %v2660
    %v3067 = vunpack.c.h.b16 %v2660
    %v3068 = vunpack.c.l.b16 %v2661
    %v3069 = vunpack.c.h.b16 %v2661
    %v3070 = vunpack.c.l.b16 %v2662
    %v3071 = vunpack.c.h.b16 %v2662
    %v3072 = vunpack.c.l.b16 %v2663
    %v3073 = vunpack.c.h.b16 %v2663
    %v3074 = vunpack.c.l.b16 %v2664
    %v3075 = vunpack.c.h.b16 %v2664
    %v3076 = vunpack.c.l.b16 %v2665
    %v3077 = vunpack.c.h.b16 %v2665
    %v3078 = vunpack.c.l.b16 %v2666
    %v3079 = vunpack.c.h.b16 %v2666
    %v3080 = vunpack.c.l.b16 %v2667
    %v3081 = vunpack.c.h.b16 %v2667
    %v3082 = vunpack.c.l.b16 %v2668
    %v3083 = vunpack.c.h.b16 %v2668
    %v3084 = vunpack.c.l.b16 %v2669
    %v3085 = vunpack.c.h.b16 %v2669
    %v3086 = vunpack.c.l.b16 %v2670
    %v3087 = vunpack.c.h.b16 %v2670
    %v3088 = vunpack.c.l.b16 %v2671
    %v3089 = vunpack.c.h.b16 %v2671
    %v3090 = vunpack.c.l.b16 %v2672
    %v3091 = vunpack.c.h.b16 %v2672
    %v3092 = vunpack.c.l.b16 %v2673
    %v3093 = vunpack.c.h.b16 %v2673
    %v3094 = vunpack.c.l.b16 %v2674
    %v3095 = vunpack.c.h.b16 %v2674
    %v3096 = vunpack.c.l.b16 %v2675
    %v3097 = vunpack.c.h.b16 %v2675
    %v3098 = vunpack.c.l.b16 %v2676
    %v3099 = vunpack.c.h.b16 %v2676
    %v3100 = vunpack.c.l.b16 %v2677
    %v3101 = vunpack.c.h.b16 %v2677
    %v3102 = vunpack.c.l.b16 %v2678
    %v3103 = vunpack.c.h.b16 %v2678
    %v3104 = vunpack.c.l.b16 %v2679
    %v3105 = vunpack.c.h.b16 %v2679
    %v3106 = vunpack.c.l.b16 %v2680
    %v3107 = vunpack.c.h.b16 %v2680
    %v3108 = vunpack.c.l.b16 %v2681
    %v3109 = vunpack.c.h.b16 %v2681
    %v3110 = vunpack.c.l.b16 %v2682
    %v3111 = vunpack.c.h.b16 %v2682
    %v3112 = vunpack.c.l.b16 %v2683
    %v3113 = vunpack.c.h.b16 %v2683
    %v3114 = vunpack.c.l.b16 %v2684
    %v3115 = vunpack.c.h.b16 %v2684
    %v3116 = vunpack.c.l.b16 %v2685
    %v3117 = vunpack.c.h.b16 %v2685
    %v3118 = vunpack.c.l.b16 %v2686
    %v3119 = vunpack.c.h.b16 %v2686
    %v3120 = vunpack.c.l.b16 %v2687
    %v3121 = vunpack.c.h.b16 %v2687
    %v3122 = vunpack.c.l.b16 %v2688
    %v3123 = vunpack.c.h.b16 %v2688
    %v3124 = vunpack.c.l.b16 %v2689
    %v3125 = vunpack.c.h.b16 %v2689
    %v3126 = vpack.c.b16 %v2878, %v2870
    %v3127 = vpack.c.b16 %v2879, %v2871
    %v3128 = vpack.c.b16 %v2880, %v2872
    %v3129 = vpack.c.b16 %v2881, %v2873
    %v3130 = vpack.c.b16 %v2882, %v2874
    %v3131 = vpack.c.b16 %v2883, %v2875
    %v3132 = vpack.c.b16 %v2884, %v2876
    %v3133 = vpack.c.b16 %v2885, %v2877
    %v3134 = vpack.c.b16 %v2894, %v2886
    %v3135 = vpack.c.b16 %v2895, %v2887
    %v3136 = vpack.c.b16 %v2896, %v2888
    %v3137 = vpack.c.b16 %v2897, %v2889
    %v3138 = vpack.c.b16 %v2898, %v2890
    %v3139 = vpack.c.b16 %v2899, %v2891
    %v3140 = vpack.c.b16 %v2900, %v2892
    %v3141 = vpack.c.b16 %v2901, %v2893
    %v3142 = vpack.c.b16 %v2910, %v2902
    %v3143 = vpack.c.b16 %v2911, %v2903
    %v3144 = vpack.c.b16 %v2912, %v2904
    %v3145 = vpack.c.b16 %v2913, %v2905
    %v3146 = vpack.c.b16 %v2914, %v2906
    %v3147 = vpack.c.b16 %v2915, %v2907
    %v3148 = vpack.c.b16 %v2916, %v2908
    %v3149 = vpack.c.b16 %v2917, %v2909
    %v3150 = vpack.c.b16 %v2926, %v2918
    %v3151 = vpack.c.b16 %v2927, %v2919
    %v3152 = vpack.c.b16 %v2928, %v2920
    %v3153 = vpack.c.b16 %v2929, %v2921
    %v3154 = vpack.c.b16 %v2930, %v2922
    %v3155 = vpack.c.b16 %v2931, %v2923
    %v3156 = vpack.c.b16 %v2932, %v2924
    %v3157 = vpack.c.b16 %v2933, %v2925
    %v3158 = vpack.c.b16 %v2942, %v2934
    %v3159 = vpack.c.b16 %v2943, %v2935
    %v3160 = vpack.c.b16 %v2944, %v2936
    %v3161 = vpack.c.b16 %v2945, %v2937
    %v3162 = vpack.c.b16 %v2946, %v2938
    %v3163 = vpack.c.b16 %v2947, %v2939
    %v3164 = vpack.c.b16 %v2948, %v2940
    %v3165 = vpack.c.b16 %v2949, %v2941
    %v3166 = vpack.c.b16 %v2958, %v2950
    %v3167 = vpack.c.b16 %v2959, %v2951
    %v3168 = vpack.c.b16 %v2960, %v2952
    %v3169 = vpack.c.b16 %v2961, %v2953
    %v3170 = vpack.c.b16 %v2962, %v2954
    %v3171 = vpack.c.b16 %v2963, %v2955
    %v3172 = vpack.c.b16 %v2964, %v2956
    %v3173 = vpack.c.b16 %v2965, %v2957
    %v3174 = vpack.c.b16 %v2974, %v2966
    %v3175 = vpack.c.b16 %v2975, %v2967
    %v3176 = vpack.c.b16 %v2976, %v2968
    %v3177 = vpack.c.b16 %v2977, %v2969
    %v3178 = vpack.c.b16 %v2978, %v2970
    %v3179 = vpack.c.b16 %v2979, %v2971
    %v3180 = vpack.c.b16 %v2980, %v2972
    %v3181 = vpack.c.b16 %v2981, %v2973
    %v3182 = vpack.c.b16 %v2990, %v2982
    %v3183 = vpack.c.b16 %v2991, %v2983
    %v3184 = vpack.c.b16 %v2992, %v2984
    %v3185 = vpack.c.b16 %v2993, %v2985
    %v3186 = vpack.c.b16 %v2994, %v2986
    %v3187 = vpack.c.b16 %v2995, %v2987
    %v3188 = vpack.c.b16 %v2996, %v2988
    %v3189 = vpack.c.b16 %v2997, %v2989
    %v3190 = vpack.c.b16 %v3006, %v2998
    %v3191 = vpack.c.b16 %v3007, %v2999
    %v3192 = vpack.c.b16 %v3008, %v3000
    %v3193 = vpack.c.b16 %v3009, %v3001
    %v3194 = vpack.c.b16 %v3010, %v3002
    %v3195 = vpack.c.b16 %v3011, %v3003
    %v3196 = vpack.c.b16 %v3012, %v3004
    %v3197 = vpack.c.b16 %v3013, %v3005
    %v3198 = vpack.c.b16 %v3022, %v3014
    %v3199 = vpack.c.b16 %v3023, %v3015
    %v3200 = vpack.c.b16 %v3024, %v3016
    %v3201 = vpack.c.b16 %v3025, %v3017
    %v3202 = vpack.c.b16 %v3026, %v3018
    %v3203 = vpack.c.b16 %v3027, %v3019
    %v3204 = vpack.c.b16 %v3028, %v3020
    %v3205 = vpack.c.b16 %v3029, %v3021
    %v3206 = vpack.c.b16 %v3038, %v3030
    %v3207 = vpack.c.b16 %v3039, %v3031
    %v3208 = vpack.c.b16 %v3040, %v3032
    %v3209 = vpack.c.b16 %v3041, %v3033
    %v3210 = vpack.c.b16 %v3042, %v3034
    %v3211 = vpack.c.b16 %v3043, %v3035
    %v3212 = vpack.c.b16 %v3044, %v3036
    %v3213 = vpack.c.b16 %v3045, %v3037
    %v3214 = vpack.c.b16 %v3054, %v3046
    %v3215 = vpack.c.b16 %v3055, %v3047
    %v3216 = vpack.c.b16 %v3056, %v3048
    %v3217 = vpack.c.b16 %v3057, %v3049
    %v3218 = vpack.c.b16 %v3058, %v3050
    %v3219 = vpack.c.b16 %v3059, %v3051
    %v3220 = vpack.c.b16 %v3060, %v3052
    %v3221 = vpack.c.b16 %v3061, %v3053
    %v3222 = vpack.c.b16 %v3070, %v3062
    %v3223 = vpack.c.b16 %v3071, %v3063
    %v3224 = vpack.c.b16 %v3072, %v3064
    %v3225 = vpack.c.b16 %v3073, %v3065
    %v3226 = vpack.c.b16 %v3074, %v3066
    %v3227 = vpack.c.b16 %v3075, %v3067
    %v3228 = vpack.c.b16 %v3076, %v3068
    %v3229 = vpack.c.b16 %v3077, %v3069
    %v3230 = vpack.c.b16 %v3086, %v3078
    %v3231 = vpack.c.b16 %v3087, %v3079
    %v3232 = vpack.c.b16 %v3088, %v3080
    %v3233 = vpack.c.b16 %v3089, %v3081
    %v3234 = vpack.c.b16 %v3090, %v3082
    %v3235 = vpack.c.b16 %v3091, %v3083
    %v3236 = vpack.c.b16 %v3092, %v3084
    %v3237 = vpack.c.b16 %v3093, %v3085
    %v3238 = vpack.c.b16 %v3102, %v3094
    %v3239 = vpack.c.b16 %v3103, %v3095
    %v3240 = vpack.c.b16 %v3104, %v3096
    %v3241 = vpack.c.b16 %v3105, %v3097
    %v3242 = vpack.c.b16 %v3106, %v3098
    %v3243 = vpack.c.b16 %v3107, %v3099
    %v3244 = vpack.c.b16 %v3108, %v3100
    %v3245 = vpack.c.b16 %v3109, %v3101
    %v3246 = vpack.c.b16 %v3118, %v3110
    %v3247 = vpack.c.b16 %v3119, %v3111
    %v3248 = vpack.c.b16 %v3120, %v3112
    %v3249 = vpack.c.b16 %v3121, %v3113
    %v3250 = vpack.c.b16 %v3122, %v3114
    %v3251 = vpack.c.b16 %v3123, %v3115
    %v3252 = vpack.c.b16 %v3124, %v3116
    %v3253 = vpack.c.b16 %v3125, %v3117
    %3382 = vmatprep.subr.bf16.mxu0 %v3127
    %3383 = vmatpush1.bf16.msra.mxu0 %v3126
    %3384 = vmatprep.subr.bf16.mxu0 %v3135
    %3385 = vmatpush1.bf16.msra.mxu0 %v3134
    %3386 = vmatprep.subr.bf16.mxu0 %v3143
    %3387 = vmatpush1.bf16.msra.mxu0 %v3142
    %3388 = vmatprep.subr.bf16.mxu0 %v3151
    %3389 = vmatpush1.bf16.msra.mxu0 %v3150
    %3390 = vmatprep.subr.bf16.mxu0 %v3159
    %3391 = vmatpush1.bf16.msra.mxu0 %v3158
    %3392 = vmatprep.subr.bf16.mxu0 %v3167
    %3393 = vmatpush1.bf16.msra.mxu0 %v3166
    %3394 = vmatprep.subr.bf16.mxu0 %v3175
    %3395 = vmatpush1.bf16.msra.mxu0 %v3174
    %3396 = vmatprep.subr.bf16.mxu0 %v3183
    %3397 = vmatpush1.bf16.msra.mxu0 %v3182
    %3398 = vmatprep.subr.bf16.mxu0 %v3191
    %3399 = vmatpush1.bf16.msra.mxu0 %v3190
    %3400 = vmatprep.subr.bf16.mxu0 %v3199
    %3401 = vmatpush1.bf16.msra.mxu0 %v3198
    %3402 = vmatprep.subr.bf16.mxu0 %v3207
    %3403 = vmatpush1.bf16.msra.mxu0 %v3206
    %3404 = vmatprep.subr.bf16.mxu0 %v3215
    %3405 = vmatpush1.bf16.msra.mxu0 %v3214
    %3406 = vmatprep.subr.bf16.mxu0 %v3223
    %3407 = vmatpush1.bf16.msra.mxu0 %v3222
    %3408 = vmatprep.subr.bf16.mxu0 %v3231
    %3409 = vmatpush1.bf16.msra.mxu0 %v3230
    %3410 = vmatprep.subr.bf16.mxu0 %v3239
    %3411 = vmatpush1.bf16.msra.mxu0 %v3238
    %3412 = vmatprep.subr.bf16.mxu0 %v3247
    %3413 = vmatpush1.bf16.msra.mxu0 %v3246
    %3414 = vmatprep.mubr.bf16.mxu0 %v2739
    %3415 = vmatmul.mubr.bf16.gmra.mrb[0].mxu0 %v2738
    %v3416 = vpop.f32.mrb[0].mxu0
    %v3417 = vadd.f32 %v2695, %v3416
    %v3418 = vpop.f32.mrb[0].mxu0
    %v3419 = vadd.f32 %v2699, %v3418
    %v3420 = vpop.f32.mrb[0].mxu0
    %v3421 = vadd.f32 %v2695, %v3420
    %v3422 = vpop.f32.mrb[0].mxu0
    %v3423 = vadd.f32 %v2699, %v3422
    %3424 = vdwg.mxu0
    %3425 = vmatprep.subr.bf16.mxu0 %v3129
    %3426 = vmatpush1.bf16.msra.mxu0 %v3128
    %3427 = vmatprep.subr.bf16.mxu0 %v3137
    %3428 = vmatpush1.bf16.msra.mxu0 %v3136
    %3429 = vmatprep.subr.bf16.mxu0 %v3145
    %3430 = vmatpush1.bf16.msra.mxu0 %v3144
    %3431 = vmatprep.subr.bf16.mxu0 %v3153
    %3432 = vmatpush1.bf16.msra.mxu0 %v3152
    %3433 = vmatprep.subr.bf16.mxu0 %v3161
    %3434 = vmatpush1.bf16.msra.mxu0 %v3160
    %3435 = vmatprep.subr.bf16.mxu0 %v3169
    %3436 = vmatpush1.bf16.msra.mxu0 %v3168
    %3437 = vmatprep.subr.bf16.mxu0 %v3177
    %3438 = vmatpush1.bf16.msra.mxu0 %v3176
    %3439 = vmatprep.subr.bf16.mxu0 %v3185
    %3440 = vmatpush1.bf16.msra.mxu0 %v3184
    %3441 = vmatprep.subr.bf16.mxu0 %v3193
    %3442 = vmatpush1.bf16.msra.mxu0 %v3192
    %3443 = vmatprep.subr.bf16.mxu0 %v3201
    %3444 = vmatpush1.bf16.msra.mxu0 %v3200
    %3445 = vmatprep.subr.bf16.mxu0 %v3209
    %3446 = vmatpush1.bf16.msra.mxu0 %v3208
    %3447 = vmatprep.subr.bf16.mxu0 %v3217
    %3448 = vmatpush1.bf16.msra.mxu0 %v3216
    %3449 = vmatprep.subr.bf16.mxu0 %v3225
    %3450 = vmatpush1.bf16.msra.mxu0 %v3224
    %3451 = vmatprep.subr.bf16.mxu0 %v3233
    %3452 = vmatpush1.bf16.msra.mxu0 %v3232
    %3453 = vmatprep.subr.bf16.mxu0 %v3241
    %3454 = vmatpush1.bf16.msra.mxu0 %v3240
    %3455 = vmatprep.subr.bf16.mxu0 %v3249
    %3456 = vmatpush1.bf16.msra.mxu0 %v3248
    %3457 = vmatprep.mubr.bf16.mxu0 %v2739
    %3458 = vmatmul.mubr.bf16.gmra.mrb[0].mxu0 %v2738
    %v3459 = vpop.f32.mrb[0].mxu0
    %v3460 = vadd.f32 %v2703, %v3459
    %v3461 = vpop.f32.mrb[0].mxu0
    %v3462 = vadd.f32 %v2707, %v3461
    %v3463 = vpop.f32.mrb[0].mxu0
    %v3464 = vadd.f32 %v2703, %v3463
    %v3465 = vpop.f32.mrb[0].mxu0
    %v3466 = vadd.f32 %v2707, %v3465
    %3467 = vdwg.mxu0
    %3468 = vmatprep.subr.bf16.mxu0 %v3131
    %3469 = vmatpush1.bf16.msra.mxu0 %v3130
    %3470 = vmatprep.subr.bf16.mxu0 %v3139
    %3471 = vmatpush1.bf16.msra.mxu0 %v3138
    %3472 = vmatprep.subr.bf16.mxu0 %v3147
    %3473 = vmatpush1.bf16.msra.mxu0 %v3146
    %3474 = vmatprep.subr.bf16.mxu0 %v3155
    %3475 = vmatpush1.bf16.msra.mxu0 %v3154
    %3476 = vmatprep.subr.bf16.mxu0 %v3163
    %3477 = vmatpush1.bf16.msra.mxu0 %v3162
    %3478 = vmatprep.subr.bf16.mxu0 %v3171
    %3479 = vmatpush1.bf16.msra.mxu0 %v3170
    %3480 = vmatprep.subr.bf16.mxu0 %v3179
    %3481 = vmatpush1.bf16.msra.mxu0 %v3178
    %3482 = vmatprep.subr.bf16.mxu0 %v3187
    %3483 = vmatpush1.bf16.msra.mxu0 %v3186
    %3484 = vmatprep.subr.bf16.mxu0 %v3195
    %3485 = vmatpush1.bf16.msra.mxu0 %v3194
    %3486 = vmatprep.subr.bf16.mxu0 %v3203
    %3487 = vmatpush1.bf16.msra.mxu0 %v3202
    %3488 = vmatprep.subr.bf16.mxu0 %v3211
    %3489 = vmatpush1.bf16.msra.mxu0 %v3210
    %3490 = vmatprep.subr.bf16.mxu0 %v3219
    %3491 = vmatpush1.bf16.msra.mxu0 %v3218
    %3492 = vmatprep.subr.bf16.mxu0 %v3227
    %3493 = vmatpush1.bf16.msra.mxu0 %v3226
    %3494 = vmatprep.subr.bf16.mxu0 %v3235
    %3495 = vmatpush1.bf16.msra.mxu0 %v3234
    %3496 = vmatprep.subr.bf16.mxu0 %v3243
    %3497 = vmatpush1.bf16.msra.mxu0 %v3242
    %3498 = vmatprep.subr.bf16.mxu0 %v3251
    %3499 = vmatpush1.bf16.msra.mxu0 %v3250
    %3500 = vmatprep.mubr.bf16.mxu0 %v2739
    %3501 = vmatmul.mubr.bf16.gmra.mrb[0].mxu0 %v2738
    %v3502 = vpop.f32.mrb[0].mxu0
    %v3503 = vadd.f32 %v2711, %v3502
    %v3504 = vpop.f32.mrb[0].mxu0
    %v3505 = vadd.f32 %v2715, %v3504
    %v3506 = vpop.f32.mrb[0].mxu0
    %v3507 = vadd.f32 %v2711, %v3506
    %v3508 = vpop.f32.mrb[0].mxu0
    %v3509 = vadd.f32 %v2715, %v3508
    %3510 = vdwg.mxu0
    %3511 = vmatprep.subr.bf16.mxu0 %v3133
    %3512 = vmatpush1.bf16.msra.mxu0 %v3132
    %3513 = vmatprep.subr.bf16.mxu0 %v3141
    %3514 = vmatpush1.bf16.msra.mxu0 %v3140
    %3515 = vmatprep.subr.bf16.mxu0 %v3149
    %3516 = vmatpush1.bf16.msra.mxu0 %v3148
    %3517 = vmatprep.subr.bf16.mxu0 %v3157
    %3518 = vmatpush1.bf16.msra.mxu0 %v3156
    %3519 = vmatprep.subr.bf16.mxu0 %v3165
    %3520 = vmatpush1.bf16.msra.mxu0 %v3164
    %3521 = vmatprep.subr.bf16.mxu0 %v3173
    %3522 = vmatpush1.bf16.msra.mxu0 %v3172
    %3523 = vmatprep.subr.bf16.mxu0 %v3181
    %3524 = vmatpush1.bf16.msra.mxu0 %v3180
    %3525 = vmatprep.subr.bf16.mxu0 %v3189
    %3526 = vmatpush1.bf16.msra.mxu0 %v3188
    %3527 = vmatprep.subr.bf16.mxu0 %v3197
    %3528 = vmatpush1.bf16.msra.mxu0 %v3196
    %3529 = vmatprep.subr.bf16.mxu0 %v3205
    %3530 = vmatpush1.bf16.msra.mxu0 %v3204
    %3531 = vmatprep.subr.bf16.mxu0 %v3213
    %3532 = vmatpush1.bf16.msra.mxu0 %v3212
    %3533 = vmatprep.subr.bf16.mxu0 %v3221
    %3534 = vmatpush1.bf16.msra.mxu0 %v3220
    %3535 = vmatprep.subr.bf16.mxu0 %v3229
    %3536 = vmatpush1.bf16.msra.mxu0 %v3228
    %3537 = vmatprep.subr.bf16.mxu0 %v3237
    %3538 = vmatpush1.bf16.msra.mxu0 %v3236
    %3539 = vmatprep.subr.bf16.mxu0 %v3245
    %3540 = vmatpush1.bf16.msra.mxu0 %v3244
    %3541 = vmatprep.subr.bf16.mxu0 %v3253
    %3542 = vmatpush1.bf16.msra.mxu0 %v3252
    %3543 = vmatprep.mubr.bf16.mxu0 %v2739
    %3544 = vmatmul.mubr.bf16.gmra.mrb[0].mxu0 %v2738
    %v3545 = vpop.f32.mrb[0].mxu0
    %v3546 = vadd.f32 %v2719, %v3545
    %v3547 = vpop.f32.mrb[0].mxu0
    %v3548 = vadd.f32 %v2723, %v3547
    %v3549 = vpop.f32.mrb[0].mxu0
    %v3550 = vadd.f32 %v2719, %v3549
    %v3551 = vpop.f32.mrb[0].mxu0
    %v3552 = vadd.f32 %v2723, %v3551
    %3553 = vdwg.mxu0
    %v3554 = vpack.c.bf16 %v2558, %v2558
    %v3555 = vpack.c.bf16 %v2559, %v2559
    %v3556 = vld [vmem:[#allocation8] sm:$0xff]
    %v3557 = vld [vmem:[#allocation8 + $0x8] sm:$0xff]
    %v3558 = vld [vmem:[#allocation8 + $0x10] sm:$0xff]
    %v3559 = vld [vmem:[#allocation8 + $0x18] sm:$0xff]
    %v3560 = vld [vmem:[#allocation8 + $0x20] sm:$0xff]
    %v3561 = vld [vmem:[#allocation8 + $0x28] sm:$0xff]
    %v3562 = vld [vmem:[#allocation8 + $0x30] sm:$0xff]
    %v3563 = vld [vmem:[#allocation8 + $0x38] sm:$0xff]
    %v3564 = vld [vmem:[#allocation8 + $0x40] sm:$0xff]
    %v3565 = vld [vmem:[#allocation8 + $0x48] sm:$0xff]
    %v3566 = vld [vmem:[#allocation8 + $0x50] sm:$0xff]
    %v3567 = vld [vmem:[#allocation8 + $0x58] sm:$0xff]
    %v3568 = vld [vmem:[#allocation8 + $0x60] sm:$0xff]
    %v3569 = vld [vmem:[#allocation8 + $0x68] sm:$0xff]
    %v3570 = vld [vmem:[#allocation8 + $0x70] sm:$0xff]
    %v3571 = vld [vmem:[#allocation8 + $0x78] sm:$0xff]
    %v3572 = vld [vmem:[#allocation8 + $0x80] sm:$0xff]
    %v3573 = vld [vmem:[#allocation8 + $0x88] sm:$0xff]
    %v3574 = vld [vmem:[#allocation8 + $0x90] sm:$0xff]
    %v3575 = vld [vmem:[#allocation8 + $0x98] sm:$0xff]
    %v3576 = vld [vmem:[#allocation8 + $0xa0] sm:$0xff]
    %v3577 = vld [vmem:[#allocation8 + $0xa8] sm:$0xff]
    %v3578 = vld [vmem:[#allocation8 + $0xb0] sm:$0xff]
    %v3579 = vld [vmem:[#allocation8 + $0xb8] sm:$0xff]
    %v3580 = vld [vmem:[#allocation8 + $0xc0] sm:$0xff]
    %v3581 = vld [vmem:[#allocation8 + $0xc8] sm:$0xff]
    %v3582 = vld [vmem:[#allocation8 + $0xd0] sm:$0xff]
    %v3583 = vld [vmem:[#allocation8 + $0xd8] sm:$0xff]
    %v3584 = vld [vmem:[#allocation8 + $0xe0] sm:$0xff]
    %v3585 = vld [vmem:[#allocation8 + $0xe8] sm:$0xff]
    %v3586 = vld [vmem:[#allocation8 + $0xf0] sm:$0xff]
    %v3587 = vld [vmem:[#allocation8 + $0xf8] sm:$0xff]
    %v3588 = vld [vmem:[#allocation8 + $0x100] sm:$0xff]
    %v3589 = vld [vmem:[#allocation8 + $0x108] sm:$0xff]
    %v3590 = vld [vmem:[#allocation8 + $0x110] sm:$0xff]
    %v3591 = vld [vmem:[#allocation8 + $0x118] sm:$0xff]
    %v3592 = vld [vmem:[#allocation8 + $0x120] sm:$0xff]
    %v3593 = vld [vmem:[#allocation8 + $0x128] sm:$0xff]
    %v3594 = vld [vmem:[#allocation8 + $0x130] sm:$0xff]
    %v3595 = vld [vmem:[#allocation8 + $0x138] sm:$0xff]
    %v3596 = vld [vmem:[#allocation8 + $0x140] sm:$0xff]
    %v3597 = vld [vmem:[#allocation8 + $0x148] sm:$0xff]
    %v3598 = vld [vmem:[#allocation8 + $0x150] sm:$0xff]
    %v3599 = vld [vmem:[#allocation8 + $0x158] sm:$0xff]
    %v3600 = vld [vmem:[#allocation8 + $0x160] sm:$0xff]
    %v3601 = vld [vmem:[#allocation8 + $0x168] sm:$0xff]
    %v3602 = vld [vmem:[#allocation8 + $0x170] sm:$0xff]
    %v3603 = vld [vmem:[#allocation8 + $0x178] sm:$0xff]
    %v3604 = vld [vmem:[#allocation8 + $0x180] sm:$0xff]
    %v3605 = vld [vmem:[#allocation8 + $0x188] sm:$0xff]
    %v3606 = vld [vmem:[#allocation8 + $0x190] sm:$0xff]
    %v3607 = vld [vmem:[#allocation8 + $0x198] sm:$0xff]
    %v3608 = vld [vmem:[#allocation8 + $0x1a0] sm:$0xff]
    %v3609 = vld [vmem:[#allocation8 + $0x1a8] sm:$0xff]
    %v3610 = vld [vmem:[#allocation8 + $0x1b0] sm:$0xff]
    %v3611 = vld [vmem:[#allocation8 + $0x1b8] sm:$0xff]
    %v3612 = vld [vmem:[#allocation8 + $0x1c0] sm:$0xff]
    %v3613 = vld [vmem:[#allocation8 + $0x1c8] sm:$0xff]
    %v3614 = vld [vmem:[#allocation8 + $0x1d0] sm:$0xff]
    %v3615 = vld [vmem:[#allocation8 + $0x1d8] sm:$0xff]
    %v3616 = vld [vmem:[#allocation8 + $0x1e0] sm:$0xff]
    %v3617 = vld [vmem:[#allocation8 + $0x1e8] sm:$0xff]
    %v3618 = vld [vmem:[#allocation8 + $0x1f0] sm:$0xff]
    %v3619 = vld [vmem:[#allocation8 + $0x1f8] sm:$0xff]
    %v3620 = vld [vmem:[#allocation8 + $0x200] sm:$0xff]
    %v3621 = vld [vmem:[#allocation8 + $0x208] sm:$0xff]
    %v3622 = vld [vmem:[#allocation8 + $0x210] sm:$0xff]
    %v3623 = vld [vmem:[#allocation8 + $0x218] sm:$0xff]
    %v3624 = vld [vmem:[#allocation8 + $0x220] sm:$0xff]
    %v3625 = vld [vmem:[#allocation8 + $0x228] sm:$0xff]
    %v3626 = vld [vmem:[#allocation8 + $0x230] sm:$0xff]
    %v3627 = vld [vmem:[#allocation8 + $0x238] sm:$0xff]
    %v3628 = vld [vmem:[#allocation8 + $0x240] sm:$0xff]
    %v3629 = vld [vmem:[#allocation8 + $0x248] sm:$0xff]
    %v3630 = vld [vmem:[#allocation8 + $0x250] sm:$0xff]
    %v3631 = vld [vmem:[#allocation8 + $0x258] sm:$0xff]
    %v3632 = vld [vmem:[#allocation8 + $0x260] sm:$0xff]
    %v3633 = vld [vmem:[#allocation8 + $0x268] sm:$0xff]
    %v3634 = vld [vmem:[#allocation8 + $0x270] sm:$0xff]
    %v3635 = vld [vmem:[#allocation8 + $0x278] sm:$0xff]
    %v3636 = vld [vmem:[#allocation8 + $0x280] sm:$0xff]
    %v3637 = vld [vmem:[#allocation8 + $0x288] sm:$0xff]
    %v3638 = vld [vmem:[#allocation8 + $0x290] sm:$0xff]
    %v3639 = vld [vmem:[#allocation8 + $0x298] sm:$0xff]
    %v3640 = vld [vmem:[#allocation8 + $0x2a0] sm:$0xff]
    %v3641 = vld [vmem:[#allocation8 + $0x2a8] sm:$0xff]
    %v3642 = vld [vmem:[#allocation8 + $0x2b0] sm:$0xff]
    %v3643 = vld [vmem:[#allocation8 + $0x2b8] sm:$0xff]
    %v3644 = vld [vmem:[#allocation8 + $0x2c0] sm:$0xff]
    %v3645 = vld [vmem:[#allocation8 + $0x2c8] sm:$0xff]
    %v3646 = vld [vmem:[#allocation8 + $0x2d0] sm:$0xff]
    %v3647 = vld [vmem:[#allocation8 + $0x2d8] sm:$0xff]
    %v3648 = vld [vmem:[#allocation8 + $0x2e0] sm:$0xff]
    %v3649 = vld [vmem:[#allocation8 + $0x2e8] sm:$0xff]
    %v3650 = vld [vmem:[#allocation8 + $0x2f0] sm:$0xff]
    %v3651 = vld [vmem:[#allocation8 + $0x2f8] sm:$0xff]
    %v3652 = vld [vmem:[#allocation8 + $0x300] sm:$0xff]
    %v3653 = vld [vmem:[#allocation8 + $0x308] sm:$0xff]
    %v3654 = vld [vmem:[#allocation8 + $0x310] sm:$0xff]
    %v3655 = vld [vmem:[#allocation8 + $0x318] sm:$0xff]
    %v3656 = vld [vmem:[#allocation8 + $0x320] sm:$0xff]
    %v3657 = vld [vmem:[#allocation8 + $0x328] sm:$0xff]
    %v3658 = vld [vmem:[#allocation8 + $0x330] sm:$0xff]
    %v3659 = vld [vmem:[#allocation8 + $0x338] sm:$0xff]
    %v3660 = vld [vmem:[#allocation8 + $0x340] sm:$0xff]
    %v3661 = vld [vmem:[#allocation8 + $0x348] sm:$0xff]
    %v3662 = vld [vmem:[#allocation8 + $0x350] sm:$0xff]
    %v3663 = vld [vmem:[#allocation8 + $0x358] sm:$0xff]
    %v3664 = vld [vmem:[#allocation8 + $0x360] sm:$0xff]
    %v3665 = vld [vmem:[#allocation8 + $0x368] sm:$0xff]
    %v3666 = vld [vmem:[#allocation8 + $0x370] sm:$0xff]
    %v3667 = vld [vmem:[#allocation8 + $0x378] sm:$0xff]
    %v3668 = vld [vmem:[#allocation8 + $0x380] sm:$0xff]
    %v3669 = vld [vmem:[#allocation8 + $0x388] sm:$0xff]
    %v3670 = vld [vmem:[#allocation8 + $0x390] sm:$0xff]
    %v3671 = vld [vmem:[#allocation8 + $0x398] sm:$0xff]
    %v3672 = vld [vmem:[#allocation8 + $0x3a0] sm:$0xff]
    %v3673 = vld [vmem:[#allocation8 + $0x3a8] sm:$0xff]
    %v3674 = vld [vmem:[#allocation8 + $0x3b0] sm:$0xff]
    %v3675 = vld [vmem:[#allocation8 + $0x3b8] sm:$0xff]
    %v3676 = vld [vmem:[#allocation8 + $0x3c0] sm:$0xff]
    %v3677 = vld [vmem:[#allocation8 + $0x3c8] sm:$0xff]
    %v3678 = vld [vmem:[#allocation8 + $0x3d0] sm:$0xff]
    %v3679 = vld [vmem:[#allocation8 + $0x3d8] sm:$0xff]
    %v3680 = vld [vmem:[#allocation8 + $0x3e0] sm:$0xff]
    %v3681 = vld [vmem:[#allocation8 + $0x3e8] sm:$0xff]
    %v3682 = vld [vmem:[#allocation8 + $0x3f0] sm:$0xff]
    %v3683 = vld [vmem:[#allocation8 + $0x3f8] sm:$0xff]
    %v3812 = vunpack.c.l.b16 %v3556
    %v3813 = vunpack.c.h.b16 %v3556
    %v3814 = vunpack.c.l.b16 %v3557
    %v3815 = vunpack.c.h.b16 %v3557
    %v3816 = vunpack.c.l.b16 %v3558
    %v3817 = vunpack.c.h.b16 %v3558
    %v3818 = vunpack.c.l.b16 %v3559
    %v3819 = vunpack.c.h.b16 %v3559
    %v3820 = vunpack.c.l.b16 %v3560
    %v3821 = vunpack.c.h.b16 %v3560
    %v3822 = vunpack.c.l.b16 %v3561
    %v3823 = vunpack.c.h.b16 %v3561
    %v3824 = vunpack.c.l.b16 %v3562
    %v3825 = vunpack.c.h.b16 %v3562
    %v3826 = vunpack.c.l.b16 %v3563
    %v3827 = vunpack.c.h.b16 %v3563
    %v3828 = vunpack.c.l.b16 %v3564
    %v3829 = vunpack.c.h.b16 %v3564
    %v3830 = vunpack.c.l.b16 %v3565
    %v3831 = vunpack.c.h.b16 %v3565
    %v3832 = vunpack.c.l.b16 %v3566
    %v3833 = vunpack.c.h.b16 %v3566
    %v3834 = vunpack.c.l.b16 %v3567
    %v3835 = vunpack.c.h.b16 %v3567
    %v3836 = vunpack.c.l.b16 %v3568
    %v3837 = vunpack.c.h.b16 %v3568
    %v3838 = vunpack.c.l.b16 %v3569
    %v3839 = vunpack.c.h.b16 %v3569
    %v3840 = vunpack.c.l.b16 %v3570
    %v3841 = vunpack.c.h.b16 %v3570
    %v3842 = vunpack.c.l.b16 %v3571
    %v3843 = vunpack.c.h.b16 %v3571
    %v3844 = vunpack.c.l.b16 %v3572
    %v3845 = vunpack.c.h.b16 %v3572
    %v3846 = vunpack.c.l.b16 %v3573
    %v3847 = vunpack.c.h.b16 %v3573
    %v3848 = vunpack.c.l.b16 %v3574
    %v3849 = vunpack.c.h.b16 %v3574
    %v3850 = vunpack.c.l.b16 %v3575
    %v3851 = vunpack.c.h.b16 %v3575
    %v3852 = vunpack.c.l.b16 %v3576
    %v3853 = vunpack.c.h.b16 %v3576
    %v3854 = vunpack.c.l.b16 %v3577
    %v3855 = vunpack.c.h.b16 %v3577
    %v3856 = vunpack.c.l.b16 %v3578
    %v3857 = vunpack.c.h.b16 %v3578
    %v3858 = vunpack.c.l.b16 %v3579
    %v3859 = vunpack.c.h.b16 %v3579
    %v3860 = vunpack.c.l.b16 %v3580
    %v3861 = vunpack.c.h.b16 %v3580
    %v3862 = vunpack.c.l.b16 %v3581
    %v3863 = vunpack.c.h.b16 %v3581
    %v3864 = vunpack.c.l.b16 %v3582
    %v3865 = vunpack.c.h.b16 %v3582
    %v3866 = vunpack.c.l.b16 %v3583
    %v3867 = vunpack.c.h.b16 %v3583
    %v3868 = vunpack.c.l.b16 %v3584
    %v3869 = vunpack.c.h.b16 %v3584
    %v3870 = vunpack.c.l.b16 %v3585
    %v3871 = vunpack.c.h.b16 %v3585
    %v3872 = vunpack.c.l.b16 %v3586
    %v3873 = vunpack.c.h.b16 %v3586
    %v3874 = vunpack.c.l.b16 %v3587
    %v3875 = vunpack.c.h.b16 %v3587
    %v3876 = vunpack.c.l.b16 %v3588
    %v3877 = vunpack.c.h.b16 %v3588
    %v3878 = vunpack.c.l.b16 %v3589
    %v3879 = vunpack.c.h.b16 %v3589
    %v3880 = vunpack.c.l.b16 %v3590
    %v3881 = vunpack.c.h.b16 %v3590
    %v3882 = vunpack.c.l.b16 %v3591
    %v3883 = vunpack.c.h.b16 %v3591
    %v3884 = vunpack.c.l.b16 %v3592
    %v3885 = vunpack.c.h.b16 %v3592
    %v3886 = vunpack.c.l.b16 %v3593
    %v3887 = vunpack.c.h.b16 %v3593
    %v3888 = vunpack.c.l.b16 %v3594
    %v3889 = vunpack.c.h.b16 %v3594
    %v3890 = vunpack.c.l.b16 %v3595
    %v3891 = vunpack.c.h.b16 %v3595
    %v3892 = vunpack.c.l.b16 %v3596
    %v3893 = vunpack.c.h.b16 %v3596
    %v3894 = vunpack.c.l.b16 %v3597
    %v3895 = vunpack.c.h.b16 %v3597
    %v3896 = vunpack.c.l.b16 %v3598
    %v3897 = vunpack.c.h.b16 %v3598
    %v3898 = vunpack.c.l.b16 %v3599
    %v3899 = vunpack.c.h.b16 %v3599
    %v3900 = vunpack.c.l.b16 %v3600
    %v3901 = vunpack.c.h.b16 %v3600
    %v3902 = vunpack.c.l.b16 %v3601
    %v3903 = vunpack.c.h.b16 %v3601
    %v3904 = vunpack.c.l.b16 %v3602
    %v3905 = vunpack.c.h.b16 %v3602
    %v3906 = vunpack.c.l.b16 %v3603
    %v3907 = vunpack.c.h.b16 %v3603
    %v3908 = vunpack.c.l.b16 %v3604
    %v3909 = vunpack.c.h.b16 %v3604
    %v3910 = vunpack.c.l.b16 %v3605
    %v3911 = vunpack.c.h.b16 %v3605
    %v3912 = vunpack.c.l.b16 %v3606
    %v3913 = vunpack.c.h.b16 %v3606
    %v3914 = vunpack.c.l.b16 %v3607
    %v3915 = vunpack.c.h.b16 %v3607
    %v3916 = vunpack.c.l.b16 %v3608
    %v3917 = vunpack.c.h.b16 %v3608
    %v3918 = vunpack.c.l.b16 %v3609
    %v3919 = vunpack.c.h.b16 %v3609
    %v3920 = vunpack.c.l.b16 %v3610
    %v3921 = vunpack.c.h.b16 %v3610
    %v3922 = vunpack.c.l.b16 %v3611
    %v3923 = vunpack.c.h.b16 %v3611
    %v3924 = vunpack.c.l.b16 %v3612
    %v3925 = vunpack.c.h.b16 %v3612
    %v3926 = vunpack.c.l.b16 %v3613
    %v3927 = vunpack.c.h.b16 %v3613
    %v3928 = vunpack.c.l.b16 %v3614
    %v3929 = vunpack.c.h.b16 %v3614
    %v3930 = vunpack.c.l.b16 %v3615
    %v3931 = vunpack.c.h.b16 %v3615
    %v3932 = vunpack.c.l.b16 %v3616
    %v3933 = vunpack.c.h.b16 %v3616
    %v3934 = vunpack.c.l.b16 %v3617
    %v3935 = vunpack.c.h.b16 %v3617
    %v3936 = vunpack.c.l.b16 %v3618
    %v3937 = vunpack.c.h.b16 %v3618
    %v3938 = vunpack.c.l.b16 %v3619
    %v3939 = vunpack.c.h.b16 %v3619
    %v3940 = vunpack.c.l.b16 %v3620
    %v3941 = vunpack.c.h.b16 %v3620
    %v3942 = vunpack.c.l.b16 %v3621
    %v3943 = vunpack.c.h.b16 %v3621
    %v3944 = vunpack.c.l.b16 %v3622
    %v3945 = vunpack.c.h.b16 %v3622
    %v3946 = vunpack.c.l.b16 %v3623
    %v3947 = vunpack.c.h.b16 %v3623
    %v3948 = vunpack.c.l.b16 %v3624
    %v3949 = vunpack.c.h.b16 %v3624
    %v3950 = vunpack.c.l.b16 %v3625
    %v3951 = vunpack.c.h.b16 %v3625
    %v3952 = vunpack.c.l.b16 %v3626
    %v3953 = vunpack.c.h.b16 %v3626
    %v3954 = vunpack.c.l.b16 %v3627
    %v3955 = vunpack.c.h.b16 %v3627
    %v3956 = vunpack.c.l.b16 %v3628
    %v3957 = vunpack.c.h.b16 %v3628
    %v3958 = vunpack.c.l.b16 %v3629
    %v3959 = vunpack.c.h.b16 %v3629
    %v3960 = vunpack.c.l.b16 %v3630
    %v3961 = vunpack.c.h.b16 %v3630
    %v3962 = vunpack.c.l.b16 %v3631
    %v3963 = vunpack.c.h.b16 %v3631
    %v3964 = vunpack.c.l.b16 %v3632
    %v3965 = vunpack.c.h.b16 %v3632
    %v3966 = vunpack.c.l.b16 %v3633
    %v3967 = vunpack.c.h.b16 %v3633
    %v3968 = vunpack.c.l.b16 %v3634
    %v3969 = vunpack.c.h.b16 %v3634
    %v3970 = vunpack.c.l.b16 %v3635
    %v3971 = vunpack.c.h.b16 %v3635
    %v3972 = vunpack.c.l.b16 %v3636
    %v3973 = vunpack.c.h.b16 %v3636
    %v3974 = vunpack.c.l.b16 %v3637
    %v3975 = vunpack.c.h.b16 %v3637
    %v3976 = vunpack.c.l.b16 %v3638
    %v3977 = vunpack.c.h.b16 %v3638
    %v3978 = vunpack.c.l.b16 %v3639
    %v3979 = vunpack.c.h.b16 %v3639
    %v3980 = vunpack.c.l.b16 %v3640
    %v3981 = vunpack.c.h.b16 %v3640
    %v3982 = vunpack.c.l.b16 %v3641
    %v3983 = vunpack.c.h.b16 %v3641
    %v3984 = vunpack.c.l.b16 %v3642
    %v3985 = vunpack.c.h.b16 %v3642
    %v3986 = vunpack.c.l.b16 %v3643
    %v3987 = vunpack.c.h.b16 %v3643
    %v3988 = vunpack.c.l.b16 %v3644
    %v3989 = vunpack.c.h.b16 %v3644
    %v3990 = vunpack.c.l.b16 %v3645
    %v3991 = vunpack.c.h.b16 %v3645
    %v3992 = vunpack.c.l.b16 %v3646
    %v3993 = vunpack.c.h.b16 %v3646
    %v3994 = vunpack.c.l.b16 %v3647
    %v3995 = vunpack.c.h.b16 %v3647
    %v3996 = vunpack.c.l.b16 %v3648
    %v3997 = vunpack.c.h.b16 %v3648
    %v3998 = vunpack.c.l.b16 %v3649
    %v3999 = vunpack.c.h.b16 %v3649
    %v4000 = vunpack.c.l.b16 %v3650
    %v4001 = vunpack.c.h.b16 %v3650
    %v4002 = vunpack.c.l.b16 %v3651
    %v4003 = vunpack.c.h.b16 %v3651
    %v4004 = vunpack.c.l.b16 %v3652
    %v4005 = vunpack.c.h.b16 %v3652
    %v4006 = vunpack.c.l.b16 %v3653
    %v4007 = vunpack.c.h.b16 %v3653
    %v4008 = vunpack.c.l.b16 %v3654
    %v4009 = vunpack.c.h.b16 %v3654
    %v4010 = vunpack.c.l.b16 %v3655
    %v4011 = vunpack.c.h.b16 %v3655
    %v4012 = vunpack.c.l.b16 %v3656
    %v4013 = vunpack.c.h.b16 %v3656
    %v4014 = vunpack.c.l.b16 %v3657
    %v4015 = vunpack.c.h.b16 %v3657
    %v4016 = vunpack.c.l.b16 %v3658
    %v4017 = vunpack.c.h.b16 %v3658
    %v4018 = vunpack.c.l.b16 %v3659
    %v4019 = vunpack.c.h.b16 %v3659
    %v4020 = vunpack.c.l.b16 %v3660
    %v4021 = vunpack.c.h.b16 %v3660
    %v4022 = vunpack.c.l.b16 %v3661
    %v4023 = vunpack.c.h.b16 %v3661
    %v4024 = vunpack.c.l.b16 %v3662
    %v4025 = vunpack.c.h.b16 %v3662
    %v4026 = vunpack.c.l.b16 %v3663
    %v4027 = vunpack.c.h.b16 %v3663
    %v4028 = vunpack.c.l.b16 %v3664
    %v4029 = vunpack.c.h.b16 %v3664
    %v4030 = vunpack.c.l.b16 %v3665
    %v4031 = vunpack.c.h.b16 %v3665
    %v4032 = vunpack.c.l.b16 %v3666
    %v4033 = vunpack.c.h.b16 %v3666
    %v4034 = vunpack.c.l.b16 %v3667
    %v4035 = vunpack.c.h.b16 %v3667
    %v4036 = vunpack.c.l.b16 %v3668
    %v4037 = vunpack.c.h.b16 %v3668
    %v4038 = vunpack.c.l.b16 %v3669
    %v4039 = vunpack.c.h.b16 %v3669
    %v4040 = vunpack.c.l.b16 %v3670
    %v4041 = vunpack.c.h.b16 %v3670
    %v4042 = vunpack.c.l.b16 %v3671
    %v4043 = vunpack.c.h.b16 %v3671
    %v4044 = vunpack.c.l.b16 %v3672
    %v4045 = vunpack.c.h.b16 %v3672
    %v4046 = vunpack.c.l.b16 %v3673
    %v4047 = vunpack.c.h.b16 %v3673
    %v4048 = vunpack.c.l.b16 %v3674
    %v4049 = vunpack.c.h.b16 %v3674
    %v4050 = vunpack.c.l.b16 %v3675
    %v4051 = vunpack.c.h.b16 %v3675
    %v4052 = vunpack.c.l.b16 %v3676
    %v4053 = vunpack.c.h.b16 %v3676
    %v4054 = vunpack.c.l.b16 %v3677
    %v4055 = vunpack.c.h.b16 %v3677
    %v4056 = vunpack.c.l.b16 %v3678
    %v4057 = vunpack.c.h.b16 %v3678
    %v4058 = vunpack.c.l.b16 %v3679
    %v4059 = vunpack.c.h.b16 %v3679
    %v4060 = vunpack.c.l.b16 %v3680
    %v4061 = vunpack.c.h.b16 %v3680
    %v4062 = vunpack.c.l.b16 %v3681
    %v4063 = vunpack.c.h.b16 %v3681
    %v4064 = vunpack.c.l.b16 %v3682
    %v4065 = vunpack.c.h.b16 %v3682
    %v4066 = vunpack.c.l.b16 %v3683
    %v4067 = vunpack.c.h.b16 %v3683
    %v4068 = vpack.c.b16 %v3820, %v3812
    %v4069 = vpack.c.b16 %v3821, %v3813
    %v4070 = vpack.c.b16 %v3822, %v3814
    %v4071 = vpack.c.b16 %v3823, %v3815
    %v4072 = vpack.c.b16 %v3824, %v3816
    %v4073 = vpack.c.b16 %v3825, %v3817
    %v4074 = vpack.c.b16 %v3826, %v3818
    %v4075 = vpack.c.b16 %v3827, %v3819
    %v4076 = vpack.c.b16 %v3836, %v3828
    %v4077 = vpack.c.b16 %v3837, %v3829
    %v4078 = vpack.c.b16 %v3838, %v3830
    %v4079 = vpack.c.b16 %v3839, %v3831
    %v4080 = vpack.c.b16 %v3840, %v3832
    %v4081 = vpack.c.b16 %v3841, %v3833
    %v4082 = vpack.c.b16 %v3842, %v3834
    %v4083 = vpack.c.b16 %v3843, %v3835
    %v4084 = vpack.c.b16 %v3852, %v3844
    %v4085 = vpack.c.b16 %v3853, %v3845
    %v4086 = vpack.c.b16 %v3854, %v3846
    %v4087 = vpack.c.b16 %v3855, %v3847
    %v4088 = vpack.c.b16 %v3856, %v3848
    %v4089 = vpack.c.b16 %v3857, %v3849
    %v4090 = vpack.c.b16 %v3858, %v3850
    %v4091 = vpack.c.b16 %v3859, %v3851
    %v4092 = vpack.c.b16 %v3868, %v3860
    %v4093 = vpack.c.b16 %v3869, %v3861
    %v4094 = vpack.c.b16 %v3870, %v3862
    %v4095 = vpack.c.b16 %v3871, %v3863
    %v4096 = vpack.c.b16 %v3872, %v3864
    %v4097 = vpack.c.b16 %v3873, %v3865
    %v4098 = vpack.c.b16 %v3874, %v3866
    %v4099 = vpack.c.b16 %v3875, %v3867
    %v4100 = vpack.c.b16 %v3884, %v3876
    %v4101 = vpack.c.b16 %v3885, %v3877
    %v4102 = vpack.c.b16 %v3886, %v3878
    %v4103 = vpack.c.b16 %v3887, %v3879
    %v4104 = vpack.c.b16 %v3888, %v3880
    %v4105 = vpack.c.b16 %v3889, %v3881
    %v4106 = vpack.c.b16 %v3890, %v3882
    %v4107 = vpack.c.b16 %v3891, %v3883
    %v4108 = vpack.c.b16 %v3900, %v3892
    %v4109 = vpack.c.b16 %v3901, %v3893
    %v4110 = vpack.c.b16 %v3902, %v3894
    %v4111 = vpack.c.b16 %v3903, %v3895
    %v4112 = vpack.c.b16 %v3904, %v3896
    %v4113 = vpack.c.b16 %v3905, %v3897
    %v4114 = vpack.c.b16 %v3906, %v3898
    %v4115 = vpack.c.b16 %v3907, %v3899
    %v4116 = vpack.c.b16 %v3916, %v3908
    %v4117 = vpack.c.b16 %v3917, %v3909
    %v4118 = vpack.c.b16 %v3918, %v3910
    %v4119 = vpack.c.b16 %v3919, %v3911
    %v4120 = vpack.c.b16 %v3920, %v3912
    %v4121 = vpack.c.b16 %v3921, %v3913
    %v4122 = vpack.c.b16 %v3922, %v3914
    %v4123 = vpack.c.b16 %v3923, %v3915
    %v4124 = vpack.c.b16 %v3932, %v3924
    %v4125 = vpack.c.b16 %v3933, %v3925
    %v4126 = vpack.c.b16 %v3934, %v3926
    %v4127 = vpack.c.b16 %v3935, %v3927
    %v4128 = vpack.c.b16 %v3936, %v3928
    %v4129 = vpack.c.b16 %v3937, %v3929
    %v4130 = vpack.c.b16 %v3938, %v3930
    %v4131 = vpack.c.b16 %v3939, %v3931
    %v4132 = vpack.c.b16 %v3948, %v3940
    %v4133 = vpack.c.b16 %v3949, %v3941
    %v4134 = vpack.c.b16 %v3950, %v3942
    %v4135 = vpack.c.b16 %v3951, %v3943
    %v4136 = vpack.c.b16 %v3952, %v3944
    %v4137 = vpack.c.b16 %v3953, %v3945
    %v4138 = vpack.c.b16 %v3954, %v3946
    %v4139 = vpack.c.b16 %v3955, %v3947
    %v4140 = vpack.c.b16 %v3964, %v3956
    %v4141 = vpack.c.b16 %v3965, %v3957
    %v4142 = vpack.c.b16 %v3966, %v3958
    %v4143 = vpack.c.b16 %v3967, %v3959
    %v4144 = vpack.c.b16 %v3968, %v3960
    %v4145 = vpack.c.b16 %v3969, %v3961
    %v4146 = vpack.c.b16 %v3970, %v3962
    %v4147 = vpack.c.b16 %v3971, %v3963
    %v4148 = vpack.c.b16 %v3980, %v3972
    %v4149 = vpack.c.b16 %v3981, %v3973
    %v4150 = vpack.c.b16 %v3982, %v3974
    %v4151 = vpack.c.b16 %v3983, %v3975
    %v4152 = vpack.c.b16 %v3984, %v3976
    %v4153 = vpack.c.b16 %v3985, %v3977
    %v4154 = vpack.c.b16 %v3986, %v3978
    %v4155 = vpack.c.b16 %v3987, %v3979
    %v4156 = vpack.c.b16 %v3996, %v3988
    %v4157 = vpack.c.b16 %v3997, %v3989
    %v4158 = vpack.c.b16 %v3998, %v3990
    %v4159 = vpack.c.b16 %v3999, %v3991
    %v4160 = vpack.c.b16 %v4000, %v3992
    %v4161 = vpack.c.b16 %v4001, %v3993
    %v4162 = vpack.c.b16 %v4002, %v3994
    %v4163 = vpack.c.b16 %v4003, %v3995
    %v4164 = vpack.c.b16 %v4012, %v4004
    %v4165 = vpack.c.b16 %v4013, %v4005
    %v4166 = vpack.c.b16 %v4014, %v4006
    %v4167 = vpack.c.b16 %v4015, %v4007
    %v4168 = vpack.c.b16 %v4016, %v4008
    %v4169 = vpack.c.b16 %v4017, %v4009
    %v4170 = vpack.c.b16 %v4018, %v4010
    %v4171 = vpack.c.b16 %v4019, %v4011
    %v4172 = vpack.c.b16 %v4028, %v4020
    %v4173 = vpack.c.b16 %v4029, %v4021
    %v4174 = vpack.c.b16 %v4030, %v4022
    %v4175 = vpack.c.b16 %v4031, %v4023
    %v4176 = vpack.c.b16 %v4032, %v4024
    %v4177 = vpack.c.b16 %v4033, %v4025
    %v4178 = vpack.c.b16 %v4034, %v4026
    %v4179 = vpack.c.b16 %v4035, %v4027
    %v4180 = vpack.c.b16 %v4044, %v4036
    %v4181 = vpack.c.b16 %v4045, %v4037
    %v4182 = vpack.c.b16 %v4046, %v4038
    %v4183 = vpack.c.b16 %v4047, %v4039
    %v4184 = vpack.c.b16 %v4048, %v4040
    %v4185 = vpack.c.b16 %v4049, %v4041
    %v4186 = vpack.c.b16 %v4050, %v4042
    %v4187 = vpack.c.b16 %v4051, %v4043
    %v4188 = vpack.c.b16 %v4060, %v4052
    %v4189 = vpack.c.b16 %v4061, %v4053
    %v4190 = vpack.c.b16 %v4062, %v4054
    %v4191 = vpack.c.b16 %v4063, %v4055
    %v4192 = vpack.c.b16 %v4064, %v4056
    %v4193 = vpack.c.b16 %v4065, %v4057
    %v4194 = vpack.c.b16 %v4066, %v4058
    %v4195 = vpack.c.b16 %v4067, %v4059
    %4324 = vmatprep.subr.bf16.mxu0 %v4069
    %4325 = vmatpush1.bf16.msra.mxu0 %v4068
    %4326 = vmatprep.subr.bf16.mxu0 %v4077
    %4327 = vmatpush1.bf16.msra.mxu0 %v4076
    %4328 = vmatprep.subr.bf16.mxu0 %v4085
    %4329 = vmatpush1.bf16.msra.mxu0 %v4084
    %4330 = vmatprep.subr.bf16.mxu0 %v4093
    %4331 = vmatpush1.bf16.msra.mxu0 %v4092
    %4332 = vmatprep.subr.bf16.mxu0 %v4101
    %4333 = vmatpush1.bf16.msra.mxu0 %v4100
    %4334 = vmatprep.subr.bf16.mxu0 %v4109
    %4335 = vmatpush1.bf16.msra.mxu0 %v4108
    %4336 = vmatprep.subr.bf16.mxu0 %v4117
    %4337 = vmatpush1.bf16.msra.mxu0 %v4116
    %4338 = vmatprep.subr.bf16.mxu0 %v4125
    %4339 = vmatpush1.bf16.msra.mxu0 %v4124
    %4340 = vmatprep.subr.bf16.mxu0 %v4133
    %4341 = vmatpush1.bf16.msra.mxu0 %v4132
    %4342 = vmatprep.subr.bf16.mxu0 %v4141
    %4343 = vmatpush1.bf16.msra.mxu0 %v4140
    %4344 = vmatprep.subr.bf16.mxu0 %v4149
    %4345 = vmatpush1.bf16.msra.mxu0 %v4148
    %4346 = vmatprep.subr.bf16.mxu0 %v4157
    %4347 = vmatpush1.bf16.msra.mxu0 %v4156
    %4348 = vmatprep.subr.bf16.mxu0 %v4165
    %4349 = vmatpush1.bf16.msra.mxu0 %v4164
    %4350 = vmatprep.subr.bf16.mxu0 %v4173
    %4351 = vmatpush1.bf16.msra.mxu0 %v4172
    %4352 = vmatprep.subr.bf16.mxu0 %v4181
    %4353 = vmatpush1.bf16.msra.mxu0 %v4180
    %4354 = vmatprep.subr.bf16.mxu0 %v4189
    %4355 = vmatpush1.bf16.msra.mxu0 %v4188
    %4356 = vmatprep.mubr.bf16.mxu0 %v3555
    %4357 = vmatmul.mubr.bf16.gmra.mrb[0].mxu0 %v3554
    %v4358 = vpop.f32.mrb[0].mxu0
    %v4359 = vadd.f32 0.0, %v4358
    %v4360 = vpop.f32.mrb[0].mxu0
    %v4361 = vadd.f32 0.0, %v4360
    %v4362 = vpop.f32.mrb[0].mxu0
    %v4363 = vpop.f32.mrb[0].mxu0
    %4364 = vdwg.mxu0
    %4365 = vmatprep.subr.bf16.mxu0 %v4071
    %4366 = vmatpush1.bf16.msra.mxu0 %v4070
    %4367 = vmatprep.subr.bf16.mxu0 %v4079
    %4368 = vmatpush1.bf16.msra.mxu0 %v4078
    %4369 = vmatprep.subr.bf16.mxu0 %v4087
    %4370 = vmatpush1.bf16.msra.mxu0 %v4086
    %4371 = vmatprep.subr.bf16.mxu0 %v4095
    %4372 = vmatpush1.bf16.msra.mxu0 %v4094
    %4373 = vmatprep.subr.bf16.mxu0 %v4103
    %4374 = vmatpush1.bf16.msra.mxu0 %v4102
    %4375 = vmatprep.subr.bf16.mxu0 %v4111
    %4376 = vmatpush1.bf16.msra.mxu0 %v4110
    %4377 = vmatprep.subr.bf16.mxu0 %v4119
    %4378 = vmatpush1.bf16.msra.mxu0 %v4118
    %4379 = vmatprep.subr.bf16.mxu0 %v4127
    %4380 = vmatpush1.bf16.msra.mxu0 %v4126
    %4381 = vmatprep.subr.bf16.mxu0 %v4135
    %4382 = vmatpush1.bf16.msra.mxu0 %v4134
    %4383 = vmatprep.subr.bf16.mxu0 %v4143
    %4384 = vmatpush1.bf16.msra.mxu0 %v4142
    %4385 = vmatprep.subr.bf16.mxu0 %v4151
    %4386 = vmatpush1.bf16.msra.mxu0 %v4150
    %4387 = vmatprep.subr.bf16.mxu0 %v4159
    %4388 = vmatpush1.bf16.msra.mxu0 %v4158
    %4389 = vmatprep.subr.bf16.mxu0 %v4167
    %4390 = vmatpush1.bf16.msra.mxu0 %v4166
    %4391 = vmatprep.subr.bf16.mxu0 %v4175
    %4392 = vmatpush1.bf16.msra.mxu0 %v4174
    %4393 = vmatprep.subr.bf16.mxu0 %v4183
    %4394 = vmatpush1.bf16.msra.mxu0 %v4182
    %4395 = vmatprep.subr.bf16.mxu0 %v4191
    %4396 = vmatpush1.bf16.msra.mxu0 %v4190
    %4397 = vmatprep.mubr.bf16.mxu0 %v3555
    %4398 = vmatmul.mubr.bf16.gmra.mrb[0].mxu0 %v3554
    %v4399 = vpop.f32.mrb[0].mxu0
    %v4400 = vadd.f32 0.0, %v4399
    %v4401 = vpop.f32.mrb[0].mxu0
    %v4402 = vadd.f32 0.0, %v4401
    %v4403 = vpop.f32.mrb[0].mxu0
    %v4404 = vpop.f32.mrb[0].mxu0
    %4405 = vdwg.mxu0
    %4406 = vmatprep.subr.bf16.mxu0 %v4073
    %4407 = vmatpush1.bf16.msra.mxu0 %v4072
    %4408 = vmatprep.subr.bf16.mxu0 %v4081
    %4409 = vmatpush1.bf16.msra.mxu0 %v4080
    %4410 = vmatprep.subr.bf16.mxu0 %v4089
    %4411 = vmatpush1.bf16.msra.mxu0 %v4088
    %4412 = vmatprep.subr.bf16.mxu0 %v4097
    %4413 = vmatpush1.bf16.msra.mxu0 %v4096
    %4414 = vmatprep.subr.bf16.mxu0 %v4105
    %4415 = vmatpush1.bf16.msra.mxu0 %v4104
    %4416 = vmatprep.subr.bf16.mxu0 %v4113
    %4417 = vmatpush1.bf16.msra.mxu0 %v4112
    %4418 = vmatprep.subr.bf16.mxu0 %v4121
    %4419 = vmatpush1.bf16.msra.mxu0 %v4120
    %4420 = vmatprep.subr.bf16.mxu0 %v4129
    %4421 = vmatpush1.bf16.msra.mxu0 %v4128
    %4422 = vmatprep.subr.bf16.mxu0 %v4137
    %4423 = vmatpush1.bf16.msra.mxu0 %v4136
    %4424 = vmatprep.subr.bf16.mxu0 %v4145
    %4425 = vmatpush1.bf16.msra.mxu0 %v4144
    %4426 = vmatprep.subr.bf16.mxu0 %v4153
    %4427 = vmatpush1.bf16.msra.mxu0 %v4152
    %4428 = vmatprep.subr.bf16.mxu0 %v4161
    %4429 = vmatpush1.bf16.msra.mxu0 %v4160
    %4430 = vmatprep.subr.bf16.mxu0 %v4169
    %4431 = vmatpush1.bf16.msra.mxu0 %v4168
    %4432 = vmatprep.subr.bf16.mxu0 %v4177
    %4433 = vmatpush1.bf16.msra.mxu0 %v4176
    %4434 = vmatprep.subr.bf16.mxu0 %v4185
    %4435 = vmatpush1.bf16.msra.mxu0 %v4184
    %4436 = vmatprep.subr.bf16.mxu0 %v4193
    %4437 = vmatpush1.bf16.msra.mxu0 %v4192
    %4438 = vmatprep.mubr.bf16.mxu0 %v3555
    %4439 = vmatmul.mubr.bf16.gmra.mrb[0].mxu0 %v3554
    %v4440 = vpop.f32.mrb[0].mxu0
    %v4441 = vadd.f32 0.0, %v4440
    %v4442 = vpop.f32.mrb[0].mxu0
    %v4443 = vadd.f32 0.0, %v4442
    %v4444 = vpop.f32.mrb[0].mxu0
    %v4445 = vpop.f32.mrb[0].mxu0
    %4446 = vdwg.mxu0
    %4447 = vmatprep.subr.bf16.mxu0 %v4075
    %4448 = vmatpush1.bf16.msra.mxu0 %v4074
    %4449 = vmatprep.subr.bf16.mxu0 %v4083
    %4450 = vmatpush1.bf16.msra.mxu0 %v4082
    %4451 = vmatprep.subr.bf16.mxu0 %v4091
    %4452 = vmatpush1.bf16.msra.mxu0 %v4090
    %4453 = vmatprep.subr.bf16.mxu0 %v4099
    %4454 = vmatpush1.bf16.msra.mxu0 %v4098
    %4455 = vmatprep.subr.bf16.mxu0 %v4107
    %4456 = vmatpush1.bf16.msra.mxu0 %v4106
    %4457 = vmatprep.subr.bf16.mxu0 %v4115
    %4458 = vmatpush1.bf16.msra.mxu0 %v4114
    %4459 = vmatprep.subr.bf16.mxu0 %v4123
    %4460 = vmatpush1.bf16.msra.mxu0 %v4122
    %4461 = vmatprep.subr.bf16.mxu0 %v4131
    %4462 = vmatpush1.bf16.msra.mxu0 %v4130
    %4463 = vmatprep.subr.bf16.mxu0 %v4139
    %4464 = vmatpush1.bf16.msra.mxu0 %v4138
    %4465 = vmatprep.subr.bf16.mxu0 %v4147
    %4466 = vmatpush1.bf16.msra.mxu0 %v4146
    %4467 = vmatprep.subr.bf16.mxu0 %v4155
    %4468 = vmatpush1.bf16.msra.mxu0 %v4154
    %4469 = vmatprep.subr.bf16.mxu0 %v4163
    %4470 = vmatpush1.bf16.msra.mxu0 %v4162
    %4471 = vmatprep.subr.bf16.mxu0 %v4171
    %4472 = vmatpush1.bf16.msra.mxu0 %v4170
    %4473 = vmatprep.subr.bf16.mxu0 %v4179
    %4474 = vmatpush1.bf16.msra.mxu0 %v4178
    %4475 = vmatprep.subr.bf16.mxu0 %v4187
    %4476 = vmatpush1.bf16.msra.mxu0 %v4186
    %4477 = vmatprep.subr.bf16.mxu0 %v4195
    %4478 = vmatpush1.bf16.msra.mxu0 %v4194
    %4479 = vmatprep.mubr.bf16.mxu0 %v3555
    %4480 = vmatmul.mubr.bf16.gmra.mrb[0].mxu0 %v3554
    %v4481 = vpop.f32.mrb[0].mxu0
    %v4482 = vadd.f32 0.0, %v4481
    %v4483 = vpop.f32.mrb[0].mxu0
    %v4484 = vadd.f32 0.0, %v4483
    %v4485 = vpop.f32.mrb[0].mxu0
    %v4486 = vpop.f32.mrb[0].mxu0
    %4487 = vdwg.mxu0
    %v4488 = vadd.f32 %v3417, %v4359
    %v4489 = vadd.f32 %v3419, %v4361
    %v4490 = vadd.f32 %v3460, %v4400
    %v4491 = vadd.f32 %v3462, %v4402
    %v4492 = vadd.f32 %v3503, %v4441
    %v4493 = vadd.f32 %v3505, %v4443
    %v4494 = vadd.f32 %v3546, %v4482
    %v4495 = vadd.f32 %v3548, %v4484
    %v4496 = vxor.u32 %v4488, 2147483648
    %v4497 = vxor.u32 %v4489, 2147483648
    %v4498 = vmul.f32 %v4496, 1.442695
    %v4499 = vpow.pop %v4498
    %v4500 = vmul.f32 %v4497, 1.442695
    %v4501 = vpow.pop %v4500
    %v4502 = vadd.f32 %v4499, 1.0
    %v4503 = vadd.f32 %v4501, 1.0
    %v4504 = vrcp.pop %v4502
    %v4505 = vmul.f32 1.0, %v4504
    %v4506 = vrcp.pop %v4503
    %v4507 = vmul.f32 1.0, %v4506
    %v4508 = vxor.u32 %v4490, 2147483648
    %v4509 = vxor.u32 %v4491, 2147483648
    %v4510 = vmul.f32 %v4508, 1.442695
    %v4511 = vpow.pop %v4510
    %v4512 = vmul.f32 %v4509, 1.442695
    %v4513 = vpow.pop %v4512
    %v4514 = vadd.f32 %v4511, 1.0
    %v4515 = vadd.f32 %v4513, 1.0
    %v4516 = vrcp.pop %v4514
    %v4517 = vmul.f32 1.0, %v4516
    %v4518 = vrcp.pop %v4515
    %v4519 = vmul.f32 1.0, %v4518
    %v4520 = vtanh.pop %v4492
    %v4521 = vtanh.pop %v4493
    %v4522 = vxor.u32 %v4494, 2147483648
    %v4523 = vxor.u32 %v4495, 2147483648
    %v4524 = vmul.f32 %v4522, 1.442695
    %v4525 = vpow.pop %v4524
    %v4526 = vmul.f32 %v4523, 1.442695
    %v4527 = vpow.pop %v4526
    %v4528 = vadd.f32 %v4525, 1.0
    %v4529 = vadd.f32 %v4527, 1.0
    %v4530 = vrcp.pop %v4528
    %v4531 = vmul.f32 1.0, %v4530
    %v4532 = vrcp.pop %v4529
    %v4533 = vmul.f32 1.0, %v4532
    %v4534 = vmul.f32 %v4517, %v2558
    %v4535 = vmul.f32 %v4519, %v2559
    %v4536 = vmul.f32 %v4505, %v4520
    %v4537 = vmul.f32 %v4507, %v4521
    %v4538 = vadd.f32 %v4534, %v4536
    %v4539 = vadd.f32 %v4535, %v4537
    %v4540 = vtanh.pop %v4538
    %v4541 = vtanh.pop %v4539
    %v4542 = vmul.f32 %v4531, %v4540
    %v4543 = vmul.f32 %v4533, %v4541
    %v4544 = vpack.c.bf16 %v4542, %v4542
    %v4545 = vpack.c.bf16 %v4543, %v4543
    %4546 = vmatprep.subr.bf16.mxu0 %v4069
    %4547 = vmatpush1.bf16.msra.mxu0 %v4068
    %4548 = vmatprep.subr.bf16.mxu0 %v4077
    %4549 = vmatpush1.bf16.msra.mxu0 %v4076
    %4550 = vmatprep.subr.bf16.mxu0 %v4085
    %4551 = vmatpush1.bf16.msra.mxu0 %v4084
    %4552 = vmatprep.subr.bf16.mxu0 %v4093
    %4553 = vmatpush1.bf16.msra.mxu0 %v4092
    %4554 = vmatprep.subr.bf16.mxu0 %v4101
    %4555 = vmatpush1.bf16.msra.mxu0 %v4100
    %4556 = vmatprep.subr.bf16.mxu0 %v4109
    %4557 = vmatpush1.bf16.msra.mxu0 %v4108
    %4558 = vmatprep.subr.bf16.mxu0 %v4117
    %4559 = vmatpush1.bf16.msra.mxu0 %v4116
    %4560 = vmatprep.subr.bf16.mxu0 %v4125
    %4561 = vmatpush1.bf16.msra.mxu0 %v4124
    %4562 = vmatprep.subr.bf16.mxu0 %v4133
    %4563 = vmatpush1.bf16.msra.mxu0 %v4132
    %4564 = vmatprep.subr.bf16.mxu0 %v4141
    %4565 = vmatpush1.bf16.msra.mxu0 %v4140
    %4566 = vmatprep.subr.bf16.mxu0 %v4149
    %4567 = vmatpush1.bf16.msra.mxu0 %v4148
    %4568 = vmatprep.subr.bf16.mxu0 %v4157
    %4569 = vmatpush1.bf16.msra.mxu0 %v4156
    %4570 = vmatprep.subr.bf16.mxu0 %v4165
    %4571 = vmatpush1.bf16.msra.mxu0 %v4164
    %4572 = vmatprep.subr.bf16.mxu0 %v4173
    %4573 = vmatpush1.bf16.msra.mxu0 %v4172
    %4574 = vmatprep.subr.bf16.mxu0 %v4181
    %4575 = vmatpush1.bf16.msra.mxu0 %v4180
    %4576 = vmatprep.subr.bf16.mxu0 %v4189
    %4577 = vmatpush1.bf16.msra.mxu0 %v4188
    %4578 = vmatprep.mubr.bf16.mxu0 %v4545
    %4579 = vmatmul.mubr.bf16.gmra.mrb[0].mxu0 %v4544
    %v4580 = vpop.f32.mrb[0].mxu0
    %v4581 = vadd.f32 0.0, %v4580
    %v4582 = vpop.f32.mrb[0].mxu0
    %v4583 = vadd.f32 0.0, %v4582
    %v4584 = vpop.f32.mrb[0].mxu0
    %v4585 = vpop.f32.mrb[0].mxu0
    %4586 = vdwg.mxu0
    %4587 = vmatprep.subr.bf16.mxu0 %v4071
    %4588 = vmatpush1.bf16.msra.mxu0 %v4070
    %4589 = vmatprep.subr.bf16.mxu0 %v4079
    %4590 = vmatpush1.bf16.msra.mxu0 %v4078
    %4591 = vmatprep.subr.bf16.mxu0 %v4087
    %4592 = vmatpush1.bf16.msra.mxu0 %v4086
    %4593 = vmatprep.subr.bf16.mxu0 %v4095
    %4594 = vmatpush1.bf16.msra.mxu0 %v4094
    %4595 = vmatprep.subr.bf16.mxu0 %v4103
    %4596 = vmatpush1.bf16.msra.mxu0 %v4102
    %4597 = vmatprep.subr.bf16.mxu0 %v4111
    %4598 = vmatpush1.bf16.msra.mxu0 %v4110
    %4599 = vmatprep.subr.bf16.mxu0 %v4119
    %4600 = vmatpush1.bf16.msra.mxu0 %v4118
    %4601 = vmatprep.subr.bf16.mxu0 %v4127
    %4602 = vmatpush1.bf16.msra.mxu0 %v4126
    %4603 = vmatprep.subr.bf16.mxu0 %v4135
    %4604 = vmatpush1.bf16.msra.mxu0 %v4134
    %4605 = vmatprep.subr.bf16.mxu0 %v4143
    %4606 = vmatpush1.bf16.msra.mxu0 %v4142
    %4607 = vmatprep.subr.bf16.mxu0 %v4151
    %4608 = vmatpush1.bf16.msra.mxu0 %v4150
    %4609 = vmatprep.subr.bf16.mxu0 %v4159
    %4610 = vmatpush1.bf16.msra.mxu0 %v4158
    %4611 = vmatprep.subr.bf16.mxu0 %v4167
    %4612 = vmatpush1.bf16.msra.mxu0 %v4166
    %4613 = vmatprep.subr.bf16.mxu0 %v4175
    %4614 = vmatpush1.bf16.msra.mxu0 %v4174
    %4615 = vmatprep.subr.bf16.mxu0 %v4183
    %4616 = vmatpush1.bf16.msra.mxu0 %v4182
    %4617 = vmatprep.subr.bf16.mxu0 %v4191
    %4618 = vmatpush1.bf16.msra.mxu0 %v4190
    %4619 = vmatprep.mubr.bf16.mxu0 %v4545
    %4620 = vmatmul.mubr.bf16.gmra.mrb[0].mxu0 %v4544
    %v4621 = vpop.f32.mrb[0].mxu0
    %v4622 = vadd.f32 0.0, %v4621
    %v4623 = vpop.f32.mrb[0].mxu0
    %v4624 = vadd.f32 0.0, %v4623
    %v4625 = vpop.f32.mrb[0].mxu0
    %v4626 = vpop.f32.mrb[0].mxu0
    %4627 = vdwg.mxu0
    %4628 = vmatprep.subr.bf16.mxu0 %v4073
    %4629 = vmatpush1.bf16.msra.mxu0 %v4072
    %4630 = vmatprep.subr.bf16.mxu0 %v4081
    %4631 = vmatpush1.bf16.msra.mxu0 %v4080
    %4632 = vmatprep.subr.bf16.mxu0 %v4089
    %4633 = vmatpush1.bf16.msra.mxu0 %v4088
    %4634 = vmatprep.subr.bf16.mxu0 %v4097
    %4635 = vmatpush1.bf16.msra.mxu0 %v4096
    %4636 = vmatprep.subr.bf16.mxu0 %v4105
    %4637 = vmatpush1.bf16.msra.mxu0 %v4104
    %4638 = vmatprep.subr.bf16.mxu0 %v4113
    %4639 = vmatpush1.bf16.msra.mxu0 %v4112
    %4640 = vmatprep.subr.bf16.mxu0 %v4121
    %4641 = vmatpush1.bf16.msra.mxu0 %v4120
    %4642 = vmatprep.subr.bf16.mxu0 %v4129
    %4643 = vmatpush1.bf16.msra.mxu0 %v4128
    %4644 = vmatprep.subr.bf16.mxu0 %v4137
    %4645 = vmatpush1.bf16.msra.mxu0 %v4136
    %4646 = vmatprep.subr.bf16.mxu0 %v4145
    %4647 = vmatpush1.bf16.msra.mxu0 %v4144
    %4648 = vmatprep.subr.bf16.mxu0 %v4153
    %4649 = vmatpush1.bf16.msra.mxu0 %v4152
    %4650 = vmatprep.subr.bf16.mxu0 %v4161
    %4651 = vmatpush1.bf16.msra.mxu0 %v4160
    %4652 = vmatprep.subr.bf16.mxu0 %v4169
    %4653 = vmatpush1.bf16.msra.mxu0 %v4168
    %4654 = vmatprep.subr.bf16.mxu0 %v4177
    %4655 = vmatpush1.bf16.msra.mxu0 %v4176
    %4656 = vmatprep.subr.bf16.mxu0 %v4185
    %4657 = vmatpush1.bf16.msra.mxu0 %v4184
    %4658 = vmatprep.subr.bf16.mxu0 %v4193
    %4659 = vmatpush1.bf16.msra.mxu0 %v4192
    %4660 = vmatprep.mubr.bf16.mxu0 %v4545
    %4661 = vmatmul.mubr.bf16.gmra.mrb[0].mxu0 %v4544
    %v4662 = vpop.f32.mrb[0].mxu0
    %v4663 = vadd.f32 0.0, %v4662
    %v4664 = vpop.f32.mrb[0].mxu0
    %v4665 = vadd.f32 0.0, %v4664
    %v4666 = vpop.f32.mrb[0].mxu0
    %v4667 = vpop.f32.mrb[0].mxu0
    %4668 = vdwg.mxu0
    %4669 = vmatprep.subr.bf16.mxu0 %v4075
    %4670 = vmatpush1.bf16.msra.mxu0 %v4074
    %4671 = vmatprep.subr.bf16.mxu0 %v4083
    %4672 = vmatpush1.bf16.msra.mxu0 %v4082
    %4673 = vmatprep.subr.bf16.mxu0 %v4091
    %4674 = vmatpush1.bf16.msra.mxu0 %v4090
    %4675 = vmatprep.subr.bf16.mxu0 %v4099
    %4676 = vmatpush1.bf16.msra.mxu0 %v4098
    %4677 = vmatprep.subr.bf16.mxu0 %v4107
    %4678 = vmatpush1.bf16.msra.mxu0 %v4106
    %4679 = vmatprep.subr.bf16.mxu0 %v4115
    %4680 = vmatpush1.bf16.msra.mxu0 %v4114
    %4681 = vmatprep.subr.bf16.mxu0 %v4123
    %4682 = vmatpush1.bf16.msra.mxu0 %v4122
    %4683 = vmatprep.subr.bf16.mxu0 %v4131
    %4684 = vmatpush1.bf16.msra.mxu0 %v4130
    %4685 = vmatprep.subr.bf16.mxu0 %v4139
    %4686 = vmatpush1.bf16.msra.mxu0 %v4138
    %4687 = vmatprep.subr.bf16.mxu0 %v4147
    %4688 = vmatpush1.bf16.msra.mxu0 %v4146
    %4689 = vmatprep.subr.bf16.mxu0 %v4155
    %4690 = vmatpush1.bf16.msra.mxu0 %v4154
    %4691 = vmatprep.subr.bf16.mxu0 %v4163
    %4692 = vmatpush1.bf16.msra.mxu0 %v4162
    %4693 = vmatprep.subr.bf16.mxu0 %v4171
    %4694 = vmatpush1.bf16.msra.mxu0 %v4170
    %4695 = vmatprep.subr.bf16.mxu0 %v4179
    %4696 = vmatpush1.bf16.msra.mxu0 %v4178
    %4697 = vmatprep.subr.bf16.mxu0 %v4187
    %4698 = vmatpush1.bf16.msra.mxu0 %v4186
    %4699 = vmatprep.subr.bf16.mxu0 %v4195
    %4700 = vmatpush1.bf16.msra.mxu0 %v4194
    %4701 = vmatprep.mubr.bf16.mxu0 %v4545
    %4702 = vmatmul.mubr.bf16.gmra.mrb[0].mxu0 %v4544
    %v4703 = vpop.f32.mrb[0].mxu0
    %v4704 = vadd.f32 0.0, %v4703
    %v4705 = vpop.f32.mrb[0].mxu0
    %v4706 = vadd.f32 0.0, %v4705
    %v4707 = vpop.f32.mrb[0].mxu0
    %v4708 = vpop.f32.mrb[0].mxu0
    %4709 = vdwg.mxu0
    %v4718 = vrot.slane %v4581, 6
    %v4719 = vrot.slane %v4583, 6
    %v4720 = vrot.slane %v4622, 6
    %v4721 = vrot.slane %v4624, 6
    %v4722 = vrot.slane %v4663, 6
    %v4723 = vrot.slane %v4665, 6
    %v4724 = vrot.slane %v4704, 6
    %v4725 = vrot.slane %v4706, 6
    %v4734 = vadd.f32 %v3417, %v4718
    %v4735 = vadd.f32 %v3419, %v4719
    %v4736 = vadd.f32 %v3460, %v4720
    %v4737 = vadd.f32 %v3462, %v4721
    %v4738 = vadd.f32 %v3503, %v4722
    %v4739 = vadd.f32 %v3505, %v4723
    %v4740 = vadd.f32 %v3546, %v4724
    %v4741 = vadd.f32 %v3548, %v4725
    %v4742 = vxor.u32 %v4734, 2147483648
    %v4743 = vxor.u32 %v4735, 2147483648
    %v4744 = vmul.f32 %v4742, 1.442695
    %v4745 = vpow.pop %v4744
    %v4746 = vmul.f32 %v4743, 1.442695
    %v4747 = vpow.pop %v4746
    %v4748 = vadd.f32 %v4745, 1.0
    %v4749 = vadd.f32 %v4747, 1.0
    %v4750 = vrcp.pop %v4748
    %v4751 = vmul.f32 1.0, %v4750
    %v4752 = vrcp.pop %v4749
    %v4753 = vmul.f32 1.0, %v4752
    %v4754 = vxor.u32 %v4736, 2147483648
    %v4755 = vxor.u32 %v4737, 2147483648
    %v4756 = vmul.f32 %v4754, 1.442695
    %v4757 = vpow.pop %v4756
    %v4758 = vmul.f32 %v4755, 1.442695
    %v4759 = vpow.pop %v4758
    %v4760 = vadd.f32 %v4757, 1.0
    %v4761 = vadd.f32 %v4759, 1.0
    %v4762 = vrcp.pop %v4760
    %v4763 = vmul.f32 1.0, %v4762
    %v4764 = vrcp.pop %v4761
    %v4765 = vmul.f32 1.0, %v4764
    %v4766 = vtanh.pop %v4738
    %v4767 = vtanh.pop %v4739
    %v4768 = vxor.u32 %v4740, 2147483648
    %v4769 = vxor.u32 %v4741, 2147483648
    %v4770 = vmul.f32 %v4768, 1.442695
    %v4771 = vpow.pop %v4770
    %v4772 = vmul.f32 %v4769, 1.442695
    %v4773 = vpow.pop %v4772
    %v4774 = vadd.f32 %v4771, 1.0
    %v4775 = vadd.f32 %v4773, 1.0
    %v4776 = vrcp.pop %v4774
    %v4777 = vmul.f32 1.0, %v4776
    %v4778 = vrcp.pop %v4775
    %v4779 = vmul.f32 1.0, %v4778
    %v4782 = vrot.slane %v4538, 6
    %v4783 = vrot.slane %v4539, 6
    %v4786 = vmul.f32 %v4763, %v4782
    %v4787 = vmul.f32 %v4765, %v4783
    %v4788 = vmul.f32 %v4751, %v4766
    %v4789 = vmul.f32 %v4753, %v4767
    %v4790 = vadd.f32 %v4786, %v4788
    %v4791 = vadd.f32 %v4787, %v4789
    %v4792 = vtanh.pop %v4790
    %v4793 = vtanh.pop %v4791
    %v4794 = vmul.f32 %v4777, %v4792
    %v4795 = vmul.f32 %v4779, %v4793
    %v4796 = vpack.c.bf16 %v4794, %v4794
    %v4797 = vpack.c.bf16 %v4795, %v4795
    %v4800 = vrot.slane %v4796, 1
    %v4801 = vrot.slane %v4797, 1
    %4804 = vmatprep.subr.bf16.mxu0 %v4069
    %4805 = vmatpush1.bf16.msra.mxu0 %v4068
    %4806 = vmatprep.subr.bf16.mxu0 %v4077
    %4807 = vmatpush1.bf16.msra.mxu0 %v4076
    %4808 = vmatprep.subr.bf16.mxu0 %v4085
    %4809 = vmatpush1.bf16.msra.mxu0 %v4084
    %4810 = vmatprep.subr.bf16.mxu0 %v4093
    %4811 = vmatpush1.bf16.msra.mxu0 %v4092
    %4812 = vmatprep.subr.bf16.mxu0 %v4101
    %4813 = vmatpush1.bf16.msra.mxu0 %v4100
    %4814 = vmatprep.subr.bf16.mxu0 %v4109
    %4815 = vmatpush1.bf16.msra.mxu0 %v4108
    %4816 = vmatprep.subr.bf16.mxu0 %v4117
    %4817 = vmatpush1.bf16.msra.mxu0 %v4116
    %4818 = vmatprep.subr.bf16.mxu0 %v4125
    %4819 = vmatpush1.bf16.msra.mxu0 %v4124
    %4820 = vmatprep.subr.bf16.mxu0 %v4133
    %4821 = vmatpush1.bf16.msra.mxu0 %v4132
    %4822 = vmatprep.subr.bf16.mxu0 %v4141
    %4823 = vmatpush1.bf16.msra.mxu0 %v4140
    %4824 = vmatprep.subr.bf16.mxu0 %v4149
    %4825 = vmatpush1.bf16.msra.mxu0 %v4148
    %4826 = vmatprep.subr.bf16.mxu0 %v4157
    %4827 = vmatpush1.bf16.msra.mxu0 %v4156
    %4828 = vmatprep.subr.bf16.mxu0 %v4165
    %4829 = vmatpush1.bf16.msra.mxu0 %v4164
    %4830 = vmatprep.subr.bf16.mxu0 %v4173
    %4831 = vmatpush1.bf16.msra.mxu0 %v4172
    %4832 = vmatprep.subr.bf16.mxu0 %v4181
    %4833 = vmatpush1.bf16.msra.mxu0 %v4180
    %4834 = vmatprep.subr.bf16.mxu0 %v4189
    %4835 = vmatpush1.bf16.msra.mxu0 %v4188
    %4836 = vmatprep.mubr.bf16.mxu0 %v4801
    %4837 = vmatmul.mubr.bf16.gmra.mrb[0].mxu0 %v4800
    %v4838 = vpop.f32.mrb[0].mxu0
    %v4839 = vadd.f32 0.0, %v4838
    %v4840 = vpop.f32.mrb[0].mxu0
    %v4841 = vadd.f32 0.0, %v4840
    %v4842 = vpop.f32.mrb[0].mxu0
    %v4843 = vpop.f32.mrb[0].mxu0
    %4844 = vdwg.mxu0
    %4845 = vmatprep.subr.bf16.mxu0 %v4071
    %4846 = vmatpush1.bf16.msra.mxu0 %v4070
    %4847 = vmatprep.subr.bf16.mxu0 %v4079
    %4848 = vmatpush1.bf16.msra.mxu0 %v4078
    %4849 = vmatprep.subr.bf16.mxu0 %v4087
    %4850 = vmatpush1.bf16.msra.mxu0 %v4086
    %4851 = vmatprep.subr.bf16.mxu0 %v4095
    %4852 = vmatpush1.bf16.msra.mxu0 %v4094
    %4853 = vmatprep.subr.bf16.mxu0 %v4103
    %4854 = vmatpush1.bf16.msra.mxu0 %v4102
    %4855 = vmatprep.subr.bf16.mxu0 %v4111
    %4856 = vmatpush1.bf16.msra.mxu0 %v4110
    %4857 = vmatprep.subr.bf16.mxu0 %v4119
    %4858 = vmatpush1.bf16.msra.mxu0 %v4118
    %4859 = vmatprep.subr.bf16.mxu0 %v4127
    %4860 = vmatpush1.bf16.msra.mxu0 %v4126
    %4861 = vmatprep.subr.bf16.mxu0 %v4135
    %4862 = vmatpush1.bf16.msra.mxu0 %v4134
    %4863 = vmatprep.subr.bf16.mxu0 %v4143
    %4864 = vmatpush1.bf16.msra.mxu0 %v4142
    %4865 = vmatprep.subr.bf16.mxu0 %v4151
    %4866 = vmatpush1.bf16.msra.mxu0 %v4150
    %4867 = vmatprep.subr.bf16.mxu0 %v4159
    %4868 = vmatpush1.bf16.msra.mxu0 %v4158
    %4869 = vmatprep.subr.bf16.mxu0 %v4167
    %4870 = vmatpush1.bf16.msra.mxu0 %v4166
    %4871 = vmatprep.subr.bf16.mxu0 %v4175
    %4872 = vmatpush1.bf16.msra.mxu0 %v4174
    %4873 = vmatprep.subr.bf16.mxu0 %v4183
    %4874 = vmatpush1.bf16.msra.mxu0 %v4182
    %4875 = vmatprep.subr.bf16.mxu0 %v4191
    %4876 = vmatpush1.bf16.msra.mxu0 %v4190
    %4877 = vmatprep.mubr.bf16.mxu0 %v4801
    %4878 = vmatmul.mubr.bf16.gmra.mrb[0].mxu0 %v4800
    %v4879 = vpop.f32.mrb[0].mxu0
    %v4880 = vadd.f32 0.0, %v4879
    %v4881 = vpop.f32.mrb[0].mxu0
    %v4882 = vadd.f32 0.0, %v4881
    %v4883 = vpop.f32.mrb[0].mxu0
    %v4884 = vpop.f32.mrb[0].mxu0
    %4885 = vdwg.mxu0
    %4886 = vmatprep.subr.bf16.mxu0 %v4073
    %4887 = vmatpush1.bf16.msra.mxu0 %v4072
    %4888 = vmatprep.subr.bf16.mxu0 %v4081
    %4889 = vmatpush1.bf16.msra.mxu0 %v4080
    %4890 = vmatprep.subr.bf16.mxu0 %v4089
    %4891 = vmatpush1.bf16.msra.mxu0 %v4088
    %4892 = vmatprep.subr.bf16.mxu0 %v4097
    %4893 = vmatpush1.bf16.msra.mxu0 %v4096
    %4894 = vmatprep.subr.bf16.mxu0 %v4105
    %4895 = vmatpush1.bf16.msra.mxu0 %v4104
    %4896 = vmatprep.subr.bf16.mxu0 %v4113
    %4897 = vmatpush1.bf16.msra.mxu0 %v4112
    %4898 = vmatprep.subr.bf16.mxu0 %v4121
    %4899 = vmatpush1.bf16.msra.mxu0 %v4120
    %4900 = vmatprep.subr.bf16.mxu0 %v4129
    %4901 = vmatpush1.bf16.msra.mxu0 %v4128
    %4902 = vmatprep.subr.bf16.mxu0 %v4137
    %4903 = vmatpush1.bf16.msra.mxu0 %v4136
    %4904 = vmatprep.subr.bf16.mxu0 %v4145
    %4905 = vmatpush1.bf16.msra.mxu0 %v4144
    %4906 = vmatprep.subr.bf16.mxu0 %v4153
    %4907 = vmatpush1.bf16.msra.mxu0 %v4152
    %4908 = vmatprep.subr.bf16.mxu0 %v4161
    %4909 = vmatpush1.bf16.msra.mxu0 %v4160
    %4910 = vmatprep.subr.bf16.mxu0 %v4169
    %4911 = vmatpush1.bf16.msra.mxu0 %v4168
    %4912 = vmatprep.subr.bf16.mxu0 %v4177
    %4913 = vmatpush1.bf16.msra.mxu0 %v4176
    %4914 = vmatprep.subr.bf16.mxu0 %v4185
    %4915 = vmatpush1.bf16.msra.mxu0 %v4184
    %4916 = vmatprep.subr.bf16.mxu0 %v4193
    %4917 = vmatpush1.bf16.msra.mxu0 %v4192
    %4918 = vmatprep.mubr.bf16.mxu0 %v4801
    %4919 = vmatmul.mubr.bf16.gmra.mrb[0].mxu0 %v4800
    %v4920 = vpop.f32.mrb[0].mxu0
    %v4921 = vadd.f32 0.0, %v4920
    %v4922 = vpop.f32.mrb[0].mxu0
    %v4923 = vadd.f32 0.0, %v4922
    %v4924 = vpop.f32.mrb[0].mxu0
    %v4925 = vpop.f32.mrb[0].mxu0
    %4926 = vdwg.mxu0
    %4927 = vmatprep.subr.bf16.mxu0 %v4075
    %4928 = vmatpush1.bf16.msra.mxu0 %v4074
    %4929 = vmatprep.subr.bf16.mxu0 %v4083
    %4930 = vmatpush1.bf16.msra.mxu0 %v4082
    %4931 = vmatprep.subr.bf16.mxu0 %v4091
    %4932 = vmatpush1.bf16.msra.mxu0 %v4090
    %4933 = vmatprep.subr.bf16.mxu0 %v4099
    %4934 = vmatpush1.bf16.msra.mxu0 %v4098
    %4935 = vmatprep.subr.bf16.mxu0 %v4107
    %4936 = vmatpush1.bf16.msra.mxu0 %v4106
    %4937 = vmatprep.subr.bf16.mxu0 %v4115
    %4938 = vmatpush1.bf16.msra.mxu0 %v4114
    %4939 = vmatprep.subr.bf16.mxu0 %v4123
    %4940 = vmatpush1.bf16.msra.mxu0 %v4122
    %4941 = vmatprep.subr.bf16.mxu0 %v4131
    %4942 = vmatpush1.bf16.msra.mxu0 %v4130
    %4943 = vmatprep.subr.bf16.mxu0 %v4139
    %4944 = vmatpush1.bf16.msra.mxu0 %v4138
    %4945 = vmatprep.subr.bf16.mxu0 %v4147
    %4946 = vmatpush1.bf16.msra.mxu0 %v4146
    %4947 = vmatprep.subr.bf16.mxu0 %v4155
    %4948 = vmatpush1.bf16.msra.mxu0 %v4154
    %4949 = vmatprep.subr.bf16.mxu0 %v4163
    %4950 = vmatpush1.bf16.msra.mxu0 %v4162
    %4951 = vmatprep.subr.bf16.mxu0 %v4171
    %4952 = vmatpush1.bf16.msra.mxu0 %v4170
    %4953 = vmatprep.subr.bf16.mxu0 %v4179
    %4954 = vmatpush1.bf16.msra.mxu0 %v4178
    %4955 = vmatprep.subr.bf16.mxu0 %v4187
    %4956 = vmatpush1.bf16.msra.mxu0 %v4186
    %4957 = vmatprep.subr.bf16.mxu0 %v4195
    %4958 = vmatpush1.bf16.msra.mxu0 %v4194
    %4959 = vmatprep.mubr.bf16.mxu0 %v4801
    %4960 = vmatmul.mubr.bf16.gmra.mrb[0].mxu0 %v4800
    %v4961 = vpop.f32.mrb[0].mxu0
    %v4962 = vadd.f32 0.0, %v4961
    %v4963 = vpop.f32.mrb[0].mxu0
    %v4964 = vadd.f32 0.0, %v4963
    %v4965 = vpop.f32.mrb[0].mxu0
    %v4966 = vpop.f32.mrb[0].mxu0
    %4967 = vdwg.mxu0
    %v4976 = vrot.slane %v4839, 4
    %v4977 = vrot.slane %v4841, 4
    %v4978 = vrot.slane %v4880, 4
    %v4979 = vrot.slane %v4882, 4
    %v4980 = vrot.slane %v4921, 4
    %v4981 = vrot.slane %v4923, 4
    %v4982 = vrot.slane %v4962, 4
    %v4983 = vrot.slane %v4964, 4
    %v4992 = vadd.f32 %v3417, %v4976
    %v4993 = vadd.f32 %v3419, %v4977
    %v4994 = vadd.f32 %v3460, %v4978
    %v4995 = vadd.f32 %v3462, %v4979
    %v4996 = vadd.f32 %v3503, %v4980
    %v4997 = vadd.f32 %v3505, %v4981
    %v4998 = vadd.f32 %v3546, %v4982
    %v4999 = vadd.f32 %v3548, %v4983
    %v5000 = vxor.u32 %v4992, 2147483648
    %v5001 = vxor.u32 %v4993, 2147483648
    %v5002 = vmul.f32 %v5000, 1.442695
    %v5003 = vpow.pop %v5002
    %v5004 = vmul.f32 %v5001, 1.442695
    %v5005 = vpow.pop %v5004
    %v5006 = vadd.f32 %v5003, 1.0
    %v5007 = vadd.f32 %v5005, 1.0
    %v5008 = vrcp.pop %v5006
    %v5009 = vmul.f32 1.0, %v5008
    %v5010 = vrcp.pop %v5007
    %v5011 = vmul.f32 1.0, %v5010
    %v5012 = vxor.u32 %v4994, 2147483648
    %v5013 = vxor.u32 %v4995, 2147483648
    %v5014 = vmul.f32 %v5012, 1.442695
    %v5015 = vpow.pop %v5014
    %v5016 = vmul.f32 %v5013, 1.442695
    %v5017 = vpow.pop %v5016
    %v5018 = vadd.f32 %v5015, 1.0
    %v5019 = vadd.f32 %v5017, 1.0
    %v5020 = vrcp.pop %v5018
    %v5021 = vmul.f32 1.0, %v5020
    %v5022 = vrcp.pop %v5019
    %v5023 = vmul.f32 1.0, %v5022
    %v5024 = vtanh.pop %v4996
    %v5025 = vtanh.pop %v4997
    %v5026 = vxor.u32 %v4998, 2147483648
    %v5027 = vxor.u32 %v4999, 2147483648
    %v5028 = vmul.f32 %v5026, 1.442695
    %v5029 = vpow.pop %v5028
    %v5030 = vmul.f32 %v5027, 1.442695
    %v5031 = vpow.pop %v5030
    %v5032 = vadd.f32 %v5029, 1.0
    %v5033 = vadd.f32 %v5031, 1.0
    %v5034 = vrcp.pop %v5032
    %v5035 = vmul.f32 1.0, %v5034
    %v5036 = vrcp.pop %v5033
    %v5037 = vmul.f32 1.0, %v5036
    %v5040 = vrot.slane %v4790, 6
    %v5041 = vrot.slane %v4791, 6
    %v5044 = vmul.f32 %v5021, %v5040
    %v5045 = vmul.f32 %v5023, %v5041
    %v5046 = vmul.f32 %v5009, %v5024
    %v5047 = vmul.f32 %v5011, %v5025
    %v5048 = vadd.f32 %v5044, %v5046
    %v5049 = vadd.f32 %v5045, %v5047
    %v5050 = vtanh.pop %v5048
    %v5051 = vtanh.pop %v5049
    %v5052 = vmul.f32 %v5035, %v5050
    %v5053 = vmul.f32 %v5037, %v5051
    %v5054 = vpack.c.bf16 %v5052, %v5052
    %v5055 = vpack.c.bf16 %v5053, %v5053
    %v5058 = vrot.slane %v5054, 2
    %v5059 = vrot.slane %v5055, 2
    %5062 = vmatprep.subr.bf16.mxu0 %v4069
    %5063 = vmatpush1.bf16.msra.mxu0 %v4068
    %5064 = vmatprep.subr.bf16.mxu0 %v4077
    %5065 = vmatpush1.bf16.msra.mxu0 %v4076
    %5066 = vmatprep.subr.bf16.mxu0 %v4085
    %5067 = vmatpush1.bf16.msra.mxu0 %v4084
    %5068 = vmatprep.subr.bf16.mxu0 %v4093
    %5069 = vmatpush1.bf16.msra.mxu0 %v4092
    %5070 = vmatprep.subr.bf16.mxu0 %v4101
    %5071 = vmatpush1.bf16.msra.mxu0 %v4100
    %5072 = vmatprep.subr.bf16.mxu0 %v4109
    %5073 = vmatpush1.bf16.msra.mxu0 %v4108
    %5074 = vmatprep.subr.bf16.mxu0 %v4117
    %5075 = vmatpush1.bf16.msra.mxu0 %v4116
    %5076 = vmatprep.subr.bf16.mxu0 %v4125
    %5077 = vmatpush1.bf16.msra.mxu0 %v4124
    %5078 = vmatprep.subr.bf16.mxu0 %v4133
    %5079 = vmatpush1.bf16.msra.mxu0 %v4132
    %5080 = vmatprep.subr.bf16.mxu0 %v4141
    %5081 = vmatpush1.bf16.msra.mxu0 %v4140
    %5082 = vmatprep.subr.bf16.mxu0 %v4149
    %5083 = vmatpush1.bf16.msra.mxu0 %v4148
    %5084 = vmatprep.subr.bf16.mxu0 %v4157
    %5085 = vmatpush1.bf16.msra.mxu0 %v4156
    %5086 = vmatprep.subr.bf16.mxu0 %v4165
    %5087 = vmatpush1.bf16.msra.mxu0 %v4164
    %5088 = vmatprep.subr.bf16.mxu0 %v4173
    %5089 = vmatpush1.bf16.msra.mxu0 %v4172
    %5090 = vmatprep.subr.bf16.mxu0 %v4181
    %5091 = vmatpush1.bf16.msra.mxu0 %v4180
    %5092 = vmatprep.subr.bf16.mxu0 %v4189
    %5093 = vmatpush1.bf16.msra.mxu0 %v4188
    %5094 = vmatprep.mubr.bf16.mxu0 %v5059
    %5095 = vmatmul.mubr.bf16.gmra.mrb[0].mxu0 %v5058
    %v5096 = vpop.f32.mrb[0].mxu0
    %v5097 = vadd.f32 0.0, %v5096
    %v5098 = vpop.f32.mrb[0].mxu0
    %v5099 = vadd.f32 0.0, %v5098
    %v5100 = vpop.f32.mrb[0].mxu0
    %v5101 = vpop.f32.mrb[0].mxu0
    %5102 = vdwg.mxu0
    %5103 = vmatprep.subr.bf16.mxu0 %v4071
    %5104 = vmatpush1.bf16.msra.mxu0 %v4070
    %5105 = vmatprep.subr.bf16.mxu0 %v4079
    %5106 = vmatpush1.bf16.msra.mxu0 %v4078
    %5107 = vmatprep.subr.bf16.mxu0 %v4087
    %5108 = vmatpush1.bf16.msra.mxu0 %v4086
    %5109 = vmatprep.subr.bf16.mxu0 %v4095
    %5110 = vmatpush1.bf16.msra.mxu0 %v4094
    %5111 = vmatprep.subr.bf16.mxu0 %v4103
    %5112 = vmatpush1.bf16.msra.mxu0 %v4102
    %5113 = vmatprep.subr.bf16.mxu0 %v4111
    %5114 = vmatpush1.bf16.msra.mxu0 %v4110
    %5115 = vmatprep.subr.bf16.mxu0 %v4119
    %5116 = vmatpush1.bf16.msra.mxu0 %v4118
    %5117 = vmatprep.subr.bf16.mxu0 %v4127
    %5118 = vmatpush1.bf16.msra.mxu0 %v4126
    %5119 = vmatprep.subr.bf16.mxu0 %v4135
    %5120 = vmatpush1.bf16.msra.mxu0 %v4134
    %5121 = vmatprep.subr.bf16.mxu0 %v4143
    %5122 = vmatpush1.bf16.msra.mxu0 %v4142
    %5123 = vmatprep.subr.bf16.mxu0 %v4151
    %5124 = vmatpush1.bf16.msra.mxu0 %v4150
    %5125 = vmatprep.subr.bf16.mxu0 %v4159
    %5126 = vmatpush1.bf16.msra.mxu0 %v4158
    %5127 = vmatprep.subr.bf16.mxu0 %v4167
    %5128 = vmatpush1.bf16.msra.mxu0 %v4166
    %5129 = vmatprep.subr.bf16.mxu0 %v4175
    %5130 = vmatpush1.bf16.msra.mxu0 %v4174
    %5131 = vmatprep.subr.bf16.mxu0 %v4183
    %5132 = vmatpush1.bf16.msra.mxu0 %v4182
    %5133 = vmatprep.subr.bf16.mxu0 %v4191
    %5134 = vmatpush1.bf16.msra.mxu0 %v4190
    %5135 = vmatprep.mubr.bf16.mxu0 %v5059
    %5136 = vmatmul.mubr.bf16.gmra.mrb[0].mxu0 %v5058
    %v5137 = vpop.f32.mrb[0].mxu0
    %v5138 = vadd.f32 0.0, %v5137
    %v5139 = vpop.f32.mrb[0].mxu0
    %v5140 = vadd.f32 0.0, %v5139
    %v5141 = vpop.f32.mrb[0].mxu0
    %v5142 = vpop.f32.mrb[0].mxu0
    %5143 = vdwg.mxu0
    %5144 = vmatprep.subr.bf16.mxu0 %v4073
    %5145 = vmatpush1.bf16.msra.mxu0 %v4072
    %5146 = vmatprep.subr.bf16.mxu0 %v4081
    %5147 = vmatpush1.bf16.msra.mxu0 %v4080
    %5148 = vmatprep.subr.bf16.mxu0 %v4089
    %5149 = vmatpush1.bf16.msra.mxu0 %v4088
    %5150 = vmatprep.subr.bf16.mxu0 %v4097
    %5151 = vmatpush1.bf16.msra.mxu0 %v4096
    %5152 = vmatprep.subr.bf16.mxu0 %v4105
    %5153 = vmatpush1.bf16.msra.mxu0 %v4104
    %5154 = vmatprep.subr.bf16.mxu0 %v4113
    %5155 = vmatpush1.bf16.msra.mxu0 %v4112
    %5156 = vmatprep.subr.bf16.mxu0 %v4121
    %5157 = vmatpush1.bf16.msra.mxu0 %v4120
    %5158 = vmatprep.subr.bf16.mxu0 %v4129
    %5159 = vmatpush1.bf16.msra.mxu0 %v4128
    %5160 = vmatprep.subr.bf16.mxu0 %v4137
    %5161 = vmatpush1.bf16.msra.mxu0 %v4136
    %5162 = vmatprep.subr.bf16.mxu0 %v4145
    %5163 = vmatpush1.bf16.msra.mxu0 %v4144
    %5164 = vmatprep.subr.bf16.mxu0 %v4153
    %5165 = vmatpush1.bf16.msra.mxu0 %v4152
    %5166 = vmatprep.subr.bf16.mxu0 %v4161
    %5167 = vmatpush1.bf16.msra.mxu0 %v4160
    %5168 = vmatprep.subr.bf16.mxu0 %v4169
    %5169 = vmatpush1.bf16.msra.mxu0 %v4168
    %5170 = vmatprep.subr.bf16.mxu0 %v4177
    %5171 = vmatpush1.bf16.msra.mxu0 %v4176
    %5172 = vmatprep.subr.bf16.mxu0 %v4185
    %5173 = vmatpush1.bf16.msra.mxu0 %v4184
    %5174 = vmatprep.subr.bf16.mxu0 %v4193
    %5175 = vmatpush1.bf16.msra.mxu0 %v4192
    %5176 = vmatprep.mubr.bf16.mxu0 %v5059
    %5177 = vmatmul.mubr.bf16.gmra.mrb[0].mxu0 %v5058
    %v5178 = vpop.f32.mrb[0].mxu0
    %v5179 = vadd.f32 0.0, %v5178
    %v5180 = vpop.f32.mrb[0].mxu0
    %v5181 = vadd.f32 0.0, %v5180
    %v5182 = vpop.f32.mrb[0].mxu0
    %v5183 = vpop.f32.mrb[0].mxu0
    %5184 = vdwg.mxu0
    %5185 = vmatprep.subr.bf16.mxu0 %v4075
    %5186 = vmatpush1.bf16.msra.mxu0 %v4074
    %5187 = vmatprep.subr.bf16.mxu0 %v4083
    %5188 = vmatpush1.bf16.msra.mxu0 %v4082
    %5189 = vmatprep.subr.bf16.mxu0 %v4091
    %5190 = vmatpush1.bf16.msra.mxu0 %v4090
    %5191 = vmatprep.subr.bf16.mxu0 %v4099
    %5192 = vmatpush1.bf16.msra.mxu0 %v4098
    %5193 = vmatprep.subr.bf16.mxu0 %v4107
    %5194 = vmatpush1.bf16.msra.mxu0 %v4106
    %5195 = vmatprep.subr.bf16.mxu0 %v4115
    %5196 = vmatpush1.bf16.msra.mxu0 %v4114
    %5197 = vmatprep.subr.bf16.mxu0 %v4123
    %5198 = vmatpush1.bf16.msra.mxu0 %v4122
    %5199 = vmatprep.subr.bf16.mxu0 %v4131
    %5200 = vmatpush1.bf16.msra.mxu0 %v4130
    %5201 = vmatprep.subr.bf16.mxu0 %v4139
    %5202 = vmatpush1.bf16.msra.mxu0 %v4138
    %5203 = vmatprep.subr.bf16.mxu0 %v4147
    %5204 = vmatpush1.bf16.msra.mxu0 %v4146
    %5205 = vmatprep.subr.bf16.mxu0 %v4155
    %5206 = vmatpush1.bf16.msra.mxu0 %v4154
    %5207 = vmatprep.subr.bf16.mxu0 %v4163
    %5208 = vmatpush1.bf16.msra.mxu0 %v4162
    %5209 = vmatprep.subr.bf16.mxu0 %v4171
    %5210 = vmatpush1.bf16.msra.mxu0 %v4170
    %5211 = vmatprep.subr.bf16.mxu0 %v4179
    %5212 = vmatpush1.bf16.msra.mxu0 %v4178
    %5213 = vmatprep.subr.bf16.mxu0 %v4187
    %5214 = vmatpush1.bf16.msra.mxu0 %v4186
    %5215 = vmatprep.subr.bf16.mxu0 %v4195
    %5216 = vmatpush1.bf16.msra.mxu0 %v4194
    %5217 = vmatprep.mubr.bf16.mxu0 %v5059
    %5218 = vmatmul.mubr.bf16.gmra.mrb[0].mxu0 %v5058
    %v5219 = vpop.f32.mrb[0].mxu0
    %v5220 = vadd.f32 0.0, %v5219
    %v5221 = vpop.f32.mrb[0].mxu0
    %v5222 = vadd.f32 0.0, %v5221
    %v5223 = vpop.f32.mrb[0].mxu0
    %v5224 = vpop.f32.mrb[0].mxu0
    %5225 = vdwg.mxu0
    %v5234 = vrot.slane %v5097, 2
    %v5235 = vrot.slane %v5099, 2
    %v5236 = vrot.slane %v5138, 2
    %v5237 = vrot.slane %v5140, 2
    %v5238 = vrot.slane %v5179, 2
    %v5239 = vrot.slane %v5181, 2
    %v5240 = vrot.slane %v5220, 2
    %v5241 = vrot.slane %v5222, 2
    %v5250 = vadd.f32 %v3417, %v5234
    %v5251 = vadd.f32 %v3419, %v5235
    %v5252 = vadd.f32 %v3460, %v5236
    %v5253 = vadd.f32 %v3462, %v5237
    %v5254 = vadd.f32 %v3503, %v5238
    %v5255 = vadd.f32 %v3505, %v5239
    %v5256 = vadd.f32 %v3546, %v5240
    %v5257 = vadd.f32 %v3548, %v5241
    %v5258 = vxor.u32 %v5250, 2147483648
    %v5259 = vxor.u32 %v5251, 2147483648
    %v5260 = vmul.f32 %v5258, 1.442695
    %v5261 = vpow.pop %v5260
    %v5262 = vmul.f32 %v5259, 1.442695
    %v5263 = vpow.pop %v5262
    %v5264 = vadd.f32 %v5261, 1.0
    %v5265 = vadd.f32 %v5263, 1.0
    %v5266 = vrcp.pop %v5264
    %v5267 = vmul.f32 1.0, %v5266
    %v5268 = vrcp.pop %v5265
    %v5269 = vmul.f32 1.0, %v5268
    %v5270 = vxor.u32 %v5252, 2147483648
    %v5271 = vxor.u32 %v5253, 2147483648
    %v5272 = vmul.f32 %v5270, 1.442695
    %v5273 = vpow.pop %v5272
    %v5274 = vmul.f32 %v5271, 1.442695
    %v5275 = vpow.pop %v5274
    %v5276 = vadd.f32 %v5273, 1.0
    %v5277 = vadd.f32 %v5275, 1.0
    %v5278 = vrcp.pop %v5276
    %v5279 = vmul.f32 1.0, %v5278
    %v5280 = vrcp.pop %v5277
    %v5281 = vmul.f32 1.0, %v5280
    %v5282 = vtanh.pop %v5254
    %v5283 = vtanh.pop %v5255
    %v5284 = vxor.u32 %v5256, 2147483648
    %v5285 = vxor.u32 %v5257, 2147483648
    %v5286 = vmul.f32 %v5284, 1.442695
    %v5287 = vpow.pop %v5286
    %v5288 = vmul.f32 %v5285, 1.442695
    %v5289 = vpow.pop %v5288
    %v5290 = vadd.f32 %v5287, 1.0
    %v5291 = vadd.f32 %v5289, 1.0
    %v5292 = vrcp.pop %v5290
    %v5293 = vmul.f32 1.0, %v5292
    %v5294 = vrcp.pop %v5291
    %v5295 = vmul.f32 1.0, %v5294
    %v5298 = vrot.slane %v5048, 6
    %v5299 = vrot.slane %v5049, 6
    %v5302 = vmul.f32 %v5279, %v5298
    %v5303 = vmul.f32 %v5281, %v5299
    %v5304 = vmul.f32 %v5267, %v5282
    %v5305 = vmul.f32 %v5269, %v5283
    %v5306 = vadd.f32 %v5302, %v5304
    %v5307 = vadd.f32 %v5303, %v5305
    %v5308 = vtanh.pop %v5306
    %v5309 = vtanh.pop %v5307
    %v5310 = vmul.f32 %v5293, %v5308
    %v5311 = vmul.f32 %v5295, %v5309
    %v5312 = vpack.c.bf16 %v5310, %v5310
    %v5313 = vpack.c.bf16 %v5311, %v5311
    %v5316 = vrot.slane %v5312, 3
    %v5317 = vrot.slane %v5313, 3
    %5320 = vmatprep.subr.bf16.mxu0 %v4069
    %5321 = vmatpush1.bf16.msra.mxu0 %v4068
    %5322 = vmatprep.subr.bf16.mxu0 %v4077
    %5323 = vmatpush1.bf16.msra.mxu0 %v4076
    %5324 = vmatprep.subr.bf16.mxu0 %v4085
    %5325 = vmatpush1.bf16.msra.mxu0 %v4084
    %5326 = vmatprep.subr.bf16.mxu0 %v4093
    %5327 = vmatpush1.bf16.msra.mxu0 %v4092
    %5328 = vmatprep.subr.bf16.mxu0 %v4101
    %5329 = vmatpush1.bf16.msra.mxu0 %v4100
    %5330 = vmatprep.subr.bf16.mxu0 %v4109
    %5331 = vmatpush1.bf16.msra.mxu0 %v4108
    %5332 = vmatprep.subr.bf16.mxu0 %v4117
    %5333 = vmatpush1.bf16.msra.mxu0 %v4116
    %5334 = vmatprep.subr.bf16.mxu0 %v4125
    %5335 = vmatpush1.bf16.msra.mxu0 %v4124
    %5336 = vmatprep.subr.bf16.mxu0 %v4133
    %5337 = vmatpush1.bf16.msra.mxu0 %v4132
    %5338 = vmatprep.subr.bf16.mxu0 %v4141
    %5339 = vmatpush1.bf16.msra.mxu0 %v4140
    %5340 = vmatprep.subr.bf16.mxu0 %v4149
    %5341 = vmatpush1.bf16.msra.mxu0 %v4148
    %5342 = vmatprep.subr.bf16.mxu0 %v4157
    %5343 = vmatpush1.bf16.msra.mxu0 %v4156
    %5344 = vmatprep.subr.bf16.mxu0 %v4165
    %5345 = vmatpush1.bf16.msra.mxu0 %v4164
    %5346 = vmatprep.subr.bf16.mxu0 %v4173
    %5347 = vmatpush1.bf16.msra.mxu0 %v4172
    %5348 = vmatprep.subr.bf16.mxu0 %v4181
    %5349 = vmatpush1.bf16.msra.mxu0 %v4180
    %5350 = vmatprep.subr.bf16.mxu0 %v4189
    %5351 = vmatpush1.bf16.msra.mxu0 %v4188
    %5352 = vmatprep.mubr.bf16.mxu0 %v5317
    %5353 = vmatmul.mubr.bf16.gmra.mrb[0].mxu0 %v5316
    %v5354 = vpop.f32.mrb[0].mxu0
    %v5355 = vadd.f32 0.0, %v5354
    %v5356 = vpop.f32.mrb[0].mxu0
    %v5357 = vadd.f32 0.0, %v5356
    %v5358 = vpop.f32.mrb[0].mxu0
    %v5359 = vpop.f32.mrb[0].mxu0
    %5360 = vdwg.mxu0
    %5361 = vmatprep.subr.bf16.mxu0 %v4071
    %5362 = vmatpush1.bf16.msra.mxu0 %v4070
    %5363 = vmatprep.subr.bf16.mxu0 %v4079
    %5364 = vmatpush1.bf16.msra.mxu0 %v4078
    %5365 = vmatprep.subr.bf16.mxu0 %v4087
    %5366 = vmatpush1.bf16.msra.mxu0 %v4086
    %5367 = vmatprep.subr.bf16.mxu0 %v4095
    %5368 = vmatpush1.bf16.msra.mxu0 %v4094
    %5369 = vmatprep.subr.bf16.mxu0 %v4103
    %5370 = vmatpush1.bf16.msra.mxu0 %v4102
    %5371 = vmatprep.subr.bf16.mxu0 %v4111
    %5372 = vmatpush1.bf16.msra.mxu0 %v4110
    %5373 = vmatprep.subr.bf16.mxu0 %v4119
    %5374 = vmatpush1.bf16.msra.mxu0 %v4118
    %5375 = vmatprep.subr.bf16.mxu0 %v4127
    %5376 = vmatpush1.bf16.msra.mxu0 %v4126
    %5377 = vmatprep.subr.bf16.mxu0 %v4135
    %5378 = vmatpush1.bf16.msra.mxu0 %v4134
    %5379 = vmatprep.subr.bf16.mxu0 %v4143
    %5380 = vmatpush1.bf16.msra.mxu0 %v4142
    %5381 = vmatprep.subr.bf16.mxu0 %v4151
    %5382 = vmatpush1.bf16.msra.mxu0 %v4150
    %5383 = vmatprep.subr.bf16.mxu0 %v4159
    %5384 = vmatpush1.bf16.msra.mxu0 %v4158
    %5385 = vmatprep.subr.bf16.mxu0 %v4167
    %5386 = vmatpush1.bf16.msra.mxu0 %v4166
    %5387 = vmatprep.subr.bf16.mxu0 %v4175
    %5388 = vmatpush1.bf16.msra.mxu0 %v4174
    %5389 = vmatprep.subr.bf16.mxu0 %v4183
    %5390 = vmatpush1.bf16.msra.mxu0 %v4182
    %5391 = vmatprep.subr.bf16.mxu0 %v4191
    %5392 = vmatpush1.bf16.msra.mxu0 %v4190
    %5393 = vmatprep.mubr.bf16.mxu0 %v5317
    %5394 = vmatmul.mubr.bf16.gmra.mrb[0].mxu0 %v5316
    %v5395 = vpop.f32.mrb[0].mxu0
    %v5396 = vadd.f32 0.0, %v5395
    %v5397 = vpop.f32.mrb[0].mxu0
    %v5398 = vadd.f32 0.0, %v5397
    %v5399 = vpop.f32.mrb[0].mxu0
    %v5400 = vpop.f32.mrb[0].mxu0
    %5401 = vdwg.mxu0
    %5402 = vmatprep.subr.bf16.mxu0 %v4073
    %5403 = vmatpush1.bf16.msra.mxu0 %v4072
    %5404 = vmatprep.subr.bf16.mxu0 %v4081
    %5405 = vmatpush1.bf16.msra.mxu0 %v4080
    %5406 = vmatprep.subr.bf16.mxu0 %v4089
    %5407 = vmatpush1.bf16.msra.mxu0 %v4088
    %5408 = vmatprep.subr.bf16.mxu0 %v4097
    %5409 = vmatpush1.bf16.msra.mxu0 %v4096
    %5410 = vmatprep.subr.bf16.mxu0 %v4105
    %5411 = vmatpush1.bf16.msra.mxu0 %v4104
    %5412 = vmatprep.subr.bf16.mxu0 %v4113
    %5413 = vmatpush1.bf16.msra.mxu0 %v4112
    %5414 = vmatprep.subr.bf16.mxu0 %v4121
    %5415 = vmatpush1.bf16.msra.mxu0 %v4120
    %5416 = vmatprep.subr.bf16.mxu0 %v4129
    %5417 = vmatpush1.bf16.msra.mxu0 %v4128
    %5418 = vmatprep.subr.bf16.mxu0 %v4137
    %5419 = vmatpush1.bf16.msra.mxu0 %v4136
    %5420 = vmatprep.subr.bf16.mxu0 %v4145
    %5421 = vmatpush1.bf16.msra.mxu0 %v4144
    %5422 = vmatprep.subr.bf16.mxu0 %v4153
    %5423 = vmatpush1.bf16.msra.mxu0 %v4152
    %5424 = vmatprep.subr.bf16.mxu0 %v4161
    %5425 = vmatpush1.bf16.msra.mxu0 %v4160
    %5426 = vmatprep.subr.bf16.mxu0 %v4169
    %5427 = vmatpush1.bf16.msra.mxu0 %v4168
    %5428 = vmatprep.subr.bf16.mxu0 %v4177
    %5429 = vmatpush1.bf16.msra.mxu0 %v4176
    %5430 = vmatprep.subr.bf16.mxu0 %v4185
    %5431 = vmatpush1.bf16.msra.mxu0 %v4184
    %5432 = vmatprep.subr.bf16.mxu0 %v4193
    %5433 = vmatpush1.bf16.msra.mxu0 %v4192
    %5434 = vmatprep.mubr.bf16.mxu0 %v5317
    %5435 = vmatmul.mubr.bf16.gmra.mrb[0].mxu0 %v5316
    %v5436 = vpop.f32.mrb[0].mxu0
    %v5437 = vadd.f32 0.0, %v5436
    %v5438 = vpop.f32.mrb[0].mxu0
    %v5439 = vadd.f32 0.0, %v5438
    %v5440 = vpop.f32.mrb[0].mxu0
    %v5441 = vpop.f32.mrb[0].mxu0
    %5442 = vdwg.mxu0
    %5443 = vmatprep.subr.bf16.mxu0 %v4075
    %5444 = vmatpush1.bf16.msra.mxu0 %v4074
    %5445 = vmatprep.subr.bf16.mxu0 %v4083
    %5446 = vmatpush1.bf16.msra.mxu0 %v4082
    %5447 = vmatprep.subr.bf16.mxu0 %v4091
    %5448 = vmatpush1.bf16.msra.mxu0 %v4090
    %5449 = vmatprep.subr.bf16.mxu0 %v4099
    %5450 = vmatpush1.bf16.msra.mxu0 %v4098
    %5451 = vmatprep.subr.bf16.mxu0 %v4107
    %5452 = vmatpush1.bf16.msra.mxu0 %v4106
    %5453 = vmatprep.subr.bf16.mxu0 %v4115
    %5454 = vmatpush1.bf16.msra.mxu0 %v4114
    %5455 = vmatprep.subr.bf16.mxu0 %v4123
    %5456 = vmatpush1.bf16.msra.mxu0 %v4122
    %5457 = vmatprep.subr.bf16.mxu0 %v4131
    %5458 = vmatpush1.bf16.msra.mxu0 %v4130
    %5459 = vmatprep.subr.bf16.mxu0 %v4139
    %5460 = vmatpush1.bf16.msra.mxu0 %v4138
    %5461 = vmatprep.subr.bf16.mxu0 %v4147
    %5462 = vmatpush1.bf16.msra.mxu0 %v4146
    %5463 = vmatprep.subr.bf16.mxu0 %v4155
    %5464 = vmatpush1.bf16.msra.mxu0 %v4154
    %5465 = vmatprep.subr.bf16.mxu0 %v4163
    %5466 = vmatpush1.bf16.msra.mxu0 %v4162
    %5467 = vmatprep.subr.bf16.mxu0 %v4171
    %5468 = vmatpush1.bf16.msra.mxu0 %v4170
    %5469 = vmatprep.subr.bf16.mxu0 %v4179
    %5470 = vmatpush1.bf16.msra.mxu0 %v4178
    %5471 = vmatprep.subr.bf16.mxu0 %v4187
    %5472 = vmatpush1.bf16.msra.mxu0 %v4186
    %5473 = vmatprep.subr.bf16.mxu0 %v4195
    %5474 = vmatpush1.bf16.msra.mxu0 %v4194
    %5475 = vmatprep.mubr.bf16.mxu0 %v5317
    %5476 = vmatmul.mubr.bf16.gmra.mrb[0].mxu0 %v5316
    %v5477 = vpop.f32.mrb[0].mxu0
    %v5478 = vadd.f32 0.0, %v5477
    %v5479 = vpop.f32.mrb[0].mxu0
    %v5480 = vadd.f32 0.0, %v5479
    %v5481 = vpop.f32.mrb[0].mxu0
    %v5482 = vpop.f32.mrb[0].mxu0
    %5483 = vdwg.mxu0
    %v5484 = vadd.f32 %v3421, %v5355
    %v5485 = vadd.f32 %v3423, %v5357
    %v5486 = vadd.f32 %v3464, %v5396
    %v5487 = vadd.f32 %v3466, %v5398
    %v5488 = vadd.f32 %v3507, %v5437
    %v5489 = vadd.f32 %v3509, %v5439
    %v5490 = vadd.f32 %v3550, %v5478
    %v5491 = vadd.f32 %v3552, %v5480
    %v5492 = vxor.u32 %v5484, 2147483648
    %v5493 = vxor.u32 %v5485, 2147483648
    %v5494 = vmul.f32 %v5492, 1.442695
    %v5495 = vpow.pop %v5494
    %v5496 = vmul.f32 %v5493, 1.442695
    %v5497 = vpow.pop %v5496
    %v5498 = vadd.f32 %v5495, 1.0
    %v5499 = vadd.f32 %v5497, 1.0
    %v5500 = vrcp.pop %v5498
    %v5501 = vmul.f32 1.0, %v5500
    %v5502 = vrcp.pop %v5499
    %v5503 = vmul.f32 1.0, %v5502
    %v5504 = vxor.u32 %v5486, 2147483648
    %v5505 = vxor.u32 %v5487, 2147483648
    %v5506 = vmul.f32 %v5504, 1.442695
    %v5507 = vpow.pop %v5506
    %v5508 = vmul.f32 %v5505, 1.442695
    %v5509 = vpow.pop %v5508
    %v5510 = vadd.f32 %v5507, 1.0
    %v5511 = vadd.f32 %v5509, 1.0
    %v5512 = vrcp.pop %v5510
    %v5513 = vmul.f32 1.0, %v5512
    %v5514 = vrcp.pop %v5511
    %v5515 = vmul.f32 1.0, %v5514
    %v5516 = vtanh.pop %v5488
    %v5517 = vtanh.pop %v5489
    %v5518 = vxor.u32 %v5490, 2147483648
    %v5519 = vxor.u32 %v5491, 2147483648
    %v5520 = vmul.f32 %v5518, 1.442695
    %v5521 = vpow.pop %v5520
    %v5522 = vmul.f32 %v5519, 1.442695
    %v5523 = vpow.pop %v5522
    %v5524 = vadd.f32 %v5521, 1.0
    %v5525 = vadd.f32 %v5523, 1.0
    %v5526 = vrcp.pop %v5524
    %v5527 = vmul.f32 1.0, %v5526
    %v5528 = vrcp.pop %v5525
    %v5529 = vmul.f32 1.0, %v5528
    %v5532 = vrot.slane %v5306, 6
    %v5533 = vrot.slane %v5307, 6
    %v5536 = vmul.f32 %v5513, %v5532
    %v5537 = vmul.f32 %v5515, %v5533
    %v5538 = vmul.f32 %v5501, %v5516
    %v5539 = vmul.f32 %v5503, %v5517
    %v5540 = vadd.f32 %v5536, %v5538
    %v5541 = vadd.f32 %v5537, %v5539
    %v5542 = vtanh.pop %v5540
    %v5543 = vtanh.pop %v5541
    %v5544 = vmul.f32 %v5527, %v5542
    %v5545 = vmul.f32 %v5529, %v5543
    %v5546 = vpack.c.bf16 %v5544, %v5544
    %v5547 = vpack.c.bf16 %v5545, %v5545
    %5548 = vmatprep.subr.bf16.mxu0 %v4069
    %5549 = vmatpush1.bf16.msra.mxu0 %v4068
    %5550 = vmatprep.subr.bf16.mxu0 %v4077
    %5551 = vmatpush1.bf16.msra.mxu0 %v4076
    %5552 = vmatprep.subr.bf16.mxu0 %v4085
    %5553 = vmatpush1.bf16.msra.mxu0 %v4084
    %5554 = vmatprep.subr.bf16.mxu0 %v4093
    %5555 = vmatpush1.bf16.msra.mxu0 %v4092
    %5556 = vmatprep.subr.bf16.mxu0 %v4101
    %5557 = vmatpush1.bf16.msra.mxu0 %v4100
    %5558 = vmatprep.subr.bf16.mxu0 %v4109
    %5559 = vmatpush1.bf16.msra.mxu0 %v4108
    %5560 = vmatprep.subr.bf16.mxu0 %v4117
    %5561 = vmatpush1.bf16.msra.mxu0 %v4116
    %5562 = vmatprep.subr.bf16.mxu0 %v4125
    %5563 = vmatpush1.bf16.msra.mxu0 %v4124
    %5564 = vmatprep.subr.bf16.mxu0 %v4133
    %5565 = vmatpush1.bf16.msra.mxu0 %v4132
    %5566 = vmatprep.subr.bf16.mxu0 %v4141
    %5567 = vmatpush1.bf16.msra.mxu0 %v4140
    %5568 = vmatprep.subr.bf16.mxu0 %v4149
    %5569 = vmatpush1.bf16.msra.mxu0 %v4148
    %5570 = vmatprep.subr.bf16.mxu0 %v4157
    %5571 = vmatpush1.bf16.msra.mxu0 %v4156
    %5572 = vmatprep.subr.bf16.mxu0 %v4165
    %5573 = vmatpush1.bf16.msra.mxu0 %v4164
    %5574 = vmatprep.subr.bf16.mxu0 %v4173
    %5575 = vmatpush1.bf16.msra.mxu0 %v4172
    %5576 = vmatprep.subr.bf16.mxu0 %v4181
    %5577 = vmatpush1.bf16.msra.mxu0 %v4180
    %5578 = vmatprep.subr.bf16.mxu0 %v4189
    %5579 = vmatpush1.bf16.msra.mxu0 %v4188
    %5580 = vmatprep.mubr.bf16.mxu0 %v5547
    %5581 = vmatmul.mubr.bf16.gmra.mrb[0].mxu0 %v5546
    %v5582 = vpop.f32.mrb[0].mxu0
    %v5583 = vadd.f32 0.0, %v5582
    %v5584 = vpop.f32.mrb[0].mxu0
    %v5585 = vadd.f32 0.0, %v5584
    %v5586 = vpop.f32.mrb[0].mxu0
    %v5587 = vpop.f32.mrb[0].mxu0
    %5588 = vdwg.mxu0
    %5589 = vmatprep.subr.bf16.mxu0 %v4071
    %5590 = vmatpush1.bf16.msra.mxu0 %v4070
    %5591 = vmatprep.subr.bf16.mxu0 %v4079
    %5592 = vmatpush1.bf16.msra.mxu0 %v4078
    %5593 = vmatprep.subr.bf16.mxu0 %v4087
    %5594 = vmatpush1.bf16.msra.mxu0 %v4086
    %5595 = vmatprep.subr.bf16.mxu0 %v4095
    %5596 = vmatpush1.bf16.msra.mxu0 %v4094
    %5597 = vmatprep.subr.bf16.mxu0 %v4103
    %5598 = vmatpush1.bf16.msra.mxu0 %v4102
    %5599 = vmatprep.subr.bf16.mxu0 %v4111
    %5600 = vmatpush1.bf16.msra.mxu0 %v4110
    %5601 = vmatprep.subr.bf16.mxu0 %v4119
    %5602 = vmatpush1.bf16.msra.mxu0 %v4118
    %5603 = vmatprep.subr.bf16.mxu0 %v4127
    %5604 = vmatpush1.bf16.msra.mxu0 %v4126
    %5605 = vmatprep.subr.bf16.mxu0 %v4135
    %5606 = vmatpush1.bf16.msra.mxu0 %v4134
    %5607 = vmatprep.subr.bf16.mxu0 %v4143
    %5608 = vmatpush1.bf16.msra.mxu0 %v4142
    %5609 = vmatprep.subr.bf16.mxu0 %v4151
    %5610 = vmatpush1.bf16.msra.mxu0 %v4150
    %5611 = vmatprep.subr.bf16.mxu0 %v4159
    %5612 = vmatpush1.bf16.msra.mxu0 %v4158
    %5613 = vmatprep.subr.bf16.mxu0 %v4167
    %5614 = vmatpush1.bf16.msra.mxu0 %v4166
    %5615 = vmatprep.subr.bf16.mxu0 %v4175
    %5616 = vmatpush1.bf16.msra.mxu0 %v4174
    %5617 = vmatprep.subr.bf16.mxu0 %v4183
    %5618 = vmatpush1.bf16.msra.mxu0 %v4182
    %5619 = vmatprep.subr.bf16.mxu0 %v4191
    %5620 = vmatpush1.bf16.msra.mxu0 %v4190
    %5621 = vmatprep.mubr.bf16.mxu0 %v5547
    %5622 = vmatmul.mubr.bf16.gmra.mrb[0].mxu0 %v5546
    %v5623 = vpop.f32.mrb[0].mxu0
    %v5624 = vadd.f32 0.0, %v5623
    %v5625 = vpop.f32.mrb[0].mxu0
    %v5626 = vadd.f32 0.0, %v5625
    %v5627 = vpop.f32.mrb[0].mxu0
    %v5628 = vpop.f32.mrb[0].mxu0
    %5629 = vdwg.mxu0
    %5630 = vmatprep.subr.bf16.mxu0 %v4073
    %5631 = vmatpush1.bf16.msra.mxu0 %v4072
    %5632 = vmatprep.subr.bf16.mxu0 %v4081
    %5633 = vmatpush1.bf16.msra.mxu0 %v4080
    %5634 = vmatprep.subr.bf16.mxu0 %v4089
    %5635 = vmatpush1.bf16.msra.mxu0 %v4088
    %5636 = vmatprep.subr.bf16.mxu0 %v4097
    %5637 = vmatpush1.bf16.msra.mxu0 %v4096
    %5638 = vmatprep.subr.bf16.mxu0 %v4105
    %5639 = vmatpush1.bf16.msra.mxu0 %v4104
    %5640 = vmatprep.subr.bf16.mxu0 %v4113
    %5641 = vmatpush1.bf16.msra.mxu0 %v4112
    %5642 = vmatprep.subr.bf16.mxu0 %v4121
    %5643 = vmatpush1.bf16.msra.mxu0 %v4120
    %5644 = vmatprep.subr.bf16.mxu0 %v4129
    %5645 = vmatpush1.bf16.msra.mxu0 %v4128
    %5646 = vmatprep.subr.bf16.mxu0 %v4137
    %5647 = vmatpush1.bf16.msra.mxu0 %v4136
    %5648 = vmatprep.subr.bf16.mxu0 %v4145
    %5649 = vmatpush1.bf16.msra.mxu0 %v4144
    %5650 = vmatprep.subr.bf16.mxu0 %v4153
    %5651 = vmatpush1.bf16.msra.mxu0 %v4152
    %5652 = vmatprep.subr.bf16.mxu0 %v4161
    %5653 = vmatpush1.bf16.msra.mxu0 %v4160
    %5654 = vmatprep.subr.bf16.mxu0 %v4169
    %5655 = vmatpush1.bf16.msra.mxu0 %v4168
    %5656 = vmatprep.subr.bf16.mxu0 %v4177
    %5657 = vmatpush1.bf16.msra.mxu0 %v4176
    %5658 = vmatprep.subr.bf16.mxu0 %v4185
    %5659 = vmatpush1.bf16.msra.mxu0 %v4184
    %5660 = vmatprep.subr.bf16.mxu0 %v4193
    %5661 = vmatpush1.bf16.msra.mxu0 %v4192
    %5662 = vmatprep.mubr.bf16.mxu0 %v5547
    %5663 = vmatmul.mubr.bf16.gmra.mrb[0].mxu0 %v5546
    %v5664 = vpop.f32.mrb[0].mxu0
    %v5665 = vadd.f32 0.0, %v5664
    %v5666 = vpop.f32.mrb[0].mxu0
    %v5667 = vadd.f32 0.0, %v5666
    %v5668 = vpop.f32.mrb[0].mxu0
    %v5669 = vpop.f32.mrb[0].mxu0
    %5670 = vdwg.mxu0
    %5671 = vmatprep.subr.bf16.mxu0 %v4075
    %5672 = vmatpush1.bf16.msra.mxu0 %v4074
    %5673 = vmatprep.subr.bf16.mxu0 %v4083
    %5674 = vmatpush1.bf16.msra.mxu0 %v4082
    %5675 = vmatprep.subr.bf16.mxu0 %v4091
    %5676 = vmatpush1.bf16.msra.mxu0 %v4090
    %5677 = vmatprep.subr.bf16.mxu0 %v4099
    %5678 = vmatpush1.bf16.msra.mxu0 %v4098
    %5679 = vmatprep.subr.bf16.mxu0 %v4107
    %5680 = vmatpush1.bf16.msra.mxu0 %v4106
    %5681 = vmatprep.subr.bf16.mxu0 %v4115
    %5682 = vmatpush1.bf16.msra.mxu0 %v4114
    %5683 = vmatprep.subr.bf16.mxu0 %v4123
    %5684 = vmatpush1.bf16.msra.mxu0 %v4122
    %5685 = vmatprep.subr.bf16.mxu0 %v4131
    %5686 = vmatpush1.bf16.msra.mxu0 %v4130
    %5687 = vmatprep.subr.bf16.mxu0 %v4139
    %5688 = vmatpush1.bf16.msra.mxu0 %v4138
    %5689 = vmatprep.subr.bf16.mxu0 %v4147
    %5690 = vmatpush1.bf16.msra.mxu0 %v4146
    %5691 = vmatprep.subr.bf16.mxu0 %v4155
    %5692 = vmatpush1.bf16.msra.mxu0 %v4154
    %5693 = vmatprep.subr.bf16.mxu0 %v4163
    %5694 = vmatpush1.bf16.msra.mxu0 %v4162
    %5695 = vmatprep.subr.bf16.mxu0 %v4171
    %5696 = vmatpush1.bf16.msra.mxu0 %v4170
    %5697 = vmatprep.subr.bf16.mxu0 %v4179
    %5698 = vmatpush1.bf16.msra.mxu0 %v4178
    %5699 = vmatprep.subr.bf16.mxu0 %v4187
    %5700 = vmatpush1.bf16.msra.mxu0 %v4186
    %5701 = vmatprep.subr.bf16.mxu0 %v4195
    %5702 = vmatpush1.bf16.msra.mxu0 %v4194
    %5703 = vmatprep.mubr.bf16.mxu0 %v5547
    %5704 = vmatmul.mubr.bf16.gmra.mrb[0].mxu0 %v5546
    %v5705 = vpop.f32.mrb[0].mxu0
    %v5706 = vadd.f32 0.0, %v5705
    %v5707 = vpop.f32.mrb[0].mxu0
    %v5708 = vadd.f32 0.0, %v5707
    %v5709 = vpop.f32.mrb[0].mxu0
    %v5710 = vpop.f32.mrb[0].mxu0
    %5711 = vdwg.mxu0
    %v5720 = vrot.slane %v5583, 6
    %v5721 = vrot.slane %v5585, 6
    %v5722 = vrot.slane %v5624, 6
    %v5723 = vrot.slane %v5626, 6
    %v5724 = vrot.slane %v5665, 6
    %v5725 = vrot.slane %v5667, 6
    %v5726 = vrot.slane %v5706, 6
    %v5727 = vrot.slane %v5708, 6
    %v5736 = vadd.f32 %v3421, %v5720
    %v5737 = vadd.f32 %v3423, %v5721
    %v5738 = vadd.f32 %v3464, %v5722
    %v5739 = vadd.f32 %v3466, %v5723
    %v5740 = vadd.f32 %v3507, %v5724
    %v5741 = vadd.f32 %v3509, %v5725
    %v5742 = vadd.f32 %v3550, %v5726
    %v5743 = vadd.f32 %v3552, %v5727
    %v5744 = vxor.u32 %v5736, 2147483648
    %v5745 = vxor.u32 %v5737, 2147483648
    %v5746 = vmul.f32 %v5744, 1.442695
    %v5747 = vpow.pop %v5746
    %v5748 = vmul.f32 %v5745, 1.442695
    %v5749 = vpow.pop %v5748
    %v5750 = vadd.f32 %v5747, 1.0
    %v5751 = vadd.f32 %v5749, 1.0
    %v5752 = vrcp.pop %v5750
    %v5753 = vmul.f32 1.0, %v5752
    %v5754 = vrcp.pop %v5751
    %v5755 = vmul.f32 1.0, %v5754
    %v5756 = vxor.u32 %v5738, 2147483648
    %v5757 = vxor.u32 %v5739, 2147483648
    %v5758 = vmul.f32 %v5756, 1.442695
    %v5759 = vpow.pop %v5758
    %v5760 = vmul.f32 %v5757, 1.442695
    %v5761 = vpow.pop %v5760
    %v5762 = vadd.f32 %v5759, 1.0
    %v5763 = vadd.f32 %v5761, 1.0
    %v5764 = vrcp.pop %v5762
    %v5765 = vmul.f32 1.0, %v5764
    %v5766 = vrcp.pop %v5763
    %v5767 = vmul.f32 1.0, %v5766
    %v5768 = vtanh.pop %v5740
    %v5769 = vtanh.pop %v5741
    %v5770 = vxor.u32 %v5742, 2147483648
    %v5771 = vxor.u32 %v5743, 2147483648
    %v5772 = vmul.f32 %v5770, 1.442695
    %v5773 = vpow.pop %v5772
    %v5774 = vmul.f32 %v5771, 1.442695
    %v5775 = vpow.pop %v5774
    %v5776 = vadd.f32 %v5773, 1.0
    %v5777 = vadd.f32 %v5775, 1.0
    %v5778 = vrcp.pop %v5776
    %v5779 = vmul.f32 1.0, %v5778
    %v5780 = vrcp.pop %v5777
    %v5781 = vmul.f32 1.0, %v5780
    %v5784 = vrot.slane %v5540, 6
    %v5785 = vrot.slane %v5541, 6
    %v5788 = vmul.f32 %v5765, %v5784
    %v5789 = vmul.f32 %v5767, %v5785
    %v5790 = vmul.f32 %v5753, %v5768
    %v5791 = vmul.f32 %v5755, %v5769
    %v5792 = vadd.f32 %v5788, %v5790
    %v5793 = vadd.f32 %v5789, %v5791
    %v5794 = vtanh.pop %v5792
    %v5795 = vtanh.pop %v5793
    %v5796 = vmul.f32 %v5779, %v5794
    %v5797 = vmul.f32 %v5781, %v5795
    %v5798 = vpack.c.bf16 %v5796, %v5796
    %v5799 = vpack.c.bf16 %v5797, %v5797
    %v5802 = vrot.slane %v5798, 1
    %v5803 = vrot.slane %v5799, 1
    %5806 = vmatprep.subr.bf16.mxu0 %v4069
    %5807 = vmatpush1.bf16.msra.mxu0 %v4068
    %5808 = vmatprep.subr.bf16.mxu0 %v4077
    %5809 = vmatpush1.bf16.msra.mxu0 %v4076
    %5810 = vmatprep.subr.bf16.mxu0 %v4085
    %5811 = vmatpush1.bf16.msra.mxu0 %v4084
    %5812 = vmatprep.subr.bf16.mxu0 %v4093
    %5813 = vmatpush1.bf16.msra.mxu0 %v4092
    %5814 = vmatprep.subr.bf16.mxu0 %v4101
    %5815 = vmatpush1.bf16.msra.mxu0 %v4100
    %5816 = vmatprep.subr.bf16.mxu0 %v4109
    %5817 = vmatpush1.bf16.msra.mxu0 %v4108
    %5818 = vmatprep.subr.bf16.mxu0 %v4117
    %5819 = vmatpush1.bf16.msra.mxu0 %v4116
    %5820 = vmatprep.subr.bf16.mxu0 %v4125
    %5821 = vmatpush1.bf16.msra.mxu0 %v4124
    %5822 = vmatprep.subr.bf16.mxu0 %v4133
    %5823 = vmatpush1.bf16.msra.mxu0 %v4132
    %5824 = vmatprep.subr.bf16.mxu0 %v4141
    %5825 = vmatpush1.bf16.msra.mxu0 %v4140
    %5826 = vmatprep.subr.bf16.mxu0 %v4149
    %5827 = vmatpush1.bf16.msra.mxu0 %v4148
    %5828 = vmatprep.subr.bf16.mxu0 %v4157
    %5829 = vmatpush1.bf16.msra.mxu0 %v4156
    %5830 = vmatprep.subr.bf16.mxu0 %v4165
    %5831 = vmatpush1.bf16.msra.mxu0 %v4164
    %5832 = vmatprep.subr.bf16.mxu0 %v4173
    %5833 = vmatpush1.bf16.msra.mxu0 %v4172
    %5834 = vmatprep.subr.bf16.mxu0 %v4181
    %5835 = vmatpush1.bf16.msra.mxu0 %v4180
    %5836 = vmatprep.subr.bf16.mxu0 %v4189
    %5837 = vmatpush1.bf16.msra.mxu0 %v4188
    %5838 = vmatprep.mubr.bf16.mxu0 %v5803
    %5839 = vmatmul.mubr.bf16.gmra.mrb[0].mxu0 %v5802
    %v5840 = vpop.f32.mrb[0].mxu0
    %v5841 = vadd.f32 0.0, %v5840
    %v5842 = vpop.f32.mrb[0].mxu0
    %v5843 = vadd.f32 0.0, %v5842
    %v5844 = vpop.f32.mrb[0].mxu0
    %v5845 = vpop.f32.mrb[0].mxu0
    %5846 = vdwg.mxu0
    %5847 = vmatprep.subr.bf16.mxu0 %v4071
    %5848 = vmatpush1.bf16.msra.mxu0 %v4070
    %5849 = vmatprep.subr.bf16.mxu0 %v4079
    %5850 = vmatpush1.bf16.msra.mxu0 %v4078
    %5851 = vmatprep.subr.bf16.mxu0 %v4087
    %5852 = vmatpush1.bf16.msra.mxu0 %v4086
    %5853 = vmatprep.subr.bf16.mxu0 %v4095
    %5854 = vmatpush1.bf16.msra.mxu0 %v4094
    %5855 = vmatprep.subr.bf16.mxu0 %v4103
    %5856 = vmatpush1.bf16.msra.mxu0 %v4102
    %5857 = vmatprep.subr.bf16.mxu0 %v4111
    %5858 = vmatpush1.bf16.msra.mxu0 %v4110
    %5859 = vmatprep.subr.bf16.mxu0 %v4119
    %5860 = vmatpush1.bf16.msra.mxu0 %v4118
    %5861 = vmatprep.subr.bf16.mxu0 %v4127
    %5862 = vmatpush1.bf16.msra.mxu0 %v4126
    %5863 = vmatprep.subr.bf16.mxu0 %v4135
    %5864 = vmatpush1.bf16.msra.mxu0 %v4134
    %5865 = vmatprep.subr.bf16.mxu0 %v4143
    %5866 = vmatpush1.bf16.msra.mxu0 %v4142
    %5867 = vmatprep.subr.bf16.mxu0 %v4151
    %5868 = vmatpush1.bf16.msra.mxu0 %v4150
    %5869 = vmatprep.subr.bf16.mxu0 %v4159
    %5870 = vmatpush1.bf16.msra.mxu0 %v4158
    %5871 = vmatprep.subr.bf16.mxu0 %v4167
    %5872 = vmatpush1.bf16.msra.mxu0 %v4166
    %5873 = vmatprep.subr.bf16.mxu0 %v4175
    %5874 = vmatpush1.bf16.msra.mxu0 %v4174
    %5875 = vmatprep.subr.bf16.mxu0 %v4183
    %5876 = vmatpush1.bf16.msra.mxu0 %v4182
    %5877 = vmatprep.subr.bf16.mxu0 %v4191
    %5878 = vmatpush1.bf16.msra.mxu0 %v4190
    %5879 = vmatprep.mubr.bf16.mxu0 %v5803
    %5880 = vmatmul.mubr.bf16.gmra.mrb[0].mxu0 %v5802
    %v5881 = vpop.f32.mrb[0].mxu0
    %v5882 = vadd.f32 0.0, %v5881
    %v5883 = vpop.f32.mrb[0].mxu0
    %v5884 = vadd.f32 0.0, %v5883
    %v5885 = vpop.f32.mrb[0].mxu0
    %v5886 = vpop.f32.mrb[0].mxu0
    %5887 = vdwg.mxu0
    %5888 = vmatprep.subr.bf16.mxu0 %v4073
    %5889 = vmatpush1.bf16.msra.mxu0 %v4072
    %5890 = vmatprep.subr.bf16.mxu0 %v4081
    %5891 = vmatpush1.bf16.msra.mxu0 %v4080
    %5892 = vmatprep.subr.bf16.mxu0 %v4089
    %5893 = vmatpush1.bf16.msra.mxu0 %v4088
    %5894 = vmatprep.subr.bf16.mxu0 %v4097
    %5895 = vmatpush1.bf16.msra.mxu0 %v4096
    %5896 = vmatprep.subr.bf16.mxu0 %v4105
    %5897 = vmatpush1.bf16.msra.mxu0 %v4104
    %5898 = vmatprep.subr.bf16.mxu0 %v4113
    %5899 = vmatpush1.bf16.msra.mxu0 %v4112
    %5900 = vmatprep.subr.bf16.mxu0 %v4121
    %5901 = vmatpush1.bf16.msra.mxu0 %v4120
    %5902 = vmatprep.subr.bf16.mxu0 %v4129
    %5903 = vmatpush1.bf16.msra.mxu0 %v4128
    %5904 = vmatprep.subr.bf16.mxu0 %v4137
    %5905 = vmatpush1.bf16.msra.mxu0 %v4136
    %5906 = vmatprep.subr.bf16.mxu0 %v4145
    %5907 = vmatpush1.bf16.msra.mxu0 %v4144
    %5908 = vmatprep.subr.bf16.mxu0 %v4153
    %5909 = vmatpush1.bf16.msra.mxu0 %v4152
    %5910 = vmatprep.subr.bf16.mxu0 %v4161
    %5911 = vmatpush1.bf16.msra.mxu0 %v4160
    %5912 = vmatprep.subr.bf16.mxu0 %v4169
    %5913 = vmatpush1.bf16.msra.mxu0 %v4168
    %5914 = vmatprep.subr.bf16.mxu0 %v4177
    %5915 = vmatpush1.bf16.msra.mxu0 %v4176
    %5916 = vmatprep.subr.bf16.mxu0 %v4185
    %5917 = vmatpush1.bf16.msra.mxu0 %v4184
    %5918 = vmatprep.subr.bf16.mxu0 %v4193
    %5919 = vmatpush1.bf16.msra.mxu0 %v4192
    %5920 = vmatprep.mubr.bf16.mxu0 %v5803
    %5921 = vmatmul.mubr.bf16.gmra.mrb[0].mxu0 %v5802
    %v5922 = vpop.f32.mrb[0].mxu0
    %v5923 = vadd.f32 0.0, %v5922
    %v5924 = vpop.f32.mrb[0].mxu0
    %v5925 = vadd.f32 0.0, %v5924
    %v5926 = vpop.f32.mrb[0].mxu0
    %v5927 = vpop.f32.mrb[0].mxu0
    %5928 = vdwg.mxu0
    %5929 = vmatprep.subr.bf16.mxu0 %v4075
    %5930 = vmatpush1.bf16.msra.mxu0 %v4074
    %5931 = vmatprep.subr.bf16.mxu0 %v4083
    %5932 = vmatpush1.bf16.msra.mxu0 %v4082
    %5933 = vmatprep.subr.bf16.mxu0 %v4091
    %5934 = vmatpush1.bf16.msra.mxu0 %v4090
    %5935 = vmatprep.subr.bf16.mxu0 %v4099
    %5936 = vmatpush1.bf16.msra.mxu0 %v4098
    %5937 = vmatprep.subr.bf16.mxu0 %v4107
    %5938 = vmatpush1.bf16.msra.mxu0 %v4106
    %5939 = vmatprep.subr.bf16.mxu0 %v4115
    %5940 = vmatpush1.bf16.msra.mxu0 %v4114
    %5941 = vmatprep.subr.bf16.mxu0 %v4123
    %5942 = vmatpush1.bf16.msra.mxu0 %v4122
    %5943 = vmatprep.subr.bf16.mxu0 %v4131
    %5944 = vmatpush1.bf16.msra.mxu0 %v4130
    %5945 = vmatprep.subr.bf16.mxu0 %v4139
    %5946 = vmatpush1.bf16.msra.mxu0 %v4138
    %5947 = vmatprep.subr.bf16.mxu0 %v4147
    %5948 = vmatpush1.bf16.msra.mxu0 %v4146
    %5949 = vmatprep.subr.bf16.mxu0 %v4155
    %5950 = vmatpush1.bf16.msra.mxu0 %v4154
    %5951 = vmatprep.subr.bf16.mxu0 %v4163
    %5952 = vmatpush1.bf16.msra.mxu0 %v4162
    %5953 = vmatprep.subr.bf16.mxu0 %v4171
    %5954 = vmatpush1.bf16.msra.mxu0 %v4170
    %5955 = vmatprep.subr.bf16.mxu0 %v4179
    %5956 = vmatpush1.bf16.msra.mxu0 %v4178
    %5957 = vmatprep.subr.bf16.mxu0 %v4187
    %5958 = vmatpush1.bf16.msra.mxu0 %v4186
    %5959 = vmatprep.subr.bf16.mxu0 %v4195
    %5960 = vmatpush1.bf16.msra.mxu0 %v4194
    %5961 = vmatprep.mubr.bf16.mxu0 %v5803
    %5962 = vmatmul.mubr.bf16.gmra.mrb[0].mxu0 %v5802
    %v5963 = vpop.f32.mrb[0].mxu0
    %v5964 = vadd.f32 0.0, %v5963
    %v5965 = vpop.f32.mrb[0].mxu0
    %v5966 = vadd.f32 0.0, %v5965
    %v5967 = vpop.f32.mrb[0].mxu0
    %v5968 = vpop.f32.mrb[0].mxu0
    %5969 = vdwg.mxu0
    %v5978 = vrot.slane %v5841, 4
    %v5979 = vrot.slane %v5843, 4
    %v5980 = vrot.slane %v5882, 4
    %v5981 = vrot.slane %v5884, 4
    %v5982 = vrot.slane %v5923, 4
    %v5983 = vrot.slane %v5925, 4
    %v5984 = vrot.slane %v5964, 4
    %v5985 = vrot.slane %v5966, 4
    %v5994 = vadd.f32 %v3421, %v5978
    %v5995 = vadd.f32 %v3423, %v5979
    %v5996 = vadd.f32 %v3464, %v5980
    %v5997 = vadd.f32 %v3466, %v5981
    %v5998 = vadd.f32 %v3507, %v5982
    %v5999 = vadd.f32 %v3509, %v5983
    %v6000 = vadd.f32 %v3550, %v5984
    %v6001 = vadd.f32 %v3552, %v5985
    %v6002 = vxor.u32 %v5994, 2147483648
    %v6003 = vxor.u32 %v5995, 2147483648
    %v6004 = vmul.f32 %v6002, 1.442695
    %v6005 = vpow.pop %v6004
    %v6006 = vmul.f32 %v6003, 1.442695
    %v6007 = vpow.pop %v6006
    %v6008 = vadd.f32 %v6005, 1.0
    %v6009 = vadd.f32 %v6007, 1.0
    %v6010 = vrcp.pop %v6008
    %v6011 = vmul.f32 1.0, %v6010
    %v6012 = vrcp.pop %v6009
    %v6013 = vmul.f32 1.0, %v6012
    %v6014 = vxor.u32 %v5996, 2147483648
    %v6015 = vxor.u32 %v5997, 2147483648
    %v6016 = vmul.f32 %v6014, 1.442695
    %v6017 = vpow.pop %v6016
    %v6018 = vmul.f32 %v6015, 1.442695
    %v6019 = vpow.pop %v6018
    %v6020 = vadd.f32 %v6017, 1.0
    %v6021 = vadd.f32 %v6019, 1.0
    %v6022 = vrcp.pop %v6020
    %v6023 = vmul.f32 1.0, %v6022
    %v6024 = vrcp.pop %v6021
    %v6025 = vmul.f32 1.0, %v6024
    %v6026 = vtanh.pop %v5998
    %v6027 = vtanh.pop %v5999
    %v6028 = vxor.u32 %v6000, 2147483648
    %v6029 = vxor.u32 %v6001, 2147483648
    %v6030 = vmul.f32 %v6028, 1.442695
    %v6031 = vpow.pop %v6030
    %v6032 = vmul.f32 %v6029, 1.442695
    %v6033 = vpow.pop %v6032
    %v6034 = vadd.f32 %v6031, 1.0
    %v6035 = vadd.f32 %v6033, 1.0
    %v6036 = vrcp.pop %v6034
    %v6037 = vmul.f32 1.0, %v6036
    %v6038 = vrcp.pop %v6035
    %v6039 = vmul.f32 1.0, %v6038
    %v6042 = vrot.slane %v5792, 6
    %v6043 = vrot.slane %v5793, 6
    %v6046 = vmul.f32 %v6023, %v6042
    %v6047 = vmul.f32 %v6025, %v6043
    %v6048 = vmul.f32 %v6011, %v6026
    %v6049 = vmul.f32 %v6013, %v6027
    %v6050 = vadd.f32 %v6046, %v6048
    %v6051 = vadd.f32 %v6047, %v6049
    %v6052 = vtanh.pop %v6050
    %v6053 = vtanh.pop %v6051
    %v6054 = vmul.f32 %v6037, %v6052
    %v6055 = vmul.f32 %v6039, %v6053
    %v6056 = vpack.c.bf16 %v6054, %v6054
    %v6057 = vpack.c.bf16 %v6055, %v6055
    %v6060 = vrot.slane %v6056, 2
    %v6061 = vrot.slane %v6057, 2
    %6064 = vmatprep.subr.bf16.mxu0 %v4069
    %6065 = vmatpush1.bf16.msra.mxu0 %v4068
    %6066 = vmatprep.subr.bf16.mxu0 %v4077
    %6067 = vmatpush1.bf16.msra.mxu0 %v4076
    %6068 = vmatprep.subr.bf16.mxu0 %v4085
    %6069 = vmatpush1.bf16.msra.mxu0 %v4084
    %6070 = vmatprep.subr.bf16.mxu0 %v4093
    %6071 = vmatpush1.bf16.msra.mxu0 %v4092
    %6072 = vmatprep.subr.bf16.mxu0 %v4101
    %6073 = vmatpush1.bf16.msra.mxu0 %v4100
    %6074 = vmatprep.subr.bf16.mxu0 %v4109
    %6075 = vmatpush1.bf16.msra.mxu0 %v4108
    %6076 = vmatprep.subr.bf16.mxu0 %v4117
    %6077 = vmatpush1.bf16.msra.mxu0 %v4116
    %6078 = vmatprep.subr.bf16.mxu0 %v4125
    %6079 = vmatpush1.bf16.msra.mxu0 %v4124
    %6080 = vmatprep.subr.bf16.mxu0 %v4133
    %6081 = vmatpush1.bf16.msra.mxu0 %v4132
    %6082 = vmatprep.subr.bf16.mxu0 %v4141
    %6083 = vmatpush1.bf16.msra.mxu0 %v4140
    %6084 = vmatprep.subr.bf16.mxu0 %v4149
    %6085 = vmatpush1.bf16.msra.mxu0 %v4148
    %6086 = vmatprep.subr.bf16.mxu0 %v4157
    %6087 = vmatpush1.bf16.msra.mxu0 %v4156
    %6088 = vmatprep.subr.bf16.mxu0 %v4165
    %6089 = vmatpush1.bf16.msra.mxu0 %v4164
    %6090 = vmatprep.subr.bf16.mxu0 %v4173
    %6091 = vmatpush1.bf16.msra.mxu0 %v4172
    %6092 = vmatprep.subr.bf16.mxu0 %v4181
    %6093 = vmatpush1.bf16.msra.mxu0 %v4180
    %6094 = vmatprep.subr.bf16.mxu0 %v4189
    %6095 = vmatpush1.bf16.msra.mxu0 %v4188
    %6096 = vmatprep.mubr.bf16.mxu0 %v6061
    %6097 = vmatmul.mubr.bf16.gmra.mrb[0].mxu0 %v6060
    %v6098 = vpop.f32.mrb[0].mxu0
    %v6099 = vadd.f32 0.0, %v6098
    %v6100 = vpop.f32.mrb[0].mxu0
    %v6101 = vadd.f32 0.0, %v6100
    %v6102 = vpop.f32.mrb[0].mxu0
    %v6103 = vpop.f32.mrb[0].mxu0
    %6104 = vdwg.mxu0
    %6105 = vmatprep.subr.bf16.mxu0 %v4071
    %6106 = vmatpush1.bf16.msra.mxu0 %v4070
    %6107 = vmatprep.subr.bf16.mxu0 %v4079
    %6108 = vmatpush1.bf16.msra.mxu0 %v4078
    %6109 = vmatprep.subr.bf16.mxu0 %v4087
    %6110 = vmatpush1.bf16.msra.mxu0 %v4086
    %6111 = vmatprep.subr.bf16.mxu0 %v4095
    %6112 = vmatpush1.bf16.msra.mxu0 %v4094
    %6113 = vmatprep.subr.bf16.mxu0 %v4103
    %6114 = vmatpush1.bf16.msra.mxu0 %v4102
    %6115 = vmatprep.subr.bf16.mxu0 %v4111
    %6116 = vmatpush1.bf16.msra.mxu0 %v4110
    %6117 = vmatprep.subr.bf16.mxu0 %v4119
    %6118 = vmatpush1.bf16.msra.mxu0 %v4118
    %6119 = vmatprep.subr.bf16.mxu0 %v4127
    %6120 = vmatpush1.bf16.msra.mxu0 %v4126
    %6121 = vmatprep.subr.bf16.mxu0 %v4135
    %6122 = vmatpush1.bf16.msra.mxu0 %v4134
    %6123 = vmatprep.subr.bf16.mxu0 %v4143
    %6124 = vmatpush1.bf16.msra.mxu0 %v4142
    %6125 = vmatprep.subr.bf16.mxu0 %v4151
    %6126 = vmatpush1.bf16.msra.mxu0 %v4150
    %6127 = vmatprep.subr.bf16.mxu0 %v4159
    %6128 = vmatpush1.bf16.msra.mxu0 %v4158
    %6129 = vmatprep.subr.bf16.mxu0 %v4167
    %6130 = vmatpush1.bf16.msra.mxu0 %v4166
    %6131 = vmatprep.subr.bf16.mxu0 %v4175
    %6132 = vmatpush1.bf16.msra.mxu0 %v4174
    %6133 = vmatprep.subr.bf16.mxu0 %v4183
    %6134 = vmatpush1.bf16.msra.mxu0 %v4182
    %6135 = vmatprep.subr.bf16.mxu0 %v4191
    %6136 = vmatpush1.bf16.msra.mxu0 %v4190
    %6137 = vmatprep.mubr.bf16.mxu0 %v6061
    %6138 = vmatmul.mubr.bf16.gmra.mrb[0].mxu0 %v6060
    %v6139 = vpop.f32.mrb[0].mxu0
    %v6140 = vadd.f32 0.0, %v6139
    %v6141 = vpop.f32.mrb[0].mxu0
    %v6142 = vadd.f32 0.0, %v6141
    %v6143 = vpop.f32.mrb[0].mxu0
    %v6144 = vpop.f32.mrb[0].mxu0
    %6145 = vdwg.mxu0
    %6146 = vmatprep.subr.bf16.mxu0 %v4073
    %6147 = vmatpush1.bf16.msra.mxu0 %v4072
    %6148 = vmatprep.subr.bf16.mxu0 %v4081
    %6149 = vmatpush1.bf16.msra.mxu0 %v4080
    %6150 = vmatprep.subr.bf16.mxu0 %v4089
    %6151 = vmatpush1.bf16.msra.mxu0 %v4088
    %6152 = vmatprep.subr.bf16.mxu0 %v4097
    %6153 = vmatpush1.bf16.msra.mxu0 %v4096
    %6154 = vmatprep.subr.bf16.mxu0 %v4105
    %6155 = vmatpush1.bf16.msra.mxu0 %v4104
    %6156 = vmatprep.subr.bf16.mxu0 %v4113
    %6157 = vmatpush1.bf16.msra.mxu0 %v4112
    %6158 = vmatprep.subr.bf16.mxu0 %v4121
    %6159 = vmatpush1.bf16.msra.mxu0 %v4120
    %6160 = vmatprep.subr.bf16.mxu0 %v4129
    %6161 = vmatpush1.bf16.msra.mxu0 %v4128
    %6162 = vmatprep.subr.bf16.mxu0 %v4137
    %6163 = vmatpush1.bf16.msra.mxu0 %v4136
    %6164 = vmatprep.subr.bf16.mxu0 %v4145
    %6165 = vmatpush1.bf16.msra.mxu0 %v4144
    %6166 = vmatprep.subr.bf16.mxu0 %v4153
    %6167 = vmatpush1.bf16.msra.mxu0 %v4152
    %6168 = vmatprep.subr.bf16.mxu0 %v4161
    %6169 = vmatpush1.bf16.msra.mxu0 %v4160
    %6170 = vmatprep.subr.bf16.mxu0 %v4169
    %6171 = vmatpush1.bf16.msra.mxu0 %v4168
    %6172 = vmatprep.subr.bf16.mxu0 %v4177
    %6173 = vmatpush1.bf16.msra.mxu0 %v4176
    %6174 = vmatprep.subr.bf16.mxu0 %v4185
    %6175 = vmatpush1.bf16.msra.mxu0 %v4184
    %6176 = vmatprep.subr.bf16.mxu0 %v4193
    %6177 = vmatpush1.bf16.msra.mxu0 %v4192
    %6178 = vmatprep.mubr.bf16.mxu0 %v6061
    %6179 = vmatmul.mubr.bf16.gmra.mrb[0].mxu0 %v6060
    %v6180 = vpop.f32.mrb[0].mxu0
    %v6181 = vadd.f32 0.0, %v6180
    %v6182 = vpop.f32.mrb[0].mxu0
    %v6183 = vadd.f32 0.0, %v6182
    %v6184 = vpop.f32.mrb[0].mxu0
    %v6185 = vpop.f32.mrb[0].mxu0
    %6186 = vdwg.mxu0
    %6187 = vmatprep.subr.bf16.mxu0 %v4075
    %6188 = vmatpush1.bf16.msra.mxu0 %v4074
    %6189 = vmatprep.subr.bf16.mxu0 %v4083
    %6190 = vmatpush1.bf16.msra.mxu0 %v4082
    %6191 = vmatprep.subr.bf16.mxu0 %v4091
    %6192 = vmatpush1.bf16.msra.mxu0 %v4090
    %6193 = vmatprep.subr.bf16.mxu0 %v4099
    %6194 = vmatpush1.bf16.msra.mxu0 %v4098
    %6195 = vmatprep.subr.bf16.mxu0 %v4107
    %6196 = vmatpush1.bf16.msra.mxu0 %v4106
    %6197 = vmatprep.subr.bf16.mxu0 %v4115
    %6198 = vmatpush1.bf16.msra.mxu0 %v4114
    %6199 = vmatprep.subr.bf16.mxu0 %v4123
    %6200 = vmatpush1.bf16.msra.mxu0 %v4122
    %6201 = vmatprep.subr.bf16.mxu0 %v4131
    %6202 = vmatpush1.bf16.msra.mxu0 %v4130
    %6203 = vmatprep.subr.bf16.mxu0 %v4139
    %6204 = vmatpush1.bf16.msra.mxu0 %v4138
    %6205 = vmatprep.subr.bf16.mxu0 %v4147
    %6206 = vmatpush1.bf16.msra.mxu0 %v4146
    %6207 = vmatprep.subr.bf16.mxu0 %v4155
    %6208 = vmatpush1.bf16.msra.mxu0 %v4154
    %6209 = vmatprep.subr.bf16.mxu0 %v4163
    %6210 = vmatpush1.bf16.msra.mxu0 %v4162
    %6211 = vmatprep.subr.bf16.mxu0 %v4171
    %6212 = vmatpush1.bf16.msra.mxu0 %v4170
    %6213 = vmatprep.subr.bf16.mxu0 %v4179
    %6214 = vmatpush1.bf16.msra.mxu0 %v4178
    %6215 = vmatprep.subr.bf16.mxu0 %v4187
    %6216 = vmatpush1.bf16.msra.mxu0 %v4186
    %6217 = vmatprep.subr.bf16.mxu0 %v4195
    %6218 = vmatpush1.bf16.msra.mxu0 %v4194
    %6219 = vmatprep.mubr.bf16.mxu0 %v6061
    %6220 = vmatmul.mubr.bf16.gmra.mrb[0].mxu0 %v6060
    %v6221 = vpop.f32.mrb[0].mxu0
    %v6222 = vadd.f32 0.0, %v6221
    %v6223 = vpop.f32.mrb[0].mxu0
    %v6224 = vadd.f32 0.0, %v6223
    %v6225 = vpop.f32.mrb[0].mxu0
    %v6226 = vpop.f32.mrb[0].mxu0
    %6227 = vdwg.mxu0
    %v6236 = vrot.slane %v6099, 2
    %v6237 = vrot.slane %v6101, 2
    %v6238 = vrot.slane %v6140, 2
    %v6239 = vrot.slane %v6142, 2
    %v6240 = vrot.slane %v6181, 2
    %v6241 = vrot.slane %v6183, 2
    %v6242 = vrot.slane %v6222, 2
    %v6243 = vrot.slane %v6224, 2
    %v6252 = vadd.f32 %v3421, %v6236
    %v6253 = vadd.f32 %v3423, %v6237
    %v6254 = vadd.f32 %v3464, %v6238
    %v6255 = vadd.f32 %v3466, %v6239
    %v6256 = vadd.f32 %v3507, %v6240
    %v6257 = vadd.f32 %v3509, %v6241
    %v6258 = vadd.f32 %v3550, %v6242
    %v6259 = vadd.f32 %v3552, %v6243
    %v6260 = vxor.u32 %v6252, 2147483648
    %v6261 = vxor.u32 %v6253, 2147483648
    %v6262 = vmul.f32 %v6260, 1.442695
    %v6263 = vpow.pop %v6262
    %v6264 = vmul.f32 %v6261, 1.442695
    %v6265 = vpow.pop %v6264
    %v6266 = vadd.f32 %v6263, 1.0
    %v6267 = vadd.f32 %v6265, 1.0
    %v6268 = vrcp.pop %v6266
    %v6269 = vmul.f32 1.0, %v6268
    %v6270 = vrcp.pop %v6267
    %v6271 = vmul.f32 1.0, %v6270
    %v6272 = vxor.u32 %v6254, 2147483648
    %v6273 = vxor.u32 %v6255, 2147483648
    %v6274 = vmul.f32 %v6272, 1.442695
    %v6275 = vpow.pop %v6274
    %v6276 = vmul.f32 %v6273, 1.442695
    %v6277 = vpow.pop %v6276
    %v6278 = vadd.f32 %v6275, 1.0
    %v6279 = vadd.f32 %v6277, 1.0
    %v6280 = vrcp.pop %v6278
    %v6281 = vmul.f32 1.0, %v6280
    %v6282 = vrcp.pop %v6279
    %v6283 = vmul.f32 1.0, %v6282
    %v6284 = vtanh.pop %v6256
    %v6285 = vtanh.pop %v6257
    %v6286 = vxor.u32 %v6258, 2147483648
    %v6287 = vxor.u32 %v6259, 2147483648
    %v6288 = vmul.f32 %v6286, 1.442695
    %v6289 = vpow.pop %v6288
    %v6290 = vmul.f32 %v6287, 1.442695
    %v6291 = vpow.pop %v6290
    %v6292 = vadd.f32 %v6289, 1.0
    %v6293 = vadd.f32 %v6291, 1.0
    %v6294 = vrcp.pop %v6292
    %v6295 = vmul.f32 1.0, %v6294
    %v6296 = vrcp.pop %v6293
    %v6297 = vmul.f32 1.0, %v6296
    %v6300 = vrot.slane %v6050, 6
    %v6301 = vrot.slane %v6051, 6
    %v6304 = vmul.f32 %v6281, %v6300
    %v6305 = vmul.f32 %v6283, %v6301
    %v6306 = vmul.f32 %v6269, %v6284
    %v6307 = vmul.f32 %v6271, %v6285
    %v6308 = vadd.f32 %v6304, %v6306
    %v6309 = vadd.f32 %v6305, %v6307
    %v6310 = vtanh.pop %v6308
    %v6311 = vtanh.pop %v6309
    %v6312 = vmul.f32 %v6295, %v6310
    %v6313 = vmul.f32 %v6297, %v6311
    %v6316 = vrot.slane %v4794, 1
    %v6317 = vrot.slane %v4795, 1
    %v6322 = vrot.slane %v5052, 2
    %v6323 = vrot.slane %v5053, 2
    %v6328 = vrot.slane %v5310, 3
    %v6329 = vrot.slane %v5311, 3
    %v6334 = vrot.slane %v5544, 4
    %v6335 = vrot.slane %v5545, 4
    %v6340 = vrot.slane %v5796, 5
    %v6341 = vrot.slane %v5797, 5
    %v6346 = vrot.slane %v6054, 6
    %v6347 = vrot.slane %v6055, 6
    %v6352 = vrot.slane %v6312, 7
    %v6353 = vrot.slane %v6313, 7
    %v6358 = vrot.slane %v4542, 1
    %v6359 = vrot.slane %v4543, 1
    %v6362 = vrot.slane %v4794, 2
    %v6363 = vrot.slane %v4795, 2
    %v6366 = vrot.slane %v5052, 3
    %v6367 = vrot.slane %v5053, 3
    %v6370 = vrot.slane %v5310, 4
    %v6371 = vrot.slane %v5311, 4
    %v6374 = vrot.slane %v5544, 5
    %v6375 = vrot.slane %v5545, 5
    %v6378 = vrot.slane %v5796, 6
    %v6379 = vrot.slane %v5797, 6
    %v6382 = vrot.slane %v6054, 7
    %v6383 = vrot.slane %v6055, 7
    %vm6386 = vcmask 1040384
    %v6387 = vsel %vm6386, %v4542, %v6316
    %v6388 = vsel %vm6386, %v4543, %v6317
    %vm6389 = vcmask 1041408
    %v6390 = vsel %vm6389, %v6387, %v6322
    %v6391 = vsel %vm6389, %v6388, %v6323
    %vm6392 = vcmask 1042432
    %v6393 = vsel %vm6392, %v6390, %v6328
    %v6394 = vsel %vm6392, %v6391, %v6329
    %v6395 = vsel %vm1731, %v6393, %v6334
    %v6396 = vsel %vm1731, %v6394, %v6335
    %vm6397 = vcmask 1044480
    %v6398 = vsel %vm6397, %v6395, %v6340
    %v6399 = vsel %vm6397, %v6396, %v6341
    %vm6400 = vcmask 1045504
    %v6401 = vsel %vm6400, %v6398, %v6346
    %v6402 = vsel %vm6400, %v6399, %v6347
    %vm6403 = vcmask 1046528
    %v6404 = vsel %vm6403, %v6401, %v6352
    %v6405 = vsel %vm6403, %v6402, %v6353
    %v6406 = vsel %vm6386, %v6358, %v6362
    %v6407 = vsel %vm6386, %v6359, %v6363
    %v6408 = vsel %vm6389, %v6406, %v6366
    %v6409 = vsel %vm6389, %v6407, %v6367
    %v6410 = vsel %vm6392, %v6408, %v6370
    %v6411 = vsel %vm6392, %v6409, %v6371
    %v6412 = vsel %vm1731, %v6410, %v6374
    %v6413 = vsel %vm1731, %v6411, %v6375
    %v6414 = vsel %vm6397, %v6412, %v6378
    %v6415 = vsel %vm6397, %v6413, %v6379
    %v6416 = vsel %vm6400, %v6414, %v6382
    %v6417 = vsel %vm6400, %v6415, %v6383
    %v6418 = vsel %vm6403, %v6416, %v6312
    %v6419 = vsel %vm6403, %v6417, %v6313
    %v6420 = vpack.c.bf16 %v6418, %v6404
    %v6421 = vpack.c.bf16 %v6419, %v6405
    %v6422 = vld [vmem:[#allocation10] sm:$0xff]
    %v6423 = vld [vmem:[#allocation10 + $0x8] sm:$0xff]
    %v6424 = vld [vmem:[#allocation10 + $0x10] sm:$0xff]
    %v6425 = vld [vmem:[#allocation10 + $0x18] sm:$0xff]
    %v6426 = vld [vmem:[#allocation10 + $0x20] sm:$0xff]
    %v6427 = vld [vmem:[#allocation10 + $0x28] sm:$0xff]
    %v6428 = vld [vmem:[#allocation10 + $0x30] sm:$0xff]
    %v6429 = vld [vmem:[#allocation10 + $0x38] sm:$0xff]
    %v6430 = vld [vmem:[#allocation10 + $0x40] sm:$0xff]
    %v6431 = vld [vmem:[#allocation10 + $0x48] sm:$0xff]
    %v6432 = vld [vmem:[#allocation10 + $0x50] sm:$0xff]
    %v6433 = vld [vmem:[#allocation10 + $0x58] sm:$0xff]
    %v6434 = vld [vmem:[#allocation10 + $0x60] sm:$0xff]
    %v6435 = vld [vmem:[#allocation10 + $0x68] sm:$0xff]
    %v6436 = vld [vmem:[#allocation10 + $0x70] sm:$0xff]
    %v6437 = vld [vmem:[#allocation10 + $0x78] sm:$0xff]
    %v6438 = vld [vmem:[#allocation10 + $0x80] sm:$0xff]
    %v6439 = vld [vmem:[#allocation10 + $0x88] sm:$0xff]
    %v6440 = vld [vmem:[#allocation10 + $0x90] sm:$0xff]
    %v6441 = vld [vmem:[#allocation10 + $0x98] sm:$0xff]
    %v6442 = vld [vmem:[#allocation10 + $0xa0] sm:$0xff]
    %v6443 = vld [vmem:[#allocation10 + $0xa8] sm:$0xff]
    %v6444 = vld [vmem:[#allocation10 + $0xb0] sm:$0xff]
    %v6445 = vld [vmem:[#allocation10 + $0xb8] sm:$0xff]
    %v6446 = vld [vmem:[#allocation10 + $0xc0] sm:$0xff]
    %v6447 = vld [vmem:[#allocation10 + $0xc8] sm:$0xff]
    %v6448 = vld [vmem:[#allocation10 + $0xd0] sm:$0xff]
    %v6449 = vld [vmem:[#allocation10 + $0xd8] sm:$0xff]
    %v6450 = vld [vmem:[#allocation10 + $0xe0] sm:$0xff]
    %v6451 = vld [vmem:[#allocation10 + $0xe8] sm:$0xff]
    %v6452 = vld [vmem:[#allocation10 + $0xf0] sm:$0xff]
    %v6453 = vld [vmem:[#allocation10 + $0xf8] sm:$0xff]
    %v6454 = vld [vmem:[#allocation10 + $0x100] sm:$0xff]
    %v6455 = vld [vmem:[#allocation10 + $0x108] sm:$0xff]
    %v6456 = vld [vmem:[#allocation10 + $0x110] sm:$0xff]
    %v6457 = vld [vmem:[#allocation10 + $0x118] sm:$0xff]
    %v6458 = vld [vmem:[#allocation10 + $0x120] sm:$0xff]
    %v6459 = vld [vmem:[#allocation10 + $0x128] sm:$0xff]
    %v6460 = vld [vmem:[#allocation10 + $0x130] sm:$0xff]
    %v6461 = vld [vmem:[#allocation10 + $0x138] sm:$0xff]
    %v6462 = vld [vmem:[#allocation10 + $0x140] sm:$0xff]
    %v6463 = vld [vmem:[#allocation10 + $0x148] sm:$0xff]
    %v6464 = vld [vmem:[#allocation10 + $0x150] sm:$0xff]
    %v6465 = vld [vmem:[#allocation10 + $0x158] sm:$0xff]
    %v6466 = vld [vmem:[#allocation10 + $0x160] sm:$0xff]
    %v6467 = vld [vmem:[#allocation10 + $0x168] sm:$0xff]
    %v6468 = vld [vmem:[#allocation10 + $0x170] sm:$0xff]
    %v6469 = vld [vmem:[#allocation10 + $0x178] sm:$0xff]
    %v6470 = vld [vmem:[#allocation10 + $0x180] sm:$0xff]
    %v6471 = vld [vmem:[#allocation10 + $0x188] sm:$0xff]
    %v6472 = vld [vmem:[#allocation10 + $0x190] sm:$0xff]
    %v6473 = vld [vmem:[#allocation10 + $0x198] sm:$0xff]
    %v6474 = vld [vmem:[#allocation10 + $0x1a0] sm:$0xff]
    %v6475 = vld [vmem:[#allocation10 + $0x1a8] sm:$0xff]
    %v6476 = vld [vmem:[#allocation10 + $0x1b0] sm:$0xff]
    %v6477 = vld [vmem:[#allocation10 + $0x1b8] sm:$0xff]
    %v6478 = vld [vmem:[#allocation10 + $0x1c0] sm:$0xff]
    %v6479 = vld [vmem:[#allocation10 + $0x1c8] sm:$0xff]
    %v6480 = vld [vmem:[#allocation10 + $0x1d0] sm:$0xff]
    %v6481 = vld [vmem:[#allocation10 + $0x1d8] sm:$0xff]
    %v6482 = vld [vmem:[#allocation10 + $0x1e0] sm:$0xff]
    %v6483 = vld [vmem:[#allocation10 + $0x1e8] sm:$0xff]
    %v6484 = vld [vmem:[#allocation10 + $0x1f0] sm:$0xff]
    %v6485 = vld [vmem:[#allocation10 + $0x1f8] sm:$0xff]
    %v6486 = vld [vmem:[%s10] sm:$0xf]
    %v6488 = vlaneseq
    %v6489 = vshrl.u32 %v6488, 7
    %v6490 = vsub.s32 0, %v6489
    %v6491 = vrot.slane %v6486, %v6490
    %v6492 = vlaneseq
    %v6493 = vshrl.u32 %v6492, 7
    %v6494 = vsub.s32 1, %v6493
    %v6495 = vrot.slane %v6486, %v6494
    %v6496 = vlaneseq
    %v6497 = vshrl.u32 %v6496, 7
    %v6498 = vsub.s32 2, %v6497
    %v6499 = vrot.slane %v6486, %v6498
    %v6500 = vlaneseq
    %v6501 = vshrl.u32 %v6500, 7
    %v6502 = vsub.s32 3, %v6501
    %v6503 = vrot.slane %v6486, %v6502
    %v6572 = vunpack.c.l.b16 %v6422
    %v6573 = vunpack.c.h.b16 %v6422
    %v6574 = vunpack.c.l.b16 %v6423
    %v6575 = vunpack.c.h.b16 %v6423
    %v6576 = vunpack.c.l.b16 %v6424
    %v6577 = vunpack.c.h.b16 %v6424
    %v6578 = vunpack.c.l.b16 %v6425
    %v6579 = vunpack.c.h.b16 %v6425
    %v6580 = vunpack.c.l.b16 %v6426
    %v6581 = vunpack.c.h.b16 %v6426
    %v6582 = vunpack.c.l.b16 %v6427
    %v6583 = vunpack.c.h.b16 %v6427
    %v6584 = vunpack.c.l.b16 %v6428
    %v6585 = vunpack.c.h.b16 %v6428
    %v6586 = vunpack.c.l.b16 %v6429
    %v6587 = vunpack.c.h.b16 %v6429
    %v6588 = vunpack.c.l.b16 %v6430
    %v6589 = vunpack.c.h.b16 %v6430
    %v6590 = vunpack.c.l.b16 %v6431
    %v6591 = vunpack.c.h.b16 %v6431
    %v6592 = vunpack.c.l.b16 %v6432
    %v6593 = vunpack.c.h.b16 %v6432
    %v6594 = vunpack.c.l.b16 %v6433
    %v6595 = vunpack.c.h.b16 %v6433
    %v6596 = vunpack.c.l.b16 %v6434
    %v6597 = vunpack.c.h.b16 %v6434
    %v6598 = vunpack.c.l.b16 %v6435
    %v6599 = vunpack.c.h.b16 %v6435
    %v6600 = vunpack.c.l.b16 %v6436
    %v6601 = vunpack.c.h.b16 %v6436
    %v6602 = vunpack.c.l.b16 %v6437
    %v6603 = vunpack.c.h.b16 %v6437
    %v6604 = vunpack.c.l.b16 %v6438
    %v6605 = vunpack.c.h.b16 %v6438
    %v6606 = vunpack.c.l.b16 %v6439
    %v6607 = vunpack.c.h.b16 %v6439
    %v6608 = vunpack.c.l.b16 %v6440
    %v6609 = vunpack.c.h.b16 %v6440
    %v6610 = vunpack.c.l.b16 %v6441
    %v6611 = vunpack.c.h.b16 %v6441
    %v6612 = vunpack.c.l.b16 %v6442
    %v6613 = vunpack.c.h.b16 %v6442
    %v6614 = vunpack.c.l.b16 %v6443
    %v6615 = vunpack.c.h.b16 %v6443
    %v6616 = vunpack.c.l.b16 %v6444
    %v6617 = vunpack.c.h.b16 %v6444
    %v6618 = vunpack.c.l.b16 %v6445
    %v6619 = vunpack.c.h.b16 %v6445
    %v6620 = vunpack.c.l.b16 %v6446
    %v6621 = vunpack.c.h.b16 %v6446
    %v6622 = vunpack.c.l.b16 %v6447
    %v6623 = vunpack.c.h.b16 %v6447
    %v6624 = vunpack.c.l.b16 %v6448
    %v6625 = vunpack.c.h.b16 %v6448
    %v6626 = vunpack.c.l.b16 %v6449
    %v6627 = vunpack.c.h.b16 %v6449
    %v6628 = vunpack.c.l.b16 %v6450
    %v6629 = vunpack.c.h.b16 %v6450
    %v6630 = vunpack.c.l.b16 %v6451
    %v6631 = vunpack.c.h.b16 %v6451
    %v6632 = vunpack.c.l.b16 %v6452
    %v6633 = vunpack.c.h.b16 %v6452
    %v6634 = vunpack.c.l.b16 %v6453
    %v6635 = vunpack.c.h.b16 %v6453
    %v6636 = vunpack.c.l.b16 %v6454
    %v6637 = vunpack.c.h.b16 %v6454
    %v6638 = vunpack.c.l.b16 %v6455
    %v6639 = vunpack.c.h.b16 %v6455
    %v6640 = vunpack.c.l.b16 %v6456
    %v6641 = vunpack.c.h.b16 %v6456
    %v6642 = vunpack.c.l.b16 %v6457
    %v6643 = vunpack.c.h.b16 %v6457
    %v6644 = vunpack.c.l.b16 %v6458
    %v6645 = vunpack.c.h.b16 %v6458
    %v6646 = vunpack.c.l.b16 %v6459
    %v6647 = vunpack.c.h.b16 %v6459
    %v6648 = vunpack.c.l.b16 %v6460
    %v6649 = vunpack.c.h.b16 %v6460
    %v6650 = vunpack.c.l.b16 %v6461
    %v6651 = vunpack.c.h.b16 %v6461
    %v6652 = vunpack.c.l.b16 %v6462
    %v6653 = vunpack.c.h.b16 %v6462
    %v6654 = vunpack.c.l.b16 %v6463
    %v6655 = vunpack.c.h.b16 %v6463
    %v6656 = vunpack.c.l.b16 %v6464
    %v6657 = vunpack.c.h.b16 %v6464
    %v6658 = vunpack.c.l.b16 %v6465
    %v6659 = vunpack.c.h.b16 %v6465
    %v6660 = vunpack.c.l.b16 %v6466
    %v6661 = vunpack.c.h.b16 %v6466
    %v6662 = vunpack.c.l.b16 %v6467
    %v6663 = vunpack.c.h.b16 %v6467
    %v6664 = vunpack.c.l.b16 %v6468
    %v6665 = vunpack.c.h.b16 %v6468
    %v6666 = vunpack.c.l.b16 %v6469
    %v6667 = vunpack.c.h.b16 %v6469
    %v6668 = vunpack.c.l.b16 %v6470
    %v6669 = vunpack.c.h.b16 %v6470
    %v6670 = vunpack.c.l.b16 %v6471
    %v6671 = vunpack.c.h.b16 %v6471
    %v6672 = vunpack.c.l.b16 %v6472
    %v6673 = vunpack.c.h.b16 %v6472
    %v6674 = vunpack.c.l.b16 %v6473
    %v6675 = vunpack.c.h.b16 %v6473
    %v6676 = vunpack.c.l.b16 %v6474
    %v6677 = vunpack.c.h.b16 %v6474
    %v6678 = vunpack.c.l.b16 %v6475
    %v6679 = vunpack.c.h.b16 %v6475
    %v6680 = vunpack.c.l.b16 %v6476
    %v6681 = vunpack.c.h.b16 %v6476
    %v6682 = vunpack.c.l.b16 %v6477
    %v6683 = vunpack.c.h.b16 %v6477
    %v6684 = vunpack.c.l.b16 %v6478
    %v6685 = vunpack.c.h.b16 %v6478
    %v6686 = vunpack.c.l.b16 %v6479
    %v6687 = vunpack.c.h.b16 %v6479
    %v6688 = vunpack.c.l.b16 %v6480
    %v6689 = vunpack.c.h.b16 %v6480
    %v6690 = vunpack.c.l.b16 %v6481
    %v6691 = vunpack.c.h.b16 %v6481
    %v6692 = vunpack.c.l.b16 %v6482
    %v6693 = vunpack.c.h.b16 %v6482
    %v6694 = vunpack.c.l.b16 %v6483
    %v6695 = vunpack.c.h.b16 %v6483
    %v6696 = vunpack.c.l.b16 %v6484
    %v6697 = vunpack.c.h.b16 %v6484
    %v6698 = vunpack.c.l.b16 %v6485
    %v6699 = vunpack.c.h.b16 %v6485
    %v6700 = vpack.c.b16 %v6576, %v6572
    %v6701 = vpack.c.b16 %v6577, %v6573
    %v6702 = vpack.c.b16 %v6578, %v6574
    %v6703 = vpack.c.b16 %v6579, %v6575
    %v6704 = vpack.c.b16 %v6584, %v6580
    %v6705 = vpack.c.b16 %v6585, %v6581
    %v6706 = vpack.c.b16 %v6586, %v6582
    %v6707 = vpack.c.b16 %v6587, %v6583
    %v6708 = vpack.c.b16 %v6592, %v6588
    %v6709 = vpack.c.b16 %v6593, %v6589
    %v6710 = vpack.c.b16 %v6594, %v6590
    %v6711 = vpack.c.b16 %v6595, %v6591
    %v6712 = vpack.c.b16 %v6600, %v6596
    %v6713 = vpack.c.b16 %v6601, %v6597
    %v6714 = vpack.c.b16 %v6602, %v6598
    %v6715 = vpack.c.b16 %v6603, %v6599
    %v6716 = vpack.c.b16 %v6608, %v6604
    %v6717 = vpack.c.b16 %v6609, %v6605
    %v6718 = vpack.c.b16 %v6610, %v6606
    %v6719 = vpack.c.b16 %v6611, %v6607
    %v6720 = vpack.c.b16 %v6616, %v6612
    %v6721 = vpack.c.b16 %v6617, %v6613
    %v6722 = vpack.c.b16 %v6618, %v6614
    %v6723 = vpack.c.b16 %v6619, %v6615
    %v6724 = vpack.c.b16 %v6624, %v6620
    %v6725 = vpack.c.b16 %v6625, %v6621
    %v6726 = vpack.c.b16 %v6626, %v6622
    %v6727 = vpack.c.b16 %v6627, %v6623
    %v6728 = vpack.c.b16 %v6632, %v6628
    %v6729 = vpack.c.b16 %v6633, %v6629
    %v6730 = vpack.c.b16 %v6634, %v6630
    %v6731 = vpack.c.b16 %v6635, %v6631
    %v6732 = vpack.c.b16 %v6640, %v6636
    %v6733 = vpack.c.b16 %v6641, %v6637
    %v6734 = vpack.c.b16 %v6642, %v6638
    %v6735 = vpack.c.b16 %v6643, %v6639
    %v6736 = vpack.c.b16 %v6648, %v6644
    %v6737 = vpack.c.b16 %v6649, %v6645
    %v6738 = vpack.c.b16 %v6650, %v6646
    %v6739 = vpack.c.b16 %v6651, %v6647
    %v6740 = vpack.c.b16 %v6656, %v6652
    %v6741 = vpack.c.b16 %v6657, %v6653
    %v6742 = vpack.c.b16 %v6658, %v6654
    %v6743 = vpack.c.b16 %v6659, %v6655
    %v6744 = vpack.c.b16 %v6664, %v6660
    %v6745 = vpack.c.b16 %v6665, %v6661
    %v6746 = vpack.c.b16 %v6666, %v6662
    %v6747 = vpack.c.b16 %v6667, %v6663
    %v6748 = vpack.c.b16 %v6672, %v6668
    %v6749 = vpack.c.b16 %v6673, %v6669
    %v6750 = vpack.c.b16 %v6674, %v6670
    %v6751 = vpack.c.b16 %v6675, %v6671
    %v6752 = vpack.c.b16 %v6680, %v6676
    %v6753 = vpack.c.b16 %v6681, %v6677
    %v6754 = vpack.c.b16 %v6682, %v6678
    %v6755 = vpack.c.b16 %v6683, %v6679
    %v6756 = vpack.c.b16 %v6688, %v6684
    %v6757 = vpack.c.b16 %v6689, %v6685
    %v6758 = vpack.c.b16 %v6690, %v6686
    %v6759 = vpack.c.b16 %v6691, %v6687
    %v6760 = vpack.c.b16 %v6696, %v6692
    %v6761 = vpack.c.b16 %v6697, %v6693
    %v6762 = vpack.c.b16 %v6698, %v6694
    %v6763 = vpack.c.b16 %v6699, %v6695
    %6828 = vmatprep.subr.bf16.mxu0 %v6701
    %6829 = vmatpush1.bf16.msra.mxu0 %v6700
    %6830 = vmatprep.subr.bf16.mxu0 %v6705
    %6831 = vmatpush1.bf16.msra.mxu0 %v6704
    %6832 = vmatprep.subr.bf16.mxu0 %v6709
    %6833 = vmatpush1.bf16.msra.mxu0 %v6708
    %6834 = vmatprep.subr.bf16.mxu0 %v6713
    %6835 = vmatpush1.bf16.msra.mxu0 %v6712
    %6836 = vmatprep.subr.bf16.mxu0 %v6717
    %6837 = vmatpush1.bf16.msra.mxu0 %v6716
    %6838 = vmatprep.subr.bf16.mxu0 %v6721
    %6839 = vmatpush1.bf16.msra.mxu0 %v6720
    %6840 = vmatprep.subr.bf16.mxu0 %v6725
    %6841 = vmatpush1.bf16.msra.mxu0 %v6724
    %6842 = vmatprep.subr.bf16.mxu0 %v6729
    %6843 = vmatpush1.bf16.msra.mxu0 %v6728
    %6844 = vmatprep.subr.bf16.mxu0 %v6733
    %6845 = vmatpush1.bf16.msra.mxu0 %v6732
    %6846 = vmatprep.subr.bf16.mxu0 %v6737
    %6847 = vmatpush1.bf16.msra.mxu0 %v6736
    %6848 = vmatprep.subr.bf16.mxu0 %v6741
    %6849 = vmatpush1.bf16.msra.mxu0 %v6740
    %6850 = vmatprep.subr.bf16.mxu0 %v6745
    %6851 = vmatpush1.bf16.msra.mxu0 %v6744
    %6852 = vmatprep.subr.bf16.mxu0 %v6749
    %6853 = vmatpush1.bf16.msra.mxu0 %v6748
    %6854 = vmatprep.subr.bf16.mxu0 %v6753
    %6855 = vmatpush1.bf16.msra.mxu0 %v6752
    %6856 = vmatprep.subr.bf16.mxu0 %v6757
    %6857 = vmatpush1.bf16.msra.mxu0 %v6756
    %6858 = vmatprep.subr.bf16.mxu0 %v6761
    %6859 = vmatpush1.bf16.msra.mxu0 %v6760
    %6860 = vmatprep.mubr.bf16.mxu0 %v6421
    %6861 = vmatmul.mubr.bf16.gmra.mrb[0].mxu0 %v6420
    %v6862 = vpop.f32.mrb[0].mxu0
    %v6863 = vadd.f32 %v6491, %v6862
    %v6864 = vpop.f32.mrb[0].mxu0
    %v6865 = vadd.f32 %v6495, %v6864
    %v6866 = vpop.f32.mrb[0].mxu0
    %v6867 = vadd.f32 %v6491, %v6866
    %v6868 = vpop.f32.mrb[0].mxu0
    %v6869 = vadd.f32 %v6495, %v6868
    %6870 = vdwg.mxu0
    %6871 = vmatprep.subr.bf16.mxu0 %v6703
    %6872 = vmatpush1.bf16.msra.mxu0 %v6702
    %6873 = vmatprep.subr.bf16.mxu0 %v6707
    %6874 = vmatpush1.bf16.msra.mxu0 %v6706
    %6875 = vmatprep.subr.bf16.mxu0 %v6711
    %6876 = vmatpush1.bf16.msra.mxu0 %v6710
    %6877 = vmatprep.subr.bf16.mxu0 %v6715
    %6878 = vmatpush1.bf16.msra.mxu0 %v6714
    %6879 = vmatprep.subr.bf16.mxu0 %v6719
    %6880 = vmatpush1.bf16.msra.mxu0 %v6718
    %6881 = vmatprep.subr.bf16.mxu0 %v6723
    %6882 = vmatpush1.bf16.msra.mxu0 %v6722
    %6883 = vmatprep.subr.bf16.mxu0 %v6727
    %6884 = vmatpush1.bf16.msra.mxu0 %v6726
    %6885 = vmatprep.subr.bf16.mxu0 %v6731
    %6886 = vmatpush1.bf16.msra.mxu0 %v6730
    %6887 = vmatprep.subr.bf16.mxu0 %v6735
    %6888 = vmatpush1.bf16.msra.mxu0 %v6734
    %6889 = vmatprep.subr.bf16.mxu0 %v6739
    %6890 = vmatpush1.bf16.msra.mxu0 %v6738
    %6891 = vmatprep.subr.bf16.mxu0 %v6743
    %6892 = vmatpush1.bf16.msra.mxu0 %v6742
    %6893 = vmatprep.subr.bf16.mxu0 %v6747
    %6894 = vmatpush1.bf16.msra.mxu0 %v6746
    %6895 = vmatprep.subr.bf16.mxu0 %v6751
    %6896 = vmatpush1.bf16.msra.mxu0 %v6750
    %6897 = vmatprep.subr.bf16.mxu0 %v6755
    %6898 = vmatpush1.bf16.msra.mxu0 %v6754
    %6899 = vmatprep.subr.bf16.mxu0 %v6759
    %6900 = vmatpush1.bf16.msra.mxu0 %v6758
    %6901 = vmatprep.subr.bf16.mxu0 %v6763
    %6902 = vmatpush1.bf16.msra.mxu0 %v6762
    %6903 = vmatprep.mubr.bf16.mxu0 %v6421
    %6904 = vmatmul.mubr.bf16.gmra.mrb[0].mxu0 %v6420
    %v6905 = vpop.f32.mrb[0].mxu0
    %v6906 = vadd.f32 %v6499, %v6905
    %v6907 = vpop.f32.mrb[0].mxu0
    %v6908 = vadd.f32 %v6503, %v6907
    %v6909 = vpop.f32.mrb[0].mxu0
    %v6910 = vadd.f32 %v6499, %v6909
    %v6911 = vpop.f32.mrb[0].mxu0
    %v6912 = vadd.f32 %v6503, %v6911
    %6913 = vdwg.mxu0
    %v6914 = vmax.f32 %v6863, 0.0
    %v6915 = vmax.f32 %v6865, 0.0
    %v6916 = vmax.f32 %v6906, 0.0
    %v6917 = vmax.f32 %v6908, 0.0
    %v6918 = vmax.f32 %v6867, 0.0
    %v6919 = vmax.f32 %v6869, 0.0
    %v6920 = vmax.f32 %v6910, 0.0
    %v6921 = vmax.f32 %v6912, 0.0
    %v6922 = vpack.c.bf16 %v6918, %v6914
    %v6923 = vpack.c.bf16 %v6919, %v6915
    %v6924 = vpack.c.bf16 %v6920, %v6916
    %v6925 = vpack.c.bf16 %v6921, %v6917
    %v6926 = vld [vmem:[#allocation11] sm:$0xff]
    %v6927 = vld [vmem:[#allocation11 + $0x8] sm:$0xff]
    %v6928 = vld [vmem:[#allocation11 + $0x10] sm:$0xff]
    %v6929 = vld [vmem:[#allocation11 + $0x18] sm:$0xff]
    %v6930 = vld [vmem:[#allocation11 + $0x20] sm:$0xff]
    %v6931 = vld [vmem:[#allocation11 + $0x28] sm:$0xff]
    %v6932 = vld [vmem:[#allocation11 + $0x30] sm:$0xff]
    %v6933 = vld [vmem:[#allocation11 + $0x38] sm:$0xff]
    %v6934 = vld [vmem:[#allocation11 + $0x40] sm:$0xff]
    %v6935 = vld [vmem:[#allocation11 + $0x48] sm:$0xff]
    %v6936 = vld [vmem:[#allocation11 + $0x50] sm:$0xff]
    %v6937 = vld [vmem:[#allocation11 + $0x58] sm:$0xff]
    %v6938 = vld [vmem:[#allocation11 + $0x60] sm:$0xff]
    %v6939 = vld [vmem:[#allocation11 + $0x68] sm:$0xff]
    %v6940 = vld [vmem:[#allocation11 + $0x70] sm:$0xff]
    %v6941 = vld [vmem:[#allocation11 + $0x78] sm:$0xff]
    %v6942 = vld [vmem:[#allocation11 + $0x80] sm:$0xff]
    %v6943 = vld [vmem:[#allocation11 + $0x88] sm:$0xff]
    %v6944 = vld [vmem:[#allocation11 + $0x90] sm:$0xff]
    %v6945 = vld [vmem:[#allocation11 + $0x98] sm:$0xff]
    %v6946 = vld [vmem:[#allocation11 + $0xa0] sm:$0xff]
    %v6947 = vld [vmem:[#allocation11 + $0xa8] sm:$0xff]
    %v6948 = vld [vmem:[#allocation11 + $0xb0] sm:$0xff]
    %v6949 = vld [vmem:[#allocation11 + $0xb8] sm:$0xff]
    %v6950 = vld [vmem:[#allocation11 + $0xc0] sm:$0xff]
    %v6951 = vld [vmem:[#allocation11 + $0xc8] sm:$0xff]
    %v6952 = vld [vmem:[#allocation11 + $0xd0] sm:$0xff]
    %v6953 = vld [vmem:[#allocation11 + $0xd8] sm:$0xff]
    %v6954 = vld [vmem:[#allocation11 + $0xe0] sm:$0xff]
    %v6955 = vld [vmem:[#allocation11 + $0xe8] sm:$0xff]
    %v6956 = vld [vmem:[#allocation11 + $0xf0] sm:$0xff]
    %v6957 = vld [vmem:[#allocation11 + $0xf8] sm:$0xff]
    %v6958 = vld [vmem:[#allocation11 + $0x100] sm:$0xff]
    %v6959 = vld [vmem:[#allocation11 + $0x108] sm:$0xff]
    %v6960 = vld [vmem:[#allocation11 + $0x110] sm:$0xff]
    %v6961 = vld [vmem:[#allocation11 + $0x118] sm:$0xff]
    %v6962 = vld [vmem:[#allocation11 + $0x120] sm:$0xff]
    %v6963 = vld [vmem:[#allocation11 + $0x128] sm:$0xff]
    %v6964 = vld [vmem:[#allocation11 + $0x130] sm:$0xff]
    %v6965 = vld [vmem:[#allocation11 + $0x138] sm:$0xff]
    %v6966 = vld [vmem:[#allocation11 + $0x140] sm:$0xff]
    %v6967 = vld [vmem:[#allocation11 + $0x148] sm:$0xff]
    %v6968 = vld [vmem:[#allocation11 + $0x150] sm:$0xff]
    %v6969 = vld [vmem:[#allocation11 + $0x158] sm:$0xff]
    %v6970 = vld [vmem:[#allocation11 + $0x160] sm:$0xff]
    %v6971 = vld [vmem:[#allocation11 + $0x168] sm:$0xff]
    %v6972 = vld [vmem:[#allocation11 + $0x170] sm:$0xff]
    %v6973 = vld [vmem:[#allocation11 + $0x178] sm:$0xff]
    %v6974 = vld [vmem:[#allocation11 + $0x180] sm:$0xff]
    %v6975 = vld [vmem:[#allocation11 + $0x188] sm:$0xff]
    %v6976 = vld [vmem:[#allocation11 + $0x190] sm:$0xff]
    %v6977 = vld [vmem:[#allocation11 + $0x198] sm:$0xff]
    %v6978 = vld [vmem:[#allocation11 + $0x1a0] sm:$0xff]
    %v6979 = vld [vmem:[#allocation11 + $0x1a8] sm:$0xff]
    %v6980 = vld [vmem:[#allocation11 + $0x1b0] sm:$0xff]
    %v6981 = vld [vmem:[#allocation11 + $0x1b8] sm:$0xff]
    %v6982 = vld [vmem:[#allocation11 + $0x1c0] sm:$0xff]
    %v6983 = vld [vmem:[#allocation11 + $0x1c8] sm:$0xff]
    %v6984 = vld [vmem:[#allocation11 + $0x1d0] sm:$0xff]
    %v6985 = vld [vmem:[#allocation11 + $0x1d8] sm:$0xff]
    %v6986 = vld [vmem:[#allocation11 + $0x1e0] sm:$0xff]
    %v6987 = vld [vmem:[#allocation11 + $0x1e8] sm:$0xff]
    %v6988 = vld [vmem:[#allocation11 + $0x1f0] sm:$0xff]
    %v6989 = vld [vmem:[#allocation11 + $0x1f8] sm:$0xff]
    %v6990 = vld [vmem:[#allocation11 + $0x200] sm:$0xff]
    %v6991 = vld [vmem:[#allocation11 + $0x208] sm:$0xff]
    %v6992 = vld [vmem:[#allocation11 + $0x210] sm:$0xff]
    %v6993 = vld [vmem:[#allocation11 + $0x218] sm:$0xff]
    %v6994 = vld [vmem:[#allocation11 + $0x220] sm:$0xff]
    %v6995 = vld [vmem:[#allocation11 + $0x228] sm:$0xff]
    %v6996 = vld [vmem:[#allocation11 + $0x230] sm:$0xff]
    %v6997 = vld [vmem:[#allocation11 + $0x238] sm:$0xff]
    %v6998 = vld [vmem:[#allocation11 + $0x240] sm:$0xff]
    %v6999 = vld [vmem:[#allocation11 + $0x248] sm:$0xff]
    %v7000 = vld [vmem:[#allocation11 + $0x250] sm:$0xff]
    %v7001 = vld [vmem:[#allocation11 + $0x258] sm:$0xff]
    %v7002 = vld [vmem:[#allocation11 + $0x260] sm:$0xff]
    %v7003 = vld [vmem:[#allocation11 + $0x268] sm:$0xff]
    %v7004 = vld [vmem:[#allocation11 + $0x270] sm:$0xff]
    %v7005 = vld [vmem:[#allocation11 + $0x278] sm:$0xff]
    %v7006 = vld [vmem:[#allocation11 + $0x280] sm:$0xff]
    %v7007 = vld [vmem:[#allocation11 + $0x288] sm:$0xff]
    %v7008 = vld [vmem:[#allocation11 + $0x290] sm:$0xff]
    %v7009 = vld [vmem:[#allocation11 + $0x298] sm:$0xff]
    %v7010 = vld [vmem:[#allocation11 + $0x2a0] sm:$0xff]
    %v7011 = vld [vmem:[#allocation11 + $0x2a8] sm:$0xff]
    %v7012 = vld [vmem:[#allocation11 + $0x2b0] sm:$0xff]
    %v7013 = vld [vmem:[#allocation11 + $0x2b8] sm:$0xff]
    %v7014 = vld [vmem:[#allocation11 + $0x2c0] sm:$0xff]
    %v7015 = vld [vmem:[#allocation11 + $0x2c8] sm:$0xff]
    %v7016 = vld [vmem:[#allocation11 + $0x2d0] sm:$0xff]
    %v7017 = vld [vmem:[#allocation11 + $0x2d8] sm:$0xff]
    %v7018 = vld [vmem:[#allocation11 + $0x2e0] sm:$0xff]
    %v7019 = vld [vmem:[#allocation11 + $0x2e8] sm:$0xff]
    %v7020 = vld [vmem:[#allocation11 + $0x2f0] sm:$0xff]
    %v7021 = vld [vmem:[#allocation11 + $0x2f8] sm:$0xff]
    %v7022 = vld [vmem:[#allocation11 + $0x300] sm:$0xff]
    %v7023 = vld [vmem:[#allocation11 + $0x308] sm:$0xff]
    %v7024 = vld [vmem:[#allocation11 + $0x310] sm:$0xff]
    %v7025 = vld [vmem:[#allocation11 + $0x318] sm:$0xff]
    %v7026 = vld [vmem:[#allocation11 + $0x320] sm:$0xff]
    %v7027 = vld [vmem:[#allocation11 + $0x328] sm:$0xff]
    %v7028 = vld [vmem:[#allocation11 + $0x330] sm:$0xff]
    %v7029 = vld [vmem:[#allocation11 + $0x338] sm:$0xff]
    %v7030 = vld [vmem:[#allocation11 + $0x340] sm:$0xff]
    %v7031 = vld [vmem:[#allocation11 + $0x348] sm:$0xff]
    %v7032 = vld [vmem:[#allocation11 + $0x350] sm:$0xff]
    %v7033 = vld [vmem:[#allocation11 + $0x358] sm:$0xff]
    %v7034 = vld [vmem:[#allocation11 + $0x360] sm:$0xff]
    %v7035 = vld [vmem:[#allocation11 + $0x368] sm:$0xff]
    %v7036 = vld [vmem:[#allocation11 + $0x370] sm:$0xff]
    %v7037 = vld [vmem:[#allocation11 + $0x378] sm:$0xff]
    %v7038 = vld [vmem:[#allocation11 + $0x380] sm:$0xff]
    %v7039 = vld [vmem:[#allocation11 + $0x388] sm:$0xff]
    %v7040 = vld [vmem:[#allocation11 + $0x390] sm:$0xff]
    %v7041 = vld [vmem:[#allocation11 + $0x398] sm:$0xff]
    %v7042 = vld [vmem:[#allocation11 + $0x3a0] sm:$0xff]
    %v7043 = vld [vmem:[#allocation11 + $0x3a8] sm:$0xff]
    %v7044 = vld [vmem:[#allocation11 + $0x3b0] sm:$0xff]
    %v7045 = vld [vmem:[#allocation11 + $0x3b8] sm:$0xff]
    %v7046 = vld [vmem:[#allocation11 + $0x3c0] sm:$0xff]
    %v7047 = vld [vmem:[#allocation11 + $0x3c8] sm:$0xff]
    %v7048 = vld [vmem:[#allocation11 + $0x3d0] sm:$0xff]
    %v7049 = vld [vmem:[#allocation11 + $0x3d8] sm:$0xff]
    %v7050 = vld [vmem:[#allocation11 + $0x3e0] sm:$0xff]
    %v7051 = vld [vmem:[#allocation11 + $0x3e8] sm:$0xff]
    %v7052 = vld [vmem:[#allocation11 + $0x3f0] sm:$0xff]
    %v7053 = vld [vmem:[#allocation11 + $0x3f8] sm:$0xff]
    %v7054 = vld [vmem:[#allocation11 + $0x400] sm:$0xff]
    %v7055 = vld [vmem:[#allocation11 + $0x408] sm:$0xff]
    %v7056 = vld [vmem:[#allocation11 + $0x410] sm:$0xff]
    %v7057 = vld [vmem:[#allocation11 + $0x418] sm:$0xff]
    %v7058 = vld [vmem:[#allocation11 + $0x420] sm:$0xff]
    %v7059 = vld [vmem:[#allocation11 + $0x428] sm:$0xff]
    %v7060 = vld [vmem:[#allocation11 + $0x430] sm:$0xff]
    %v7061 = vld [vmem:[#allocation11 + $0x438] sm:$0xff]
    %v7062 = vld [vmem:[#allocation11 + $0x440] sm:$0xff]
    %v7063 = vld [vmem:[#allocation11 + $0x448] sm:$0xff]
    %v7064 = vld [vmem:[#allocation11 + $0x450] sm:$0xff]
    %v7065 = vld [vmem:[#allocation11 + $0x458] sm:$0xff]
    %v7066 = vld [vmem:[#allocation11 + $0x460] sm:$0xff]
    %v7067 = vld [vmem:[#allocation11 + $0x468] sm:$0xff]
    %v7068 = vld [vmem:[#allocation11 + $0x470] sm:$0xff]
    %v7069 = vld [vmem:[#allocation11 + $0x478] sm:$0xff]
    %v7070 = vld [vmem:[#allocation11 + $0x480] sm:$0xff]
    %v7071 = vld [vmem:[#allocation11 + $0x488] sm:$0xff]
    %v7072 = vld [vmem:[#allocation11 + $0x490] sm:$0xff]
    %v7073 = vld [vmem:[#allocation11 + $0x498] sm:$0xff]
    %v7074 = vld [vmem:[#allocation11 + $0x4a0] sm:$0xff]
    %v7075 = vld [vmem:[#allocation11 + $0x4a8] sm:$0xff]
    %v7076 = vld [vmem:[#allocation11 + $0x4b0] sm:$0xff]
    %v7077 = vld [vmem:[#allocation11 + $0x4b8] sm:$0xff]
    %v7078 = vld [vmem:[#allocation11 + $0x4c0] sm:$0xff]
    %v7079 = vld [vmem:[#allocation11 + $0x4c8] sm:$0xff]
    %v7080 = vld [vmem:[#allocation11 + $0x4d0] sm:$0xff]
    %v7081 = vld [vmem:[#allocation11 + $0x4d8] sm:$0xff]
    %v7082 = vld [vmem:[#allocation11 + $0x4e0] sm:$0xff]
    %v7083 = vld [vmem:[#allocation11 + $0x4e8] sm:$0xff]
    %v7084 = vld [vmem:[#allocation11 + $0x4f0] sm:$0xff]
    %v7085 = vld [vmem:[#allocation11 + $0x4f8] sm:$0xff]
    %v7086 = vld [vmem:[#allocation11 + $0x500] sm:$0xff]
    %v7087 = vld [vmem:[#allocation11 + $0x508] sm:$0xff]
    %v7088 = vld [vmem:[#allocation11 + $0x510] sm:$0xff]
    %v7089 = vld [vmem:[#allocation11 + $0x518] sm:$0xff]
    %v7090 = vld [vmem:[#allocation11 + $0x520] sm:$0xff]
    %v7091 = vld [vmem:[#allocation11 + $0x528] sm:$0xff]
    %v7092 = vld [vmem:[#allocation11 + $0x530] sm:$0xff]
    %v7093 = vld [vmem:[#allocation11 + $0x538] sm:$0xff]
    %v7094 = vld [vmem:[#allocation11 + $0x540] sm:$0xff]
    %v7095 = vld [vmem:[#allocation11 + $0x548] sm:$0xff]
    %v7096 = vld [vmem:[#allocation11 + $0x550] sm:$0xff]
    %v7097 = vld [vmem:[#allocation11 + $0x558] sm:$0xff]
    %v7098 = vld [vmem:[#allocation11 + $0x560] sm:$0xff]
    %v7099 = vld [vmem:[#allocation11 + $0x568] sm:$0xff]
    %v7100 = vld [vmem:[#allocation11 + $0x570] sm:$0xff]
    %v7101 = vld [vmem:[#allocation11 + $0x578] sm:$0xff]
    %v7102 = vld [vmem:[#allocation11 + $0x580] sm:$0xff]
    %v7103 = vld [vmem:[#allocation11 + $0x588] sm:$0xff]
    %v7104 = vld [vmem:[#allocation11 + $0x590] sm:$0xff]
    %v7105 = vld [vmem:[#allocation11 + $0x598] sm:$0xff]
    %v7106 = vld [vmem:[#allocation11 + $0x5a0] sm:$0xff]
    %v7107 = vld [vmem:[#allocation11 + $0x5a8] sm:$0xff]
    %v7108 = vld [vmem:[#allocation11 + $0x5b0] sm:$0xff]
    %v7109 = vld [vmem:[#allocation11 + $0x5b8] sm:$0xff]
    %v7110 = vld [vmem:[#allocation11 + $0x5c0] sm:$0xff]
    %v7111 = vld [vmem:[#allocation11 + $0x5c8] sm:$0xff]
    %v7112 = vld [vmem:[#allocation11 + $0x5d0] sm:$0xff]
    %v7113 = vld [vmem:[#allocation11 + $0x5d8] sm:$0xff]
    %v7114 = vld [vmem:[#allocation11 + $0x5e0] sm:$0xff]
    %v7115 = vld [vmem:[#allocation11 + $0x5e8] sm:$0xff]
    %v7116 = vld [vmem:[#allocation11 + $0x5f0] sm:$0xff]
    %v7117 = vld [vmem:[#allocation11 + $0x5f8] sm:$0xff]
    %v7118 = vld [vmem:[#allocation11 + $0x600] sm:$0xff]
    %v7119 = vld [vmem:[#allocation11 + $0x608] sm:$0xff]
    %v7120 = vld [vmem:[#allocation11 + $0x610] sm:$0xff]
    %v7121 = vld [vmem:[#allocation11 + $0x618] sm:$0xff]
    %v7122 = vld [vmem:[#allocation11 + $0x620] sm:$0xff]
    %v7123 = vld [vmem:[#allocation11 + $0x628] sm:$0xff]
    %v7124 = vld [vmem:[#allocation11 + $0x630] sm:$0xff]
    %v7125 = vld [vmem:[#allocation11 + $0x638] sm:$0xff]
    %v7126 = vld [vmem:[#allocation11 + $0x640] sm:$0xff]
    %v7127 = vld [vmem:[#allocation11 + $0x648] sm:$0xff]
    %v7128 = vld [vmem:[#allocation11 + $0x650] sm:$0xff]
    %v7129 = vld [vmem:[#allocation11 + $0x658] sm:$0xff]
    %v7130 = vld [vmem:[#allocation11 + $0x660] sm:$0xff]
    %v7131 = vld [vmem:[#allocation11 + $0x668] sm:$0xff]
    %v7132 = vld [vmem:[#allocation11 + $0x670] sm:$0xff]
    %v7133 = vld [vmem:[#allocation11 + $0x678] sm:$0xff]
    %v7134 = vld [vmem:[#allocation11 + $0x680] sm:$0xff]
    %v7135 = vld [vmem:[#allocation11 + $0x688] sm:$0xff]
    %v7136 = vld [vmem:[#allocation11 + $0x690] sm:$0xff]
    %v7137 = vld [vmem:[#allocation11 + $0x698] sm:$0xff]
    %v7138 = vld [vmem:[#allocation11 + $0x6a0] sm:$0xff]
    %v7139 = vld [vmem:[#allocation11 + $0x6a8] sm:$0xff]
    %v7140 = vld [vmem:[#allocation11 + $0x6b0] sm:$0xff]
    %v7141 = vld [vmem:[#allocation11 + $0x6b8] sm:$0xff]
    %v7142 = vld [vmem:[#allocation11 + $0x6c0] sm:$0xff]
    %v7143 = vld [vmem:[#allocation11 + $0x6c8] sm:$0xff]
    %v7144 = vld [vmem:[#allocation11 + $0x6d0] sm:$0xff]
    %v7145 = vld [vmem:[#allocation11 + $0x6d8] sm:$0xff]
    %v7146 = vld [vmem:[#allocation11 + $0x6e0] sm:$0xff]
    %v7147 = vld [vmem:[#allocation11 + $0x6e8] sm:$0xff]
    %v7148 = vld [vmem:[#allocation11 + $0x6f0] sm:$0xff]
    %v7149 = vld [vmem:[#allocation11 + $0x6f8] sm:$0xff]
    %v7150 = vld [vmem:[#allocation11 + $0x700] sm:$0xff]
    %v7151 = vld [vmem:[#allocation11 + $0x708] sm:$0xff]
    %v7152 = vld [vmem:[#allocation11 + $0x710] sm:$0xff]
    %v7153 = vld [vmem:[#allocation11 + $0x718] sm:$0xff]
    %v7154 = vld [vmem:[#allocation11 + $0x720] sm:$0xff]
    %v7155 = vld [vmem:[#allocation11 + $0x728] sm:$0xff]
    %v7156 = vld [vmem:[#allocation11 + $0x730] sm:$0xff]
    %v7157 = vld [vmem:[#allocation11 + $0x738] sm:$0xff]
    %v7158 = vld [vmem:[#allocation11 + $0x740] sm:$0xff]
    %v7159 = vld [vmem:[#allocation11 + $0x748] sm:$0xff]
    %v7160 = vld [vmem:[#allocation11 + $0x750] sm:$0xff]
    %v7161 = vld [vmem:[#allocation11 + $0x758] sm:$0xff]
    %v7162 = vld [vmem:[#allocation11 + $0x760] sm:$0xff]
    %v7163 = vld [vmem:[#allocation11 + $0x768] sm:$0xff]
    %v7164 = vld [vmem:[#allocation11 + $0x770] sm:$0xff]
    %v7165 = vld [vmem:[#allocation11 + $0x778] sm:$0xff]
    %v7166 = vld [vmem:[#allocation11 + $0x780] sm:$0xff]
    %v7167 = vld [vmem:[#allocation11 + $0x788] sm:$0xff]
    %v7168 = vld [vmem:[#allocation11 + $0x790] sm:$0xff]
    %v7169 = vld [vmem:[#allocation11 + $0x798] sm:$0xff]
    %v7170 = vld [vmem:[#allocation11 + $0x7a0] sm:$0xff]
    %v7171 = vld [vmem:[#allocation11 + $0x7a8] sm:$0xff]
    %v7172 = vld [vmem:[#allocation11 + $0x7b0] sm:$0xff]
    %v7173 = vld [vmem:[#allocation11 + $0x7b8] sm:$0xff]
    %v7174 = vld [vmem:[#allocation11 + $0x7c0] sm:$0xff]
    %v7175 = vld [vmem:[#allocation11 + $0x7c8] sm:$0xff]
    %v7176 = vld [vmem:[#allocation11 + $0x7d0] sm:$0xff]
    %v7177 = vld [vmem:[#allocation11 + $0x7d8] sm:$0xff]
    %v7178 = vld [vmem:[#allocation11 + $0x7e0] sm:$0xff]
    %v7179 = vld [vmem:[#allocation11 + $0x7e8] sm:$0xff]
    %v7180 = vld [vmem:[#allocation11 + $0x7f0] sm:$0xff]
    %v7181 = vld [vmem:[#allocation11 + $0x7f8] sm:$0xff]
    %v7182 = vld [vmem:[%s12] sm:$0xff]
    %v7184 = vlaneseq
    %v7185 = vshrl.u32 %v7184, 7
    %v7186 = vsub.s32 0, %v7185
    %v7187 = vrot.slane %v7182, %v7186
    %v7188 = vlaneseq
    %v7189 = vshrl.u32 %v7188, 7
    %v7190 = vsub.s32 1, %v7189
    %v7191 = vrot.slane %v7182, %v7190
    %v7192 = vlaneseq
    %v7193 = vshrl.u32 %v7192, 7
    %v7194 = vsub.s32 2, %v7193
    %v7195 = vrot.slane %v7182, %v7194
    %v7196 = vlaneseq
    %v7197 = vshrl.u32 %v7196, 7
    %v7198 = vsub.s32 3, %v7197
    %v7199 = vrot.slane %v7182, %v7198
    %v7200 = vlaneseq
    %v7201 = vshrl.u32 %v7200, 7
    %v7202 = vsub.s32 4, %v7201
    %v7203 = vrot.slane %v7182, %v7202
    %v7204 = vlaneseq
    %v7205 = vshrl.u32 %v7204, 7
    %v7206 = vsub.s32 5, %v7205
    %v7207 = vrot.slane %v7182, %v7206
    %v7208 = vlaneseq
    %v7209 = vshrl.u32 %v7208, 7
    %v7210 = vsub.s32 6, %v7209
    %v7211 = vrot.slane %v7182, %v7210
    %v7212 = vlaneseq
    %v7213 = vshrl.u32 %v7212, 7
    %v7214 = vsub.s32 7, %v7213
    %v7215 = vrot.slane %v7182, %v7214
    %v7480 = vunpack.c.l.b16 %v6926
    %v7481 = vunpack.c.h.b16 %v6926
    %v7482 = vunpack.c.l.b16 %v6927
    %v7483 = vunpack.c.h.b16 %v6927
    %v7484 = vunpack.c.l.b16 %v6928
    %v7485 = vunpack.c.h.b16 %v6928
    %v7486 = vunpack.c.l.b16 %v6929
    %v7487 = vunpack.c.h.b16 %v6929
    %v7488 = vunpack.c.l.b16 %v6930
    %v7489 = vunpack.c.h.b16 %v6930
    %v7490 = vunpack.c.l.b16 %v6931
    %v7491 = vunpack.c.h.b16 %v6931
    %v7492 = vunpack.c.l.b16 %v6932
    %v7493 = vunpack.c.h.b16 %v6932
    %v7494 = vunpack.c.l.b16 %v6933
    %v7495 = vunpack.c.h.b16 %v6933
    %v7496 = vunpack.c.l.b16 %v6934
    %v7497 = vunpack.c.h.b16 %v6934
    %v7498 = vunpack.c.l.b16 %v6935
    %v7499 = vunpack.c.h.b16 %v6935
    %v7500 = vunpack.c.l.b16 %v6936
    %v7501 = vunpack.c.h.b16 %v6936
    %v7502 = vunpack.c.l.b16 %v6937
    %v7503 = vunpack.c.h.b16 %v6937
    %v7504 = vunpack.c.l.b16 %v6938
    %v7505 = vunpack.c.h.b16 %v6938
    %v7506 = vunpack.c.l.b16 %v6939
    %v7507 = vunpack.c.h.b16 %v6939
    %v7508 = vunpack.c.l.b16 %v6940
    %v7509 = vunpack.c.h.b16 %v6940
    %v7510 = vunpack.c.l.b16 %v6941
    %v7511 = vunpack.c.h.b16 %v6941
    %v7512 = vunpack.c.l.b16 %v6942
    %v7513 = vunpack.c.h.b16 %v6942
    %v7514 = vunpack.c.l.b16 %v6943
    %v7515 = vunpack.c.h.b16 %v6943
    %v7516 = vunpack.c.l.b16 %v6944
    %v7517 = vunpack.c.h.b16 %v6944
    %v7518 = vunpack.c.l.b16 %v6945
    %v7519 = vunpack.c.h.b16 %v6945
    %v7520 = vunpack.c.l.b16 %v6946
    %v7521 = vunpack.c.h.b16 %v6946
    %v7522 = vunpack.c.l.b16 %v6947
    %v7523 = vunpack.c.h.b16 %v6947
    %v7524 = vunpack.c.l.b16 %v6948
    %v7525 = vunpack.c.h.b16 %v6948
    %v7526 = vunpack.c.l.b16 %v6949
    %v7527 = vunpack.c.h.b16 %v6949
    %v7528 = vunpack.c.l.b16 %v6950
    %v7529 = vunpack.c.h.b16 %v6950
    %v7530 = vunpack.c.l.b16 %v6951
    %v7531 = vunpack.c.h.b16 %v6951
    %v7532 = vunpack.c.l.b16 %v6952
    %v7533 = vunpack.c.h.b16 %v6952
    %v7534 = vunpack.c.l.b16 %v6953
    %v7535 = vunpack.c.h.b16 %v6953
    %v7536 = vunpack.c.l.b16 %v6954
    %v7537 = vunpack.c.h.b16 %v6954
    %v7538 = vunpack.c.l.b16 %v6955
    %v7539 = vunpack.c.h.b16 %v6955
    %v7540 = vunpack.c.l.b16 %v6956
    %v7541 = vunpack.c.h.b16 %v6956
    %v7542 = vunpack.c.l.b16 %v6957
    %v7543 = vunpack.c.h.b16 %v6957
    %v7544 = vunpack.c.l.b16 %v6958
    %v7545 = vunpack.c.h.b16 %v6958
    %v7546 = vunpack.c.l.b16 %v6959
    %v7547 = vunpack.c.h.b16 %v6959
    %v7548 = vunpack.c.l.b16 %v6960
    %v7549 = vunpack.c.h.b16 %v6960
    %v7550 = vunpack.c.l.b16 %v6961
    %v7551 = vunpack.c.h.b16 %v6961
    %v7552 = vunpack.c.l.b16 %v6962
    %v7553 = vunpack.c.h.b16 %v6962
    %v7554 = vunpack.c.l.b16 %v6963
    %v7555 = vunpack.c.h.b16 %v6963
    %v7556 = vunpack.c.l.b16 %v6964
    %v7557 = vunpack.c.h.b16 %v6964
    %v7558 = vunpack.c.l.b16 %v6965
    %v7559 = vunpack.c.h.b16 %v6965
    %v7560 = vunpack.c.l.b16 %v6966
    %v7561 = vunpack.c.h.b16 %v6966
    %v7562 = vunpack.c.l.b16 %v6967
    %v7563 = vunpack.c.h.b16 %v6967
    %v7564 = vunpack.c.l.b16 %v6968
    %v7565 = vunpack.c.h.b16 %v6968
    %v7566 = vunpack.c.l.b16 %v6969
    %v7567 = vunpack.c.h.b16 %v6969
    %v7568 = vunpack.c.l.b16 %v6970
    %v7569 = vunpack.c.h.b16 %v6970
    %v7570 = vunpack.c.l.b16 %v6971
    %v7571 = vunpack.c.h.b16 %v6971
    %v7572 = vunpack.c.l.b16 %v6972
    %v7573 = vunpack.c.h.b16 %v6972
    %v7574 = vunpack.c.l.b16 %v6973
    %v7575 = vunpack.c.h.b16 %v6973
    %v7576 = vunpack.c.l.b16 %v6974
    %v7577 = vunpack.c.h.b16 %v6974
    %v7578 = vunpack.c.l.b16 %v6975
    %v7579 = vunpack.c.h.b16 %v6975
    %v7580 = vunpack.c.l.b16 %v6976
    %v7581 = vunpack.c.h.b16 %v6976
    %v7582 = vunpack.c.l.b16 %v6977
    %v7583 = vunpack.c.h.b16 %v6977
    %v7584 = vunpack.c.l.b16 %v6978
    %v7585 = vunpack.c.h.b16 %v6978
    %v7586 = vunpack.c.l.b16 %v6979
    %v7587 = vunpack.c.h.b16 %v6979
    %v7588 = vunpack.c.l.b16 %v6980
    %v7589 = vunpack.c.h.b16 %v6980
    %v7590 = vunpack.c.l.b16 %v6981
    %v7591 = vunpack.c.h.b16 %v6981
    %v7592 = vunpack.c.l.b16 %v6982
    %v7593 = vunpack.c.h.b16 %v6982
    %v7594 = vunpack.c.l.b16 %v6983
    %v7595 = vunpack.c.h.b16 %v6983
    %v7596 = vunpack.c.l.b16 %v6984
    %v7597 = vunpack.c.h.b16 %v6984
    %v7598 = vunpack.c.l.b16 %v6985
    %v7599 = vunpack.c.h.b16 %v6985
    %v7600 = vunpack.c.l.b16 %v6986
    %v7601 = vunpack.c.h.b16 %v6986
    %v7602 = vunpack.c.l.b16 %v6987
    %v7603 = vunpack.c.h.b16 %v6987
    %v7604 = vunpack.c.l.b16 %v6988
    %v7605 = vunpack.c.h.b16 %v6988
    %v7606 = vunpack.c.l.b16 %v6989
    %v7607 = vunpack.c.h.b16 %v6989
    %v7608 = vunpack.c.l.b16 %v6990
    %v7609 = vunpack.c.h.b16 %v6990
    %v7610 = vunpack.c.l.b16 %v6991
    %v7611 = vunpack.c.h.b16 %v6991
    %v7612 = vunpack.c.l.b16 %v6992
    %v7613 = vunpack.c.h.b16 %v6992
    %v7614 = vunpack.c.l.b16 %v6993
    %v7615 = vunpack.c.h.b16 %v6993
    %v7616 = vunpack.c.l.b16 %v6994
    %v7617 = vunpack.c.h.b16 %v6994
    %v7618 = vunpack.c.l.b16 %v6995
    %v7619 = vunpack.c.h.b16 %v6995
    %v7620 = vunpack.c.l.b16 %v6996
    %v7621 = vunpack.c.h.b16 %v6996
    %v7622 = vunpack.c.l.b16 %v6997
    %v7623 = vunpack.c.h.b16 %v6997
    %v7624 = vunpack.c.l.b16 %v6998
    %v7625 = vunpack.c.h.b16 %v6998
    %v7626 = vunpack.c.l.b16 %v6999
    %v7627 = vunpack.c.h.b16 %v6999
    %v7628 = vunpack.c.l.b16 %v7000
    %v7629 = vunpack.c.h.b16 %v7000
    %v7630 = vunpack.c.l.b16 %v7001
    %v7631 = vunpack.c.h.b16 %v7001
    %v7632 = vunpack.c.l.b16 %v7002
    %v7633 = vunpack.c.h.b16 %v7002
    %v7634 = vunpack.c.l.b16 %v7003
    %v7635 = vunpack.c.h.b16 %v7003
    %v7636 = vunpack.c.l.b16 %v7004
    %v7637 = vunpack.c.h.b16 %v7004
    %v7638 = vunpack.c.l.b16 %v7005
    %v7639 = vunpack.c.h.b16 %v7005
    %v7640 = vunpack.c.l.b16 %v7006
    %v7641 = vunpack.c.h.b16 %v7006
    %v7642 = vunpack.c.l.b16 %v7007
    %v7643 = vunpack.c.h.b16 %v7007
    %v7644 = vunpack.c.l.b16 %v7008
    %v7645 = vunpack.c.h.b16 %v7008
    %v7646 = vunpack.c.l.b16 %v7009
    %v7647 = vunpack.c.h.b16 %v7009
    %v7648 = vunpack.c.l.b16 %v7010
    %v7649 = vunpack.c.h.b16 %v7010
    %v7650 = vunpack.c.l.b16 %v7011
    %v7651 = vunpack.c.h.b16 %v7011
    %v7652 = vunpack.c.l.b16 %v7012
    %v7653 = vunpack.c.h.b16 %v7012
    %v7654 = vunpack.c.l.b16 %v7013
    %v7655 = vunpack.c.h.b16 %v7013
    %v7656 = vunpack.c.l.b16 %v7014
    %v7657 = vunpack.c.h.b16 %v7014
    %v7658 = vunpack.c.l.b16 %v7015
    %v7659 = vunpack.c.h.b16 %v7015
    %v7660 = vunpack.c.l.b16 %v7016
    %v7661 = vunpack.c.h.b16 %v7016
    %v7662 = vunpack.c.l.b16 %v7017
    %v7663 = vunpack.c.h.b16 %v7017
    %v7664 = vunpack.c.l.b16 %v7018
    %v7665 = vunpack.c.h.b16 %v7018
    %v7666 = vunpack.c.l.b16 %v7019
    %v7667 = vunpack.c.h.b16 %v7019
    %v7668 = vunpack.c.l.b16 %v7020
    %v7669 = vunpack.c.h.b16 %v7020
    %v7670 = vunpack.c.l.b16 %v7021
    %v7671 = vunpack.c.h.b16 %v7021
    %v7672 = vunpack.c.l.b16 %v7022
    %v7673 = vunpack.c.h.b16 %v7022
    %v7674 = vunpack.c.l.b16 %v7023
    %v7675 = vunpack.c.h.b16 %v7023
    %v7676 = vunpack.c.l.b16 %v7024
    %v7677 = vunpack.c.h.b16 %v7024
    %v7678 = vunpack.c.l.b16 %v7025
    %v7679 = vunpack.c.h.b16 %v7025
    %v7680 = vunpack.c.l.b16 %v7026
    %v7681 = vunpack.c.h.b16 %v7026
    %v7682 = vunpack.c.l.b16 %v7027
    %v7683 = vunpack.c.h.b16 %v7027
    %v7684 = vunpack.c.l.b16 %v7028
    %v7685 = vunpack.c.h.b16 %v7028
    %v7686 = vunpack.c.l.b16 %v7029
    %v7687 = vunpack.c.h.b16 %v7029
    %v7688 = vunpack.c.l.b16 %v7030
    %v7689 = vunpack.c.h.b16 %v7030
    %v7690 = vunpack.c.l.b16 %v7031
    %v7691 = vunpack.c.h.b16 %v7031
    %v7692 = vunpack.c.l.b16 %v7032
    %v7693 = vunpack.c.h.b16 %v7032
    %v7694 = vunpack.c.l.b16 %v7033
    %v7695 = vunpack.c.h.b16 %v7033
    %v7696 = vunpack.c.l.b16 %v7034
    %v7697 = vunpack.c.h.b16 %v7034
    %v7698 = vunpack.c.l.b16 %v7035
    %v7699 = vunpack.c.h.b16 %v7035
    %v7700 = vunpack.c.l.b16 %v7036
    %v7701 = vunpack.c.h.b16 %v7036
    %v7702 = vunpack.c.l.b16 %v7037
    %v7703 = vunpack.c.h.b16 %v7037
    %v7704 = vunpack.c.l.b16 %v7038
    %v7705 = vunpack.c.h.b16 %v7038
    %v7706 = vunpack.c.l.b16 %v7039
    %v7707 = vunpack.c.h.b16 %v7039
    %v7708 = vunpack.c.l.b16 %v7040
    %v7709 = vunpack.c.h.b16 %v7040
    %v7710 = vunpack.c.l.b16 %v7041
    %v7711 = vunpack.c.h.b16 %v7041
    %v7712 = vunpack.c.l.b16 %v7042
    %v7713 = vunpack.c.h.b16 %v7042
    %v7714 = vunpack.c.l.b16 %v7043
    %v7715 = vunpack.c.h.b16 %v7043
    %v7716 = vunpack.c.l.b16 %v7044
    %v7717 = vunpack.c.h.b16 %v7044
    %v7718 = vunpack.c.l.b16 %v7045
    %v7719 = vunpack.c.h.b16 %v7045
    %v7720 = vunpack.c.l.b16 %v7046
    %v7721 = vunpack.c.h.b16 %v7046
    %v7722 = vunpack.c.l.b16 %v7047
    %v7723 = vunpack.c.h.b16 %v7047
    %v7724 = vunpack.c.l.b16 %v7048
    %v7725 = vunpack.c.h.b16 %v7048
    %v7726 = vunpack.c.l.b16 %v7049
    %v7727 = vunpack.c.h.b16 %v7049
    %v7728 = vunpack.c.l.b16 %v7050
    %v7729 = vunpack.c.h.b16 %v7050
    %v7730 = vunpack.c.l.b16 %v7051
    %v7731 = vunpack.c.h.b16 %v7051
    %v7732 = vunpack.c.l.b16 %v7052
    %v7733 = vunpack.c.h.b16 %v7052
    %v7734 = vunpack.c.l.b16 %v7053
    %v7735 = vunpack.c.h.b16 %v7053
    %v7736 = vunpack.c.l.b16 %v7054
    %v7737 = vunpack.c.h.b16 %v7054
    %v7738 = vunpack.c.l.b16 %v7055
    %v7739 = vunpack.c.h.b16 %v7055
    %v7740 = vunpack.c.l.b16 %v7056
    %v7741 = vunpack.c.h.b16 %v7056
    %v7742 = vunpack.c.l.b16 %v7057
    %v7743 = vunpack.c.h.b16 %v7057
    %v7744 = vunpack.c.l.b16 %v7058
    %v7745 = vunpack.c.h.b16 %v7058
    %v7746 = vunpack.c.l.b16 %v7059
    %v7747 = vunpack.c.h.b16 %v7059
    %v7748 = vunpack.c.l.b16 %v7060
    %v7749 = vunpack.c.h.b16 %v7060
    %v7750 = vunpack.c.l.b16 %v7061
    %v7751 = vunpack.c.h.b16 %v7061
    %v7752 = vunpack.c.l.b16 %v7062
    %v7753 = vunpack.c.h.b16 %v7062
    %v7754 = vunpack.c.l.b16 %v7063
    %v7755 = vunpack.c.h.b16 %v7063
    %v7756 = vunpack.c.l.b16 %v7064
    %v7757 = vunpack.c.h.b16 %v7064
    %v7758 = vunpack.c.l.b16 %v7065
    %v7759 = vunpack.c.h.b16 %v7065
    %v7760 = vunpack.c.l.b16 %v7066
    %v7761 = vunpack.c.h.b16 %v7066
    %v7762 = vunpack.c.l.b16 %v7067
    %v7763 = vunpack.c.h.b16 %v7067
    %v7764 = vunpack.c.l.b16 %v7068
    %v7765 = vunpack.c.h.b16 %v7068
    %v7766 = vunpack.c.l.b16 %v7069
    %v7767 = vunpack.c.h.b16 %v7069
    %v7768 = vunpack.c.l.b16 %v7070
    %v7769 = vunpack.c.h.b16 %v7070
    %v7770 = vunpack.c.l.b16 %v7071
    %v7771 = vunpack.c.h.b16 %v7071
    %v7772 = vunpack.c.l.b16 %v7072
    %v7773 = vunpack.c.h.b16 %v7072
    %v7774 = vunpack.c.l.b16 %v7073
    %v7775 = vunpack.c.h.b16 %v7073
    %v7776 = vunpack.c.l.b16 %v7074
    %v7777 = vunpack.c.h.b16 %v7074
    %v7778 = vunpack.c.l.b16 %v7075
    %v7779 = vunpack.c.h.b16 %v7075
    %v7780 = vunpack.c.l.b16 %v7076
    %v7781 = vunpack.c.h.b16 %v7076
    %v7782 = vunpack.c.l.b16 %v7077
    %v7783 = vunpack.c.h.b16 %v7077
    %v7784 = vunpack.c.l.b16 %v7078
    %v7785 = vunpack.c.h.b16 %v7078
    %v7786 = vunpack.c.l.b16 %v7079
    %v7787 = vunpack.c.h.b16 %v7079
    %v7788 = vunpack.c.l.b16 %v7080
    %v7789 = vunpack.c.h.b16 %v7080
    %v7790 = vunpack.c.l.b16 %v7081
    %v7791 = vunpack.c.h.b16 %v7081
    %v7792 = vunpack.c.l.b16 %v7082
    %v7793 = vunpack.c.h.b16 %v7082
    %v7794 = vunpack.c.l.b16 %v7083
    %v7795 = vunpack.c.h.b16 %v7083
    %v7796 = vunpack.c.l.b16 %v7084
    %v7797 = vunpack.c.h.b16 %v7084
    %v7798 = vunpack.c.l.b16 %v7085
    %v7799 = vunpack.c.h.b16 %v7085
    %v7800 = vunpack.c.l.b16 %v7086
    %v7801 = vunpack.c.h.b16 %v7086
    %v7802 = vunpack.c.l.b16 %v7087
    %v7803 = vunpack.c.h.b16 %v7087
    %v7804 = vunpack.c.l.b16 %v7088
    %v7805 = vunpack.c.h.b16 %v7088
    %v7806 = vunpack.c.l.b16 %v7089
    %v7807 = vunpack.c.h.b16 %v7089
    %v7808 = vunpack.c.l.b16 %v7090
    %v7809 = vunpack.c.h.b16 %v7090
    %v7810 = vunpack.c.l.b16 %v7091
    %v7811 = vunpack.c.h.b16 %v7091
    %v7812 = vunpack.c.l.b16 %v7092
    %v7813 = vunpack.c.h.b16 %v7092
    %v7814 = vunpack.c.l.b16 %v7093
    %v7815 = vunpack.c.h.b16 %v7093
    %v7816 = vunpack.c.l.b16 %v7094
    %v7817 = vunpack.c.h.b16 %v7094
    %v7818 = vunpack.c.l.b16 %v7095
    %v7819 = vunpack.c.h.b16 %v7095
    %v7820 = vunpack.c.l.b16 %v7096
    %v7821 = vunpack.c.h.b16 %v7096
    %v7822 = vunpack.c.l.b16 %v7097
    %v7823 = vunpack.c.h.b16 %v7097
    %v7824 = vunpack.c.l.b16 %v7098
    %v7825 = vunpack.c.h.b16 %v7098
    %v7826 = vunpack.c.l.b16 %v7099
    %v7827 = vunpack.c.h.b16 %v7099
    %v7828 = vunpack.c.l.b16 %v7100
    %v7829 = vunpack.c.h.b16 %v7100
    %v7830 = vunpack.c.l.b16 %v7101
    %v7831 = vunpack.c.h.b16 %v7101
    %v7832 = vunpack.c.l.b16 %v7102
    %v7833 = vunpack.c.h.b16 %v7102
    %v7834 = vunpack.c.l.b16 %v7103
    %v7835 = vunpack.c.h.b16 %v7103
    %v7836 = vunpack.c.l.b16 %v7104
    %v7837 = vunpack.c.h.b16 %v7104
    %v7838 = vunpack.c.l.b16 %v7105
    %v7839 = vunpack.c.h.b16 %v7105
    %v7840 = vunpack.c.l.b16 %v7106
    %v7841 = vunpack.c.h.b16 %v7106
    %v7842 = vunpack.c.l.b16 %v7107
    %v7843 = vunpack.c.h.b16 %v7107
    %v7844 = vunpack.c.l.b16 %v7108
    %v7845 = vunpack.c.h.b16 %v7108
    %v7846 = vunpack.c.l.b16 %v7109
    %v7847 = vunpack.c.h.b16 %v7109
    %v7848 = vunpack.c.l.b16 %v7110
    %v7849 = vunpack.c.h.b16 %v7110
    %v7850 = vunpack.c.l.b16 %v7111
    %v7851 = vunpack.c.h.b16 %v7111
    %v7852 = vunpack.c.l.b16 %v7112
    %v7853 = vunpack.c.h.b16 %v7112
    %v7854 = vunpack.c.l.b16 %v7113
    %v7855 = vunpack.c.h.b16 %v7113
    %v7856 = vunpack.c.l.b16 %v7114
    %v7857 = vunpack.c.h.b16 %v7114
    %v7858 = vunpack.c.l.b16 %v7115
    %v7859 = vunpack.c.h.b16 %v7115
    %v7860 = vunpack.c.l.b16 %v7116
    %v7861 = vunpack.c.h.b16 %v7116
    %v7862 = vunpack.c.l.b16 %v7117
    %v7863 = vunpack.c.h.b16 %v7117
    %v7864 = vunpack.c.l.b16 %v7118
    %v7865 = vunpack.c.h.b16 %v7118
    %v7866 = vunpack.c.l.b16 %v7119
    %v7867 = vunpack.c.h.b16 %v7119
    %v7868 = vunpack.c.l.b16 %v7120
    %v7869 = vunpack.c.h.b16 %v7120
    %v7870 = vunpack.c.l.b16 %v7121
    %v7871 = vunpack.c.h.b16 %v7121
    %v7872 = vunpack.c.l.b16 %v7122
    %v7873 = vunpack.c.h.b16 %v7122
    %v7874 = vunpack.c.l.b16 %v7123
    %v7875 = vunpack.c.h.b16 %v7123
    %v7876 = vunpack.c.l.b16 %v7124
    %v7877 = vunpack.c.h.b16 %v7124
    %v7878 = vunpack.c.l.b16 %v7125
    %v7879 = vunpack.c.h.b16 %v7125
    %v7880 = vunpack.c.l.b16 %v7126
    %v7881 = vunpack.c.h.b16 %v7126
    %v7882 = vunpack.c.l.b16 %v7127
    %v7883 = vunpack.c.h.b16 %v7127
    %v7884 = vunpack.c.l.b16 %v7128
    %v7885 = vunpack.c.h.b16 %v7128
    %v7886 = vunpack.c.l.b16 %v7129
    %v7887 = vunpack.c.h.b16 %v7129
    %v7888 = vunpack.c.l.b16 %v7130
    %v7889 = vunpack.c.h.b16 %v7130
    %v7890 = vunpack.c.l.b16 %v7131
    %v7891 = vunpack.c.h.b16 %v7131
    %v7892 = vunpack.c.l.b16 %v7132
    %v7893 = vunpack.c.h.b16 %v7132
    %v7894 = vunpack.c.l.b16 %v7133
    %v7895 = vunpack.c.h.b16 %v7133
    %v7896 = vunpack.c.l.b16 %v7134
    %v7897 = vunpack.c.h.b16 %v7134
    %v7898 = vunpack.c.l.b16 %v7135
    %v7899 = vunpack.c.h.b16 %v7135
    %v7900 = vunpack.c.l.b16 %v7136
    %v7901 = vunpack.c.h.b16 %v7136
    %v7902 = vunpack.c.l.b16 %v7137
    %v7903 = vunpack.c.h.b16 %v7137
    %v7904 = vunpack.c.l.b16 %v7138
    %v7905 = vunpack.c.h.b16 %v7138
    %v7906 = vunpack.c.l.b16 %v7139
    %v7907 = vunpack.c.h.b16 %v7139
    %v7908 = vunpack.c.l.b16 %v7140
    %v7909 = vunpack.c.h.b16 %v7140
    %v7910 = vunpack.c.l.b16 %v7141
    %v7911 = vunpack.c.h.b16 %v7141
    %v7912 = vunpack.c.l.b16 %v7142
    %v7913 = vunpack.c.h.b16 %v7142
    %v7914 = vunpack.c.l.b16 %v7143
    %v7915 = vunpack.c.h.b16 %v7143
    %v7916 = vunpack.c.l.b16 %v7144
    %v7917 = vunpack.c.h.b16 %v7144
    %v7918 = vunpack.c.l.b16 %v7145
    %v7919 = vunpack.c.h.b16 %v7145
    %v7920 = vunpack.c.l.b16 %v7146
    %v7921 = vunpack.c.h.b16 %v7146
    %v7922 = vunpack.c.l.b16 %v7147
    %v7923 = vunpack.c.h.b16 %v7147
    %v7924 = vunpack.c.l.b16 %v7148
    %v7925 = vunpack.c.h.b16 %v7148
    %v7926 = vunpack.c.l.b16 %v7149
    %v7927 = vunpack.c.h.b16 %v7149
    %v7928 = vunpack.c.l.b16 %v7150
    %v7929 = vunpack.c.h.b16 %v7150
    %v7930 = vunpack.c.l.b16 %v7151
    %v7931 = vunpack.c.h.b16 %v7151
    %v7932 = vunpack.c.l.b16 %v7152
    %v7933 = vunpack.c.h.b16 %v7152
    %v7934 = vunpack.c.l.b16 %v7153
    %v7935 = vunpack.c.h.b16 %v7153
    %v7936 = vunpack.c.l.b16 %v7154
    %v7937 = vunpack.c.h.b16 %v7154
    %v7938 = vunpack.c.l.b16 %v7155
    %v7939 = vunpack.c.h.b16 %v7155
    %v7940 = vunpack.c.l.b16 %v7156
    %v7941 = vunpack.c.h.b16 %v7156
    %v7942 = vunpack.c.l.b16 %v7157
    %v7943 = vunpack.c.h.b16 %v7157
    %v7944 = vunpack.c.l.b16 %v7158
    %v7945 = vunpack.c.h.b16 %v7158
    %v7946 = vunpack.c.l.b16 %v7159
    %v7947 = vunpack.c.h.b16 %v7159
    %v7948 = vunpack.c.l.b16 %v7160
    %v7949 = vunpack.c.h.b16 %v7160
    %v7950 = vunpack.c.l.b16 %v7161
    %v7951 = vunpack.c.h.b16 %v7161
    %v7952 = vunpack.c.l.b16 %v7162
    %v7953 = vunpack.c.h.b16 %v7162
    %v7954 = vunpack.c.l.b16 %v7163
    %v7955 = vunpack.c.h.b16 %v7163
    %v7956 = vunpack.c.l.b16 %v7164
    %v7957 = vunpack.c.h.b16 %v7164
    %v7958 = vunpack.c.l.b16 %v7165
    %v7959 = vunpack.c.h.b16 %v7165
    %v7960 = vunpack.c.l.b16 %v7166
    %v7961 = vunpack.c.h.b16 %v7166
    %v7962 = vunpack.c.l.b16 %v7167
    %v7963 = vunpack.c.h.b16 %v7167
    %v7964 = vunpack.c.l.b16 %v7168
    %v7965 = vunpack.c.h.b16 %v7168
    %v7966 = vunpack.c.l.b16 %v7169
    %v7967 = vunpack.c.h.b16 %v7169
    %v7968 = vunpack.c.l.b16 %v7170
    %v7969 = vunpack.c.h.b16 %v7170
    %v7970 = vunpack.c.l.b16 %v7171
    %v7971 = vunpack.c.h.b16 %v7171
    %v7972 = vunpack.c.l.b16 %v7172
    %v7973 = vunpack.c.h.b16 %v7172
    %v7974 = vunpack.c.l.b16 %v7173
    %v7975 = vunpack.c.h.b16 %v7173
    %v7976 = vunpack.c.l.b16 %v7174
    %v7977 = vunpack.c.h.b16 %v7174
    %v7978 = vunpack.c.l.b16 %v7175
    %v7979 = vunpack.c.h.b16 %v7175
    %v7980 = vunpack.c.l.b16 %v7176
    %v7981 = vunpack.c.h.b16 %v7176
    %v7982 = vunpack.c.l.b16 %v7177
    %v7983 = vunpack.c.h.b16 %v7177
    %v7984 = vunpack.c.l.b16 %v7178
    %v7985 = vunpack.c.h.b16 %v7178
    %v7986 = vunpack.c.l.b16 %v7179
    %v7987 = vunpack.c.h.b16 %v7179
    %v7988 = vunpack.c.l.b16 %v7180
    %v7989 = vunpack.c.h.b16 %v7180
    %v7990 = vunpack.c.l.b16 %v7181
    %v7991 = vunpack.c.h.b16 %v7181
    %v7992 = vpack.c.b16 %v7488, %v7480
    %v7993 = vpack.c.b16 %v7489, %v7481
    %v7994 = vpack.c.b16 %v7490, %v7482
    %v7995 = vpack.c.b16 %v7491, %v7483
    %v7996 = vpack.c.b16 %v7492, %v7484
    %v7997 = vpack.c.b16 %v7493, %v7485
    %v7998 = vpack.c.b16 %v7494, %v7486
    %v7999 = vpack.c.b16 %v7495, %v7487
    %v8000 = vpack.c.b16 %v7504, %v7496
    %v8001 = vpack.c.b16 %v7505, %v7497
    %v8002 = vpack.c.b16 %v7506, %v7498
    %v8003 = vpack.c.b16 %v7507, %v7499
    %v8004 = vpack.c.b16 %v7508, %v7500
    %v8005 = vpack.c.b16 %v7509, %v7501
    %v8006 = vpack.c.b16 %v7510, %v7502
    %v8007 = vpack.c.b16 %v7511, %v7503
    %v8008 = vpack.c.b16 %v7520, %v7512
    %v8009 = vpack.c.b16 %v7521, %v7513
    %v8010 = vpack.c.b16 %v7522, %v7514
    %v8011 = vpack.c.b16 %v7523, %v7515
    %v8012 = vpack.c.b16 %v7524, %v7516
    %v8013 = vpack.c.b16 %v7525, %v7517
    %v8014 = vpack.c.b16 %v7526, %v7518
    %v8015 = vpack.c.b16 %v7527, %v7519
    %v8016 = vpack.c.b16 %v7536, %v7528
    %v8017 = vpack.c.b16 %v7537, %v7529
    %v8018 = vpack.c.b16 %v7538, %v7530
    %v8019 = vpack.c.b16 %v7539, %v7531
    %v8020 = vpack.c.b16 %v7540, %v7532
    %v8021 = vpack.c.b16 %v7541, %v7533
    %v8022 = vpack.c.b16 %v7542, %v7534
    %v8023 = vpack.c.b16 %v7543, %v7535
    %v8024 = vpack.c.b16 %v7552, %v7544
    %v8025 = vpack.c.b16 %v7553, %v7545
    %v8026 = vpack.c.b16 %v7554, %v7546
    %v8027 = vpack.c.b16 %v7555, %v7547
    %v8028 = vpack.c.b16 %v7556, %v7548
    %v8029 = vpack.c.b16 %v7557, %v7549
    %v8030 = vpack.c.b16 %v7558, %v7550
    %v8031 = vpack.c.b16 %v7559, %v7551
    %v8032 = vpack.c.b16 %v7568, %v7560
    %v8033 = vpack.c.b16 %v7569, %v7561
    %v8034 = vpack.c.b16 %v7570, %v7562
    %v8035 = vpack.c.b16 %v7571, %v7563
    %v8036 = vpack.c.b16 %v7572, %v7564
    %v8037 = vpack.c.b16 %v7573, %v7565
    %v8038 = vpack.c.b16 %v7574, %v7566
    %v8039 = vpack.c.b16 %v7575, %v7567
    %v8040 = vpack.c.b16 %v7584, %v7576
    %v8041 = vpack.c.b16 %v7585, %v7577
    %v8042 = vpack.c.b16 %v7586, %v7578
    %v8043 = vpack.c.b16 %v7587, %v7579
    %v8044 = vpack.c.b16 %v7588, %v7580
    %v8045 = vpack.c.b16 %v7589, %v7581
    %v8046 = vpack.c.b16 %v7590, %v7582
    %v8047 = vpack.c.b16 %v7591, %v7583
    %v8048 = vpack.c.b16 %v7600, %v7592
    %v8049 = vpack.c.b16 %v7601, %v7593
    %v8050 = vpack.c.b16 %v7602, %v7594
    %v8051 = vpack.c.b16 %v7603, %v7595
    %v8052 = vpack.c.b16 %v7604, %v7596
    %v8053 = vpack.c.b16 %v7605, %v7597
    %v8054 = vpack.c.b16 %v7606, %v7598
    %v8055 = vpack.c.b16 %v7607, %v7599
    %v8056 = vpack.c.b16 %v7616, %v7608
    %v8057 = vpack.c.b16 %v7617, %v7609
    %v8058 = vpack.c.b16 %v7618, %v7610
    %v8059 = vpack.c.b16 %v7619, %v7611
    %v8060 = vpack.c.b16 %v7620, %v7612
    %v8061 = vpack.c.b16 %v7621, %v7613
    %v8062 = vpack.c.b16 %v7622, %v7614
    %v8063 = vpack.c.b16 %v7623, %v7615
    %v8064 = vpack.c.b16 %v7632, %v7624
    %v8065 = vpack.c.b16 %v7633, %v7625
    %v8066 = vpack.c.b16 %v7634, %v7626
    %v8067 = vpack.c.b16 %v7635, %v7627
    %v8068 = vpack.c.b16 %v7636, %v7628
    %v8069 = vpack.c.b16 %v7637, %v7629
    %v8070 = vpack.c.b16 %v7638, %v7630
    %v8071 = vpack.c.b16 %v7639, %v7631
    %v8072 = vpack.c.b16 %v7648, %v7640
    %v8073 = vpack.c.b16 %v7649, %v7641
    %v8074 = vpack.c.b16 %v7650, %v7642
    %v8075 = vpack.c.b16 %v7651, %v7643
    %v8076 = vpack.c.b16 %v7652, %v7644
    %v8077 = vpack.c.b16 %v7653, %v7645
    %v8078 = vpack.c.b16 %v7654, %v7646
    %v8079 = vpack.c.b16 %v7655, %v7647
    %v8080 = vpack.c.b16 %v7664, %v7656
    %v8081 = vpack.c.b16 %v7665, %v7657
    %v8082 = vpack.c.b16 %v7666, %v7658
    %v8083 = vpack.c.b16 %v7667, %v7659
    %v8084 = vpack.c.b16 %v7668, %v7660
    %v8085 = vpack.c.b16 %v7669, %v7661
    %v8086 = vpack.c.b16 %v7670, %v7662
    %v8087 = vpack.c.b16 %v7671, %v7663
    %v8088 = vpack.c.b16 %v7680, %v7672
    %v8089 = vpack.c.b16 %v7681, %v7673
    %v8090 = vpack.c.b16 %v7682, %v7674
    %v8091 = vpack.c.b16 %v7683, %v7675
    %v8092 = vpack.c.b16 %v7684, %v7676
    %v8093 = vpack.c.b16 %v7685, %v7677
    %v8094 = vpack.c.b16 %v7686, %v7678
    %v8095 = vpack.c.b16 %v7687, %v7679
    %v8096 = vpack.c.b16 %v7696, %v7688
    %v8097 = vpack.c.b16 %v7697, %v7689
    %v8098 = vpack.c.b16 %v7698, %v7690
    %v8099 = vpack.c.b16 %v7699, %v7691
    %v8100 = vpack.c.b16 %v7700, %v7692
    %v8101 = vpack.c.b16 %v7701, %v7693
    %v8102 = vpack.c.b16 %v7702, %v7694
    %v8103 = vpack.c.b16 %v7703, %v7695
    %v8104 = vpack.c.b16 %v7712, %v7704
    %v8105 = vpack.c.b16 %v7713, %v7705
    %v8106 = vpack.c.b16 %v7714, %v7706
    %v8107 = vpack.c.b16 %v7715, %v7707
    %v8108 = vpack.c.b16 %v7716, %v7708
    %v8109 = vpack.c.b16 %v7717, %v7709
    %v8110 = vpack.c.b16 %v7718, %v7710
    %v8111 = vpack.c.b16 %v7719, %v7711
    %v8112 = vpack.c.b16 %v7728, %v7720
    %v8113 = vpack.c.b16 %v7729, %v7721
    %v8114 = vpack.c.b16 %v7730, %v7722
    %v8115 = vpack.c.b16 %v7731, %v7723
    %v8116 = vpack.c.b16 %v7732, %v7724
    %v8117 = vpack.c.b16 %v7733, %v7725
    %v8118 = vpack.c.b16 %v7734, %v7726
    %v8119 = vpack.c.b16 %v7735, %v7727
    %v8120 = vpack.c.b16 %v7744, %v7736
    %v8121 = vpack.c.b16 %v7745, %v7737
    %v8122 = vpack.c.b16 %v7746, %v7738
    %v8123 = vpack.c.b16 %v7747, %v7739
    %v8124 = vpack.c.b16 %v7748, %v7740
    %v8125 = vpack.c.b16 %v7749, %v7741
    %v8126 = vpack.c.b16 %v7750, %v7742
    %v8127 = vpack.c.b16 %v7751, %v7743
    %v8128 = vpack.c.b16 %v7760, %v7752
    %v8129 = vpack.c.b16 %v7761, %v7753
    %v8130 = vpack.c.b16 %v7762, %v7754
    %v8131 = vpack.c.b16 %v7763, %v7755
    %v8132 = vpack.c.b16 %v7764, %v7756
    %v8133 = vpack.c.b16 %v7765, %v7757
    %v8134 = vpack.c.b16 %v7766, %v7758
    %v8135 = vpack.c.b16 %v7767, %v7759
    %v8136 = vpack.c.b16 %v7776, %v7768
    %v8137 = vpack.c.b16 %v7777, %v7769
    %v8138 = vpack.c.b16 %v7778, %v7770
    %v8139 = vpack.c.b16 %v7779, %v7771
    %v8140 = vpack.c.b16 %v7780, %v7772
    %v8141 = vpack.c.b16 %v7781, %v7773
    %v8142 = vpack.c.b16 %v7782, %v7774
    %v8143 = vpack.c.b16 %v7783, %v7775
    %v8144 = vpack.c.b16 %v7792, %v7784
    %v8145 = vpack.c.b16 %v7793, %v7785
    %v8146 = vpack.c.b16 %v7794, %v7786
    %v8147 = vpack.c.b16 %v7795, %v7787
    %v8148 = vpack.c.b16 %v7796, %v7788
    %v8149 = vpack.c.b16 %v7797, %v7789
    %v8150 = vpack.c.b16 %v7798, %v7790
    %v8151 = vpack.c.b16 %v7799, %v7791
    %v8152 = vpack.c.b16 %v7808, %v7800
    %v8153 = vpack.c.b16 %v7809, %v7801
    %v8154 = vpack.c.b16 %v7810, %v7802
    %v8155 = vpack.c.b16 %v7811, %v7803
    %v8156 = vpack.c.b16 %v7812, %v7804
    %v8157 = vpack.c.b16 %v7813, %v7805
    %v8158 = vpack.c.b16 %v7814, %v7806
    %v8159 = vpack.c.b16 %v7815, %v7807
    %v8160 = vpack.c.b16 %v7824, %v7816
    %v8161 = vpack.c.b16 %v7825, %v7817
    %v8162 = vpack.c.b16 %v7826, %v7818
    %v8163 = vpack.c.b16 %v7827, %v7819
    %v8164 = vpack.c.b16 %v7828, %v7820
    %v8165 = vpack.c.b16 %v7829, %v7821
    %v8166 = vpack.c.b16 %v7830, %v7822
    %v8167 = vpack.c.b16 %v7831, %v7823
    %v8168 = vpack.c.b16 %v7840, %v7832
    %v8169 = vpack.c.b16 %v7841, %v7833
    %v8170 = vpack.c.b16 %v7842, %v7834
    %v8171 = vpack.c.b16 %v7843, %v7835
    %v8172 = vpack.c.b16 %v7844, %v7836
    %v8173 = vpack.c.b16 %v7845, %v7837
    %v8174 = vpack.c.b16 %v7846, %v7838
    %v8175 = vpack.c.b16 %v7847, %v7839
    %v8176 = vpack.c.b16 %v7856, %v7848
    %v8177 = vpack.c.b16 %v7857, %v7849
    %v8178 = vpack.c.b16 %v7858, %v7850
    %v8179 = vpack.c.b16 %v7859, %v7851
    %v8180 = vpack.c.b16 %v7860, %v7852
    %v8181 = vpack.c.b16 %v7861, %v7853
    %v8182 = vpack.c.b16 %v7862, %v7854
    %v8183 = vpack.c.b16 %v7863, %v7855
    %v8184 = vpack.c.b16 %v7872, %v7864
    %v8185 = vpack.c.b16 %v7873, %v7865
    %v8186 = vpack.c.b16 %v7874, %v7866
    %v8187 = vpack.c.b16 %v7875, %v7867
    %v8188 = vpack.c.b16 %v7876, %v7868
    %v8189 = vpack.c.b16 %v7877, %v7869
    %v8190 = vpack.c.b16 %v7878, %v7870
    %v8191 = vpack.c.b16 %v7879, %v7871
    %v8192 = vpack.c.b16 %v7888, %v7880
    %v8193 = vpack.c.b16 %v7889, %v7881
    %v8194 = vpack.c.b16 %v7890, %v7882
    %v8195 = vpack.c.b16 %v7891, %v7883
    %v8196 = vpack.c.b16 %v7892, %v7884
    %v8197 = vpack.c.b16 %v7893, %v7885
    %v8198 = vpack.c.b16 %v7894, %v7886
    %v8199 = vpack.c.b16 %v7895, %v7887
    %v8200 = vpack.c.b16 %v7904, %v7896
    %v8201 = vpack.c.b16 %v7905, %v7897
    %v8202 = vpack.c.b16 %v7906, %v7898
    %v8203 = vpack.c.b16 %v7907, %v7899
    %v8204 = vpack.c.b16 %v7908, %v7900
    %v8205 = vpack.c.b16 %v7909, %v7901
    %v8206 = vpack.c.b16 %v7910, %v7902
    %v8207 = vpack.c.b16 %v7911, %v7903
    %v8208 = vpack.c.b16 %v7920, %v7912
    %v8209 = vpack.c.b16 %v7921, %v7913
    %v8210 = vpack.c.b16 %v7922, %v7914
    %v8211 = vpack.c.b16 %v7923, %v7915
    %v8212 = vpack.c.b16 %v7924, %v7916
    %v8213 = vpack.c.b16 %v7925, %v7917
    %v8214 = vpack.c.b16 %v7926, %v7918
    %v8215 = vpack.c.b16 %v7927, %v7919
    %v8216 = vpack.c.b16 %v7936, %v7928
    %v8217 = vpack.c.b16 %v7937, %v7929
    %v8218 = vpack.c.b16 %v7938, %v7930
    %v8219 = vpack.c.b16 %v7939, %v7931
    %v8220 = vpack.c.b16 %v7940, %v7932
    %v8221 = vpack.c.b16 %v7941, %v7933
    %v8222 = vpack.c.b16 %v7942, %v7934
    %v8223 = vpack.c.b16 %v7943, %v7935
    %v8224 = vpack.c.b16 %v7952, %v7944
    %v8225 = vpack.c.b16 %v7953, %v7945
    %v8226 = vpack.c.b16 %v7954, %v7946
    %v8227 = vpack.c.b16 %v7955, %v7947
    %v8228 = vpack.c.b16 %v7956, %v7948
    %v8229 = vpack.c.b16 %v7957, %v7949
    %v8230 = vpack.c.b16 %v7958, %v7950
    %v8231 = vpack.c.b16 %v7959, %v7951
    %v8232 = vpack.c.b16 %v7968, %v7960
    %v8233 = vpack.c.b16 %v7969, %v7961
    %v8234 = vpack.c.b16 %v7970, %v7962
    %v8235 = vpack.c.b16 %v7971, %v7963
    %v8236 = vpack.c.b16 %v7972, %v7964
    %v8237 = vpack.c.b16 %v7973, %v7965
    %v8238 = vpack.c.b16 %v7974, %v7966
    %v8239 = vpack.c.b16 %v7975, %v7967
    %v8240 = vpack.c.b16 %v7984, %v7976
    %v8241 = vpack.c.b16 %v7985, %v7977
    %v8242 = vpack.c.b16 %v7986, %v7978
    %v8243 = vpack.c.b16 %v7987, %v7979
    %v8244 = vpack.c.b16 %v7988, %v7980
    %v8245 = vpack.c.b16 %v7989, %v7981
    %v8246 = vpack.c.b16 %v7990, %v7982
    %v8247 = vpack.c.b16 %v7991, %v7983
    %8504 = vmatprep.subr.bf16.mxu0 %v7993
    %8505 = vmatpush1.bf16.msra.mxu0 %v7992
    %8506 = vmatprep.subr.bf16.mxu0 %v8001
    %8507 = vmatpush1.bf16.msra.mxu0 %v8000
    %8508 = vmatprep.subr.bf16.mxu0 %v8009
    %8509 = vmatpush1.bf16.msra.mxu0 %v8008
    %8510 = vmatprep.subr.bf16.mxu0 %v8017
    %8511 = vmatpush1.bf16.msra.mxu0 %v8016
    %8512 = vmatprep.subr.bf16.mxu0 %v8025
    %8513 = vmatpush1.bf16.msra.mxu0 %v8024
    %8514 = vmatprep.subr.bf16.mxu0 %v8033
    %8515 = vmatpush1.bf16.msra.mxu0 %v8032
    %8516 = vmatprep.subr.bf16.mxu0 %v8041
    %8517 = vmatpush1.bf16.msra.mxu0 %v8040
    %8518 = vmatprep.subr.bf16.mxu0 %v8049
    %8519 = vmatpush1.bf16.msra.mxu0 %v8048
    %8520 = vmatprep.subr.bf16.mxu0 %v8057
    %8521 = vmatpush1.bf16.msra.mxu0 %v8056
    %8522 = vmatprep.subr.bf16.mxu0 %v8065
    %8523 = vmatpush1.bf16.msra.mxu0 %v8064
    %8524 = vmatprep.subr.bf16.mxu0 %v8073
    %8525 = vmatpush1.bf16.msra.mxu0 %v8072
    %8526 = vmatprep.subr.bf16.mxu0 %v8081
    %8527 = vmatpush1.bf16.msra.mxu0 %v8080
    %8528 = vmatprep.subr.bf16.mxu0 %v8089
    %8529 = vmatpush1.bf16.msra.mxu0 %v8088
    %8530 = vmatprep.subr.bf16.mxu0 %v8097
    %8531 = vmatpush1.bf16.msra.mxu0 %v8096
    %8532 = vmatprep.subr.bf16.mxu0 %v8105
    %8533 = vmatpush1.bf16.msra.mxu0 %v8104
    %8534 = vmatprep.subr.bf16.mxu0 %v8113
    %8535 = vmatpush1.bf16.msra.mxu0 %v8112
    %8536 = vmatprep.mubr.bf16.mxu0 %v6923
    %8537 = vmatmul.mubr.bf16.gmra.mrb[0].mxu0 %v6922
    %v8538 = vpop.f32.mrb[0].mxu0
    %v8539 = vadd.f32 %v7187, %v8538
    %v8540 = vpop.f32.mrb[0].mxu0
    %v8541 = vadd.f32 %v7191, %v8540
    %v8542 = vpop.f32.mrb[0].mxu0
    %v8543 = vadd.f32 %v7187, %v8542
    %v8544 = vpop.f32.mrb[0].mxu0
    %v8545 = vadd.f32 %v7191, %v8544
    %8546 = vdwg.mxu0
    %8547 = vmatprep.subr.bf16.mxu0 %v8121
    %8548 = vmatpush1.bf16.msra.mxu0 %v8120
    %8549 = vmatprep.subr.bf16.mxu0 %v8129
    %8550 = vmatpush1.bf16.msra.mxu0 %v8128
    %8551 = vmatprep.subr.bf16.mxu0 %v8137
    %8552 = vmatpush1.bf16.msra.mxu0 %v8136
    %8553 = vmatprep.subr.bf16.mxu0 %v8145
    %8554 = vmatpush1.bf16.msra.mxu0 %v8144
    %8555 = vmatprep.subr.bf16.mxu0 %v8153
    %8556 = vmatpush1.bf16.msra.mxu0 %v8152
    %8557 = vmatprep.subr.bf16.mxu0 %v8161
    %8558 = vmatpush1.bf16.msra.mxu0 %v8160
    %8559 = vmatprep.subr.bf16.mxu0 %v8169
    %8560 = vmatpush1.bf16.msra.mxu0 %v8168
    %8561 = vmatprep.subr.bf16.mxu0 %v8177
    %8562 = vmatpush1.bf16.msra.mxu0 %v8176
    %8563 = vmatprep.subr.bf16.mxu0 %v8185
    %8564 = vmatpush1.bf16.msra.mxu0 %v8184
    %8565 = vmatprep.subr.bf16.mxu0 %v8193
    %8566 = vmatpush1.bf16.msra.mxu0 %v8192
    %8567 = vmatprep.subr.bf16.mxu0 %v8201
    %8568 = vmatpush1.bf16.msra.mxu0 %v8200
    %8569 = vmatprep.subr.bf16.mxu0 %v8209
    %8570 = vmatpush1.bf16.msra.mxu0 %v8208
    %8571 = vmatprep.subr.bf16.mxu0 %v8217
    %8572 = vmatpush1.bf16.msra.mxu0 %v8216
    %8573 = vmatprep.subr.bf16.mxu0 %v8225
    %8574 = vmatpush1.bf16.msra.mxu0 %v8224
    %8575 = vmatprep.subr.bf16.mxu0 %v8233
    %8576 = vmatpush1.bf16.msra.mxu0 %v8232
    %8577 = vmatprep.subr.bf16.mxu0 %v8241
    %8578 = vmatpush1.bf16.msra.mxu0 %v8240
    %8579 = vmatprep.mubr.bf16.mxu0 %v6925
    %8580 = vmatmul.mubr.bf16.gmra.mrb[0].mxu0 %v6924
    %v8581 = vpop.f32.mrb[0].mxu0
    %v8582 = vadd.f32 %v8539, %v8581
    %v8583 = vpop.f32.mrb[0].mxu0
    %v8584 = vadd.f32 %v8541, %v8583
    %v8585 = vpop.f32.mrb[0].mxu0
    %v8586 = vadd.f32 %v8543, %v8585
    %v8587 = vpop.f32.mrb[0].mxu0
    %v8588 = vadd.f32 %v8545, %v8587
    %8589 = vdwg.mxu0
    %8590 = vmatprep.subr.bf16.mxu0 %v7995
    %8591 = vmatpush1.bf16.msra.mxu0 %v7994
    %8592 = vmatprep.subr.bf16.mxu0 %v8003
    %8593 = vmatpush1.bf16.msra.mxu0 %v8002
    %8594 = vmatprep.subr.bf16.mxu0 %v8011
    %8595 = vmatpush1.bf16.msra.mxu0 %v8010
    %8596 = vmatprep.subr.bf16.mxu0 %v8019
    %8597 = vmatpush1.bf16.msra.mxu0 %v8018
    %8598 = vmatprep.subr.bf16.mxu0 %v8027
    %8599 = vmatpush1.bf16.msra.mxu0 %v8026
    %8600 = vmatprep.subr.bf16.mxu0 %v8035
    %8601 = vmatpush1.bf16.msra.mxu0 %v8034
    %8602 = vmatprep.subr.bf16.mxu0 %v8043
    %8603 = vmatpush1.bf16.msra.mxu0 %v8042
    %8604 = vmatprep.subr.bf16.mxu0 %v8051
    %8605 = vmatpush1.bf16.msra.mxu0 %v8050
    %8606 = vmatprep.subr.bf16.mxu0 %v8059
    %8607 = vmatpush1.bf16.msra.mxu0 %v8058
    %8608 = vmatprep.subr.bf16.mxu0 %v8067
    %8609 = vmatpush1.bf16.msra.mxu0 %v8066
    %8610 = vmatprep.subr.bf16.mxu0 %v8075
    %8611 = vmatpush1.bf16.msra.mxu0 %v8074
    %8612 = vmatprep.subr.bf16.mxu0 %v8083
    %8613 = vmatpush1.bf16.msra.mxu0 %v8082
    %8614 = vmatprep.subr.bf16.mxu0 %v8091
    %8615 = vmatpush1.bf16.msra.mxu0 %v8090
    %8616 = vmatprep.subr.bf16.mxu0 %v8099
    %8617 = vmatpush1.bf16.msra.mxu0 %v8098
    %8618 = vmatprep.subr.bf16.mxu0 %v8107
    %8619 = vmatpush1.bf16.msra.mxu0 %v8106
    %8620 = vmatprep.subr.bf16.mxu0 %v8115
    %8621 = vmatpush1.bf16.msra.mxu0 %v8114
    %8622 = vmatprep.mubr.bf16.mxu0 %v6923
    %8623 = vmatmul.mubr.bf16.gmra.mrb[0].mxu0 %v6922
    %v8624 = vpop.f32.mrb[0].mxu0
    %v8625 = vadd.f32 %v7195, %v8624
    %v8626 = vpop.f32.mrb[0].mxu0
    %v8627 = vadd.f32 %v7199, %v8626
    %v8628 = vpop.f32.mrb[0].mxu0
    %v8629 = vadd.f32 %v7195, %v8628
    %v8630 = vpop.f32.mrb[0].mxu0
    %v8631 = vadd.f32 %v7199, %v8630
    %8632 = vdwg.mxu0
    %8633 = vmatprep.subr.bf16.mxu0 %v8123
    %8634 = vmatpush1.bf16.msra.mxu0 %v8122
    %8635 = vmatprep.subr.bf16.mxu0 %v8131
    %8636 = vmatpush1.bf16.msra.mxu0 %v8130
    %8637 = vmatprep.subr.bf16.mxu0 %v8139
    %8638 = vmatpush1.bf16.msra.mxu0 %v8138
    %8639 = vmatprep.subr.bf16.mxu0 %v8147
    %8640 = vmatpush1.bf16.msra.mxu0 %v8146
    %8641 = vmatprep.subr.bf16.mxu0 %v8155
    %8642 = vmatpush1.bf16.msra.mxu0 %v8154
    %8643 = vmatprep.subr.bf16.mxu0 %v8163
    %8644 = vmatpush1.bf16.msra.mxu0 %v8162
    %8645 = vmatprep.subr.bf16.mxu0 %v8171
    %8646 = vmatpush1.bf16.msra.mxu0 %v8170
    %8647 = vmatprep.subr.bf16.mxu0 %v8179
    %8648 = vmatpush1.bf16.msra.mxu0 %v8178
    %8649 = vmatprep.subr.bf16.mxu0 %v8187
    %8650 = vmatpush1.bf16.msra.mxu0 %v8186
    %8651 = vmatprep.subr.bf16.mxu0 %v8195
    %8652 = vmatpush1.bf16.msra.mxu0 %v8194
    %8653 = vmatprep.subr.bf16.mxu0 %v8203
    %8654 = vmatpush1.bf16.msra.mxu0 %v8202
    %8655 = vmatprep.subr.bf16.mxu0 %v8211
    %8656 = vmatpush1.bf16.msra.mxu0 %v8210
    %8657 = vmatprep.subr.bf16.mxu0 %v8219
    %8658 = vmatpush1.bf16.msra.mxu0 %v8218
    %8659 = vmatprep.subr.bf16.mxu0 %v8227
    %8660 = vmatpush1.bf16.msra.mxu0 %v8226
    %8661 = vmatprep.subr.bf16.mxu0 %v8235
    %8662 = vmatpush1.bf16.msra.mxu0 %v8234
    %8663 = vmatprep.subr.bf16.mxu0 %v8243
    %8664 = vmatpush1.bf16.msra.mxu0 %v8242
    %8665 = vmatprep.mubr.bf16.mxu0 %v6925
    %8666 = vmatmul.mubr.bf16.gmra.mrb[0].mxu0 %v6924
    %v8667 = vpop.f32.mrb[0].mxu0
    %v8668 = vadd.f32 %v8625, %v8667
    %v8669 = vpop.f32.mrb[0].mxu0
    %v8670 = vadd.f32 %v8627, %v8669
    %v8671 = vpop.f32.mrb[0].mxu0
    %v8672 = vadd.f32 %v8629, %v8671
    %v8673 = vpop.f32.mrb[0].mxu0
    %v8674 = vadd.f32 %v8631, %v8673
    %8675 = vdwg.mxu0
    %8676 = vmatprep.subr.bf16.mxu0 %v7997
    %8677 = vmatpush1.bf16.msra.mxu0 %v7996
    %8678 = vmatprep.subr.bf16.mxu0 %v8005
    %8679 = vmatpush1.bf16.msra.mxu0 %v8004
    %8680 = vmatprep.subr.bf16.mxu0 %v8013
    %8681 = vmatpush1.bf16.msra.mxu0 %v8012
    %8682 = vmatprep.subr.bf16.mxu0 %v8021
    %8683 = vmatpush1.bf16.msra.mxu0 %v8020
    %8684 = vmatprep.subr.bf16.mxu0 %v8029
    %8685 = vmatpush1.bf16.msra.mxu0 %v8028
    %8686 = vmatprep.subr.bf16.mxu0 %v8037
    %8687 = vmatpush1.bf16.msra.mxu0 %v8036
    %8688 = vmatprep.subr.bf16.mxu0 %v8045
    %8689 = vmatpush1.bf16.msra.mxu0 %v8044
    %8690 = vmatprep.subr.bf16.mxu0 %v8053
    %8691 = vmatpush1.bf16.msra.mxu0 %v8052
    %8692 = vmatprep.subr.bf16.mxu0 %v8061
    %8693 = vmatpush1.bf16.msra.mxu0 %v8060
    %8694 = vmatprep.subr.bf16.mxu0 %v8069
    %8695 = vmatpush1.bf16.msra.mxu0 %v8068
    %8696 = vmatprep.subr.bf16.mxu0 %v8077
    %8697 = vmatpush1.bf16.msra.mxu0 %v8076
    %8698 = vmatprep.subr.bf16.mxu0 %v8085
    %8699 = vmatpush1.bf16.msra.mxu0 %v8084
    %8700 = vmatprep.subr.bf16.mxu0 %v8093
    %8701 = vmatpush1.bf16.msra.mxu0 %v8092
    %8702 = vmatprep.subr.bf16.mxu0 %v8101
    %8703 = vmatpush1.bf16.msra.mxu0 %v8100
    %8704 = vmatprep.subr.bf16.mxu0 %v8109
    %8705 = vmatpush1.bf16.msra.mxu0 %v8108
    %8706 = vmatprep.subr.bf16.mxu0 %v8117
    %8707 = vmatpush1.bf16.msra.mxu0 %v8116
    %8708 = vmatprep.mubr.bf16.mxu0 %v6923
    %8709 = vmatmul.mubr.bf16.gmra.mrb[0].mxu0 %v6922
    %v8710 = vpop.f32.mrb[0].mxu0
    %v8711 = vadd.f32 %v7203, %v8710
    %v8712 = vpop.f32.mrb[0].mxu0
    %v8713 = vadd.f32 %v7207, %v8712
    %v8714 = vpop.f32.mrb[0].mxu0
    %v8715 = vadd.f32 %v7203, %v8714
    %v8716 = vpop.f32.mrb[0].mxu0
    %v8717 = vadd.f32 %v7207, %v8716
    %8718 = vdwg.mxu0
    %8719 = vmatprep.subr.bf16.mxu0 %v8125
    %8720 = vmatpush1.bf16.msra.mxu0 %v8124
    %8721 = vmatprep.subr.bf16.mxu0 %v8133
    %8722 = vmatpush1.bf16.msra.mxu0 %v8132
    %8723 = vmatprep.subr.bf16.mxu0 %v8141
    %8724 = vmatpush1.bf16.msra.mxu0 %v8140
    %8725 = vmatprep.subr.bf16.mxu0 %v8149
    %8726 = vmatpush1.bf16.msra.mxu0 %v8148
    %8727 = vmatprep.subr.bf16.mxu0 %v8157
    %8728 = vmatpush1.bf16.msra.mxu0 %v8156
    %8729 = vmatprep.subr.bf16.mxu0 %v8165
    %8730 = vmatpush1.bf16.msra.mxu0 %v8164
    %8731 = vmatprep.subr.bf16.mxu0 %v8173
    %8732 = vmatpush1.bf16.msra.mxu0 %v8172
    %8733 = vmatprep.subr.bf16.mxu0 %v8181
    %8734 = vmatpush1.bf16.msra.mxu0 %v8180
    %8735 = vmatprep.subr.bf16.mxu0 %v8189
    %8736 = vmatpush1.bf16.msra.mxu0 %v8188
    %8737 = vmatprep.subr.bf16.mxu0 %v8197
    %8738 = vmatpush1.bf16.msra.mxu0 %v8196
    %8739 = vmatprep.subr.bf16.mxu0 %v8205
    %8740 = vmatpush1.bf16.msra.mxu0 %v8204
    %8741 = vmatprep.subr.bf16.mxu0 %v8213
    %8742 = vmatpush1.bf16.msra.mxu0 %v8212
    %8743 = vmatprep.subr.bf16.mxu0 %v8221
    %8744 = vmatpush1.bf16.msra.mxu0 %v8220
    %8745 = vmatprep.subr.bf16.mxu0 %v8229
    %8746 = vmatpush1.bf16.msra.mxu0 %v8228
    %8747 = vmatprep.subr.bf16.mxu0 %v8237
    %8748 = vmatpush1.bf16.msra.mxu0 %v8236
    %8749 = vmatprep.subr.bf16.mxu0 %v8245
    %8750 = vmatpush1.bf16.msra.mxu0 %v8244
    %8751 = vmatprep.mubr.bf16.mxu0 %v6925
    %8752 = vmatmul.mubr.bf16.gmra.mrb[0].mxu0 %v6924
    %v8753 = vpop.f32.mrb[0].mxu0
    %v8754 = vadd.f32 %v8711, %v8753
    %v8755 = vpop.f32.mrb[0].mxu0
    %v8756 = vadd.f32 %v8713, %v8755
    %v8757 = vpop.f32.mrb[0].mxu0
    %v8758 = vadd.f32 %v8715, %v8757
    %v8759 = vpop.f32.mrb[0].mxu0
    %v8760 = vadd.f32 %v8717, %v8759
    %8761 = vdwg.mxu0
    %8762 = vmatprep.subr.bf16.mxu0 %v7999
    %8763 = vmatpush1.bf16.msra.mxu0 %v7998
    %8764 = vmatprep.subr.bf16.mxu0 %v8007
    %8765 = vmatpush1.bf16.msra.mxu0 %v8006
    %8766 = vmatprep.subr.bf16.mxu0 %v8015
    %8767 = vmatpush1.bf16.msra.mxu0 %v8014
    %8768 = vmatprep.subr.bf16.mxu0 %v8023
    %8769 = vmatpush1.bf16.msra.mxu0 %v8022
    %8770 = vmatprep.subr.bf16.mxu0 %v8031
    %8771 = vmatpush1.bf16.msra.mxu0 %v8030
    %8772 = vmatprep.subr.bf16.mxu0 %v8039
    %8773 = vmatpush1.bf16.msra.mxu0 %v8038
    %8774 = vmatprep.subr.bf16.mxu0 %v8047
    %8775 = vmatpush1.bf16.msra.mxu0 %v8046
    %8776 = vmatprep.subr.bf16.mxu0 %v8055
    %8777 = vmatpush1.bf16.msra.mxu0 %v8054
    %8778 = vmatprep.subr.bf16.mxu0 %v8063
    %8779 = vmatpush1.bf16.msra.mxu0 %v8062
    %8780 = vmatprep.subr.bf16.mxu0 %v8071
    %8781 = vmatpush1.bf16.msra.mxu0 %v8070
    %8782 = vmatprep.subr.bf16.mxu0 %v8079
    %8783 = vmatpush1.bf16.msra.mxu0 %v8078
    %8784 = vmatprep.subr.bf16.mxu0 %v8087
    %8785 = vmatpush1.bf16.msra.mxu0 %v8086
    %8786 = vmatprep.subr.bf16.mxu0 %v8095
    %8787 = vmatpush1.bf16.msra.mxu0 %v8094
    %8788 = vmatprep.subr.bf16.mxu0 %v8103
    %8789 = vmatpush1.bf16.msra.mxu0 %v8102
    %8790 = vmatprep.subr.bf16.mxu0 %v8111
    %8791 = vmatpush1.bf16.msra.mxu0 %v8110
    %8792 = vmatprep.subr.bf16.mxu0 %v8119
    %8793 = vmatpush1.bf16.msra.mxu0 %v8118
    %8794 = vmatprep.mubr.bf16.mxu0 %v6923
    %8795 = vmatmul.mubr.bf16.gmra.mrb[0].mxu0 %v6922
    %v8796 = vpop.f32.mrb[0].mxu0
    %v8797 = vadd.f32 %v7211, %v8796
    %v8798 = vpop.f32.mrb[0].mxu0
    %v8799 = vadd.f32 %v7215, %v8798
    %v8800 = vpop.f32.mrb[0].mxu0
    %v8801 = vadd.f32 %v7211, %v8800
    %v8802 = vpop.f32.mrb[0].mxu0
    %v8803 = vadd.f32 %v7215, %v8802
    %8804 = vdwg.mxu0
    %8805 = vmatprep.subr.bf16.mxu0 %v8127
    %8806 = vmatpush1.bf16.msra.mxu0 %v8126
    %8807 = vmatprep.subr.bf16.mxu0 %v8135
    %8808 = vmatpush1.bf16.msra.mxu0 %v8134
    %8809 = vmatprep.subr.bf16.mxu0 %v8143
    %8810 = vmatpush1.bf16.msra.mxu0 %v8142
    %8811 = vmatprep.subr.bf16.mxu0 %v8151
    %8812 = vmatpush1.bf16.msra.mxu0 %v8150
    %8813 = vmatprep.subr.bf16.mxu0 %v8159
    %8814 = vmatpush1.bf16.msra.mxu0 %v8158
    %8815 = vmatprep.subr.bf16.mxu0 %v8167
    %8816 = vmatpush1.bf16.msra.mxu0 %v8166
    %8817 = vmatprep.subr.bf16.mxu0 %v8175
    %8818 = vmatpush1.bf16.msra.mxu0 %v8174
    %8819 = vmatprep.subr.bf16.mxu0 %v8183
    %8820 = vmatpush1.bf16.msra.mxu0 %v8182
    %8821 = vmatprep.subr.bf16.mxu0 %v8191
    %8822 = vmatpush1.bf16.msra.mxu0 %v8190
    %8823 = vmatprep.subr.bf16.mxu0 %v8199
    %8824 = vmatpush1.bf16.msra.mxu0 %v8198
    %8825 = vmatprep.subr.bf16.mxu0 %v8207
    %8826 = vmatpush1.bf16.msra.mxu0 %v8206
    %8827 = vmatprep.subr.bf16.mxu0 %v8215
    %8828 = vmatpush1.bf16.msra.mxu0 %v8214
    %8829 = vmatprep.subr.bf16.mxu0 %v8223
    %8830 = vmatpush1.bf16.msra.mxu0 %v8222
    %8831 = vmatprep.subr.bf16.mxu0 %v8231
    %8832 = vmatpush1.bf16.msra.mxu0 %v8230
    %8833 = vmatprep.subr.bf16.mxu0 %v8239
    %8834 = vmatpush1.bf16.msra.mxu0 %v8238
    %8835 = vmatprep.subr.bf16.mxu0 %v8247
    %8836 = vmatpush1.bf16.msra.mxu0 %v8246
    %8837 = vmatprep.mubr.bf16.mxu0 %v6925
    %8838 = vmatmul.mubr.bf16.gmra.mrb[0].mxu0 %v6924
    %v8839 = vpop.f32.mrb[0].mxu0
    %v8840 = vadd.f32 %v8797, %v8839
    %v8841 = vpop.f32.mrb[0].mxu0
    %v8842 = vadd.f32 %v8799, %v8841
    %v8843 = vpop.f32.mrb[0].mxu0
    %v8844 = vadd.f32 %v8801, %v8843
    %v8845 = vpop.f32.mrb[0].mxu0
    %v8846 = vadd.f32 %v8803, %v8845
    %8847 = vdwg.mxu0
    %v8848 = vpack.c.bf16 %v8586, %v8582
    %v8849 = vpack.c.bf16 %v8588, %v8584
    %v8850 = vpack.c.bf16 %v8672, %v8668
    %v8851 = vpack.c.bf16 %v8674, %v8670
    %v8852 = vpack.c.bf16 %v8758, %v8754
    %v8853 = vpack.c.bf16 %v8760, %v8756
    %v8854 = vpack.c.bf16 %v8844, %v8840
    %v8855 = vpack.c.bf16 %v8846, %v8842
    %v8856 = vld [vmem:[#allocation13] sm:$0xff]
    %v8857 = vld [vmem:[#allocation13 + $0x8] sm:$0xff]
    %v8858 = vld [vmem:[#allocation13 + $0x10] sm:$0xff]
    %v8859 = vld [vmem:[#allocation13 + $0x18] sm:$0xff]
    %v8860 = vld [vmem:[#allocation13 + $0x20] sm:$0xff]
    %v8861 = vld [vmem:[#allocation13 + $0x28] sm:$0xff]
    %v8862 = vld [vmem:[#allocation13 + $0x30] sm:$0xff]
    %v8863 = vld [vmem:[#allocation13 + $0x38] sm:$0xff]
    %v8864 = vld [vmem:[#allocation13 + $0x40] sm:$0xff]
    %v8865 = vld [vmem:[#allocation13 + $0x48] sm:$0xff]
    %v8866 = vld [vmem:[#allocation13 + $0x50] sm:$0xff]
    %v8867 = vld [vmem:[#allocation13 + $0x58] sm:$0xff]
    %v8868 = vld [vmem:[#allocation13 + $0x60] sm:$0xff]
    %v8869 = vld [vmem:[#allocation13 + $0x68] sm:$0xff]
    %v8870 = vld [vmem:[#allocation13 + $0x70] sm:$0xff]
    %v8871 = vld [vmem:[#allocation13 + $0x78] sm:$0xff]
    %v8872 = vld [vmem:[#allocation13 + $0x80] sm:$0xff]
    %v8873 = vld [vmem:[#allocation13 + $0x88] sm:$0xff]
    %v8874 = vld [vmem:[#allocation13 + $0x90] sm:$0xff]
    %v8875 = vld [vmem:[#allocation13 + $0x98] sm:$0xff]
    %v8876 = vld [vmem:[#allocation13 + $0xa0] sm:$0xff]
    %v8877 = vld [vmem:[#allocation13 + $0xa8] sm:$0xff]
    %v8878 = vld [vmem:[#allocation13 + $0xb0] sm:$0xff]
    %v8879 = vld [vmem:[#allocation13 + $0xb8] sm:$0xff]
    %v8880 = vld [vmem:[#allocation13 + $0xc0] sm:$0xff]
    %v8881 = vld [vmem:[#allocation13 + $0xc8] sm:$0xff]
    %v8882 = vld [vmem:[#allocation13 + $0xd0] sm:$0xff]
    %v8883 = vld [vmem:[#allocation13 + $0xd8] sm:$0xff]
    %v8884 = vld [vmem:[#allocation13 + $0xe0] sm:$0xff]
    %v8885 = vld [vmem:[#allocation13 + $0xe8] sm:$0xff]
    %v8886 = vld [vmem:[#allocation13 + $0xf0] sm:$0xff]
    %v8887 = vld [vmem:[#allocation13 + $0xf8] sm:$0xff]
    %v8888 = vld [vmem:[#allocation13 + $0x100] sm:$0xff]
    %v8889 = vld [vmem:[#allocation13 + $0x108] sm:$0xff]
    %v8890 = vld [vmem:[#allocation13 + $0x110] sm:$0xff]
    %v8891 = vld [vmem:[#allocation13 + $0x118] sm:$0xff]
    %v8892 = vld [vmem:[#allocation13 + $0x120] sm:$0xff]
    %v8893 = vld [vmem:[#allocation13 + $0x128] sm:$0xff]
    %v8894 = vld [vmem:[#allocation13 + $0x130] sm:$0xff]
    %v8895 = vld [vmem:[#allocation13 + $0x138] sm:$0xff]
    %v8896 = vld [vmem:[#allocation13 + $0x140] sm:$0xff]
    %v8897 = vld [vmem:[#allocation13 + $0x148] sm:$0xff]
    %v8898 = vld [vmem:[#allocation13 + $0x150] sm:$0xff]
    %v8899 = vld [vmem:[#allocation13 + $0x158] sm:$0xff]
    %v8900 = vld [vmem:[#allocation13 + $0x160] sm:$0xff]
    %v8901 = vld [vmem:[#allocation13 + $0x168] sm:$0xff]
    %v8902 = vld [vmem:[#allocation13 + $0x170] sm:$0xff]
    %v8903 = vld [vmem:[#allocation13 + $0x178] sm:$0xff]
    %v8904 = vld [vmem:[#allocation13 + $0x180] sm:$0xff]
    %v8905 = vld [vmem:[#allocation13 + $0x188] sm:$0xff]
    %v8906 = vld [vmem:[#allocation13 + $0x190] sm:$0xff]
    %v8907 = vld [vmem:[#allocation13 + $0x198] sm:$0xff]
    %v8908 = vld [vmem:[#allocation13 + $0x1a0] sm:$0xff]
    %v8909 = vld [vmem:[#allocation13 + $0x1a8] sm:$0xff]
    %v8910 = vld [vmem:[#allocation13 + $0x1b0] sm:$0xff]
    %v8911 = vld [vmem:[#allocation13 + $0x1b8] sm:$0xff]
    %v8912 = vld [vmem:[#allocation13 + $0x1c0] sm:$0xff]
    %v8913 = vld [vmem:[#allocation13 + $0x1c8] sm:$0xff]
    %v8914 = vld [vmem:[#allocation13 + $0x1d0] sm:$0xff]
    %v8915 = vld [vmem:[#allocation13 + $0x1d8] sm:$0xff]
    %v8916 = vld [vmem:[#allocation13 + $0x1e0] sm:$0xff]
    %v8917 = vld [vmem:[#allocation13 + $0x1e8] sm:$0xff]
    %v8918 = vld [vmem:[#allocation13 + $0x1f0] sm:$0xff]
    %v8919 = vld [vmem:[#allocation13 + $0x1f8] sm:$0xff]
    %v8920 = vld [vmem:[#allocation13 + $0x200] sm:$0xff]
    %v8921 = vld [vmem:[#allocation13 + $0x208] sm:$0xff]
    %v8922 = vld [vmem:[#allocation13 + $0x210] sm:$0xff]
    %v8923 = vld [vmem:[#allocation13 + $0x218] sm:$0xff]
    %v8924 = vld [vmem:[#allocation13 + $0x220] sm:$0xff]
    %v8925 = vld [vmem:[#allocation13 + $0x228] sm:$0xff]
    %v8926 = vld [vmem:[#allocation13 + $0x230] sm:$0xff]
    %v8927 = vld [vmem:[#allocation13 + $0x238] sm:$0xff]
    %v8928 = vld [vmem:[#allocation13 + $0x240] sm:$0xff]
    %v8929 = vld [vmem:[#allocation13 + $0x248] sm:$0xff]
    %v8930 = vld [vmem:[#allocation13 + $0x250] sm:$0xff]
    %v8931 = vld [vmem:[#allocation13 + $0x258] sm:$0xff]
    %v8932 = vld [vmem:[#allocation13 + $0x260] sm:$0xff]
    %v8933 = vld [vmem:[#allocation13 + $0x268] sm:$0xff]
    %v8934 = vld [vmem:[#allocation13 + $0x270] sm:$0xff]
    %v8935 = vld [vmem:[#allocation13 + $0x278] sm:$0xff]
    %v8936 = vld [vmem:[#allocation13 + $0x280] sm:$0xff]
    %v8937 = vld [vmem:[#allocation13 + $0x288] sm:$0xff]
    %v8938 = vld [vmem:[#allocation13 + $0x290] sm:$0xff]
    %v8939 = vld [vmem:[#allocation13 + $0x298] sm:$0xff]
    %v8940 = vld [vmem:[#allocation13 + $0x2a0] sm:$0xff]
    %v8941 = vld [vmem:[#allocation13 + $0x2a8] sm:$0xff]
    %v8942 = vld [vmem:[#allocation13 + $0x2b0] sm:$0xff]
    %v8943 = vld [vmem:[#allocation13 + $0x2b8] sm:$0xff]
    %v8944 = vld [vmem:[#allocation13 + $0x2c0] sm:$0xff]
    %v8945 = vld [vmem:[#allocation13 + $0x2c8] sm:$0xff]
    %v8946 = vld [vmem:[#allocation13 + $0x2d0] sm:$0xff]
    %v8947 = vld [vmem:[#allocation13 + $0x2d8] sm:$0xff]
    %v8948 = vld [vmem:[#allocation13 + $0x2e0] sm:$0xff]
    %v8949 = vld [vmem:[#allocation13 + $0x2e8] sm:$0xff]
    %v8950 = vld [vmem:[#allocation13 + $0x2f0] sm:$0xff]
    %v8951 = vld [vmem:[#allocation13 + $0x2f8] sm:$0xff]
    %v8952 = vld [vmem:[#allocation13 + $0x300] sm:$0xff]
    %v8953 = vld [vmem:[#allocation13 + $0x308] sm:$0xff]
    %v8954 = vld [vmem:[#allocation13 + $0x310] sm:$0xff]
    %v8955 = vld [vmem:[#allocation13 + $0x318] sm:$0xff]
    %v8956 = vld [vmem:[#allocation13 + $0x320] sm:$0xff]
    %v8957 = vld [vmem:[#allocation13 + $0x328] sm:$0xff]
    %v8958 = vld [vmem:[#allocation13 + $0x330] sm:$0xff]
    %v8959 = vld [vmem:[#allocation13 + $0x338] sm:$0xff]
    %v8960 = vld [vmem:[#allocation13 + $0x340] sm:$0xff]
    %v8961 = vld [vmem:[#allocation13 + $0x348] sm:$0xff]
    %v8962 = vld [vmem:[#allocation13 + $0x350] sm:$0xff]
    %v8963 = vld [vmem:[#allocation13 + $0x358] sm:$0xff]
    %v8964 = vld [vmem:[#allocation13 + $0x360] sm:$0xff]
    %v8965 = vld [vmem:[#allocation13 + $0x368] sm:$0xff]
    %v8966 = vld [vmem:[#allocation13 + $0x370] sm:$0xff]
    %v8967 = vld [vmem:[#allocation13 + $0x378] sm:$0xff]
    %v8968 = vld [vmem:[#allocation13 + $0x380] sm:$0xff]
    %v8969 = vld [vmem:[#allocation13 + $0x388] sm:$0xff]
    %v8970 = vld [vmem:[#allocation13 + $0x390] sm:$0xff]
    %v8971 = vld [vmem:[#allocation13 + $0x398] sm:$0xff]
    %v8972 = vld [vmem:[#allocation13 + $0x3a0] sm:$0xff]
    %v8973 = vld [vmem:[#allocation13 + $0x3a8] sm:$0xff]
    %v8974 = vld [vmem:[#allocation13 + $0x3b0] sm:$0xff]
    %v8975 = vld [vmem:[#allocation13 + $0x3b8] sm:$0xff]
    %v8976 = vld [vmem:[#allocation13 + $0x3c0] sm:$0xff]
    %v8977 = vld [vmem:[#allocation13 + $0x3c8] sm:$0xff]
    %v8978 = vld [vmem:[#allocation13 + $0x3d0] sm:$0xff]
    %v8979 = vld [vmem:[#allocation13 + $0x3d8] sm:$0xff]
    %v8980 = vld [vmem:[#allocation13 + $0x3e0] sm:$0xff]
    %v8981 = vld [vmem:[#allocation13 + $0x3e8] sm:$0xff]
    %v8982 = vld [vmem:[#allocation13 + $0x3f0] sm:$0xff]
    %v8983 = vld [vmem:[#allocation13 + $0x3f8] sm:$0xff]
    %v8984 = vld [vmem:[#allocation13 + $0x400] sm:$0xff]
    %v8985 = vld [vmem:[#allocation13 + $0x408] sm:$0xff]
    %v8986 = vld [vmem:[#allocation13 + $0x410] sm:$0xff]
    %v8987 = vld [vmem:[#allocation13 + $0x418] sm:$0xff]
    %v8988 = vld [vmem:[#allocation13 + $0x420] sm:$0xff]
    %v8989 = vld [vmem:[#allocation13 + $0x428] sm:$0xff]
    %v8990 = vld [vmem:[#allocation13 + $0x430] sm:$0xff]
    %v8991 = vld [vmem:[#allocation13 + $0x438] sm:$0xff]
    %v8992 = vld [vmem:[#allocation13 + $0x440] sm:$0xff]
    %v8993 = vld [vmem:[#allocation13 + $0x448] sm:$0xff]
    %v8994 = vld [vmem:[#allocation13 + $0x450] sm:$0xff]
    %v8995 = vld [vmem:[#allocation13 + $0x458] sm:$0xff]
    %v8996 = vld [vmem:[#allocation13 + $0x460] sm:$0xff]
    %v8997 = vld [vmem:[#allocation13 + $0x468] sm:$0xff]
    %v8998 = vld [vmem:[#allocation13 + $0x470] sm:$0xff]
    %v8999 = vld [vmem:[#allocation13 + $0x478] sm:$0xff]
    %v9000 = vld [vmem:[#allocation13 + $0x480] sm:$0xff]
    %v9001 = vld [vmem:[#allocation13 + $0x488] sm:$0xff]
    %v9002 = vld [vmem:[#allocation13 + $0x490] sm:$0xff]
    %v9003 = vld [vmem:[#allocation13 + $0x498] sm:$0xff]
    %v9004 = vld [vmem:[#allocation13 + $0x4a0] sm:$0xff]
    %v9005 = vld [vmem:[#allocation13 + $0x4a8] sm:$0xff]
    %v9006 = vld [vmem:[#allocation13 + $0x4b0] sm:$0xff]
    %v9007 = vld [vmem:[#allocation13 + $0x4b8] sm:$0xff]
    %v9008 = vld [vmem:[#allocation13 + $0x4c0] sm:$0xff]
    %v9009 = vld [vmem:[#allocation13 + $0x4c8] sm:$0xff]
    %v9010 = vld [vmem:[#allocation13 + $0x4d0] sm:$0xff]
    %v9011 = vld [vmem:[#allocation13 + $0x4d8] sm:$0xff]
    %v9012 = vld [vmem:[#allocation13 + $0x4e0] sm:$0xff]
    %v9013 = vld [vmem:[#allocation13 + $0x4e8] sm:$0xff]
    %v9014 = vld [vmem:[#allocation13 + $0x4f0] sm:$0xff]
    %v9015 = vld [vmem:[#allocation13 + $0x4f8] sm:$0xff]
    %v9016 = vld [vmem:[#allocation13 + $0x500] sm:$0xff]
    %v9017 = vld [vmem:[#allocation13 + $0x508] sm:$0xff]
    %v9018 = vld [vmem:[#allocation13 + $0x510] sm:$0xff]
    %v9019 = vld [vmem:[#allocation13 + $0x518] sm:$0xff]
    %v9020 = vld [vmem:[#allocation13 + $0x520] sm:$0xff]
    %v9021 = vld [vmem:[#allocation13 + $0x528] sm:$0xff]
    %v9022 = vld [vmem:[#allocation13 + $0x530] sm:$0xff]
    %v9023 = vld [vmem:[#allocation13 + $0x538] sm:$0xff]
    %v9024 = vld [vmem:[#allocation13 + $0x540] sm:$0xff]
    %v9025 = vld [vmem:[#allocation13 + $0x548] sm:$0xff]
    %v9026 = vld [vmem:[#allocation13 + $0x550] sm:$0xff]
    %v9027 = vld [vmem:[#allocation13 + $0x558] sm:$0xff]
    %v9028 = vld [vmem:[#allocation13 + $0x560] sm:$0xff]
    %v9029 = vld [vmem:[#allocation13 + $0x568] sm:$0xff]
    %v9030 = vld [vmem:[#allocation13 + $0x570] sm:$0xff]
    %v9031 = vld [vmem:[#allocation13 + $0x578] sm:$0xff]
    %v9032 = vld [vmem:[#allocation13 + $0x580] sm:$0xff]
    %v9033 = vld [vmem:[#allocation13 + $0x588] sm:$0xff]
    %v9034 = vld [vmem:[#allocation13 + $0x590] sm:$0xff]
    %v9035 = vld [vmem:[#allocation13 + $0x598] sm:$0xff]
    %v9036 = vld [vmem:[#allocation13 + $0x5a0] sm:$0xff]
    %v9037 = vld [vmem:[#allocation13 + $0x5a8] sm:$0xff]
    %v9038 = vld [vmem:[#allocation13 + $0x5b0] sm:$0xff]
    %v9039 = vld [vmem:[#allocation13 + $0x5b8] sm:$0xff]
    %v9040 = vld [vmem:[#allocation13 + $0x5c0] sm:$0xff]
    %v9041 = vld [vmem:[#allocation13 + $0x5c8] sm:$0xff]
    %v9042 = vld [vmem:[#allocation13 + $0x5d0] sm:$0xff]
    %v9043 = vld [vmem:[#allocation13 + $0x5d8] sm:$0xff]
    %v9044 = vld [vmem:[#allocation13 + $0x5e0] sm:$0xff]
    %v9045 = vld [vmem:[#allocation13 + $0x5e8] sm:$0xff]
    %v9046 = vld [vmem:[#allocation13 + $0x5f0] sm:$0xff]
    %v9047 = vld [vmem:[#allocation13 + $0x5f8] sm:$0xff]
    %v9048 = vld [vmem:[#allocation13 + $0x600] sm:$0xff]
    %v9049 = vld [vmem:[#allocation13 + $0x608] sm:$0xff]
    %v9050 = vld [vmem:[#allocation13 + $0x610] sm:$0xff]
    %v9051 = vld [vmem:[#allocation13 + $0x618] sm:$0xff]
    %v9052 = vld [vmem:[#allocation13 + $0x620] sm:$0xff]
    %v9053 = vld [vmem:[#allocation13 + $0x628] sm:$0xff]
    %v9054 = vld [vmem:[#allocation13 + $0x630] sm:$0xff]
    %v9055 = vld [vmem:[#allocation13 + $0x638] sm:$0xff]
    %v9056 = vld [vmem:[#allocation13 + $0x640] sm:$0xff]
    %v9057 = vld [vmem:[#allocation13 + $0x648] sm:$0xff]
    %v9058 = vld [vmem:[#allocation13 + $0x650] sm:$0xff]
    %v9059 = vld [vmem:[#allocation13 + $0x658] sm:$0xff]
    %v9060 = vld [vmem:[#allocation13 + $0x660] sm:$0xff]
    %v9061 = vld [vmem:[#allocation13 + $0x668] sm:$0xff]
    %v9062 = vld [vmem:[#allocation13 + $0x670] sm:$0xff]
    %v9063 = vld [vmem:[#allocation13 + $0x678] sm:$0xff]
    %v9064 = vld [vmem:[#allocation13 + $0x680] sm:$0xff]
    %v9065 = vld [vmem:[#allocation13 + $0x688] sm:$0xff]
    %v9066 = vld [vmem:[#allocation13 + $0x690] sm:$0xff]
    %v9067 = vld [vmem:[#allocation13 + $0x698] sm:$0xff]
    %v9068 = vld [vmem:[#allocation13 + $0x6a0] sm:$0xff]
    %v9069 = vld [vmem:[#allocation13 + $0x6a8] sm:$0xff]
    %v9070 = vld [vmem:[#allocation13 + $0x6b0] sm:$0xff]
    %v9071 = vld [vmem:[#allocation13 + $0x6b8] sm:$0xff]
    %v9072 = vld [vmem:[#allocation13 + $0x6c0] sm:$0xff]
    %v9073 = vld [vmem:[#allocation13 + $0x6c8] sm:$0xff]
    %v9074 = vld [vmem:[#allocation13 + $0x6d0] sm:$0xff]
    %v9075 = vld [vmem:[#allocation13 + $0x6d8] sm:$0xff]
    %v9076 = vld [vmem:[#allocation13 + $0x6e0] sm:$0xff]
    %v9077 = vld [vmem:[#allocation13 + $0x6e8] sm:$0xff]
    %v9078 = vld [vmem:[#allocation13 + $0x6f0] sm:$0xff]
    %v9079 = vld [vmem:[#allocation13 + $0x6f8] sm:$0xff]
    %v9080 = vld [vmem:[#allocation13 + $0x700] sm:$0xff]
    %v9081 = vld [vmem:[#allocation13 + $0x708] sm:$0xff]
    %v9082 = vld [vmem:[#allocation13 + $0x710] sm:$0xff]
    %v9083 = vld [vmem:[#allocation13 + $0x718] sm:$0xff]
    %v9084 = vld [vmem:[#allocation13 + $0x720] sm:$0xff]
    %v9085 = vld [vmem:[#allocation13 + $0x728] sm:$0xff]
    %v9086 = vld [vmem:[#allocation13 + $0x730] sm:$0xff]
    %v9087 = vld [vmem:[#allocation13 + $0x738] sm:$0xff]
    %v9088 = vld [vmem:[#allocation13 + $0x740] sm:$0xff]
    %v9089 = vld [vmem:[#allocation13 + $0x748] sm:$0xff]
    %v9090 = vld [vmem:[#allocation13 + $0x750] sm:$0xff]
    %v9091 = vld [vmem:[#allocation13 + $0x758] sm:$0xff]
    %v9092 = vld [vmem:[#allocation13 + $0x760] sm:$0xff]
    %v9093 = vld [vmem:[#allocation13 + $0x768] sm:$0xff]
    %v9094 = vld [vmem:[#allocation13 + $0x770] sm:$0xff]
    %v9095 = vld [vmem:[#allocation13 + $0x778] sm:$0xff]
    %v9096 = vld [vmem:[#allocation13 + $0x780] sm:$0xff]
    %v9097 = vld [vmem:[#allocation13 + $0x788] sm:$0xff]
    %v9098 = vld [vmem:[#allocation13 + $0x790] sm:$0xff]
    %v9099 = vld [vmem:[#allocation13 + $0x798] sm:$0xff]
    %v9100 = vld [vmem:[#allocation13 + $0x7a0] sm:$0xff]
    %v9101 = vld [vmem:[#allocation13 + $0x7a8] sm:$0xff]
    %v9102 = vld [vmem:[#allocation13 + $0x7b0] sm:$0xff]
    %v9103 = vld [vmem:[#allocation13 + $0x7b8] sm:$0xff]
    %v9104 = vld [vmem:[#allocation13 + $0x7c0] sm:$0xff]
    %v9105 = vld [vmem:[#allocation13 + $0x7c8] sm:$0xff]
    %v9106 = vld [vmem:[#allocation13 + $0x7d0] sm:$0xff]
    %v9107 = vld [vmem:[#allocation13 + $0x7d8] sm:$0xff]
    %v9108 = vld [vmem:[#allocation13 + $0x7e0] sm:$0xff]
    %v9109 = vld [vmem:[#allocation13 + $0x7e8] sm:$0xff]
    %v9110 = vld [vmem:[#allocation13 + $0x7f0] sm:$0xff]
    %v9111 = vld [vmem:[#allocation13 + $0x7f8] sm:$0xff]
    %v9112 = vld [vmem:[%s14] sm:$0xf]
    %v9114 = vlaneseq
    %v9115 = vshrl.u32 %v9114, 7
    %v9116 = vsub.s32 0, %v9115
    %v9117 = vrot.slane %v9112, %v9116
    %v9118 = vlaneseq
    %v9119 = vshrl.u32 %v9118, 7
    %v9120 = vsub.s32 1, %v9119
    %v9121 = vrot.slane %v9112, %v9120
    %v9122 = vlaneseq
    %v9123 = vshrl.u32 %v9122, 7
    %v9124 = vsub.s32 2, %v9123
    %v9125 = vrot.slane %v9112, %v9124
    %v9126 = vlaneseq
    %v9127 = vshrl.u32 %v9126, 7
    %v9128 = vsub.s32 3, %v9127
    %v9129 = vrot.slane %v9112, %v9128
    %v9390 = vunpack.c.l.b16 %v8856
    %v9391 = vunpack.c.h.b16 %v8856
    %v9392 = vunpack.c.l.b16 %v8857
    %v9393 = vunpack.c.h.b16 %v8857
    %v9394 = vunpack.c.l.b16 %v8858
    %v9395 = vunpack.c.h.b16 %v8858
    %v9396 = vunpack.c.l.b16 %v8859
    %v9397 = vunpack.c.h.b16 %v8859
    %v9398 = vunpack.c.l.b16 %v8860
    %v9399 = vunpack.c.h.b16 %v8860
    %v9400 = vunpack.c.l.b16 %v8861
    %v9401 = vunpack.c.h.b16 %v8861
    %v9402 = vunpack.c.l.b16 %v8862
    %v9403 = vunpack.c.h.b16 %v8862
    %v9404 = vunpack.c.l.b16 %v8863
    %v9405 = vunpack.c.h.b16 %v8863
    %v9406 = vunpack.c.l.b16 %v8864
    %v9407 = vunpack.c.h.b16 %v8864
    %v9408 = vunpack.c.l.b16 %v8865
    %v9409 = vunpack.c.h.b16 %v8865
    %v9410 = vunpack.c.l.b16 %v8866
    %v9411 = vunpack.c.h.b16 %v8866
    %v9412 = vunpack.c.l.b16 %v8867
    %v9413 = vunpack.c.h.b16 %v8867
    %v9414 = vunpack.c.l.b16 %v8868
    %v9415 = vunpack.c.h.b16 %v8868
    %v9416 = vunpack.c.l.b16 %v8869
    %v9417 = vunpack.c.h.b16 %v8869
    %v9418 = vunpack.c.l.b16 %v8870
    %v9419 = vunpack.c.h.b16 %v8870
    %v9420 = vunpack.c.l.b16 %v8871
    %v9421 = vunpack.c.h.b16 %v8871
    %v9422 = vunpack.c.l.b16 %v8872
    %v9423 = vunpack.c.h.b16 %v8872
    %v9424 = vunpack.c.l.b16 %v8873
    %v9425 = vunpack.c.h.b16 %v8873
    %v9426 = vunpack.c.l.b16 %v8874
    %v9427 = vunpack.c.h.b16 %v8874
    %v9428 = vunpack.c.l.b16 %v8875
    %v9429 = vunpack.c.h.b16 %v8875
    %v9430 = vunpack.c.l.b16 %v8876
    %v9431 = vunpack.c.h.b16 %v8876
    %v9432 = vunpack.c.l.b16 %v8877
    %v9433 = vunpack.c.h.b16 %v8877
    %v9434 = vunpack.c.l.b16 %v8878
    %v9435 = vunpack.c.h.b16 %v8878
    %v9436 = vunpack.c.l.b16 %v8879
    %v9437 = vunpack.c.h.b16 %v8879
    %v9438 = vunpack.c.l.b16 %v8880
    %v9439 = vunpack.c.h.b16 %v8880
    %v9440 = vunpack.c.l.b16 %v8881
    %v9441 = vunpack.c.h.b16 %v8881
    %v9442 = vunpack.c.l.b16 %v8882
    %v9443 = vunpack.c.h.b16 %v8882
    %v9444 = vunpack.c.l.b16 %v8883
    %v9445 = vunpack.c.h.b16 %v8883
    %v9446 = vunpack.c.l.b16 %v8884
    %v9447 = vunpack.c.h.b16 %v8884
    %v9448 = vunpack.c.l.b16 %v8885
    %v9449 = vunpack.c.h.b16 %v8885
    %v9450 = vunpack.c.l.b16 %v8886
    %v9451 = vunpack.c.h.b16 %v8886
    %v9452 = vunpack.c.l.b16 %v8887
    %v9453 = vunpack.c.h.b16 %v8887
    %v9454 = vunpack.c.l.b16 %v8888
    %v9455 = vunpack.c.h.b16 %v8888
    %v9456 = vunpack.c.l.b16 %v8889
    %v9457 = vunpack.c.h.b16 %v8889
    %v9458 = vunpack.c.l.b16 %v8890
    %v9459 = vunpack.c.h.b16 %v8890
    %v9460 = vunpack.c.l.b16 %v8891
    %v9461 = vunpack.c.h.b16 %v8891
    %v9462 = vunpack.c.l.b16 %v8892
    %v9463 = vunpack.c.h.b16 %v8892
    %v9464 = vunpack.c.l.b16 %v8893
    %v9465 = vunpack.c.h.b16 %v8893
    %v9466 = vunpack.c.l.b16 %v8894
    %v9467 = vunpack.c.h.b16 %v8894
    %v9468 = vunpack.c.l.b16 %v8895
    %v9469 = vunpack.c.h.b16 %v8895
    %v9470 = vunpack.c.l.b16 %v8896
    %v9471 = vunpack.c.h.b16 %v8896
    %v9472 = vunpack.c.l.b16 %v8897
    %v9473 = vunpack.c.h.b16 %v8897
    %v9474 = vunpack.c.l.b16 %v8898
    %v9475 = vunpack.c.h.b16 %v8898
    %v9476 = vunpack.c.l.b16 %v8899
    %v9477 = vunpack.c.h.b16 %v8899
    %v9478 = vunpack.c.l.b16 %v8900
    %v9479 = vunpack.c.h.b16 %v8900
    %v9480 = vunpack.c.l.b16 %v8901
    %v9481 = vunpack.c.h.b16 %v8901
    %v9482 = vunpack.c.l.b16 %v8902
    %v9483 = vunpack.c.h.b16 %v8902
    %v9484 = vunpack.c.l.b16 %v8903
    %v9485 = vunpack.c.h.b16 %v8903
    %v9486 = vunpack.c.l.b16 %v8904
    %v9487 = vunpack.c.h.b16 %v8904
    %v9488 = vunpack.c.l.b16 %v8905
    %v9489 = vunpack.c.h.b16 %v8905
    %v9490 = vunpack.c.l.b16 %v8906
    %v9491 = vunpack.c.h.b16 %v8906
    %v9492 = vunpack.c.l.b16 %v8907
    %v9493 = vunpack.c.h.b16 %v8907
    %v9494 = vunpack.c.l.b16 %v8908
    %v9495 = vunpack.c.h.b16 %v8908
    %v9496 = vunpack.c.l.b16 %v8909
    %v9497 = vunpack.c.h.b16 %v8909
    %v9498 = vunpack.c.l.b16 %v8910
    %v9499 = vunpack.c.h.b16 %v8910
    %v9500 = vunpack.c.l.b16 %v8911
    %v9501 = vunpack.c.h.b16 %v8911
    %v9502 = vunpack.c.l.b16 %v8912
    %v9503 = vunpack.c.h.b16 %v8912
    %v9504 = vunpack.c.l.b16 %v8913
    %v9505 = vunpack.c.h.b16 %v8913
    %v9506 = vunpack.c.l.b16 %v8914
    %v9507 = vunpack.c.h.b16 %v8914
    %v9508 = vunpack.c.l.b16 %v8915
    %v9509 = vunpack.c.h.b16 %v8915
    %v9510 = vunpack.c.l.b16 %v8916
    %v9511 = vunpack.c.h.b16 %v8916
    %v9512 = vunpack.c.l.b16 %v8917
    %v9513 = vunpack.c.h.b16 %v8917
    %v9514 = vunpack.c.l.b16 %v8918
    %v9515 = vunpack.c.h.b16 %v8918
    %v9516 = vunpack.c.l.b16 %v8919
    %v9517 = vunpack.c.h.b16 %v8919
    %v9518 = vunpack.c.l.b16 %v8920
    %v9519 = vunpack.c.h.b16 %v8920
    %v9520 = vunpack.c.l.b16 %v8921
    %v9521 = vunpack.c.h.b16 %v8921
    %v9522 = vunpack.c.l.b16 %v8922
    %v9523 = vunpack.c.h.b16 %v8922
    %v9524 = vunpack.c.l.b16 %v8923
    %v9525 = vunpack.c.h.b16 %v8923
    %v9526 = vunpack.c.l.b16 %v8924
    %v9527 = vunpack.c.h.b16 %v8924
    %v9528 = vunpack.c.l.b16 %v8925
    %v9529 = vunpack.c.h.b16 %v8925
    %v9530 = vunpack.c.l.b16 %v8926
    %v9531 = vunpack.c.h.b16 %v8926
    %v9532 = vunpack.c.l.b16 %v8927
    %v9533 = vunpack.c.h.b16 %v8927
    %v9534 = vunpack.c.l.b16 %v8928
    %v9535 = vunpack.c.h.b16 %v8928
    %v9536 = vunpack.c.l.b16 %v8929
    %v9537 = vunpack.c.h.b16 %v8929
    %v9538 = vunpack.c.l.b16 %v8930
    %v9539 = vunpack.c.h.b16 %v8930
    %v9540 = vunpack.c.l.b16 %v8931
    %v9541 = vunpack.c.h.b16 %v8931
    %v9542 = vunpack.c.l.b16 %v8932
    %v9543 = vunpack.c.h.b16 %v8932
    %v9544 = vunpack.c.l.b16 %v8933
    %v9545 = vunpack.c.h.b16 %v8933
    %v9546 = vunpack.c.l.b16 %v8934
    %v9547 = vunpack.c.h.b16 %v8934
    %v9548 = vunpack.c.l.b16 %v8935
    %v9549 = vunpack.c.h.b16 %v8935
    %v9550 = vunpack.c.l.b16 %v8936
    %v9551 = vunpack.c.h.b16 %v8936
    %v9552 = vunpack.c.l.b16 %v8937
    %v9553 = vunpack.c.h.b16 %v8937
    %v9554 = vunpack.c.l.b16 %v8938
    %v9555 = vunpack.c.h.b16 %v8938
    %v9556 = vunpack.c.l.b16 %v8939
    %v9557 = vunpack.c.h.b16 %v8939
    %v9558 = vunpack.c.l.b16 %v8940
    %v9559 = vunpack.c.h.b16 %v8940
    %v9560 = vunpack.c.l.b16 %v8941
    %v9561 = vunpack.c.h.b16 %v8941
    %v9562 = vunpack.c.l.b16 %v8942
    %v9563 = vunpack.c.h.b16 %v8942
    %v9564 = vunpack.c.l.b16 %v8943
    %v9565 = vunpack.c.h.b16 %v8943
    %v9566 = vunpack.c.l.b16 %v8944
    %v9567 = vunpack.c.h.b16 %v8944
    %v9568 = vunpack.c.l.b16 %v8945
    %v9569 = vunpack.c.h.b16 %v8945
    %v9570 = vunpack.c.l.b16 %v8946
    %v9571 = vunpack.c.h.b16 %v8946
    %v9572 = vunpack.c.l.b16 %v8947
    %v9573 = vunpack.c.h.b16 %v8947
    %v9574 = vunpack.c.l.b16 %v8948
    %v9575 = vunpack.c.h.b16 %v8948
    %v9576 = vunpack.c.l.b16 %v8949
    %v9577 = vunpack.c.h.b16 %v8949
    %v9578 = vunpack.c.l.b16 %v8950
    %v9579 = vunpack.c.h.b16 %v8950
    %v9580 = vunpack.c.l.b16 %v8951
    %v9581 = vunpack.c.h.b16 %v8951
    %v9582 = vunpack.c.l.b16 %v8952
    %v9583 = vunpack.c.h.b16 %v8952
    %v9584 = vunpack.c.l.b16 %v8953
    %v9585 = vunpack.c.h.b16 %v8953
    %v9586 = vunpack.c.l.b16 %v8954
    %v9587 = vunpack.c.h.b16 %v8954
    %v9588 = vunpack.c.l.b16 %v8955
    %v9589 = vunpack.c.h.b16 %v8955
    %v9590 = vunpack.c.l.b16 %v8956
    %v9591 = vunpack.c.h.b16 %v8956
    %v9592 = vunpack.c.l.b16 %v8957
    %v9593 = vunpack.c.h.b16 %v8957
    %v9594 = vunpack.c.l.b16 %v8958
    %v9595 = vunpack.c.h.b16 %v8958
    %v9596 = vunpack.c.l.b16 %v8959
    %v9597 = vunpack.c.h.b16 %v8959
    %v9598 = vunpack.c.l.b16 %v8960
    %v9599 = vunpack.c.h.b16 %v8960
    %v9600 = vunpack.c.l.b16 %v8961
    %v9601 = vunpack.c.h.b16 %v8961
    %v9602 = vunpack.c.l.b16 %v8962
    %v9603 = vunpack.c.h.b16 %v8962
    %v9604 = vunpack.c.l.b16 %v8963
    %v9605 = vunpack.c.h.b16 %v8963
    %v9606 = vunpack.c.l.b16 %v8964
    %v9607 = vunpack.c.h.b16 %v8964
    %v9608 = vunpack.c.l.b16 %v8965
    %v9609 = vunpack.c.h.b16 %v8965
    %v9610 = vunpack.c.l.b16 %v8966
    %v9611 = vunpack.c.h.b16 %v8966
    %v9612 = vunpack.c.l.b16 %v8967
    %v9613 = vunpack.c.h.b16 %v8967
    %v9614 = vunpack.c.l.b16 %v8968
    %v9615 = vunpack.c.h.b16 %v8968
    %v9616 = vunpack.c.l.b16 %v8969
    %v9617 = vunpack.c.h.b16 %v8969
    %v9618 = vunpack.c.l.b16 %v8970
    %v9619 = vunpack.c.h.b16 %v8970
    %v9620 = vunpack.c.l.b16 %v8971
    %v9621 = vunpack.c.h.b16 %v8971
    %v9622 = vunpack.c.l.b16 %v8972
    %v9623 = vunpack.c.h.b16 %v8972
    %v9624 = vunpack.c.l.b16 %v8973
    %v9625 = vunpack.c.h.b16 %v8973
    %v9626 = vunpack.c.l.b16 %v8974
    %v9627 = vunpack.c.h.b16 %v8974
    %v9628 = vunpack.c.l.b16 %v8975
    %v9629 = vunpack.c.h.b16 %v8975
    %v9630 = vunpack.c.l.b16 %v8976
    %v9631 = vunpack.c.h.b16 %v8976
    %v9632 = vunpack.c.l.b16 %v8977
    %v9633 = vunpack.c.h.b16 %v8977
    %v9634 = vunpack.c.l.b16 %v8978
    %v9635 = vunpack.c.h.b16 %v8978
    %v9636 = vunpack.c.l.b16 %v8979
    %v9637 = vunpack.c.h.b16 %v8979
    %v9638 = vunpack.c.l.b16 %v8980
    %v9639 = vunpack.c.h.b16 %v8980
    %v9640 = vunpack.c.l.b16 %v8981
    %v9641 = vunpack.c.h.b16 %v8981
    %v9642 = vunpack.c.l.b16 %v8982
    %v9643 = vunpack.c.h.b16 %v8982
    %v9644 = vunpack.c.l.b16 %v8983
    %v9645 = vunpack.c.h.b16 %v8983
    %v9646 = vunpack.c.l.b16 %v8984
    %v9647 = vunpack.c.h.b16 %v8984
    %v9648 = vunpack.c.l.b16 %v8985
    %v9649 = vunpack.c.h.b16 %v8985
    %v9650 = vunpack.c.l.b16 %v8986
    %v9651 = vunpack.c.h.b16 %v8986
    %v9652 = vunpack.c.l.b16 %v8987
    %v9653 = vunpack.c.h.b16 %v8987
    %v9654 = vunpack.c.l.b16 %v8988
    %v9655 = vunpack.c.h.b16 %v8988
    %v9656 = vunpack.c.l.b16 %v8989
    %v9657 = vunpack.c.h.b16 %v8989
    %v9658 = vunpack.c.l.b16 %v8990
    %v9659 = vunpack.c.h.b16 %v8990
    %v9660 = vunpack.c.l.b16 %v8991
    %v9661 = vunpack.c.h.b16 %v8991
    %v9662 = vunpack.c.l.b16 %v8992
    %v9663 = vunpack.c.h.b16 %v8992
    %v9664 = vunpack.c.l.b16 %v8993
    %v9665 = vunpack.c.h.b16 %v8993
    %v9666 = vunpack.c.l.b16 %v8994
    %v9667 = vunpack.c.h.b16 %v8994
    %v9668 = vunpack.c.l.b16 %v8995
    %v9669 = vunpack.c.h.b16 %v8995
    %v9670 = vunpack.c.l.b16 %v8996
    %v9671 = vunpack.c.h.b16 %v8996
    %v9672 = vunpack.c.l.b16 %v8997
    %v9673 = vunpack.c.h.b16 %v8997
    %v9674 = vunpack.c.l.b16 %v8998
    %v9675 = vunpack.c.h.b16 %v8998
    %v9676 = vunpack.c.l.b16 %v8999
    %v9677 = vunpack.c.h.b16 %v8999
    %v9678 = vunpack.c.l.b16 %v9000
    %v9679 = vunpack.c.h.b16 %v9000
    %v9680 = vunpack.c.l.b16 %v9001
    %v9681 = vunpack.c.h.b16 %v9001
    %v9682 = vunpack.c.l.b16 %v9002
    %v9683 = vunpack.c.h.b16 %v9002
    %v9684 = vunpack.c.l.b16 %v9003
    %v9685 = vunpack.c.h.b16 %v9003
    %v9686 = vunpack.c.l.b16 %v9004
    %v9687 = vunpack.c.h.b16 %v9004
    %v9688 = vunpack.c.l.b16 %v9005
    %v9689 = vunpack.c.h.b16 %v9005
    %v9690 = vunpack.c.l.b16 %v9006
    %v9691 = vunpack.c.h.b16 %v9006
    %v9692 = vunpack.c.l.b16 %v9007
    %v9693 = vunpack.c.h.b16 %v9007
    %v9694 = vunpack.c.l.b16 %v9008
    %v9695 = vunpack.c.h.b16 %v9008
    %v9696 = vunpack.c.l.b16 %v9009
    %v9697 = vunpack.c.h.b16 %v9009
    %v9698 = vunpack.c.l.b16 %v9010
    %v9699 = vunpack.c.h.b16 %v9010
    %v9700 = vunpack.c.l.b16 %v9011
    %v9701 = vunpack.c.h.b16 %v9011
    %v9702 = vunpack.c.l.b16 %v9012
    %v9703 = vunpack.c.h.b16 %v9012
    %v9704 = vunpack.c.l.b16 %v9013
    %v9705 = vunpack.c.h.b16 %v9013
    %v9706 = vunpack.c.l.b16 %v9014
    %v9707 = vunpack.c.h.b16 %v9014
    %v9708 = vunpack.c.l.b16 %v9015
    %v9709 = vunpack.c.h.b16 %v9015
    %v9710 = vunpack.c.l.b16 %v9016
    %v9711 = vunpack.c.h.b16 %v9016
    %v9712 = vunpack.c.l.b16 %v9017
    %v9713 = vunpack.c.h.b16 %v9017
    %v9714 = vunpack.c.l.b16 %v9018
    %v9715 = vunpack.c.h.b16 %v9018
    %v9716 = vunpack.c.l.b16 %v9019
    %v9717 = vunpack.c.h.b16 %v9019
    %v9718 = vunpack.c.l.b16 %v9020
    %v9719 = vunpack.c.h.b16 %v9020
    %v9720 = vunpack.c.l.b16 %v9021
    %v9721 = vunpack.c.h.b16 %v9021
    %v9722 = vunpack.c.l.b16 %v9022
    %v9723 = vunpack.c.h.b16 %v9022
    %v9724 = vunpack.c.l.b16 %v9023
    %v9725 = vunpack.c.h.b16 %v9023
    %v9726 = vunpack.c.l.b16 %v9024
    %v9727 = vunpack.c.h.b16 %v9024
    %v9728 = vunpack.c.l.b16 %v9025
    %v9729 = vunpack.c.h.b16 %v9025
    %v9730 = vunpack.c.l.b16 %v9026
    %v9731 = vunpack.c.h.b16 %v9026
    %v9732 = vunpack.c.l.b16 %v9027
    %v9733 = vunpack.c.h.b16 %v9027
    %v9734 = vunpack.c.l.b16 %v9028
    %v9735 = vunpack.c.h.b16 %v9028
    %v9736 = vunpack.c.l.b16 %v9029
    %v9737 = vunpack.c.h.b16 %v9029
    %v9738 = vunpack.c.l.b16 %v9030
    %v9739 = vunpack.c.h.b16 %v9030
    %v9740 = vunpack.c.l.b16 %v9031
    %v9741 = vunpack.c.h.b16 %v9031
    %v9742 = vunpack.c.l.b16 %v9032
    %v9743 = vunpack.c.h.b16 %v9032
    %v9744 = vunpack.c.l.b16 %v9033
    %v9745 = vunpack.c.h.b16 %v9033
    %v9746 = vunpack.c.l.b16 %v9034
    %v9747 = vunpack.c.h.b16 %v9034
    %v9748 = vunpack.c.l.b16 %v9035
    %v9749 = vunpack.c.h.b16 %v9035
    %v9750 = vunpack.c.l.b16 %v9036
    %v9751 = vunpack.c.h.b16 %v9036
    %v9752 = vunpack.c.l.b16 %v9037
    %v9753 = vunpack.c.h.b16 %v9037
    %v9754 = vunpack.c.l.b16 %v9038
    %v9755 = vunpack.c.h.b16 %v9038
    %v9756 = vunpack.c.l.b16 %v9039
    %v9757 = vunpack.c.h.b16 %v9039
    %v9758 = vunpack.c.l.b16 %v9040
    %v9759 = vunpack.c.h.b16 %v9040
    %v9760 = vunpack.c.l.b16 %v9041
    %v9761 = vunpack.c.h.b16 %v9041
    %v9762 = vunpack.c.l.b16 %v9042
    %v9763 = vunpack.c.h.b16 %v9042
    %v9764 = vunpack.c.l.b16 %v9043
    %v9765 = vunpack.c.h.b16 %v9043
    %v9766 = vunpack.c.l.b16 %v9044
    %v9767 = vunpack.c.h.b16 %v9044
    %v9768 = vunpack.c.l.b16 %v9045
    %v9769 = vunpack.c.h.b16 %v9045
    %v9770 = vunpack.c.l.b16 %v9046
    %v9771 = vunpack.c.h.b16 %v9046
    %v9772 = vunpack.c.l.b16 %v9047
    %v9773 = vunpack.c.h.b16 %v9047
    %v9774 = vunpack.c.l.b16 %v9048
    %v9775 = vunpack.c.h.b16 %v9048
    %v9776 = vunpack.c.l.b16 %v9049
    %v9777 = vunpack.c.h.b16 %v9049
    %v9778 = vunpack.c.l.b16 %v9050
    %v9779 = vunpack.c.h.b16 %v9050
    %v9780 = vunpack.c.l.b16 %v9051
    %v9781 = vunpack.c.h.b16 %v9051
    %v9782 = vunpack.c.l.b16 %v9052
    %v9783 = vunpack.c.h.b16 %v9052
    %v9784 = vunpack.c.l.b16 %v9053
    %v9785 = vunpack.c.h.b16 %v9053
    %v9786 = vunpack.c.l.b16 %v9054
    %v9787 = vunpack.c.h.b16 %v9054
    %v9788 = vunpack.c.l.b16 %v9055
    %v9789 = vunpack.c.h.b16 %v9055
    %v9790 = vunpack.c.l.b16 %v9056
    %v9791 = vunpack.c.h.b16 %v9056
    %v9792 = vunpack.c.l.b16 %v9057
    %v9793 = vunpack.c.h.b16 %v9057
    %v9794 = vunpack.c.l.b16 %v9058
    %v9795 = vunpack.c.h.b16 %v9058
    %v9796 = vunpack.c.l.b16 %v9059
    %v9797 = vunpack.c.h.b16 %v9059
    %v9798 = vunpack.c.l.b16 %v9060
    %v9799 = vunpack.c.h.b16 %v9060
    %v9800 = vunpack.c.l.b16 %v9061
    %v9801 = vunpack.c.h.b16 %v9061
    %v9802 = vunpack.c.l.b16 %v9062
    %v9803 = vunpack.c.h.b16 %v9062
    %v9804 = vunpack.c.l.b16 %v9063
    %v9805 = vunpack.c.h.b16 %v9063
    %v9806 = vunpack.c.l.b16 %v9064
    %v9807 = vunpack.c.h.b16 %v9064
    %v9808 = vunpack.c.l.b16 %v9065
    %v9809 = vunpack.c.h.b16 %v9065
    %v9810 = vunpack.c.l.b16 %v9066
    %v9811 = vunpack.c.h.b16 %v9066
    %v9812 = vunpack.c.l.b16 %v9067
    %v9813 = vunpack.c.h.b16 %v9067
    %v9814 = vunpack.c.l.b16 %v9068
    %v9815 = vunpack.c.h.b16 %v9068
    %v9816 = vunpack.c.l.b16 %v9069
    %v9817 = vunpack.c.h.b16 %v9069
    %v9818 = vunpack.c.l.b16 %v9070
    %v9819 = vunpack.c.h.b16 %v9070
    %v9820 = vunpack.c.l.b16 %v9071
    %v9821 = vunpack.c.h.b16 %v9071
    %v9822 = vunpack.c.l.b16 %v9072
    %v9823 = vunpack.c.h.b16 %v9072
    %v9824 = vunpack.c.l.b16 %v9073
    %v9825 = vunpack.c.h.b16 %v9073
    %v9826 = vunpack.c.l.b16 %v9074
    %v9827 = vunpack.c.h.b16 %v9074
    %v9828 = vunpack.c.l.b16 %v9075
    %v9829 = vunpack.c.h.b16 %v9075
    %v9830 = vunpack.c.l.b16 %v9076
    %v9831 = vunpack.c.h.b16 %v9076
    %v9832 = vunpack.c.l.b16 %v9077
    %v9833 = vunpack.c.h.b16 %v9077
    %v9834 = vunpack.c.l.b16 %v9078
    %v9835 = vunpack.c.h.b16 %v9078
    %v9836 = vunpack.c.l.b16 %v9079
    %v9837 = vunpack.c.h.b16 %v9079
    %v9838 = vunpack.c.l.b16 %v9080
    %v9839 = vunpack.c.h.b16 %v9080
    %v9840 = vunpack.c.l.b16 %v9081
    %v9841 = vunpack.c.h.b16 %v9081
    %v9842 = vunpack.c.l.b16 %v9082
    %v9843 = vunpack.c.h.b16 %v9082
    %v9844 = vunpack.c.l.b16 %v9083
    %v9845 = vunpack.c.h.b16 %v9083
    %v9846 = vunpack.c.l.b16 %v9084
    %v9847 = vunpack.c.h.b16 %v9084
    %v9848 = vunpack.c.l.b16 %v9085
    %v9849 = vunpack.c.h.b16 %v9085
    %v9850 = vunpack.c.l.b16 %v9086
    %v9851 = vunpack.c.h.b16 %v9086
    %v9852 = vunpack.c.l.b16 %v9087
    %v9853 = vunpack.c.h.b16 %v9087
    %v9854 = vunpack.c.l.b16 %v9088
    %v9855 = vunpack.c.h.b16 %v9088
    %v9856 = vunpack.c.l.b16 %v9089
    %v9857 = vunpack.c.h.b16 %v9089
    %v9858 = vunpack.c.l.b16 %v9090
    %v9859 = vunpack.c.h.b16 %v9090
    %v9860 = vunpack.c.l.b16 %v9091
    %v9861 = vunpack.c.h.b16 %v9091
    %v9862 = vunpack.c.l.b16 %v9092
    %v9863 = vunpack.c.h.b16 %v9092
    %v9864 = vunpack.c.l.b16 %v9093
    %v9865 = vunpack.c.h.b16 %v9093
    %v9866 = vunpack.c.l.b16 %v9094
    %v9867 = vunpack.c.h.b16 %v9094
    %v9868 = vunpack.c.l.b16 %v9095
    %v9869 = vunpack.c.h.b16 %v9095
    %v9870 = vunpack.c.l.b16 %v9096
    %v9871 = vunpack.c.h.b16 %v9096
    %v9872 = vunpack.c.l.b16 %v9097
    %v9873 = vunpack.c.h.b16 %v9097
    %v9874 = vunpack.c.l.b16 %v9098
    %v9875 = vunpack.c.h.b16 %v9098
    %v9876 = vunpack.c.l.b16 %v9099
    %v9877 = vunpack.c.h.b16 %v9099
    %v9878 = vunpack.c.l.b16 %v9100
    %v9879 = vunpack.c.h.b16 %v9100
    %v9880 = vunpack.c.l.b16 %v9101
    %v9881 = vunpack.c.h.b16 %v9101
    %v9882 = vunpack.c.l.b16 %v9102
    %v9883 = vunpack.c.h.b16 %v9102
    %v9884 = vunpack.c.l.b16 %v9103
    %v9885 = vunpack.c.h.b16 %v9103
    %v9886 = vunpack.c.l.b16 %v9104
    %v9887 = vunpack.c.h.b16 %v9104
    %v9888 = vunpack.c.l.b16 %v9105
    %v9889 = vunpack.c.h.b16 %v9105
    %v9890 = vunpack.c.l.b16 %v9106
    %v9891 = vunpack.c.h.b16 %v9106
    %v9892 = vunpack.c.l.b16 %v9107
    %v9893 = vunpack.c.h.b16 %v9107
    %v9894 = vunpack.c.l.b16 %v9108
    %v9895 = vunpack.c.h.b16 %v9108
    %v9896 = vunpack.c.l.b16 %v9109
    %v9897 = vunpack.c.h.b16 %v9109
    %v9898 = vunpack.c.l.b16 %v9110
    %v9899 = vunpack.c.h.b16 %v9110
    %v9900 = vunpack.c.l.b16 %v9111
    %v9901 = vunpack.c.h.b16 %v9111
    %v9902 = vpack.c.b16 %v9394, %v9390
    %v9903 = vpack.c.b16 %v9395, %v9391
    %v9904 = vpack.c.b16 %v9396, %v9392
    %v9905 = vpack.c.b16 %v9397, %v9393
    %v9906 = vpack.c.b16 %v9402, %v9398
    %v9907 = vpack.c.b16 %v9403, %v9399
    %v9908 = vpack.c.b16 %v9404, %v9400
    %v9909 = vpack.c.b16 %v9405, %v9401
    %v9910 = vpack.c.b16 %v9410, %v9406
    %v9911 = vpack.c.b16 %v9411, %v9407
    %v9912 = vpack.c.b16 %v9412, %v9408
    %v9913 = vpack.c.b16 %v9413, %v9409
    %v9914 = vpack.c.b16 %v9418, %v9414
    %v9915 = vpack.c.b16 %v9419, %v9415
    %v9916 = vpack.c.b16 %v9420, %v9416
    %v9917 = vpack.c.b16 %v9421, %v9417
    %v9918 = vpack.c.b16 %v9426, %v9422
    %v9919 = vpack.c.b16 %v9427, %v9423
    %v9920 = vpack.c.b16 %v9428, %v9424
    %v9921 = vpack.c.b16 %v9429, %v9425
    %v9922 = vpack.c.b16 %v9434, %v9430
    %v9923 = vpack.c.b16 %v9435, %v9431
    %v9924 = vpack.c.b16 %v9436, %v9432
    %v9925 = vpack.c.b16 %v9437, %v9433
    %v9926 = vpack.c.b16 %v9442, %v9438
    %v9927 = vpack.c.b16 %v9443, %v9439
    %v9928 = vpack.c.b16 %v9444, %v9440
    %v9929 = vpack.c.b16 %v9445, %v9441
    %v9930 = vpack.c.b16 %v9450, %v9446
    %v9931 = vpack.c.b16 %v9451, %v9447
    %v9932 = vpack.c.b16 %v9452, %v9448
    %v9933 = vpack.c.b16 %v9453, %v9449
    %v9934 = vpack.c.b16 %v9458, %v9454
    %v9935 = vpack.c.b16 %v9459, %v9455
    %v9936 = vpack.c.b16 %v9460, %v9456
    %v9937 = vpack.c.b16 %v9461, %v9457
    %v9938 = vpack.c.b16 %v9466, %v9462
    %v9939 = vpack.c.b16 %v9467, %v9463
    %v9940 = vpack.c.b16 %v9468, %v9464
    %v9941 = vpack.c.b16 %v9469, %v9465
    %v9942 = vpack.c.b16 %v9474, %v9470
    %v9943 = vpack.c.b16 %v9475, %v9471
    %v9944 = vpack.c.b16 %v9476, %v9472
    %v9945 = vpack.c.b16 %v9477, %v9473
    %v9946 = vpack.c.b16 %v9482, %v9478
    %v9947 = vpack.c.b16 %v9483, %v9479
    %v9948 = vpack.c.b16 %v9484, %v9480
    %v9949 = vpack.c.b16 %v9485, %v9481
    %v9950 = vpack.c.b16 %v9490, %v9486
    %v9951 = vpack.c.b16 %v9491, %v9487
    %v9952 = vpack.c.b16 %v9492, %v9488
    %v9953 = vpack.c.b16 %v9493, %v9489
    %v9954 = vpack.c.b16 %v9498, %v9494
    %v9955 = vpack.c.b16 %v9499, %v9495
    %v9956 = vpack.c.b16 %v9500, %v9496
    %v9957 = vpack.c.b16 %v9501, %v9497
    %v9958 = vpack.c.b16 %v9506, %v9502
    %v9959 = vpack.c.b16 %v9507, %v9503
    %v9960 = vpack.c.b16 %v9508, %v9504
    %v9961 = vpack.c.b16 %v9509, %v9505
    %v9962 = vpack.c.b16 %v9514, %v9510
    %v9963 = vpack.c.b16 %v9515, %v9511
    %v9964 = vpack.c.b16 %v9516, %v9512
    %v9965 = vpack.c.b16 %v9517, %v9513
    %v9966 = vpack.c.b16 %v9522, %v9518
    %v9967 = vpack.c.b16 %v9523, %v9519
    %v9968 = vpack.c.b16 %v9524, %v9520
    %v9969 = vpack.c.b16 %v9525, %v9521
    %v9970 = vpack.c.b16 %v9530, %v9526
    %v9971 = vpack.c.b16 %v9531, %v9527
    %v9972 = vpack.c.b16 %v9532, %v9528
    %v9973 = vpack.c.b16 %v9533, %v9529
    %v9974 = vpack.c.b16 %v9538, %v9534
    %v9975 = vpack.c.b16 %v9539, %v9535
    %v9976 = vpack.c.b16 %v9540, %v9536
    %v9977 = vpack.c.b16 %v9541, %v9537
    %v9978 = vpack.c.b16 %v9546, %v9542
    %v9979 = vpack.c.b16 %v9547, %v9543
    %v9980 = vpack.c.b16 %v9548, %v9544
    %v9981 = vpack.c.b16 %v9549, %v9545
    %v9982 = vpack.c.b16 %v9554, %v9550
    %v9983 = vpack.c.b16 %v9555, %v9551
    %v9984 = vpack.c.b16 %v9556, %v9552
    %v9985 = vpack.c.b16 %v9557, %v9553
    %v9986 = vpack.c.b16 %v9562, %v9558
    %v9987 = vpack.c.b16 %v9563, %v9559
    %v9988 = vpack.c.b16 %v9564, %v9560
    %v9989 = vpack.c.b16 %v9565, %v9561
    %v9990 = vpack.c.b16 %v9570, %v9566
    %v9991 = vpack.c.b16 %v9571, %v9567
    %v9992 = vpack.c.b16 %v9572, %v9568
    %v9993 = vpack.c.b16 %v9573, %v9569
    %v9994 = vpack.c.b16 %v9578, %v9574
    %v9995 = vpack.c.b16 %v9579, %v9575
    %v9996 = vpack.c.b16 %v9580, %v9576
    %v9997 = vpack.c.b16 %v9581, %v9577
    %v9998 = vpack.c.b16 %v9586, %v9582
    %v9999 = vpack.c.b16 %v9587, %v9583
    %v10000 = vpack.c.b16 %v9588, %v9584
    %v10001 = vpack.c.b16 %v9589, %v9585
    %v10002 = vpack.c.b16 %v9594, %v9590
    %v10003 = vpack.c.b16 %v9595, %v9591
    %v10004 = vpack.c.b16 %v9596, %v9592
    %v10005 = vpack.c.b16 %v9597, %v9593
    %v10006 = vpack.c.b16 %v9602, %v9598
    %v10007 = vpack.c.b16 %v9603, %v9599
    %v10008 = vpack.c.b16 %v9604, %v9600
    %v10009 = vpack.c.b16 %v9605, %v9601
    %v10010 = vpack.c.b16 %v9610, %v9606
    %v10011 = vpack.c.b16 %v9611, %v9607
    %v10012 = vpack.c.b16 %v9612, %v9608
    %v10013 = vpack.c.b16 %v9613, %v9609
    %v10014 = vpack.c.b16 %v9618, %v9614
    %v10015 = vpack.c.b16 %v9619, %v9615
    %v10016 = vpack.c.b16 %v9620, %v9616
    %v10017 = vpack.c.b16 %v9621, %v9617
    %v10018 = vpack.c.b16 %v9626, %v9622
    %v10019 = vpack.c.b16 %v9627, %v9623
    %v10020 = vpack.c.b16 %v9628, %v9624
    %v10021 = vpack.c.b16 %v9629, %v9625
    %v10022 = vpack.c.b16 %v9634, %v9630
    %v10023 = vpack.c.b16 %v9635, %v9631
    %v10024 = vpack.c.b16 %v9636, %v9632
    %v10025 = vpack.c.b16 %v9637, %v9633
    %v10026 = vpack.c.b16 %v9642, %v9638
    %v10027 = vpack.c.b16 %v9643, %v9639
    %v10028 = vpack.c.b16 %v9644, %v9640
    %v10029 = vpack.c.b16 %v9645, %v9641
    %v10030 = vpack.c.b16 %v9650, %v9646
    %v10031 = vpack.c.b16 %v9651, %v9647
    %v10032 = vpack.c.b16 %v9652, %v9648
    %v10033 = vpack.c.b16 %v9653, %v9649
    %v10034 = vpack.c.b16 %v9658, %v9654
    %v10035 = vpack.c.b16 %v9659, %v9655
    %v10036 = vpack.c.b16 %v9660, %v9656
    %v10037 = vpack.c.b16 %v9661, %v9657
    %v10038 = vpack.c.b16 %v9666, %v9662
    %v10039 = vpack.c.b16 %v9667, %v9663
    %v10040 = vpack.c.b16 %v9668, %v9664
    %v10041 = vpack.c.b16 %v9669, %v9665
    %v10042 = vpack.c.b16 %v9674, %v9670
    %v10043 = vpack.c.b16 %v9675, %v9671
    %v10044 = vpack.c.b16 %v9676, %v9672
    %v10045 = vpack.c.b16 %v9677, %v9673
    %v10046 = vpack.c.b16 %v9682, %v9678
    %v10047 = vpack.c.b16 %v9683, %v9679
    %v10048 = vpack.c.b16 %v9684, %v9680
    %v10049 = vpack.c.b16 %v9685, %v9681
    %v10050 = vpack.c.b16 %v9690, %v9686
    %v10051 = vpack.c.b16 %v9691, %v9687
    %v10052 = vpack.c.b16 %v9692, %v9688
    %v10053 = vpack.c.b16 %v9693, %v9689
    %v10054 = vpack.c.b16 %v9698, %v9694
    %v10055 = vpack.c.b16 %v9699, %v9695
    %v10056 = vpack.c.b16 %v9700, %v9696
    %v10057 = vpack.c.b16 %v9701, %v9697
    %v10058 = vpack.c.b16 %v9706, %v9702
    %v10059 = vpack.c.b16 %v9707, %v9703
    %v10060 = vpack.c.b16 %v9708, %v9704
    %v10061 = vpack.c.b16 %v9709, %v9705
    %v10062 = vpack.c.b16 %v9714, %v9710
    %v10063 = vpack.c.b16 %v9715, %v9711
    %v10064 = vpack.c.b16 %v9716, %v9712
    %v10065 = vpack.c.b16 %v9717, %v9713
    %v10066 = vpack.c.b16 %v9722, %v9718
    %v10067 = vpack.c.b16 %v9723, %v9719
    %v10068 = vpack.c.b16 %v9724, %v9720
    %v10069 = vpack.c.b16 %v9725, %v9721
    %v10070 = vpack.c.b16 %v9730, %v9726
    %v10071 = vpack.c.b16 %v9731, %v9727
    %v10072 = vpack.c.b16 %v9732, %v9728
    %v10073 = vpack.c.b16 %v9733, %v9729
    %v10074 = vpack.c.b16 %v9738, %v9734
    %v10075 = vpack.c.b16 %v9739, %v9735
    %v10076 = vpack.c.b16 %v9740, %v9736
    %v10077 = vpack.c.b16 %v9741, %v9737
    %v10078 = vpack.c.b16 %v9746, %v9742
    %v10079 = vpack.c.b16 %v9747, %v9743
    %v10080 = vpack.c.b16 %v9748, %v9744
    %v10081 = vpack.c.b16 %v9749, %v9745
    %v10082 = vpack.c.b16 %v9754, %v9750
    %v10083 = vpack.c.b16 %v9755, %v9751
    %v10084 = vpack.c.b16 %v9756, %v9752
    %v10085 = vpack.c.b16 %v9757, %v9753
    %v10086 = vpack.c.b16 %v9762, %v9758
    %v10087 = vpack.c.b16 %v9763, %v9759
    %v10088 = vpack.c.b16 %v9764, %v9760
    %v10089 = vpack.c.b16 %v9765, %v9761
    %v10090 = vpack.c.b16 %v9770, %v9766
    %v10091 = vpack.c.b16 %v9771, %v9767
    %v10092 = vpack.c.b16 %v9772, %v9768
    %v10093 = vpack.c.b16 %v9773, %v9769
    %v10094 = vpack.c.b16 %v9778, %v9774
    %v10095 = vpack.c.b16 %v9779, %v9775
    %v10096 = vpack.c.b16 %v9780, %v9776
    %v10097 = vpack.c.b16 %v9781, %v9777
    %v10098 = vpack.c.b16 %v9786, %v9782
    %v10099 = vpack.c.b16 %v9787, %v9783
    %v10100 = vpack.c.b16 %v9788, %v9784
    %v10101 = vpack.c.b16 %v9789, %v9785
    %v10102 = vpack.c.b16 %v9794, %v9790
    %v10103 = vpack.c.b16 %v9795, %v9791
    %v10104 = vpack.c.b16 %v9796, %v9792
    %v10105 = vpack.c.b16 %v9797, %v9793
    %v10106 = vpack.c.b16 %v9802, %v9798
    %v10107 = vpack.c.b16 %v9803, %v9799
    %v10108 = vpack.c.b16 %v9804, %v9800
    %v10109 = vpack.c.b16 %v9805, %v9801
    %v10110 = vpack.c.b16 %v9810, %v9806
    %v10111 = vpack.c.b16 %v9811, %v9807
    %v10112 = vpack.c.b16 %v9812, %v9808
    %v10113 = vpack.c.b16 %v9813, %v9809
    %v10114 = vpack.c.b16 %v9818, %v9814
    %v10115 = vpack.c.b16 %v9819, %v9815
    %v10116 = vpack.c.b16 %v9820, %v9816
    %v10117 = vpack.c.b16 %v9821, %v9817
    %v10118 = vpack.c.b16 %v9826, %v9822
    %v10119 = vpack.c.b16 %v9827, %v9823
    %v10120 = vpack.c.b16 %v9828, %v9824
    %v10121 = vpack.c.b16 %v9829, %v9825
    %v10122 = vpack.c.b16 %v9834, %v9830
    %v10123 = vpack.c.b16 %v9835, %v9831
    %v10124 = vpack.c.b16 %v9836, %v9832
    %v10125 = vpack.c.b16 %v9837, %v9833
    %v10126 = vpack.c.b16 %v9842, %v9838
    %v10127 = vpack.c.b16 %v9843, %v9839
    %v10128 = vpack.c.b16 %v9844, %v9840
    %v10129 = vpack.c.b16 %v9845, %v9841
    %v10130 = vpack.c.b16 %v9850, %v9846
    %v10131 = vpack.c.b16 %v9851, %v9847
    %v10132 = vpack.c.b16 %v9852, %v9848
    %v10133 = vpack.c.b16 %v9853, %v9849
    %v10134 = vpack.c.b16 %v9858, %v9854
    %v10135 = vpack.c.b16 %v9859, %v9855
    %v10136 = vpack.c.b16 %v9860, %v9856
    %v10137 = vpack.c.b16 %v9861, %v9857
    %v10138 = vpack.c.b16 %v9866, %v9862
    %v10139 = vpack.c.b16 %v9867, %v9863
    %v10140 = vpack.c.b16 %v9868, %v9864
    %v10141 = vpack.c.b16 %v9869, %v9865
    %v10142 = vpack.c.b16 %v9874, %v9870
    %v10143 = vpack.c.b16 %v9875, %v9871
    %v10144 = vpack.c.b16 %v9876, %v9872
    %v10145 = vpack.c.b16 %v9877, %v9873
    %v10146 = vpack.c.b16 %v9882, %v9878
    %v10147 = vpack.c.b16 %v9883, %v9879
    %v10148 = vpack.c.b16 %v9884, %v9880
    %v10149 = vpack.c.b16 %v9885, %v9881
    %v10150 = vpack.c.b16 %v9890, %v9886
    %v10151 = vpack.c.b16 %v9891, %v9887
    %v10152 = vpack.c.b16 %v9892, %v9888
    %v10153 = vpack.c.b16 %v9893, %v9889
    %v10154 = vpack.c.b16 %v9898, %v9894
    %v10155 = vpack.c.b16 %v9899, %v9895
    %v10156 = vpack.c.b16 %v9900, %v9896
    %v10157 = vpack.c.b16 %v9901, %v9897
    %10414 = vmatprep.subr.bf16.mxu0 %v9903
    %10415 = vmatpush1.bf16.msra.mxu0 %v9902
    %10416 = vmatprep.subr.bf16.mxu0 %v9907
    %10417 = vmatpush1.bf16.msra.mxu0 %v9906
    %10418 = vmatprep.subr.bf16.mxu0 %v9911
    %10419 = vmatpush1.bf16.msra.mxu0 %v9910
    %10420 = vmatprep.subr.bf16.mxu0 %v9915
    %10421 = vmatpush1.bf16.msra.mxu0 %v9914
    %10422 = vmatprep.subr.bf16.mxu0 %v9919
    %10423 = vmatpush1.bf16.msra.mxu0 %v9918
    %10424 = vmatprep.subr.bf16.mxu0 %v9923
    %10425 = vmatpush1.bf16.msra.mxu0 %v9922
    %10426 = vmatprep.subr.bf16.mxu0 %v9927
    %10427 = vmatpush1.bf16.msra.mxu0 %v9926
    %10428 = vmatprep.subr.bf16.mxu0 %v9931
    %10429 = vmatpush1.bf16.msra.mxu0 %v9930
    %10430 = vmatprep.subr.bf16.mxu0 %v9935
    %10431 = vmatpush1.bf16.msra.mxu0 %v9934
    %10432 = vmatprep.subr.bf16.mxu0 %v9939
    %10433 = vmatpush1.bf16.msra.mxu0 %v9938
    %10434 = vmatprep.subr.bf16.mxu0 %v9943
    %10435 = vmatpush1.bf16.msra.mxu0 %v9942
    %10436 = vmatprep.subr.bf16.mxu0 %v9947
    %10437 = vmatpush1.bf16.msra.mxu0 %v9946
    %10438 = vmatprep.subr.bf16.mxu0 %v9951
    %10439 = vmatpush1.bf16.msra.mxu0 %v9950
    %10440 = vmatprep.subr.bf16.mxu0 %v9955
    %10441 = vmatpush1.bf16.msra.mxu0 %v9954
    %10442 = vmatprep.subr.bf16.mxu0 %v9959
    %10443 = vmatpush1.bf16.msra.mxu0 %v9958
    %10444 = vmatprep.subr.bf16.mxu0 %v9963
    %10445 = vmatpush1.bf16.msra.mxu0 %v9962
    %10446 = vmatprep.mubr.bf16.mxu0 %v8849
    %10447 = vmatmul.mubr.bf16.gmra.mrb[0].mxu0 %v8848
    %v10448 = vpop.f32.mrb[0].mxu0
    %v10449 = vadd.f32 %v9117, %v10448
    %v10450 = vpop.f32.mrb[0].mxu0
    %v10451 = vadd.f32 %v9121, %v10450
    %v10452 = vpop.f32.mrb[0].mxu0
    %v10453 = vadd.f32 %v9117, %v10452
    %v10454 = vpop.f32.mrb[0].mxu0
    %v10455 = vadd.f32 %v9121, %v10454
    %10456 = vdwg.mxu0
    %10457 = vmatprep.subr.bf16.mxu0 %v9967
    %10458 = vmatpush1.bf16.msra.mxu0 %v9966
    %10459 = vmatprep.subr.bf16.mxu0 %v9971
    %10460 = vmatpush1.bf16.msra.mxu0 %v9970
    %10461 = vmatprep.subr.bf16.mxu0 %v9975
    %10462 = vmatpush1.bf16.msra.mxu0 %v9974
    %10463 = vmatprep.subr.bf16.mxu0 %v9979
    %10464 = vmatpush1.bf16.msra.mxu0 %v9978
    %10465 = vmatprep.subr.bf16.mxu0 %v9983
    %10466 = vmatpush1.bf16.msra.mxu0 %v9982
    %10467 = vmatprep.subr.bf16.mxu0 %v9987
    %10468 = vmatpush1.bf16.msra.mxu0 %v9986
    %10469 = vmatprep.subr.bf16.mxu0 %v9991
    %10470 = vmatpush1.bf16.msra.mxu0 %v9990
    %10471 = vmatprep.subr.bf16.mxu0 %v9995
    %10472 = vmatpush1.bf16.msra.mxu0 %v9994
    %10473 = vmatprep.subr.bf16.mxu0 %v9999
    %10474 = vmatpush1.bf16.msra.mxu0 %v9998
    %10475 = vmatprep.subr.bf16.mxu0 %v10003
    %10476 = vmatpush1.bf16.msra.mxu0 %v10002
    %10477 = vmatprep.subr.bf16.mxu0 %v10007
    %10478 = vmatpush1.bf16.msra.mxu0 %v10006
    %10479 = vmatprep.subr.bf16.mxu0 %v10011
    %10480 = vmatpush1.bf16.msra.mxu0 %v10010
    %10481 = vmatprep.subr.bf16.mxu0 %v10015
    %10482 = vmatpush1.bf16.msra.mxu0 %v10014
    %10483 = vmatprep.subr.bf16.mxu0 %v10019
    %10484 = vmatpush1.bf16.msra.mxu0 %v10018
    %10485 = vmatprep.subr.bf16.mxu0 %v10023
    %10486 = vmatpush1.bf16.msra.mxu0 %v10022
    %10487 = vmatprep.subr.bf16.mxu0 %v10027
    %10488 = vmatpush1.bf16.msra.mxu0 %v10026
    %10489 = vmatprep.mubr.bf16.mxu0 %v8851
    %10490 = vmatmul.mubr.bf16.gmra.mrb[0].mxu0 %v8850
    %v10491 = vpop.f32.mrb[0].mxu0
    %v10492 = vadd.f32 %v10449, %v10491
    %v10493 = vpop.f32.mrb[0].mxu0
    %v10494 = vadd.f32 %v10451, %v10493
    %v10495 = vpop.f32.mrb[0].mxu0
    %v10496 = vadd.f32 %v10453, %v10495
    %v10497 = vpop.f32.mrb[0].mxu0
    %v10498 = vadd.f32 %v10455, %v10497
    %10499 = vdwg.mxu0
    %10500 = vmatprep.subr.bf16.mxu0 %v10031
    %10501 = vmatpush1.bf16.msra.mxu0 %v10030
    %10502 = vmatprep.subr.bf16.mxu0 %v10035
    %10503 = vmatpush1.bf16.msra.mxu0 %v10034
    %10504 = vmatprep.subr.bf16.mxu0 %v10039
    %10505 = vmatpush1.bf16.msra.mxu0 %v10038
    %10506 = vmatprep.subr.bf16.mxu0 %v10043
    %10507 = vmatpush1.bf16.msra.mxu0 %v10042
    %10508 = vmatprep.subr.bf16.mxu0 %v10047
    %10509 = vmatpush1.bf16.msra.mxu0 %v10046
    %10510 = vmatprep.subr.bf16.mxu0 %v10051
    %10511 = vmatpush1.bf16.msra.mxu0 %v10050
    %10512 = vmatprep.subr.bf16.mxu0 %v10055
    %10513 = vmatpush1.bf16.msra.mxu0 %v10054
    %10514 = vmatprep.subr.bf16.mxu0 %v10059
    %10515 = vmatpush1.bf16.msra.mxu0 %v10058
    %10516 = vmatprep.subr.bf16.mxu0 %v10063
    %10517 = vmatpush1.bf16.msra.mxu0 %v10062
    %10518 = vmatprep.subr.bf16.mxu0 %v10067
    %10519 = vmatpush1.bf16.msra.mxu0 %v10066
    %10520 = vmatprep.subr.bf16.mxu0 %v10071
    %10521 = vmatpush1.bf16.msra.mxu0 %v10070
    %10522 = vmatprep.subr.bf16.mxu0 %v10075
    %10523 = vmatpush1.bf16.msra.mxu0 %v10074
    %10524 = vmatprep.subr.bf16.mxu0 %v10079
    %10525 = vmatpush1.bf16.msra.mxu0 %v10078
    %10526 = vmatprep.subr.bf16.mxu0 %v10083
    %10527 = vmatpush1.bf16.msra.mxu0 %v10082
    %10528 = vmatprep.subr.bf16.mxu0 %v10087
    %10529 = vmatpush1.bf16.msra.mxu0 %v10086
    %10530 = vmatprep.subr.bf16.mxu0 %v10091
    %10531 = vmatpush1.bf16.msra.mxu0 %v10090
    %10532 = vmatprep.mubr.bf16.mxu0 %v8853
    %10533 = vmatmul.mubr.bf16.gmra.mrb[0].mxu0 %v8852
    %v10534 = vpop.f32.mrb[0].mxu0
    %v10535 = vadd.f32 %v10492, %v10534
    %v10536 = vpop.f32.mrb[0].mxu0
    %v10537 = vadd.f32 %v10494, %v10536
    %v10538 = vpop.f32.mrb[0].mxu0
    %v10539 = vadd.f32 %v10496, %v10538
    %v10540 = vpop.f32.mrb[0].mxu0
    %v10541 = vadd.f32 %v10498, %v10540
    %10542 = vdwg.mxu0
    %10543 = vmatprep.subr.bf16.mxu0 %v10095
    %10544 = vmatpush1.bf16.msra.mxu0 %v10094
    %10545 = vmatprep.subr.bf16.mxu0 %v10099
    %10546 = vmatpush1.bf16.msra.mxu0 %v10098
    %10547 = vmatprep.subr.bf16.mxu0 %v10103
    %10548 = vmatpush1.bf16.msra.mxu0 %v10102
    %10549 = vmatprep.subr.bf16.mxu0 %v10107
    %10550 = vmatpush1.bf16.msra.mxu0 %v10106
    %10551 = vmatprep.subr.bf16.mxu0 %v10111
    %10552 = vmatpush1.bf16.msra.mxu0 %v10110
    %10553 = vmatprep.subr.bf16.mxu0 %v10115
    %10554 = vmatpush1.bf16.msra.mxu0 %v10114
    %10555 = vmatprep.subr.bf16.mxu0 %v10119
    %10556 = vmatpush1.bf16.msra.mxu0 %v10118
    %10557 = vmatprep.subr.bf16.mxu0 %v10123
    %10558 = vmatpush1.bf16.msra.mxu0 %v10122
    %10559 = vmatprep.subr.bf16.mxu0 %v10127
    %10560 = vmatpush1.bf16.msra.mxu0 %v10126
    %10561 = vmatprep.subr.bf16.mxu0 %v10131
    %10562 = vmatpush1.bf16.msra.mxu0 %v10130
    %10563 = vmatprep.subr.bf16.mxu0 %v10135
    %10564 = vmatpush1.bf16.msra.mxu0 %v10134
    %10565 = vmatprep.subr.bf16.mxu0 %v10139
    %10566 = vmatpush1.bf16.msra.mxu0 %v10138
    %10567 = vmatprep.subr.bf16.mxu0 %v10143
    %10568 = vmatpush1.bf16.msra.mxu0 %v10142
    %10569 = vmatprep.subr.bf16.mxu0 %v10147
    %10570 = vmatpush1.bf16.msra.mxu0 %v10146
    %10571 = vmatprep.subr.bf16.mxu0 %v10151
    %10572 = vmatpush1.bf16.msra.mxu0 %v10150
    %10573 = vmatprep.subr.bf16.mxu0 %v10155
    %10574 = vmatpush1.bf16.msra.mxu0 %v10154
    %10575 = vmatprep.mubr.bf16.mxu0 %v8855
    %10576 = vmatmul.mubr.bf16.gmra.mrb[0].mxu0 %v8854
    %v10577 = vpop.f32.mrb[0].mxu0
    %v10578 = vadd.f32 %v10535, %v10577
    %v10579 = vpop.f32.mrb[0].mxu0
    %v10580 = vadd.f32 %v10537, %v10579
    %v10581 = vpop.f32.mrb[0].mxu0
    %v10582 = vadd.f32 %v10539, %v10581
    %v10583 = vpop.f32.mrb[0].mxu0
    %v10584 = vadd.f32 %v10541, %v10583
    %10585 = vdwg.mxu0
    %10586 = vmatprep.subr.bf16.mxu0 %v9905
    %10587 = vmatpush1.bf16.msra.mxu0 %v9904
    %10588 = vmatprep.subr.bf16.mxu0 %v9909
    %10589 = vmatpush1.bf16.msra.mxu0 %v9908
    %10590 = vmatprep.subr.bf16.mxu0 %v9913
    %10591 = vmatpush1.bf16.msra.mxu0 %v9912
    %10592 = vmatprep.subr.bf16.mxu0 %v9917
    %10593 = vmatpush1.bf16.msra.mxu0 %v9916
    %10594 = vmatprep.subr.bf16.mxu0 %v9921
    %10595 = vmatpush1.bf16.msra.mxu0 %v9920
    %10596 = vmatprep.subr.bf16.mxu0 %v9925
    %10597 = vmatpush1.bf16.msra.mxu0 %v9924
    %10598 = vmatprep.subr.bf16.mxu0 %v9929
    %10599 = vmatpush1.bf16.msra.mxu0 %v9928
    %10600 = vmatprep.subr.bf16.mxu0 %v9933
    %10601 = vmatpush1.bf16.msra.mxu0 %v9932
    %10602 = vmatprep.subr.bf16.mxu0 %v9937
    %10603 = vmatpush1.bf16.msra.mxu0 %v9936
    %10604 = vmatprep.subr.bf16.mxu0 %v9941
    %10605 = vmatpush1.bf16.msra.mxu0 %v9940
    %10606 = vmatprep.subr.bf16.mxu0 %v9945
    %10607 = vmatpush1.bf16.msra.mxu0 %v9944
    %10608 = vmatprep.subr.bf16.mxu0 %v9949
    %10609 = vmatpush1.bf16.msra.mxu0 %v9948
    %10610 = vmatprep.subr.bf16.mxu0 %v9953
    %10611 = vmatpush1.bf16.msra.mxu0 %v9952
    %10612 = vmatprep.subr.bf16.mxu0 %v9957
    %10613 = vmatpush1.bf16.msra.mxu0 %v9956
    %10614 = vmatprep.subr.bf16.mxu0 %v9961
    %10615 = vmatpush1.bf16.msra.mxu0 %v9960
    %10616 = vmatprep.subr.bf16.mxu0 %v9965
    %10617 = vmatpush1.bf16.msra.mxu0 %v9964
    %10618 = vmatprep.mubr.bf16.mxu0 %v8849
    %10619 = vmatmul.mubr.bf16.gmra.mrb[0].mxu0 %v8848
    %v10620 = vpop.f32.mrb[0].mxu0
    %v10621 = vadd.f32 %v9125, %v10620
    %v10622 = vpop.f32.mrb[0].mxu0
    %v10623 = vadd.f32 %v9129, %v10622
    %v10624 = vpop.f32.mrb[0].mxu0
    %v10625 = vadd.f32 %v9125, %v10624
    %v10626 = vpop.f32.mrb[0].mxu0
    %v10627 = vadd.f32 %v9129, %v10626
    %10628 = vdwg.mxu0
    %10629 = vmatprep.subr.bf16.mxu0 %v9969
    %10630 = vmatpush1.bf16.msra.mxu0 %v9968
    %10631 = vmatprep.subr.bf16.mxu0 %v9973
    %10632 = vmatpush1.bf16.msra.mxu0 %v9972
    %10633 = vmatprep.subr.bf16.mxu0 %v9977
    %10634 = vmatpush1.bf16.msra.mxu0 %v9976
    %10635 = vmatprep.subr.bf16.mxu0 %v9981
    %10636 = vmatpush1.bf16.msra.mxu0 %v9980
    %10637 = vmatprep.subr.bf16.mxu0 %v9985
    %10638 = vmatpush1.bf16.msra.mxu0 %v9984
    %10639 = vmatprep.subr.bf16.mxu0 %v9989
    %10640 = vmatpush1.bf16.msra.mxu0 %v9988
    %10641 = vmatprep.subr.bf16.mxu0 %v9993
    %10642 = vmatpush1.bf16.msra.mxu0 %v9992
    %10643 = vmatprep.subr.bf16.mxu0 %v9997
    %10644 = vmatpush1.bf16.msra.mxu0 %v9996
    %10645 = vmatprep.subr.bf16.mxu0 %v10001
    %10646 = vmatpush1.bf16.msra.mxu0 %v10000
    %10647 = vmatprep.subr.bf16.mxu0 %v10005
    %10648 = vmatpush1.bf16.msra.mxu0 %v10004
    %10649 = vmatprep.subr.bf16.mxu0 %v10009
    %10650 = vmatpush1.bf16.msra.mxu0 %v10008
    %10651 = vmatprep.subr.bf16.mxu0 %v10013
    %10652 = vmatpush1.bf16.msra.mxu0 %v10012
    %10653 = vmatprep.subr.bf16.mxu0 %v10017
    %10654 = vmatpush1.bf16.msra.mxu0 %v10016
    %10655 = vmatprep.subr.bf16.mxu0 %v10021
    %10656 = vmatpush1.bf16.msra.mxu0 %v10020
    %10657 = vmatprep.subr.bf16.mxu0 %v10025
    %10658 = vmatpush1.bf16.msra.mxu0 %v10024
    %10659 = vmatprep.subr.bf16.mxu0 %v10029
    %10660 = vmatpush1.bf16.msra.mxu0 %v10028
    %10661 = vmatprep.mubr.bf16.mxu0 %v8851
    %10662 = vmatmul.mubr.bf16.gmra.mrb[0].mxu0 %v8850
    %v10663 = vpop.f32.mrb[0].mxu0
    %v10664 = vadd.f32 %v10621, %v10663
    %v10665 = vpop.f32.mrb[0].mxu0
    %v10666 = vadd.f32 %v10623, %v10665
    %v10667 = vpop.f32.mrb[0].mxu0
    %v10668 = vadd.f32 %v10625, %v10667
    %v10669 = vpop.f32.mrb[0].mxu0
    %v10670 = vadd.f32 %v10627, %v10669
    %10671 = vdwg.mxu0
    %10672 = vmatprep.subr.bf16.mxu0 %v10033
    %10673 = vmatpush1.bf16.msra.mxu0 %v10032
    %10674 = vmatprep.subr.bf16.mxu0 %v10037
    %10675 = vmatpush1.bf16.msra.mxu0 %v10036
    %10676 = vmatprep.subr.bf16.mxu0 %v10041
    %10677 = vmatpush1.bf16.msra.mxu0 %v10040
    %10678 = vmatprep.subr.bf16.mxu0 %v10045
    %10679 = vmatpush1.bf16.msra.mxu0 %v10044
    %10680 = vmatprep.subr.bf16.mxu0 %v10049
    %10681 = vmatpush1.bf16.msra.mxu0 %v10048
    %10682 = vmatprep.subr.bf16.mxu0 %v10053
    %10683 = vmatpush1.bf16.msra.mxu0 %v10052
    %10684 = vmatprep.subr.bf16.mxu0 %v10057
    %10685 = vmatpush1.bf16.msra.mxu0 %v10056
    %10686 = vmatprep.subr.bf16.mxu0 %v10061
    %10687 = vmatpush1.bf16.msra.mxu0 %v10060
    %10688 = vmatprep.subr.bf16.mxu0 %v10065
    %10689 = vmatpush1.bf16.msra.mxu0 %v10064
    %10690 = vmatprep.subr.bf16.mxu0 %v10069
    %10691 = vmatpush1.bf16.msra.mxu0 %v10068
    %10692 = vmatprep.subr.bf16.mxu0 %v10073
    %10693 = vmatpush1.bf16.msra.mxu0 %v10072
    %10694 = vmatprep.subr.bf16.mxu0 %v10077
    %10695 = vmatpush1.bf16.msra.mxu0 %v10076
    %10696 = vmatprep.subr.bf16.mxu0 %v10081
    %10697 = vmatpush1.bf16.msra.mxu0 %v10080
    %10698 = vmatprep.subr.bf16.mxu0 %v10085
    %10699 = vmatpush1.bf16.msra.mxu0 %v10084
    %10700 = vmatprep.subr.bf16.mxu0 %v10089
    %10701 = vmatpush1.bf16.msra.mxu0 %v10088
    %10702 = vmatprep.subr.bf16.mxu0 %v10093
    %10703 = vmatpush1.bf16.msra.mxu0 %v10092
    %10704 = vmatprep.mubr.bf16.mxu0 %v8853
    %10705 = vmatmul.mubr.bf16.gmra.mrb[0].mxu0 %v8852
    %v10706 = vpop.f32.mrb[0].mxu0
    %v10707 = vadd.f32 %v10664, %v10706
    %v10708 = vpop.f32.mrb[0].mxu0
    %v10709 = vadd.f32 %v10666, %v10708
    %v10710 = vpop.f32.mrb[0].mxu0
    %v10711 = vadd.f32 %v10668, %v10710
    %v10712 = vpop.f32.mrb[0].mxu0
    %v10713 = vadd.f32 %v10670, %v10712
    %10714 = vdwg.mxu0
    %10715 = vmatprep.subr.bf16.mxu0 %v10097
    %10716 = vmatpush1.bf16.msra.mxu0 %v10096
    %10717 = vmatprep.subr.bf16.mxu0 %v10101
    %10718 = vmatpush1.bf16.msra.mxu0 %v10100
    %10719 = vmatprep.subr.bf16.mxu0 %v10105
    %10720 = vmatpush1.bf16.msra.mxu0 %v10104
    %10721 = vmatprep.subr.bf16.mxu0 %v10109
    %10722 = vmatpush1.bf16.msra.mxu0 %v10108
    %10723 = vmatprep.subr.bf16.mxu0 %v10113
    %10724 = vmatpush1.bf16.msra.mxu0 %v10112
    %10725 = vmatprep.subr.bf16.mxu0 %v10117
    %10726 = vmatpush1.bf16.msra.mxu0 %v10116
    %10727 = vmatprep.subr.bf16.mxu0 %v10121
    %10728 = vmatpush1.bf16.msra.mxu0 %v10120
    %10729 = vmatprep.subr.bf16.mxu0 %v10125
    %10730 = vmatpush1.bf16.msra.mxu0 %v10124
    %10731 = vmatprep.subr.bf16.mxu0 %v10129
    %10732 = vmatpush1.bf16.msra.mxu0 %v10128
    %10733 = vmatprep.subr.bf16.mxu0 %v10133
    %10734 = vmatpush1.bf16.msra.mxu0 %v10132
    %10735 = vmatprep.subr.bf16.mxu0 %v10137
    %10736 = vmatpush1.bf16.msra.mxu0 %v10136
    %10737 = vmatprep.subr.bf16.mxu0 %v10141
    %10738 = vmatpush1.bf16.msra.mxu0 %v10140
    %10739 = vmatprep.subr.bf16.mxu0 %v10145
    %10740 = vmatpush1.bf16.msra.mxu0 %v10144
    %10741 = vmatprep.subr.bf16.mxu0 %v10149
    %10742 = vmatpush1.bf16.msra.mxu0 %v10148
    %10743 = vmatprep.subr.bf16.mxu0 %v10153
    %10744 = vmatpush1.bf16.msra.mxu0 %v10152
    %10745 = vmatprep.subr.bf16.mxu0 %v10157
    %10746 = vmatpush1.bf16.msra.mxu0 %v10156
    %10747 = vmatprep.mubr.bf16.mxu0 %v8855
    %10748 = vmatmul.mubr.bf16.gmra.mrb[0].mxu0 %v8854
    %v10749 = vpop.f32.mrb[0].mxu0
    %v10750 = vadd.f32 %v10707, %v10749
    %v10751 = vpop.f32.mrb[0].mxu0
    %v10752 = vadd.f32 %v10709, %v10751
    %v10753 = vpop.f32.mrb[0].mxu0
    %v10754 = vadd.f32 %v10711, %v10753
    %v10755 = vpop.f32.mrb[0].mxu0
    %v10756 = vadd.f32 %v10713, %v10755
    %10757 = vdwg.mxu0
    %10758 = vst [vmem:[#allocation14] sm:$0xff] %v10578
    %10759 = vst [vmem:[#allocation14 + $0x8] sm:$0xff] %v10580
    %10760 = vst [vmem:[#allocation14 + $0x10] sm:$0xff] %v10750
    %10761 = vst [vmem:[#allocation14 + $0x18] sm:$0xff] %v10752
    %10762 = vst [vmem:[#allocation14 + $0x20] sm:$0xff] %v10582
    %10763 = vst [vmem:[#allocation14 + $0x28] sm:$0xff] %v10584
    %10764 = vst [vmem:[#allocation14 + $0x30] sm:$0xff] %v10754
    %10765 = vst [vmem:[#allocation14 + $0x38] sm:$0xff] %v10756
    // Predicated region
    $region90: #{rnn_decoder_forward.1} parent=1 // pred_check
      _
    $region91: #{rnn_decoder_forward.1} parent=1 // pred_check_branch
      %10767 = sbr.rel (0) target = $region93
    $region92: #{rnn_decoder_forward.1} parent=1 // pred_region
      %s10769 = ssub.s32 1024, 1024
      %10770 = vsyncadd [#allocation4], %s10769
      %s10771 = sshll.u32 [#allocation14], 4
      %s10772 = int_to_ptr.vmem [resolvable:$true] %s10771
      %10777 = dma.vmem_to_hbm [thread:$0]  %s10772, 1024, %s15, [#allocation4], 512, 512, 32
    $region93: #{rnn_decoder_forward.1} parent=1 // pred_fallthru
      _
    // Predicated region
    $region94: #{rnn_decoder_forward.1} parent=1 // pred_check
      _
    $region95: #{rnn_decoder_forward.1} parent=1 // pred_check_branch
      %10779 = sbr.rel (0) target = $region97
    $region96: #{rnn_decoder_forward.1} parent=1 // pred_region
      %10780 = dma.done [#allocation4], 1024
    $region97: #{rnn_decoder_forward.1} parent=1 // pred_fallthru
      _
    %10781 = vsyncpa [#allocation3], 1
    %10782 = vsyncpa [#allocation6], 1
    %10783 = vsyncpa [#allocation9], 1
    %10784 = vsyncpa [#allocation12], 1
    %10785 = vsyncpa [#allocation4], 1

</llo_original>
